<compile_context>
chip_gen: v6e
topology: v6e:2x2x1
jax: 0.10.0
libtpu: 0.0.40
codegen_flags: <defaults>
</compile_context>

<pallas_src>
import jax
import jax.numpy as jnp
from jax.experimental import pallas as pl
from jax.experimental.pallas import tpu as pltpu


def _make_attn_kernel(num_heads, head_dim):
    """One (batch, query-tile) grid step of the fused attention forward."""

    def kernel(xq_ref, xkv_ref, wq_ref, bq_ref, wkv_ref, bkv_ref,
               wp_ref, bp_ref, o_ref, kv_ref):
        # --- KV projection, hoisted out of the query-tile axis -------------
        # kv_ref is a persistent VMEM scratch (N, 2C) in bf16; it is
        # recomputed only when a new batch element starts (program_id(1)==0)
        # and reused by every query tile of that batch element.
        @pl.when(pl.program_id(1) == 0)
        def _():
            xkv = xkv_ref[0].astype(jnp.bfloat16)              # (N, C)
            wkv = wkv_ref[...].astype(jnp.bfloat16)            # (C, 2C)
            kv = jnp.dot(xkv, wkv, preferred_element_type=jnp.float32)
            kv_ref[...] = (kv + bkv_ref[...]).astype(kv_ref.dtype)

        xq = xq_ref[0]                                         # (tq, C)
        tq, C = xq.shape

        # Q projection; the softmax scale is already folded into wq / bq.
        q = jnp.dot(xq.astype(jnp.bfloat16), wq_ref[...].astype(jnp.bfloat16),
                    preferred_element_type=jnp.float32) + bq_ref[...]
        q = q.astype(jnp.bfloat16)                             # (tq, C)

        wp = wp_ref[...].astype(jnp.bfloat16)                  # (C, C)

        acc = jnp.zeros((tq, C), jnp.float32)
        for h in range(num_heads):       # static loop; 128-aligned lane slices
            lo, hi = h * head_dim, (h + 1) * head_dim
            qh = q[:, lo:hi]                                   # (tq, hd) bf16
            kh = kv_ref[:, lo:hi]                              # (N,  hd) bf16
            vh = kv_ref[:, C + lo:C + hi]                      # (N,  hd) bf16

            # scores (tq, N): MXU, bf16 operands, f32 accumulation
            s = jax.lax.dot_general(qh, kh, (((1,), (1,)), ((), ())),
                                    preferred_element_type=jnp.float32)
            s = s - jnp.max(s, axis=-1, keepdims=True)
            e = jnp.exp(s)
            # TODO(synk): if EUP-bound after the MXU cuts, compute the exp in
            # bf16 (v6e/v7x only).
            p = e * pl.reciprocal(jnp.sum(e, axis=-1, keepdims=True),
                                  approx=True)

            ctx = jnp.dot(p.astype(jnp.bfloat16), vh,
                          preferred_element_type=jnp.float32)  # (tq, hd)
            # proj applied per head-slice and accumulated == proj(concat heads)
            acc = acc + jnp.dot(ctx.astype(jnp.bfloat16), wp[lo:hi, :],
                                preferred_element_type=jnp.float32)

        o_ref[0] = (acc + bp_ref[...]).astype(o_ref.dtype)

    return kernel


def _full_spec(arr):
    nd = arr.ndim
    return pl.BlockSpec(arr.shape, (lambda nd: (lambda b, i: (0,) * nd))(nd))


def attention_forward(x, params, num_heads, *, tq=256):
    """Pallas version of Attention.forward (sr_ratio == 1). x: (B, N, C)."""
    B, N, C = x.shape
    assert C % num_heads == 0
    head_dim = C // num_heads
    scale = float(head_dim) ** -0.5
    tq = min(tq, N)
    assert N % tq == 0, "query tile must divide N"
    assert C % 128 == 0 and tq % 8 == 0, "lane/sublane alignment"
    # head_dim % 128 != 0 stays correct but loses lane-dense per-head slices.

    # Fold the softmax scale into the Q projection (exactly equivalent).
    wq = params["wq"] * scale
    bq = params["bq"] * scale
    prm = [wq, bq, params["wkv"], params["bkv"], params["wp"], params["bp"]]

    kernel = _make_attn_kernel(num_heads, head_dim)

    q_spec = pl.BlockSpec((1, tq, C), lambda b, i: (b, i, 0))   # query tile
    kv_spec = pl.BlockSpec((1, N, C), lambda b, i: (b, 0, 0))   # all tokens

    # Scoped-VMEM budget: raise above the ~32 MiB default only when the
    # resident set demands it; cap at 64 MiB (v7x physical).  Beyond that a
    # KV-tiled flash-style kernel is required (see TODO above).
    vmem_bytes = (
        2 * (2 * tq * C + N * C) * 4                 # xq / out / xkv buffers
        + 2 * (4 * C * C + 6 * C) * 4                # weights + biases (x2 buf)
        + N * 2 * C * 2                              # KV scratch (bf16)
        + (tq * N + 3 * tq * C) * 4                  # live scores / q / acc
    )
    compiler_kwargs = {}
    if vmem_bytes > 30 * 1024 * 1024:
        compiler_kwargs["vmem_limit_bytes"] = min(
            int(1.25 * vmem_bytes), 64 * 1024 * 1024)

    return pl.pallas_call(
        kernel,
        out_shape=jax.ShapeDtypeStruct((B, N, C), x.dtype),
        grid_spec=pltpu.PrefetchScalarGridSpec(
            num_scalar_prefetch=0,
            grid=(B, N // tq),
            in_specs=[q_spec, kv_spec] + [_full_spec(p) for p in prm],
            out_specs=q_spec,
            scratch_shapes=[pltpu.VMEM((N, 2 * C), jnp.bfloat16)],
        ),
        compiler_params=pltpu.CompilerParams(
            # Batch axis parallel (megacore shards over B); query-tile axis is
            # arbitrary because the KV scratch carries across it.
            dimension_semantics=("parallel", "arbitrary"),
            **compiler_kwargs),
    )(x, x, *prm)


def attention_ref(x, params, num_heads):
    """Pure-JAX f32 reference matching the PyTorch module (sr_ratio == 1)."""
    B, N, C = x.shape
    hd = C // num_heads
    scale = hd ** -0.5
    hp = jax.lax.Precision.HIGHEST
    q = jnp.dot(x, params["wq"], precision=hp) + params["bq"]
    q = q.reshape(B, N, num_heads, hd).transpose(0, 2, 1, 3)
    kv = jnp.dot(x, params["wkv"], precision=hp) + params["bkv"]
    kv = kv.reshape(B, N, 2, num_heads, hd).transpose(2, 0, 3, 1, 4)
    k, v = kv[0], kv[1]
    attn = jax.nn.softmax(
        jnp.einsum("bhqd,bhkd->bhqk", q, k, precision=hp) * scale, axis=-1)
    ctx = jnp.einsum("bhqk,bhkd->bhqd", attn, v, precision=hp)
    ctx = ctx.transpose(0, 2, 1, 3).reshape(B, N, C)
    return jnp.dot(ctx, params["wp"], precision=hp) + params["bp"]


if __name__ == "__main__":
    B, H, W = 2, 16, 32               # N = H*W = 512 tokens -> 2 query tiles
    dim, head, sr_ratio = 256, 2, 1   # head_dim = 128 (lane-dense)
    N = H * W

    key = jax.random.PRNGKey(0)
    kx, k0, k1, k2, k3, k4, k5 = jax.random.split(key, 7)
    x = jax.random.normal(kx, (B, N, dim), dtype=jnp.float32)

    s = dim ** -0.5
    params = {
        "wq": s * jax.random.normal(k0, (dim, dim), jnp.float32),
        "bq": 0.02 * jax.random.normal(k1, (1, dim), jnp.float32),
        "wkv": s * jax.random.normal(k2, (dim, 2 * dim), jnp.float32),
        "bkv": 0.02 * jax.random.normal(k3, (1, 2 * dim), jnp.float32),
        "wp": s * jax.random.normal(k4, (dim, dim), jnp.float32),
        "bp": 0.02 * jax.random.normal(k5, (1, dim), jnp.float32),
    }

    out = attention_forward(x, params, head, tq=256)
    out = jax.block_until_ready(out)

    ref = attention_ref(x, params, head)
    assert out.shape == (B, N, dim)
    assert bool(jnp.isfinite(out).all())
    # bf16 MXU operands (f32 accumulation) + approx reciprocal vs. an exact
    # f32 reference: allow a looser tolerance than the all-f32 version.
    max_err = float(jnp.max(jnp.abs(out - ref)))
    assert max_err < 5e-2, f"max abs err {max_err}"
    print("KERNEL_OK")
</pallas_src>

<mosaic_0001>
module attributes {stable_mosaic.version = 11 : i64} {
  func.func @kernel(%arg0: i32, %arg1: i32, %arg2: memref<1x256x256xf32, #tpu.memory_space<vmem>>, %arg3: memref<1x512x256xf32, #tpu.memory_space<vmem>>, %arg4: memref<256x256xf32, #tpu.memory_space<vmem>>, %arg5: memref<1x256xf32, #tpu.memory_space<vmem>>, %arg6: memref<256x512xf32, #tpu.memory_space<vmem>>, %arg7: memref<1x512xf32, #tpu.memory_space<vmem>>, %arg8: memref<256x256xf32, #tpu.memory_space<vmem>>, %arg9: memref<1x256xf32, #tpu.memory_space<vmem>>, %arg10: memref<1x256x256xf32, #tpu.memory_space<vmem>>, %arg11: memref<512x512xbf16, #tpu.memory_space<vmem>>) attributes {dimension_semantics = [#tpu.dimension_semantics<parallel>, #tpu.dimension_semantics<arbitrary>], iteration_bounds = array<i64: 2, 2>, scalar_prefetch = 0 : i64, scratch_operands = 1 : i64, tpu.core_type = #tpu.core_type<tc>, window_params = [{transform_indices = @transform_0, window_bounds = array<i64: 1, 256, 256>}, {transform_indices = @transform_1, window_bounds = array<i64: 1, 512, 256>}, {pipeline_mode = #tpu.pipeline_mode<synchronous>, transform_indices = @transform_2, window_bounds = array<i64: 256, 256>}, {pipeline_mode = #tpu.pipeline_mode<synchronous>, transform_indices = @transform_3, window_bounds = array<i64: 1, 256>}, {pipeline_mode = #tpu.pipeline_mode<synchronous>, transform_indices = @transform_4, window_bounds = array<i64: 256, 512>}, {pipeline_mode = #tpu.pipeline_mode<synchronous>, transform_indices = @transform_5, window_bounds = array<i64: 1, 512>}, {pipeline_mode = #tpu.pipeline_mode<synchronous>, transform_indices = @transform_6, window_bounds = array<i64: 256, 256>}, {pipeline_mode = #tpu.pipeline_mode<synchronous>, transform_indices = @transform_7, window_bounds = array<i64: 1, 256>}, {transform_indices = @transform_8, window_bounds = array<i64: 1, 256, 256>}]} {
    %c0_i32 = arith.constant 0 : i32
    %0 = arith.cmpi eq, %arg1, %c0_i32 : i32
    %1 = arith.extui %0 : i1 to i32
    %c0_i32_0 = arith.constant 0 : i32
    %2 = arith.cmpi ne, %1, %c0_i32_0 : i32
    scf.if %2 {
      %c0_30 = arith.constant 0 : index
      %c0_31 = arith.constant 0 : index
      %c0_32 = arith.constant 0 : index
      %62 = vector.load %arg3[%c0_30, %c0_31, %c0_32] : memref<1x512x256xf32, #tpu.memory_space<vmem>>, vector<1x512x256xf32>
      %63 = vector.shape_cast %62 : vector<1x512x256xf32> to vector<512x256xf32>
      %64 = arith.truncf %63 : vector<512x256xf32> to vector<512x256xbf16>
      %c0_33 = arith.constant 0 : index
      %c0_34 = arith.constant 0 : index
      %65 = vector.load %arg6[%c0_33, %c0_34] : memref<256x512xf32, #tpu.memory_space<vmem>>, vector<256x512xf32>
      %66 = arith.truncf %65 : vector<256x512xf32> to vector<256x512xbf16>
      %cst_35 = arith.constant dense<0.000000e+00> : vector<512x512xf32>
      %67 = tpu.matmul %64, %66, %cst_35 {dimension_numbers = #tpu.dot_dimension_numbers<[1], [0], [0], [1], [0, 0, 1, 1], [], []>} : vector<512x256xbf16>, vector<256x512xbf16>, vector<512x512xf32> -> vector<512x512xf32>
      %c0_36 = arith.constant 0 : index
      %c0_37 = arith.constant 0 : index
      %68 = vector.load %arg7[%c0_36, %c0_37] : memref<1x512xf32, #tpu.memory_space<vmem>>, vector<1x512xf32>
      %69 = vector.broadcast %68 : vector<1x512xf32> to vector<512x512xf32>
      %70 = arith.addf %67, %69 : vector<512x512xf32>
      %71 = arith.truncf %70 : vector<512x512xf32> to vector<512x512xbf16>
      %c0_38 = arith.constant 0 : index
      %c0_39 = arith.constant 0 : index
      %72 = vector.load %arg11[%c0_38, %c0_39] : memref<512x512xbf16, #tpu.memory_space<vmem>>, vector<512x512xbf16>
      tpu.vector_store %arg11[%c0_38, %c0_39], %71 {strides = array<i32>} : memref<512x512xbf16, #tpu.memory_space<vmem>>, vector<512x512xbf16>,
    } else {
    }
    %c0 = arith.constant 0 : index
    %c0_1 = arith.constant 0 : index
    %c0_2 = arith.constant 0 : index
    %3 = vector.load %arg2[%c0, %c0_1, %c0_2] : memref<1x256x256xf32, #tpu.memory_space<vmem>>, vector<1x256x256xf32>
    %4 = vector.shape_cast %3 : vector<1x256x256xf32> to vector<256x256xf32>
    %5 = arith.truncf %4 : vector<256x256xf32> to vector<256x256xbf16>
    %c0_3 = arith.constant 0 : index
    %c0_4 = arith.constant 0 : index
    %6 = vector.load %arg4[%c0_3, %c0_4] : memref<256x256xf32, #tpu.memory_space<vmem>>, vector<256x256xf32>
    %7 = arith.truncf %6 : vector<256x256xf32> to vector<256x256xbf16>
    %cst = arith.constant dense<0.000000e+00> : vector<256x256xf32>
    %8 = tpu.matmul %5, %7, %cst {dimension_numbers = #tpu.dot_dimension_numbers<[1], [0], [0], [1], [0, 0, 1, 1], [], []>} : vector<256x256xbf16>, vector<256x256xbf16>, vector<256x256xf32> -> vector<256x256xf32>
    %c0_5 = arith.constant 0 : index
    %c0_6 = arith.constant 0 : index
    %9 = vector.load %arg5[%c0_5, %c0_6] : memref<1x256xf32, #tpu.memory_space<vmem>>, vector<1x256xf32>
    %10 = vector.broadcast %9 : vector<1x256xf32> to vector<256x256xf32>
    %11 = arith.addf %8, %10 : vector<256x256xf32>
    %12 = arith.truncf %11 : vector<256x256xf32> to vector<256x256xbf16>
    %c0_7 = arith.constant 0 : index
    %c0_8 = arith.constant 0 : index
    %13 = vector.load %arg8[%c0_7, %c0_8] : memref<256x256xf32, #tpu.memory_space<vmem>>, vector<256x256xf32>
    %14 = arith.truncf %13 : vector<256x256xf32> to vector<256x256xbf16>
    %cst_9 = arith.constant 0.000000e+00 : f32
    %15 = vector.broadcast %cst_9 : f32 to vector<256x256xf32>
    %16 = vector.extract_strided_slice %12 {offsets = [0, 0], sizes = [256, 128], strides = [1, 1]} : vector<256x256xbf16> to vector<256x128xbf16>
    %c0_10 = arith.constant 0 : index
    %c0_11 = arith.constant 0 : index
    %17 = vector.load %arg11[%c0_10, %c0_11] : memref<512x512xbf16, #tpu.memory_space<vmem>>, vector<512x128xbf16>
    %c0_12 = arith.constant 0 : index
    %c256 = arith.constant 256 : index
    %18 = vector.load %arg11[%c0_12, %c256] : memref<512x512xbf16, #tpu.memory_space<vmem>>, vector<512x128xbf16>
    %cst_13 = arith.constant dense<0.000000e+00> : vector<256x512xf32>
    %19 = tpu.matmul %16, %17, %cst_13 {dimension_numbers = #tpu.dot_dimension_numbers<[1], [1], [0], [0], [0, 0, 1, 0], [], []>} : vector<256x128xbf16>, vector<512x128xbf16>, vector<256x512xf32> -> vector<256x512xf32>
    %cst_14 = arith.constant dense<0xFF800000> : vector<256xf32>
    %20 = vector.multi_reduction <maximumf>, %19, %cst_14 [1] : vector<256x512xf32> to vector<256xf32>
    %21 = vector.shape_cast %20 : vector<256xf32> to vector<256x1xf32>
    %22 = vector.broadcast %21 : vector<256x1xf32> to vector<256x512xf32>
    %23 = arith.subf %19, %22 : vector<256x512xf32>
    %24 = math.exp %23 : vector<256x512xf32>
    %cst_15 = arith.constant dense<0.000000e+00> : vector<256xf32>
    %25 = vector.multi_reduction <add>, %24, %cst_15 [1] : vector<256x512xf32> to vector<256xf32>
    %26 = vector.shape_cast %25 : vector<256xf32> to vector<256x1xf32>
    %27 = tpu.reciprocal %26 {approx = true} : vector<256x1xf32> -> vector<256x1xf32>
    %28 = vector.broadcast %27 : vector<256x1xf32> to vector<256x512xf32>
    %29 = arith.mulf %24, %28 : vector<256x512xf32>
    %30 = arith.truncf %29 : vector<256x512xf32> to vector<256x512xbf16>
    %cst_16 = arith.constant dense<0.000000e+00> : vector<256x128xf32>
    %31 = tpu.matmul %30, %18, %cst_16 {dimension_numbers = #tpu.dot_dimension_numbers<[1], [0], [0], [1], [0, 0, 1, 1], [], []>} : vector<256x512xbf16>, vector<512x128xbf16>, vector<256x128xf32> -> vector<256x128xf32>
    %32 = arith.truncf %31 : vector<256x128xf32> to vector<256x128xbf16>
    %33 = vector.extract_strided_slice %14 {offsets = [0, 0], sizes = [128, 256], strides = [1, 1]} : vector<256x256xbf16> to vector<128x256xbf16>
    %cst_17 = arith.constant dense<0.000000e+00> : vector<256x256xf32>
    %34 = tpu.matmul %32, %33, %cst_17 {dimension_numbers = #tpu.dot_dimension_numbers<[1], [0], [0], [1], [0, 0, 1, 1], [], []>} : vector<256x128xbf16>, vector<128x256xbf16>, vector<256x256xf32> -> vector<256x256xf32>
    %35 = arith.addf %15, %34 : vector<256x256xf32>
    %36 = vector.extract_strided_slice %12 {offsets = [0, 128], sizes = [256, 128], strides = [1, 1]} : vector<256x256xbf16> to vector<256x128xbf16>
    %c0_18 = arith.constant 0 : index
    %c128 = arith.constant 128 : index
    %37 = vector.load %arg11[%c0_18, %c128] : memref<512x512xbf16, #tpu.memory_space<vmem>>, vector<512x128xbf16>
    %c0_19 = arith.constant 0 : index
    %c384 = arith.constant 384 : index
    %38 = vector.load %arg11[%c0_19, %c384] : memref<512x512xbf16, #tpu.memory_space<vmem>>, vector<512x128xbf16>
    %cst_20 = arith.constant dense<0.000000e+00> : vector<256x512xf32>
    %39 = tpu.matmul %36, %37, %cst_20 {dimension_numbers = #tpu.dot_dimension_numbers<[1], [1], [0], [0], [0, 0, 1, 0], [], []>} : vector<256x128xbf16>, vector<512x128xbf16>, vector<256x512xf32> -> vector<256x512xf32>
    %cst_21 = arith.constant dense<0xFF800000> : vector<256xf32>
    %40 = vector.multi_reduction <maximumf>, %39, %cst_21 [1] : vector<256x512xf32> to vector<256xf32>
    %41 = vector.shape_cast %40 : vector<256xf32> to vector<256x1xf32>
    %42 = vector.broadcast %41 : vector<256x1xf32> to vector<256x512xf32>
    %43 = arith.subf %39, %42 : vector<256x512xf32>
    %44 = math.exp %43 : vector<256x512xf32>
    %cst_22 = arith.constant dense<0.000000e+00> : vector<256xf32>
    %45 = vector.multi_reduction <add>, %44, %cst_22 [1] : vector<256x512xf32> to vector<256xf32>
    %46 = vector.shape_cast %45 : vector<256xf32> to vector<256x1xf32>
    %47 = tpu.reciprocal %46 {approx = true} : vector<256x1xf32> -> vector<256x1xf32>
    %48 = vector.broadcast %47 : vector<256x1xf32> to vector<256x512xf32>
    %49 = arith.mulf %44, %48 : vector<256x512xf32>
    %50 = arith.truncf %49 : vector<256x512xf32> to vector<256x512xbf16>
    %cst_23 = arith.constant dense<0.000000e+00> : vector<256x128xf32>
    %51 = tpu.matmul %50, %38, %cst_23 {dimension_numbers = #tpu.dot_dimension_numbers<[1], [0], [0], [1], [0, 0, 1, 1], [], []>} : vector<256x512xbf16>, vector<512x128xbf16>, vector<256x128xf32> -> vector<256x128xf32>
    %52 = arith.truncf %51 : vector<256x128xf32> to vector<256x128xbf16>
    %53 = vector.extract_strided_slice %14 {offsets = [128, 0], sizes = [128, 256], strides = [1, 1]} : vector<256x256xbf16> to vector<128x256xbf16>
    %cst_24 = arith.constant dense<0.000000e+00> : vector<256x256xf32>
    %54 = tpu.matmul %52, %53, %cst_24 {dimension_numbers = #tpu.dot_dimension_numbers<[1], [0], [0], [1], [0, 0, 1, 1], [], []>} : vector<256x128xbf16>, vector<128x256xbf16>, vector<256x256xf32> -> vector<256x256xf32>
    %55 = arith.addf %35, %54 : vector<256x256xf32>
    %c0_25 = arith.constant 0 : index
    %c0_26 = arith.constant 0 : index
    %56 = vector.load %arg9[%c0_25, %c0_26] : memref<1x256xf32, #tpu.memory_space<vmem>>, vector<1x256xf32>
    %57 = vector.broadcast %56 : vector<1x256xf32> to vector<256x256xf32>
    %58 = arith.addf %55, %57 : vector<256x256xf32>
    %c0_27 = arith.constant 0 : index
    %c0_28 = arith.constant 0 : index
    %c0_29 = arith.constant 0 : index
    %59 = vector.load %arg10[%c0_27, %c0_28, %c0_29] : memref<1x256x256xf32, #tpu.memory_space<vmem>>, vector<1x256x256xf32>
    %60 = vector.shape_cast %59 : vector<1x256x256xf32> to vector<256x256xf32>
    %61 = vector.shape_cast %58 : vector<256x256xf32> to vector<1x256x256xf32>
    tpu.vector_store %arg10[%c0_27, %c0_28, %c0_29], %61 {strides = array<i32>} : memref<1x256x256xf32, #tpu.memory_space<vmem>>, vector<1x256x256xf32>,
    return
  }
  func.func @transform_0(%arg0: i32, %arg1: i32) -> (i32, i32, i32) {
    %c0_i32 = arith.constant 0 : i32
    %c0_i32_0 = arith.constant 0 : i32
    return %arg0, %arg1, %c0_i32 : i32, i32, i32
  }
  func.func @transform_1(%arg0: i32, %arg1: i32) -> (i32, i32, i32) {
    %c0_i32 = arith.constant 0 : i32
    %c0_i32_0 = arith.constant 0 : i32
    %c0_i32_1 = arith.constant 0 : i32
    return %arg0, %c0_i32, %c0_i32_0 : i32, i32, i32
  }
  func.func @transform_2(%arg0: i32, %arg1: i32) -> (i32, i32) {
    %c0_i32 = arith.constant 0 : i32
    %c0_i32_0 = arith.constant 0 : i32
    %c0_i32_1 = arith.constant 0 : i32
    return %c0_i32, %c0_i32_0 : i32, i32
  }
  func.func @transform_3(%arg0: i32, %arg1: i32) -> (i32, i32) {
    %c0_i32 = arith.constant 0 : i32
    %c0_i32_0 = arith.constant 0 : i32
    %c0_i32_1 = arith.constant 0 : i32
    return %c0_i32, %c0_i32_0 : i32, i32
  }
  func.func @transform_4(%arg0: i32, %arg1: i32) -> (i32, i32) {
    %c0_i32 = arith.constant 0 : i32
    %c0_i32_0 = arith.constant 0 : i32
    %c0_i32_1 = arith.constant 0 : i32
    return %c0_i32, %c0_i32_0 : i32, i32
  }
  func.func @transform_5(%arg0: i32, %arg1: i32) -> (i32, i32) {
    %c0_i32 = arith.constant 0 : i32
    %c0_i32_0 = arith.constant 0 : i32
    %c0_i32_1 = arith.constant 0 : i32
    return %c0_i32, %c0_i32_0 : i32, i32
  }
  func.func @transform_6(%arg0: i32, %arg1: i32) -> (i32, i32) {
    %c0_i32 = arith.constant 0 : i32
    %c0_i32_0 = arith.constant 0 : i32
    %c0_i32_1 = arith.constant 0 : i32
    return %c0_i32, %c0_i32_0 : i32, i32
  }
  func.func @transform_7(%arg0: i32, %arg1: i32) -> (i32, i32) {
    %c0_i32 = arith.constant 0 : i32
    %c0_i32_0 = arith.constant 0 : i32
    %c0_i32_1 = arith.constant 0 : i32
    return %c0_i32, %c0_i32_0 : i32, i32
  }
  func.func @transform_8(%arg0: i32, %arg1: i32) -> (i32, i32, i32) {
    %c0_i32 = arith.constant 0 : i32
    %c0_i32_0 = arith.constant 0 : i32
    return %arg0, %arg1, %c0_i32 : i32, i32, i32
  }
}

</mosaic_0001>

<llo_original>
// kernel: tpu_custom_call.1
$region0: #{tpu_custom_call.1}
  #allocation0 [shape = 'u32[]', space=smem, size = 0x4, offset = 0x4, fixed_abs, tag = 'smem constant byte address 0x4 - core index']
  #allocation1 [shape = 'u32[144,128]{1,0:T(1,128)}', space=vmem, size = 0x12000, scoped, tag = 'internal scratch']
  #allocation2 [shape = 'bf16[512,512]{1,0:T(8,128)(2,1)}', space=vmem, size = 0x80000, scoped, tag = 'scratch operand']
  %s0 = inlined_call_operand.hbm [shape: f32[2,512,256], index: 0, kind: input, shape index: {}]
  %s1 = inlined_call_operand.hbm [shape: f32[2,512,256], index: 1, kind: input, shape index: {}]
  %s2 = inlined_call_operand.hbm [shape: f32[256,256], index: 2, kind: input, shape index: {}]
  %s3 = inlined_call_operand.vmem [shape: f32[1,256], index: 3, kind: input, shape index: {}]
  %s4 = inlined_call_operand.hbm [shape: f32[256,512], index: 4, kind: input, shape index: {}]
  %s5 = inlined_call_operand.vmem [shape: f32[1,512], index: 5, kind: input, shape index: {}]
  %s6 = inlined_call_operand.hbm [shape: f32[256,256], index: 6, kind: input, shape index: {}]
  %s7 = inlined_call_operand.vmem [shape: f32[1,256], index: 7, kind: input, shape index: {}]
  %s8 = inlined_call_operand.hbm [shape: f32[2,512,256], index: 8, kind: output, shape index: {}]
  %s9 = sld [smem:[#allocation0]]
  $region89: #{tpu_custom_call.1} parent=0
    _
  %s11 = ssub.s32 1, %s9
  %s12 = scalar_select 0, %s11, %s9
  $region1: #{tpu_custom_call.1} parent=0
    #allocation3 [shape = 'u8[524288]{0}', space=vmem, size = 0x80000, scoped, tag = 'input window, operand 0']
    #allocation4 [shape = 's32[2]{0}', space=sflag, size = 0x8, scoped, tag = 'scoped memory for tpu_custom_call.1']
    #allocation5 [shape = 's32[2]{0}', space=sflag, size = 0x8, scoped, tag = 'scoped memory for tpu_custom_call.1']
    #allocation6 [shape = 'u8[1048576]{0}', space=vmem, size = 0x100000, scoped, tag = 'input window, operand 1']
    #allocation7 [shape = 's32[2]{0}', space=sflag, size = 0x8, scoped, tag = 'scoped memory for tpu_custom_call.1']
    #allocation8 [shape = 'u8[262144]{0}', space=vmem, size = 0x40000, scoped, tag = 'input window, operand 2, single buffered']
    #allocation9 [shape = 'u8[524288]{0}', space=vmem, size = 0x80000, scoped, tag = 'input window, operand 4, single buffered']
    #allocation10 [shape = 's32[1]{0}', space=sflag, size = 0x4, scoped, tag = 'scoped memory for tpu_custom_call.1']
    #allocation11 [shape = 'u8[262144]{0}', space=vmem, size = 0x40000, scoped, tag = 'input window, operand 6, single buffered']
    #allocation12 [shape = 'u8[524288]{0}', space=vmem, size = 0x80000, scoped, tag = 'output window, operand 0']
    %13 = vsyncpa [#allocation4], 0
    %s14 = scalar_lea.sflag [#allocation4], 1
    %15 = vsyncpa %s14, 0
    %16 = vsyncpa [#allocation7], 0
    %s17 = scalar_lea.sflag [#allocation7], 1
    %18 = vsyncpa %s17, 0
    %19 = vsyncpa [#allocation10], 0
    %20 = vsyncpa [#allocation5], 0
    %s21 = scalar_lea.sflag [#allocation5], 1
    %22 = vsyncpa %s21, 0
    loop: start=0, step=1, limit=6
    $region2: #{tpu_custom_call.1} parent=1 // loop_pre_header
      _
    $region3: #{tpu_custom_call.1} parent=1 // loop_header
      %s24 = sphi 0, %s28
      %p25 = scmp.ge.s32.totalorder %s24, 6
      %s31 = sphi 0, %s43
      %s32 = sphi 0, %s39
      %s33 = sphi 0, %s31
      %s34 = sphi 0, %s32
      %s35 = sphi 0, %s33
      %s36 = sphi 0, %s34
      %s48 = sphi 0, %s50
      %s51 = sphi 0, %s48
      %s52 = sphi 0, %s51
      %s68 = sphi 0, %s52
      %s74 = sphi 0, %s76
      %s77 = sphi 0, %s74
      %s78 = sphi 0, %s77
      %s94 = sphi 0, %s78
      %s98 = sphi 0, %s98
      %s100 = sphi 0, %s98
      %s101 = sphi 0, %s100
      %s115 = sphi 0, %s101
      %s119 = sphi 0, %s119
      %s121 = sphi 0, %s119
      %s122 = sphi 0, %s121
      %s136 = sphi 0, %s122
      %s140 = sphi 0, %s140
      %s142 = sphi 0, %s140
      %s143 = sphi 0, %s142
      %s157 = sphi 0, %s143
      %s161 = sphi 0, %s161
      %s163 = sphi 0, %s161
      %s164 = sphi 0, %s163
      %s178 = sphi 0, %s164
      %s182 = sphi 0, %s182
      %s184 = sphi 0, %s182
      %s185 = sphi 0, %s184
      %s199 = sphi 0, %s185
      %s203 = sphi 0, %s203
      %s205 = sphi 0, %s203
      %s206 = sphi 0, %s205
      %s220 = sphi 0, %s206
      %s228 = sphi 0, %s230
      %s231 = sphi 0, %s228
      %s232 = sphi 0, %s231
      %s248 = sphi 0, %s232
    $region4: #{tpu_custom_call.1} parent=1 // loop_header_branch
      %27 = sbr.rel (%p25) target = $region8
    $region5: #{tpu_custom_call.1} parent=1 // loop_body
      %s29 = ssub.s32 %s24, 1
      %s30 = ssub.s32 %s24, 2
      %s37 = sadd.s32 1, %s32
      %p38 = scmp.ge.s32.totalorder %s37, 2
      %s39 = scalar_select %p38, 0, %s37
      %s40 = sadd.s32 1, %s31
      %s41 = scalar_select %p38, %s40, %s31
      %p42 = scmp.ge.s32.totalorder %s41, 2
      %s43 = scalar_select %p42, 0, %s41
      %s44 = ssub.s32 %s31, %s43
      %s45 = ssub.s32 %s32, %s39
      %s46 = sor.u32 %s44, %s45
      %p47 = scmp.eq.s32.totalorder %s46, 0
      %s49 = sadd.s32 %s48, 1
      %s50 = scalar_select %p47, %s48, %s49
      %p53 = pneg %p47
      %p54 = scmp.eq.s32.totalorder %s24, 3
      %p55 = por %p53, %p54
      %p56 = scmp.ne.s32.totalorder %s48, %s51
      %p57 = scmp.eq.s32.totalorder %s24, 0
      %p58 = por %p56, %p57
      %p59 = scmp.ne.s32.totalorder %s48, %s51
      %p60 = scmp.eq.s32.totalorder %s29, 3
      %p61 = por %p59, %p60
      %p62 = scmp.ne.s32.totalorder %s51, %s52
      %p63 = scmp.eq.s32.totalorder %s29, 0
      %p64 = por %p62, %p63
      %p65 = scmp.ne.s32.totalorder %s51, %s52
      %p66 = scmp.eq.s32.totalorder %s30, 3
      %p67 = por %p65, %p66
      %p69 = scmp.ne.s32.totalorder %s52, %s68
      %p70 = scmp.eq.s32.totalorder %s30, 0
      %p71 = por %p69, %p70
      %s72 = ssub.s32 %s31, %s43
      %p73 = scmp.eq.s32.totalorder %s72, 0
      %s75 = sadd.s32 %s74, 1
      %s76 = scalar_select %p73, %s74, %s75
      %p79 = pneg %p73
      %p80 = scmp.eq.s32.totalorder %s24, 3
      %p81 = por %p79, %p80
      %p82 = scmp.ne.s32.totalorder %s74, %s77
      %p83 = scmp.eq.s32.totalorder %s24, 0
      %p84 = por %p82, %p83
      %p85 = scmp.ne.s32.totalorder %s74, %s77
      %p86 = scmp.eq.s32.totalorder %s29, 3
      %p87 = por %p85, %p86
      %p88 = scmp.ne.s32.totalorder %s77, %s78
      %p89 = scmp.eq.s32.totalorder %s29, 0
      %p90 = por %p88, %p89
      %p91 = scmp.ne.s32.totalorder %s77, %s78
      %p92 = scmp.eq.s32.totalorder %s30, 3
      %p93 = por %p91, %p92
      %p95 = scmp.ne.s32.totalorder %s78, %s94
      %p96 = scmp.eq.s32.totalorder %s30, 0
      %p97 = por %p95, %p96
      %s99 = sadd.s32 %s98, 1
      %p102 = scmp.eq.s32.totalorder %s24, 3
      %p103 = scmp.ne.s32.totalorder %s98, %s100
      %p104 = scmp.eq.s32.totalorder %s24, 0
      %p105 = por %p103, %p104
      %p106 = scmp.ne.s32.totalorder %s98, %s100
      %p107 = scmp.eq.s32.totalorder %s29, 3
      %p108 = por %p106, %p107
      %p109 = scmp.ne.s32.totalorder %s100, %s101
      %p110 = scmp.eq.s32.totalorder %s29, 0
      %p111 = por %p109, %p110
      %p112 = scmp.ne.s32.totalorder %s100, %s101
      %p113 = scmp.eq.s32.totalorder %s30, 3
      %p114 = por %p112, %p113
      %p116 = scmp.ne.s32.totalorder %s101, %s115
      %p117 = scmp.eq.s32.totalorder %s30, 0
      %p118 = por %p116, %p117
      %s120 = sadd.s32 %s119, 1
      %p123 = scmp.eq.s32.totalorder %s24, 3
      %p124 = scmp.ne.s32.totalorder %s119, %s121
      %p125 = scmp.eq.s32.totalorder %s24, 0
      %p126 = por %p124, %p125
      %p127 = scmp.ne.s32.totalorder %s119, %s121
      %p128 = scmp.eq.s32.totalorder %s29, 3
      %p129 = por %p127, %p128
      %p130 = scmp.ne.s32.totalorder %s121, %s122
      %p131 = scmp.eq.s32.totalorder %s29, 0
      %p132 = por %p130, %p131
      %p133 = scmp.ne.s32.totalorder %s121, %s122
      %p134 = scmp.eq.s32.totalorder %s30, 3
      %p135 = por %p133, %p134
      %p137 = scmp.ne.s32.totalorder %s122, %s136
      %p138 = scmp.eq.s32.totalorder %s30, 0
      %p139 = por %p137, %p138
      %s141 = sadd.s32 %s140, 1
      %p144 = scmp.eq.s32.totalorder %s24, 3
      %p145 = scmp.ne.s32.totalorder %s140, %s142
      %p146 = scmp.eq.s32.totalorder %s24, 0
      %p147 = por %p145, %p146
      %p148 = scmp.ne.s32.totalorder %s140, %s142
      %p149 = scmp.eq.s32.totalorder %s29, 3
      %p150 = por %p148, %p149
      %p151 = scmp.ne.s32.totalorder %s142, %s143
      %p152 = scmp.eq.s32.totalorder %s29, 0
      %p153 = por %p151, %p152
      %p154 = scmp.ne.s32.totalorder %s142, %s143
      %p155 = scmp.eq.s32.totalorder %s30, 3
      %p156 = por %p154, %p155
      %p158 = scmp.ne.s32.totalorder %s143, %s157
      %p159 = scmp.eq.s32.totalorder %s30, 0
      %p160 = por %p158, %p159
      %s162 = sadd.s32 %s161, 1
      %p165 = scmp.eq.s32.totalorder %s24, 3
      %p166 = scmp.ne.s32.totalorder %s161, %s163
      %p167 = scmp.eq.s32.totalorder %s24, 0
      %p168 = por %p166, %p167
      %p169 = scmp.ne.s32.totalorder %s161, %s163
      %p170 = scmp.eq.s32.totalorder %s29, 3
      %p171 = por %p169, %p170
      %p172 = scmp.ne.s32.totalorder %s163, %s164
      %p173 = scmp.eq.s32.totalorder %s29, 0
      %p174 = por %p172, %p173
      %p175 = scmp.ne.s32.totalorder %s163, %s164
      %p176 = scmp.eq.s32.totalorder %s30, 3
      %p177 = por %p175, %p176
      %p179 = scmp.ne.s32.totalorder %s164, %s178
      %p180 = scmp.eq.s32.totalorder %s30, 0
      %p181 = por %p179, %p180
      %s183 = sadd.s32 %s182, 1
      %p186 = scmp.eq.s32.totalorder %s24, 3
      %p187 = scmp.ne.s32.totalorder %s182, %s184
      %p188 = scmp.eq.s32.totalorder %s24, 0
      %p189 = por %p187, %p188
      %p190 = scmp.ne.s32.totalorder %s182, %s184
      %p191 = scmp.eq.s32.totalorder %s29, 3
      %p192 = por %p190, %p191
      %p193 = scmp.ne.s32.totalorder %s184, %s185
      %p194 = scmp.eq.s32.totalorder %s29, 0
      %p195 = por %p193, %p194
      %p196 = scmp.ne.s32.totalorder %s184, %s185
      %p197 = scmp.eq.s32.totalorder %s30, 3
      %p198 = por %p196, %p197
      %p200 = scmp.ne.s32.totalorder %s185, %s199
      %p201 = scmp.eq.s32.totalorder %s30, 0
      %p202 = por %p200, %p201
      %s204 = sadd.s32 %s203, 1
      %p207 = scmp.eq.s32.totalorder %s24, 3
      %p208 = scmp.ne.s32.totalorder %s203, %s205
      %p209 = scmp.eq.s32.totalorder %s24, 0
      %p210 = por %p208, %p209
      %p211 = scmp.ne.s32.totalorder %s203, %s205
      %p212 = scmp.eq.s32.totalorder %s29, 3
      %p213 = por %p211, %p212
      %p214 = scmp.ne.s32.totalorder %s205, %s206
      %p215 = scmp.eq.s32.totalorder %s29, 0
      %p216 = por %p214, %p215
      %p217 = scmp.ne.s32.totalorder %s205, %s206
      %p218 = scmp.eq.s32.totalorder %s30, 3
      %p219 = por %p217, %p218
      %p221 = scmp.ne.s32.totalorder %s206, %s220
      %p222 = scmp.eq.s32.totalorder %s30, 0
      %p223 = por %p221, %p222
      %s224 = ssub.s32 %s31, %s43
      %s225 = ssub.s32 %s32, %s39
      %s226 = sor.u32 %s224, %s225
      %p227 = scmp.eq.s32.totalorder %s226, 0
      %s229 = sadd.s32 %s228, 1
      %s230 = scalar_select %p227, %s228, %s229
      %p233 = pneg %p227
      %p234 = scmp.eq.s32.totalorder %s24, 3
      %p235 = por %p233, %p234
      %p236 = scmp.ne.s32.totalorder %s228, %s231
      %p237 = scmp.eq.s32.totalorder %s24, 0
      %p238 = por %p236, %p237
      %p239 = scmp.ne.s32.totalorder %s228, %s231
      %p240 = scmp.eq.s32.totalorder %s29, 3
      %p241 = por %p239, %p240
      %p242 = scmp.ne.s32.totalorder %s231, %s232
      %p243 = scmp.eq.s32.totalorder %s29, 0
      %p244 = por %p242, %p243
      %p245 = scmp.ne.s32.totalorder %s231, %s232
      %p246 = scmp.eq.s32.totalorder %s30, 3
      %p247 = por %p245, %p246
      %p249 = scmp.ne.s32.totalorder %s232, %s248
      %p250 = scmp.eq.s32.totalorder %s30, 0
      %p251 = por %p249, %p250
      %p252 = scmp.le.s32.totalorder 1, %s24
      %p253 = scmp.lt.s32.totalorder %s24, 5
      %p254 = pnand %p252, %p253
      %p255 = pneg %p254
      // Predicated region
      $region9: #{tpu_custom_call.1} parent=5 // pred_check
        _
      $region10: #{tpu_custom_call.1} parent=5 // pred_check_branch
        %257 = sbr.rel (%p254) target = $region12
      $region11: #{tpu_custom_call.1} parent=5 // pred_region
        %s258 = ssub.s32 %s24, 1
        // Predicated region
        $region13: #{tpu_custom_call.1} parent=11 // pred_check
          %p259 = pneg %p111
        $region14: #{tpu_custom_call.1} parent=11 // pred_check_branch
          %261 = sbr.rel (%p259) target = $region16
        $region15: #{tpu_custom_call.1} parent=11 // pred_region
          %s263 = ssub.s32 8192, 8192
          %264 = vsyncadd [#allocation7], %s263
          %s265 = sshll.u32 [#allocation8], 4
          %s266 = int_to_ptr.vmem [resolvable:$true] %s265
          %271 = dma.hbm_to_vmem [thread:$0]  %s2, 8192, %s266, [#allocation7], 256, 256, 16
        $region16: #{tpu_custom_call.1} parent=11 // pred_fallthru
          _
        // Predicated region
        $region17: #{tpu_custom_call.1} parent=11 // pred_check
          %p272 = pneg %p132
        $region18: #{tpu_custom_call.1} parent=11 // pred_check_branch
          %274 = sbr.rel (%p272) target = $region20
        $region19: #{tpu_custom_call.1} parent=11 // pred_region
          _
        $region20: #{tpu_custom_call.1} parent=11 // pred_fallthru
          _
        // Predicated region
        $region21: #{tpu_custom_call.1} parent=11 // pred_check
          %p275 = pneg %p153
        $region22: #{tpu_custom_call.1} parent=11 // pred_check_branch
          %277 = sbr.rel (%p275) target = $region24
        $region23: #{tpu_custom_call.1} parent=11 // pred_region
          %s279 = ssub.s32 16384, 16384
          %280 = vsyncadd [#allocation10], %s279
          %s281 = sshll.u32 [#allocation9], 4
          %s282 = int_to_ptr.vmem [resolvable:$true] %s281
          %287 = dma.hbm_to_vmem [thread:$0]  %s4, 16384, %s282, [#allocation10], 512, 512, 32
        $region24: #{tpu_custom_call.1} parent=11 // pred_fallthru
          _
        // Predicated region
        $region25: #{tpu_custom_call.1} parent=11 // pred_check
          %p288 = pneg %p174
        $region26: #{tpu_custom_call.1} parent=11 // pred_check_branch
          %290 = sbr.rel (%p288) target = $region28
        $region27: #{tpu_custom_call.1} parent=11 // pred_region
          _
        $region28: #{tpu_custom_call.1} parent=11 // pred_fallthru
          _
        // Predicated region
        $region29: #{tpu_custom_call.1} parent=11 // pred_check
          %p291 = pneg %p195
        $region30: #{tpu_custom_call.1} parent=11 // pred_check_branch
          %293 = sbr.rel (%p291) target = $region32
        $region31: #{tpu_custom_call.1} parent=11 // pred_region
          %s295 = ssub.s32 8192, 8192
          %296 = vsyncadd [#allocation10], %s295
          %s297 = sshll.u32 [#allocation11], 4
          %s298 = int_to_ptr.vmem [resolvable:$true] %s297
          %303 = dma.hbm_to_vmem [thread:$0]  %s6, 8192, %s298, [#allocation10], 256, 256, 16
        $region32: #{tpu_custom_call.1} parent=11 // pred_fallthru
          _
        // Predicated region
        $region33: #{tpu_custom_call.1} parent=11 // pred_check
          %p304 = pneg %p216
        $region34: #{tpu_custom_call.1} parent=11 // pred_check_branch
          %306 = sbr.rel (%p304) target = $region36
        $region35: #{tpu_custom_call.1} parent=11 // pred_region
          _
        $region36: #{tpu_custom_call.1} parent=11 // pred_fallthru
          _
      $region12: #{tpu_custom_call.1} parent=5 // pred_fallthru
        _
      %p307 = scmp.lt.s32.totalorder %s24, 4
      // Predicated region
      $region37: #{tpu_custom_call.1} parent=5 // pred_check
        %p308 = pneg %p307
      $region38: #{tpu_custom_call.1} parent=5 // pred_check_branch
        %310 = sbr.rel (%p308) target = $region40
      $region39: #{tpu_custom_call.1} parent=5 // pred_region
        // Predicated region
        $region41: #{tpu_custom_call.1} parent=39 // pred_check
          %p311 = pneg %p58
        $region42: #{tpu_custom_call.1} parent=39 // pred_check_branch
          %313 = sbr.rel (%p311) target = $region44
        $region43: #{tpu_custom_call.1} parent=39 // pred_region
          %s314 = sand.u32 %s48, 1
          %s315 = scalar_lea.sflag [#allocation4], %s314
          %s316 = sand.u32 %s48, 1
          %s317 = smul.addr %s316, 512
          %s318 = scalar_lea.vmem [#allocation3], %s317
          %s319 = smul.u32 32, %s32
          %s321 = ssub.s32 8192, 8192
          %322 = vsyncadd %s315, %s321
          %s323 = smul.addr %s319, 2
          %s324 = smul.addr %s31, 128
          %s325 = sadd.s32 %s323, %s324
          %s326 = smul.addr %s325, 128
          %s327 = scalar_lea.hbm %s0, %s326
          %s328 = sshll.u32 %s318, 4
          %s329 = int_to_ptr.vmem [resolvable:$true] %s328
          %334 = dma.hbm_to_vmem [thread:$0]  %s327, 8192, %s329, %s315, 256, 256, 16
        $region44: #{tpu_custom_call.1} parent=39 // pred_fallthru
          _
        // Predicated region
        $region45: #{tpu_custom_call.1} parent=39 // pred_check
          %p335 = pneg %p84
        $region46: #{tpu_custom_call.1} parent=39 // pred_check_branch
          %337 = sbr.rel (%p335) target = $region48
        $region47: #{tpu_custom_call.1} parent=39 // pred_region
          %s338 = sand.u32 %s24, 1
          %s339 = scalar_lea.sflag [#allocation7], %s338
          %s340 = sand.u32 %s74, 1
          %s341 = smul.addr %s340, 1024
          %s342 = scalar_lea.vmem [#allocation6], %s341
          %s344 = ssub.s32 16384, 16384
          %345 = vsyncadd %s339, %s344
          %s346 = smul.addr %s31, 128
          %s347 = smul.addr %s346, 128
          %s348 = scalar_lea.hbm %s1, %s347
          %s349 = sshll.u32 %s342, 4
          %s350 = int_to_ptr.vmem [resolvable:$true] %s349
          %355 = dma.hbm_to_vmem [thread:$0]  %s348, 16384, %s350, %s339, 256, 256, 16
        $region48: #{tpu_custom_call.1} parent=39 // pred_fallthru
          _
      $region40: #{tpu_custom_call.1} parent=5 // pred_fallthru
        _
      %p356 = scmp.le.s32.totalorder 1, %s24
      %p357 = scmp.lt.s32.totalorder %s24, 5
      %p358 = pnand %p356, %p357
      %p359 = pneg %p358
      // Predicated region
      $region49: #{tpu_custom_call.1} parent=5 // pred_check
        _
      $region50: #{tpu_custom_call.1} parent=5 // pred_check_branch
        %361 = sbr.rel (%p358) target = $region52
      $region51: #{tpu_custom_call.1} parent=5 // pred_region
        %s362 = ssub.s32 %s24, 1
        %s363 = sand.u32 %s51, 1
        %s364 = scalar_lea.sflag [#allocation4], %s363
        %s365 = sand.u32 %s51, 1
        %s366 = smul.addr %s365, 512
        %s367 = scalar_lea.vmem [#allocation3], %s366
        // Predicated region
        $region53: #{tpu_custom_call.1} parent=51 // pred_check
          %p368 = pneg %p64
        $region54: #{tpu_custom_call.1} parent=51 // pred_check_branch
          %370 = sbr.rel (%p368) target = $region56
        $region55: #{tpu_custom_call.1} parent=51 // pred_region
          %371 = dma.done %s364, 8192
        $region56: #{tpu_custom_call.1} parent=51 // pred_fallthru
          _
        %s372 = sand.u32 %s29, 1
        %s373 = scalar_lea.sflag [#allocation7], %s372
        %s374 = sand.u32 %s77, 1
        %s375 = smul.addr %s374, 1024
        %s376 = scalar_lea.vmem [#allocation6], %s375
        // Predicated region
        $region57: #{tpu_custom_call.1} parent=51 // pred_check
          %p377 = pneg %p90
        $region58: #{tpu_custom_call.1} parent=51 // pred_check_branch
          %379 = sbr.rel (%p377) target = $region60
        $region59: #{tpu_custom_call.1} parent=51 // pred_region
          %380 = dma.done %s373, 16384
        $region60: #{tpu_custom_call.1} parent=51 // pred_fallthru
          _
        // Predicated region
        $region61: #{tpu_custom_call.1} parent=51 // pred_check
          %p381 = pneg %p111
        $region62: #{tpu_custom_call.1} parent=51 // pred_check_branch
          %383 = sbr.rel (%p381) target = $region64
        $region63: #{tpu_custom_call.1} parent=51 // pred_region
          %384 = dma.done [#allocation7], 8192
        $region64: #{tpu_custom_call.1} parent=51 // pred_fallthru
          _
        // Predicated region
        $region65: #{tpu_custom_call.1} parent=51 // pred_check
          %p385 = pneg %p153
        $region66: #{tpu_custom_call.1} parent=51 // pred_check_branch
          %387 = sbr.rel (%p385) target = $region68
        $region67: #{tpu_custom_call.1} parent=51 // pred_region
          %388 = dma.done [#allocation10], 16384
        $region68: #{tpu_custom_call.1} parent=51 // pred_fallthru
          _
        // Predicated region
        $region69: #{tpu_custom_call.1} parent=51 // pred_check
          %p389 = pneg %p195
        $region70: #{tpu_custom_call.1} parent=51 // pred_check_branch
          %391 = sbr.rel (%p389) target = $region72
        $region71: #{tpu_custom_call.1} parent=51 // pred_region
          %392 = dma.done [#allocation10], 8192
        $region72: #{tpu_custom_call.1} parent=51 // pred_fallthru
          _
        %s393 = sand.u32 %s51, 1
        %s394 = scalar_lea.sflag [#allocation4], %s393
        %s395 = sand.u32 %s51, 1
        %s396 = smul.addr %s395, 512
        %s397 = scalar_lea.vmem [#allocation3], %s396
        %p398 = pneg %p64
        %p399 = pneg %p61
        %s400 = sand.u32 %s29, 1
        %s401 = scalar_lea.sflag [#allocation7], %s400
        %s402 = sand.u32 %s77, 1
        %s403 = smul.addr %s402, 1024
        %s404 = scalar_lea.vmem [#allocation6], %s403
        %p405 = pneg %p90
        %p406 = pneg %p87
        %p407 = pneg %p111
        %p408 = pneg %p108
        %p409 = pneg %p132
        %p410 = pneg %p129
        %p411 = pneg %p153
        %p412 = pneg %p150
        %p413 = pneg %p174
        %p414 = pneg %p171
        %p415 = pneg %p195
        %p416 = pneg %p192
        %p417 = pneg %p216
        %p418 = pneg %p213
        %p419 = pneg %p244
        %p420 = pneg %p241
        %s421 = sand.u32 %s231, 1
        %s422 = scalar_lea.sflag [#allocation5], %s421
        %s423 = sand.u32 %s231, 1
        %s424 = smul.addr %s423, 512
        %s425 = scalar_lea.vmem [#allocation12], %s424
        %s426 = smul.u32 32, %s34
        %s427 = smul.u32 32, %s34
        %p429 = scmp.eq.s32.totalorder %s34, 0
        // Predicated region
        $region73: #{tpu_custom_call.1} parent=51 // pred_check
          %p430 = pneg %p429
        $region74: #{tpu_custom_call.1} parent=51 // pred_check_branch
          %432 = sbr.rel (%p430) target = $region76
        $region75: #{tpu_custom_call.1} parent=51 // pred_region
          %v433 = vld [vmem:[%s376] sm:$0xff]
          %v434 = vld [vmem:[%s376 + $0x8] sm:$0xff]
          %v435 = vld [vmem:[%s376 + $0x10] sm:$0xff]
          %v436 = vld [vmem:[%s376 + $0x18] sm:$0xff]
          %v437 = vld [vmem:[%s376 + $0x20] sm:$0xff]
          %v438 = vld [vmem:[%s376 + $0x28] sm:$0xff]
          %v439 = vld [vmem:[%s376 + $0x30] sm:$0xff]
          %v440 = vld [vmem:[%s376 + $0x38] sm:$0xff]
          %v441 = vld [vmem:[%s376 + $0x40] sm:$0xff]
          %v442 = vld [vmem:[%s376 + $0x48] sm:$0xff]
          %v443 = vld [vmem:[%s376 + $0x50] sm:$0xff]
          %v444 = vld [vmem:[%s376 + $0x58] sm:$0xff]
          %v445 = vld [vmem:[%s376 + $0x60] sm:$0xff]
          %v446 = vld [vmem:[%s376 + $0x68] sm:$0xff]
          %v447 = vld [vmem:[%s376 + $0x70] sm:$0xff]
          %v448 = vld [vmem:[%s376 + $0x78] sm:$0xff]
          %v449 = vld [vmem:[%s376 + $0x80] sm:$0xff]
          %v450 = vld [vmem:[%s376 + $0x88] sm:$0xff]
          %v451 = vld [vmem:[%s376 + $0x90] sm:$0xff]
          %v452 = vld [vmem:[%s376 + $0x98] sm:$0xff]
          %v453 = vld [vmem:[%s376 + $0xa0] sm:$0xff]
          %v454 = vld [vmem:[%s376 + $0xa8] sm:$0xff]
          %v455 = vld [vmem:[%s376 + $0xb0] sm:$0xff]
          %v456 = vld [vmem:[%s376 + $0xb8] sm:$0xff]
          %v457 = vld [vmem:[%s376 + $0xc0] sm:$0xff]
          %v458 = vld [vmem:[%s376 + $0xc8] sm:$0xff]
          %v459 = vld [vmem:[%s376 + $0xd0] sm:$0xff]
          %v460 = vld [vmem:[%s376 + $0xd8] sm:$0xff]
          %v461 = vld [vmem:[%s376 + $0xe0] sm:$0xff]
          %v462 = vld [vmem:[%s376 + $0xe8] sm:$0xff]
          %v463 = vld [vmem:[%s376 + $0xf0] sm:$0xff]
          %v464 = vld [vmem:[%s376 + $0xf8] sm:$0xff]
          %v465 = vld [vmem:[%s376 + $0x100] sm:$0xff]
          %v466 = vld [vmem:[%s376 + $0x108] sm:$0xff]
          %v467 = vld [vmem:[%s376 + $0x110] sm:$0xff]
          %v468 = vld [vmem:[%s376 + $0x118] sm:$0xff]
          %v469 = vld [vmem:[%s376 + $0x120] sm:$0xff]
          %v470 = vld [vmem:[%s376 + $0x128] sm:$0xff]
          %v471 = vld [vmem:[%s376 + $0x130] sm:$0xff]
          %v472 = vld [vmem:[%s376 + $0x138] sm:$0xff]
          %v473 = vld [vmem:[%s376 + $0x140] sm:$0xff]
          %v474 = vld [vmem:[%s376 + $0x148] sm:$0xff]
          %v475 = vld [vmem:[%s376 + $0x150] sm:$0xff]
          %v476 = vld [vmem:[%s376 + $0x158] sm:$0xff]
          %v477 = vld [vmem:[%s376 + $0x160] sm:$0xff]
          %v478 = vld [vmem:[%s376 + $0x168] sm:$0xff]
          %v479 = vld [vmem:[%s376 + $0x170] sm:$0xff]
          %v480 = vld [vmem:[%s376 + $0x178] sm:$0xff]
          %v481 = vld [vmem:[%s376 + $0x180] sm:$0xff]
          %v482 = vld [vmem:[%s376 + $0x188] sm:$0xff]
          %v483 = vld [vmem:[%s376 + $0x190] sm:$0xff]
          %v484 = vld [vmem:[%s376 + $0x198] sm:$0xff]
          %v485 = vld [vmem:[%s376 + $0x1a0] sm:$0xff]
          %v486 = vld [vmem:[%s376 + $0x1a8] sm:$0xff]
          %v487 = vld [vmem:[%s376 + $0x1b0] sm:$0xff]
          %v488 = vld [vmem:[%s376 + $0x1b8] sm:$0xff]
          %v489 = vld [vmem:[%s376 + $0x1c0] sm:$0xff]
          %v490 = vld [vmem:[%s376 + $0x1c8] sm:$0xff]
          %v491 = vld [vmem:[%s376 + $0x1d0] sm:$0xff]
          %v492 = vld [vmem:[%s376 + $0x1d8] sm:$0xff]
          %v493 = vld [vmem:[%s376 + $0x1e0] sm:$0xff]
          %v494 = vld [vmem:[%s376 + $0x1e8] sm:$0xff]
          %v495 = vld [vmem:[%s376 + $0x1f0] sm:$0xff]
          %v496 = vld [vmem:[%s376 + $0x1f8] sm:$0xff]
          %v497 = vld [vmem:[%s376 + $0x200] sm:$0xff]
          %v498 = vld [vmem:[%s376 + $0x208] sm:$0xff]
          %v499 = vld [vmem:[%s376 + $0x210] sm:$0xff]
          %v500 = vld [vmem:[%s376 + $0x218] sm:$0xff]
          %v501 = vld [vmem:[%s376 + $0x220] sm:$0xff]
          %v502 = vld [vmem:[%s376 + $0x228] sm:$0xff]
          %v503 = vld [vmem:[%s376 + $0x230] sm:$0xff]
          %v504 = vld [vmem:[%s376 + $0x238] sm:$0xff]
          %v505 = vld [vmem:[%s376 + $0x240] sm:$0xff]
          %v506 = vld [vmem:[%s376 + $0x248] sm:$0xff]
          %v507 = vld [vmem:[%s376 + $0x250] sm:$0xff]
          %v508 = vld [vmem:[%s376 + $0x258] sm:$0xff]
          %v509 = vld [vmem:[%s376 + $0x260] sm:$0xff]
          %v510 = vld [vmem:[%s376 + $0x268] sm:$0xff]
          %v511 = vld [vmem:[%s376 + $0x270] sm:$0xff]
          %v512 = vld [vmem:[%s376 + $0x278] sm:$0xff]
          %v513 = vld [vmem:[%s376 + $0x280] sm:$0xff]
          %v514 = vld [vmem:[%s376 + $0x288] sm:$0xff]
          %v515 = vld [vmem:[%s376 + $0x290] sm:$0xff]
          %v516 = vld [vmem:[%s376 + $0x298] sm:$0xff]
          %v517 = vld [vmem:[%s376 + $0x2a0] sm:$0xff]
          %v518 = vld [vmem:[%s376 + $0x2a8] sm:$0xff]
          %v519 = vld [vmem:[%s376 + $0x2b0] sm:$0xff]
          %v520 = vld [vmem:[%s376 + $0x2b8] sm:$0xff]
          %v521 = vld [vmem:[%s376 + $0x2c0] sm:$0xff]
          %v522 = vld [vmem:[%s376 + $0x2c8] sm:$0xff]
          %v523 = vld [vmem:[%s376 + $0x2d0] sm:$0xff]
          %v524 = vld [vmem:[%s376 + $0x2d8] sm:$0xff]
          %v525 = vld [vmem:[%s376 + $0x2e0] sm:$0xff]
          %v526 = vld [vmem:[%s376 + $0x2e8] sm:$0xff]
          %v527 = vld [vmem:[%s376 + $0x2f0] sm:$0xff]
          %v528 = vld [vmem:[%s376 + $0x2f8] sm:$0xff]
          %v529 = vld [vmem:[%s376 + $0x300] sm:$0xff]
          %v530 = vld [vmem:[%s376 + $0x308] sm:$0xff]
          %v531 = vld [vmem:[%s376 + $0x310] sm:$0xff]
          %v532 = vld [vmem:[%s376 + $0x318] sm:$0xff]
          %v533 = vld [vmem:[%s376 + $0x320] sm:$0xff]
          %v534 = vld [vmem:[%s376 + $0x328] sm:$0xff]
          %v535 = vld [vmem:[%s376 + $0x330] sm:$0xff]
          %v536 = vld [vmem:[%s376 + $0x338] sm:$0xff]
          %v537 = vld [vmem:[%s376 + $0x340] sm:$0xff]
          %v538 = vld [vmem:[%s376 + $0x348] sm:$0xff]
          %v539 = vld [vmem:[%s376 + $0x350] sm:$0xff]
          %v540 = vld [vmem:[%s376 + $0x358] sm:$0xff]
          %v541 = vld [vmem:[%s376 + $0x360] sm:$0xff]
          %v542 = vld [vmem:[%s376 + $0x368] sm:$0xff]
          %v543 = vld [vmem:[%s376 + $0x370] sm:$0xff]
          %v544 = vld [vmem:[%s376 + $0x378] sm:$0xff]
          %v545 = vld [vmem:[%s376 + $0x380] sm:$0xff]
          %v546 = vld [vmem:[%s376 + $0x388] sm:$0xff]
          %v547 = vld [vmem:[%s376 + $0x390] sm:$0xff]
          %v548 = vld [vmem:[%s376 + $0x398] sm:$0xff]
          %v549 = vld [vmem:[%s376 + $0x3a0] sm:$0xff]
          %v550 = vld [vmem:[%s376 + $0x3a8] sm:$0xff]
          %v551 = vld [vmem:[%s376 + $0x3b0] sm:$0xff]
          %v552 = vld [vmem:[%s376 + $0x3b8] sm:$0xff]
          %v553 = vld [vmem:[%s376 + $0x3c0] sm:$0xff]
          %v554 = vld [vmem:[%s376 + $0x3c8] sm:$0xff]
          %v555 = vld [vmem:[%s376 + $0x3d0] sm:$0xff]
          %v556 = vld [vmem:[%s376 + $0x3d8] sm:$0xff]
          %v557 = vld [vmem:[%s376 + $0x3e0] sm:$0xff]
          %v558 = vld [vmem:[%s376 + $0x3e8] sm:$0xff]
          %v559 = vld [vmem:[%s376 + $0x3f0] sm:$0xff]
          %v560 = vld [vmem:[%s376 + $0x3f8] sm:$0xff]
          %v561 = vpack.c.bf16 %v435, %v433
          %v562 = vpack.c.bf16 %v436, %v434
          %v563 = vpack.c.bf16 %v439, %v437
          %v564 = vpack.c.bf16 %v440, %v438
          %v565 = vpack.c.bf16 %v443, %v441
          %v566 = vpack.c.bf16 %v444, %v442
          %v567 = vpack.c.bf16 %v447, %v445
          %v568 = vpack.c.bf16 %v448, %v446
          %v569 = vpack.c.bf16 %v451, %v449
          %v570 = vpack.c.bf16 %v452, %v450
          %v571 = vpack.c.bf16 %v455, %v453
          %v572 = vpack.c.bf16 %v456, %v454
          %v573 = vpack.c.bf16 %v459, %v457
          %v574 = vpack.c.bf16 %v460, %v458
          %v575 = vpack.c.bf16 %v463, %v461
          %v576 = vpack.c.bf16 %v464, %v462
          %v577 = vpack.c.bf16 %v467, %v465
          %v578 = vpack.c.bf16 %v468, %v466
          %v579 = vpack.c.bf16 %v471, %v469
          %v580 = vpack.c.bf16 %v472, %v470
          %v581 = vpack.c.bf16 %v475, %v473
          %v582 = vpack.c.bf16 %v476, %v474
          %v583 = vpack.c.bf16 %v479, %v477
          %v584 = vpack.c.bf16 %v480, %v478
          %v585 = vpack.c.bf16 %v483, %v481
          %v586 = vpack.c.bf16 %v484, %v482
          %v587 = vpack.c.bf16 %v487, %v485
          %v588 = vpack.c.bf16 %v488, %v486
          %v589 = vpack.c.bf16 %v491, %v489
          %v590 = vpack.c.bf16 %v492, %v490
          %v591 = vpack.c.bf16 %v495, %v493
          %v592 = vpack.c.bf16 %v496, %v494
          %v593 = vpack.c.bf16 %v499, %v497
          %v594 = vpack.c.bf16 %v500, %v498
          %v595 = vpack.c.bf16 %v503, %v501
          %v596 = vpack.c.bf16 %v504, %v502
          %v597 = vpack.c.bf16 %v507, %v505
          %v598 = vpack.c.bf16 %v508, %v506
          %v599 = vpack.c.bf16 %v511, %v509
          %v600 = vpack.c.bf16 %v512, %v510
          %v601 = vpack.c.bf16 %v515, %v513
          %v602 = vpack.c.bf16 %v516, %v514
          %v603 = vpack.c.bf16 %v519, %v517
          %v604 = vpack.c.bf16 %v520, %v518
          %v605 = vpack.c.bf16 %v523, %v521
          %v606 = vpack.c.bf16 %v524, %v522
          %v607 = vpack.c.bf16 %v527, %v525
          %v608 = vpack.c.bf16 %v528, %v526
          %v609 = vpack.c.bf16 %v531, %v529
          %v610 = vpack.c.bf16 %v532, %v530
          %v611 = vpack.c.bf16 %v535, %v533
          %v612 = vpack.c.bf16 %v536, %v534
          %v613 = vpack.c.bf16 %v539, %v537
          %v614 = vpack.c.bf16 %v540, %v538
          %v615 = vpack.c.bf16 %v543, %v541
          %v616 = vpack.c.bf16 %v544, %v542
          %v617 = vpack.c.bf16 %v547, %v545
          %v618 = vpack.c.bf16 %v548, %v546
          %v619 = vpack.c.bf16 %v551, %v549
          %v620 = vpack.c.bf16 %v552, %v550
          %v621 = vpack.c.bf16 %v555, %v553
          %v622 = vpack.c.bf16 %v556, %v554
          %v623 = vpack.c.bf16 %v559, %v557
          %v624 = vpack.c.bf16 %v560, %v558
          %v625 = vld [vmem:[#allocation9] sm:$0xff]
          %v626 = vld [vmem:[#allocation9 + $0x8] sm:$0xff]
          %v627 = vld [vmem:[#allocation9 + $0x10] sm:$0xff]
          %v628 = vld [vmem:[#allocation9 + $0x18] sm:$0xff]
          %v629 = vld [vmem:[#allocation9 + $0x20] sm:$0xff]
          %v630 = vld [vmem:[#allocation9 + $0x28] sm:$0xff]
          %v631 = vld [vmem:[#allocation9 + $0x30] sm:$0xff]
          %v632 = vld [vmem:[#allocation9 + $0x38] sm:$0xff]
          %v633 = vld [vmem:[#allocation9 + $0x40] sm:$0xff]
          %v634 = vld [vmem:[#allocation9 + $0x48] sm:$0xff]
          %v635 = vld [vmem:[#allocation9 + $0x50] sm:$0xff]
          %v636 = vld [vmem:[#allocation9 + $0x58] sm:$0xff]
          %v637 = vld [vmem:[#allocation9 + $0x60] sm:$0xff]
          %v638 = vld [vmem:[#allocation9 + $0x68] sm:$0xff]
          %v639 = vld [vmem:[#allocation9 + $0x70] sm:$0xff]
          %v640 = vld [vmem:[#allocation9 + $0x78] sm:$0xff]
          %v641 = vld [vmem:[#allocation9 + $0x80] sm:$0xff]
          %v642 = vld [vmem:[#allocation9 + $0x88] sm:$0xff]
          %v643 = vld [vmem:[#allocation9 + $0x90] sm:$0xff]
          %v644 = vld [vmem:[#allocation9 + $0x98] sm:$0xff]
          %v645 = vld [vmem:[#allocation9 + $0xa0] sm:$0xff]
          %v646 = vld [vmem:[#allocation9 + $0xa8] sm:$0xff]
          %v647 = vld [vmem:[#allocation9 + $0xb0] sm:$0xff]
          %v648 = vld [vmem:[#allocation9 + $0xb8] sm:$0xff]
          %v649 = vld [vmem:[#allocation9 + $0xc0] sm:$0xff]
          %v650 = vld [vmem:[#allocation9 + $0xc8] sm:$0xff]
          %v651 = vld [vmem:[#allocation9 + $0xd0] sm:$0xff]
          %v652 = vld [vmem:[#allocation9 + $0xd8] sm:$0xff]
          %v653 = vld [vmem:[#allocation9 + $0xe0] sm:$0xff]
          %v654 = vld [vmem:[#allocation9 + $0xe8] sm:$0xff]
          %v655 = vld [vmem:[#allocation9 + $0xf0] sm:$0xff]
          %v656 = vld [vmem:[#allocation9 + $0xf8] sm:$0xff]
          %v657 = vld [vmem:[#allocation9 + $0x100] sm:$0xff]
          %v658 = vld [vmem:[#allocation9 + $0x108] sm:$0xff]
          %v659 = vld [vmem:[#allocation9 + $0x110] sm:$0xff]
          %v660 = vld [vmem:[#allocation9 + $0x118] sm:$0xff]
          %v661 = vld [vmem:[#allocation9 + $0x120] sm:$0xff]
          %v662 = vld [vmem:[#allocation9 + $0x128] sm:$0xff]
          %v663 = vld [vmem:[#allocation9 + $0x130] sm:$0xff]
          %v664 = vld [vmem:[#allocation9 + $0x138] sm:$0xff]
          %v665 = vld [vmem:[#allocation9 + $0x140] sm:$0xff]
          %v666 = vld [vmem:[#allocation9 + $0x148] sm:$0xff]
          %v667 = vld [vmem:[#allocation9 + $0x150] sm:$0xff]
          %v668 = vld [vmem:[#allocation9 + $0x158] sm:$0xff]
          %v669 = vld [vmem:[#allocation9 + $0x160] sm:$0xff]
          %v670 = vld [vmem:[#allocation9 + $0x168] sm:$0xff]
          %v671 = vld [vmem:[#allocation9 + $0x170] sm:$0xff]
          %v672 = vld [vmem:[#allocation9 + $0x178] sm:$0xff]
          %v673 = vld [vmem:[#allocation9 + $0x180] sm:$0xff]
          %v674 = vld [vmem:[#allocation9 + $0x188] sm:$0xff]
          %v675 = vld [vmem:[#allocation9 + $0x190] sm:$0xff]
          %v676 = vld [vmem:[#allocation9 + $0x198] sm:$0xff]
          %v677 = vld [vmem:[#allocation9 + $0x1a0] sm:$0xff]
          %v678 = vld [vmem:[#allocation9 + $0x1a8] sm:$0xff]
          %v679 = vld [vmem:[#allocation9 + $0x1b0] sm:$0xff]
          %v680 = vld [vmem:[#allocation9 + $0x1b8] sm:$0xff]
          %v681 = vld [vmem:[#allocation9 + $0x1c0] sm:$0xff]
          %v682 = vld [vmem:[#allocation9 + $0x1c8] sm:$0xff]
          %v683 = vld [vmem:[#allocation9 + $0x1d0] sm:$0xff]
          %v684 = vld [vmem:[#allocation9 + $0x1d8] sm:$0xff]
          %v685 = vld [vmem:[#allocation9 + $0x1e0] sm:$0xff]
          %v686 = vld [vmem:[#allocation9 + $0x1e8] sm:$0xff]
          %v687 = vld [vmem:[#allocation9 + $0x1f0] sm:$0xff]
          %v688 = vld [vmem:[#allocation9 + $0x1f8] sm:$0xff]
          %v689 = vld [vmem:[#allocation9 + $0x200] sm:$0xff]
          %v690 = vld [vmem:[#allocation9 + $0x208] sm:$0xff]
          %v691 = vld [vmem:[#allocation9 + $0x210] sm:$0xff]
          %v692 = vld [vmem:[#allocation9 + $0x218] sm:$0xff]
          %v693 = vld [vmem:[#allocation9 + $0x220] sm:$0xff]
          %v694 = vld [vmem:[#allocation9 + $0x228] sm:$0xff]
          %v695 = vld [vmem:[#allocation9 + $0x230] sm:$0xff]
          %v696 = vld [vmem:[#allocation9 + $0x238] sm:$0xff]
          %v697 = vld [vmem:[#allocation9 + $0x240] sm:$0xff]
          %v698 = vld [vmem:[#allocation9 + $0x248] sm:$0xff]
          %v699 = vld [vmem:[#allocation9 + $0x250] sm:$0xff]
          %v700 = vld [vmem:[#allocation9 + $0x258] sm:$0xff]
          %v701 = vld [vmem:[#allocation9 + $0x260] sm:$0xff]
          %v702 = vld [vmem:[#allocation9 + $0x268] sm:$0xff]
          %v703 = vld [vmem:[#allocation9 + $0x270] sm:$0xff]
          %v704 = vld [vmem:[#allocation9 + $0x278] sm:$0xff]
          %v705 = vld [vmem:[#allocation9 + $0x280] sm:$0xff]
          %v706 = vld [vmem:[#allocation9 + $0x288] sm:$0xff]
          %v707 = vld [vmem:[#allocation9 + $0x290] sm:$0xff]
          %v708 = vld [vmem:[#allocation9 + $0x298] sm:$0xff]
          %v709 = vld [vmem:[#allocation9 + $0x2a0] sm:$0xff]
          %v710 = vld [vmem:[#allocation9 + $0x2a8] sm:$0xff]
          %v711 = vld [vmem:[#allocation9 + $0x2b0] sm:$0xff]
          %v712 = vld [vmem:[#allocation9 + $0x2b8] sm:$0xff]
          %v713 = vld [vmem:[#allocation9 + $0x2c0] sm:$0xff]
          %v714 = vld [vmem:[#allocation9 + $0x2c8] sm:$0xff]
          %v715 = vld [vmem:[#allocation9 + $0x2d0] sm:$0xff]
          %v716 = vld [vmem:[#allocation9 + $0x2d8] sm:$0xff]
          %v717 = vld [vmem:[#allocation9 + $0x2e0] sm:$0xff]
          %v718 = vld [vmem:[#allocation9 + $0x2e8] sm:$0xff]
          %v719 = vld [vmem:[#allocation9 + $0x2f0] sm:$0xff]
          %v720 = vld [vmem:[#allocation9 + $0x2f8] sm:$0xff]
          %v721 = vld [vmem:[#allocation9 + $0x300] sm:$0xff]
          %v722 = vld [vmem:[#allocation9 + $0x308] sm:$0xff]
          %v723 = vld [vmem:[#allocation9 + $0x310] sm:$0xff]
          %v724 = vld [vmem:[#allocation9 + $0x318] sm:$0xff]
          %v725 = vld [vmem:[#allocation9 + $0x320] sm:$0xff]
          %v726 = vld [vmem:[#allocation9 + $0x328] sm:$0xff]
          %v727 = vld [vmem:[#allocation9 + $0x330] sm:$0xff]
          %v728 = vld [vmem:[#allocation9 + $0x338] sm:$0xff]
          %v729 = vld [vmem:[#allocation9 + $0x340] sm:$0xff]
          %v730 = vld [vmem:[#allocation9 + $0x348] sm:$0xff]
          %v731 = vld [vmem:[#allocation9 + $0x350] sm:$0xff]
          %v732 = vld [vmem:[#allocation9 + $0x358] sm:$0xff]
          %v733 = vld [vmem:[#allocation9 + $0x360] sm:$0xff]
          %v734 = vld [vmem:[#allocation9 + $0x368] sm:$0xff]
          %v735 = vld [vmem:[#allocation9 + $0x370] sm:$0xff]
          %v736 = vld [vmem:[#allocation9 + $0x378] sm:$0xff]
          %v737 = vld [vmem:[#allocation9 + $0x380] sm:$0xff]
          %v738 = vld [vmem:[#allocation9 + $0x388] sm:$0xff]
          %v739 = vld [vmem:[#allocation9 + $0x390] sm:$0xff]
          %v740 = vld [vmem:[#allocation9 + $0x398] sm:$0xff]
          %v741 = vld [vmem:[#allocation9 + $0x3a0] sm:$0xff]
          %v742 = vld [vmem:[#allocation9 + $0x3a8] sm:$0xff]
          %v743 = vld [vmem:[#allocation9 + $0x3b0] sm:$0xff]
          %v744 = vld [vmem:[#allocation9 + $0x3b8] sm:$0xff]
          %v745 = vld [vmem:[#allocation9 + $0x3c0] sm:$0xff]
          %v746 = vld [vmem:[#allocation9 + $0x3c8] sm:$0xff]
          %v747 = vld [vmem:[#allocation9 + $0x3d0] sm:$0xff]
          %v748 = vld [vmem:[#allocation9 + $0x3d8] sm:$0xff]
          %v749 = vld [vmem:[#allocation9 + $0x3e0] sm:$0xff]
          %v750 = vld [vmem:[#allocation9 + $0x3e8] sm:$0xff]
          %v751 = vld [vmem:[#allocation9 + $0x3f0] sm:$0xff]
          %v752 = vld [vmem:[#allocation9 + $0x3f8] sm:$0xff]
          %v753 = vpack.c.bf16 %v629, %v625
          %v754 = vpack.c.bf16 %v630, %v626
          %v755 = vpack.c.bf16 %v631, %v627
          %v756 = vpack.c.bf16 %v632, %v628
          %v757 = vpack.c.bf16 %v637, %v633
          %v758 = vpack.c.bf16 %v638, %v634
          %v759 = vpack.c.bf16 %v639, %v635
          %v760 = vpack.c.bf16 %v640, %v636
          %v761 = vpack.c.bf16 %v645, %v641
          %v762 = vpack.c.bf16 %v646, %v642
          %v763 = vpack.c.bf16 %v647, %v643
          %v764 = vpack.c.bf16 %v648, %v644
          %v765 = vpack.c.bf16 %v653, %v649
          %v766 = vpack.c.bf16 %v654, %v650
          %v767 = vpack.c.bf16 %v655, %v651
          %v768 = vpack.c.bf16 %v656, %v652
          %v769 = vpack.c.bf16 %v661, %v657
          %v770 = vpack.c.bf16 %v662, %v658
          %v771 = vpack.c.bf16 %v663, %v659
          %v772 = vpack.c.bf16 %v664, %v660
          %v773 = vpack.c.bf16 %v669, %v665
          %v774 = vpack.c.bf16 %v670, %v666
          %v775 = vpack.c.bf16 %v671, %v667
          %v776 = vpack.c.bf16 %v672, %v668
          %v777 = vpack.c.bf16 %v677, %v673
          %v778 = vpack.c.bf16 %v678, %v674
          %v779 = vpack.c.bf16 %v679, %v675
          %v780 = vpack.c.bf16 %v680, %v676
          %v781 = vpack.c.bf16 %v685, %v681
          %v782 = vpack.c.bf16 %v686, %v682
          %v783 = vpack.c.bf16 %v687, %v683
          %v784 = vpack.c.bf16 %v688, %v684
          %v785 = vpack.c.bf16 %v693, %v689
          %v786 = vpack.c.bf16 %v694, %v690
          %v787 = vpack.c.bf16 %v695, %v691
          %v788 = vpack.c.bf16 %v696, %v692
          %v789 = vpack.c.bf16 %v701, %v697
          %v790 = vpack.c.bf16 %v702, %v698
          %v791 = vpack.c.bf16 %v703, %v699
          %v792 = vpack.c.bf16 %v704, %v700
          %v793 = vpack.c.bf16 %v709, %v705
          %v794 = vpack.c.bf16 %v710, %v706
          %v795 = vpack.c.bf16 %v711, %v707
          %v796 = vpack.c.bf16 %v712, %v708
          %v797 = vpack.c.bf16 %v717, %v713
          %v798 = vpack.c.bf16 %v718, %v714
          %v799 = vpack.c.bf16 %v719, %v715
          %v800 = vpack.c.bf16 %v720, %v716
          %v801 = vpack.c.bf16 %v725, %v721
          %v802 = vpack.c.bf16 %v726, %v722
          %v803 = vpack.c.bf16 %v727, %v723
          %v804 = vpack.c.bf16 %v728, %v724
          %v805 = vpack.c.bf16 %v733, %v729
          %v806 = vpack.c.bf16 %v734, %v730
          %v807 = vpack.c.bf16 %v735, %v731
          %v808 = vpack.c.bf16 %v736, %v732
          %v809 = vpack.c.bf16 %v741, %v737
          %v810 = vpack.c.bf16 %v742, %v738
          %v811 = vpack.c.bf16 %v743, %v739
          %v812 = vpack.c.bf16 %v744, %v740
          %v813 = vpack.c.bf16 %v749, %v745
          %v814 = vpack.c.bf16 %v750, %v746
          %v815 = vpack.c.bf16 %v751, %v747
          %v816 = vpack.c.bf16 %v752, %v748
          %v817 = vld [vmem:[%s5] sm:$0xf]
          %v819 = vlaneseq
          %v820 = vshrl.u32 %v819, 7
          %v821 = vsub.s32 0, %v820
          %v822 = vrot.slane %v817, %v821
          %v823 = vlaneseq
          %v824 = vshrl.u32 %v823, 7
          %v825 = vsub.s32 1, %v824
          %v826 = vrot.slane %v817, %v825
          %v827 = vlaneseq
          %v828 = vshrl.u32 %v827, 7
          %v829 = vsub.s32 2, %v828
          %v830 = vrot.slane %v817, %v829
          %v831 = vlaneseq
          %v832 = vshrl.u32 %v831, 7
          %v833 = vsub.s32 3, %v832
          %v834 = vrot.slane %v817, %v833
          %839 = vmatprep.subr.bf16.mxu0 %v782
          %840 = vmatpush1.bf16.msra.mxu0 %v781
          %841 = vmatprep.subr.bf16.mxu0 %v778
          %842 = vmatpush1.bf16.msra.mxu0 %v777
          %843 = vmatprep.subr.bf16.mxu0 %v774
          %844 = vmatpush1.bf16.msra.mxu0 %v773
          %845 = vmatprep.subr.bf16.mxu0 %v770
          %846 = vmatpush1.bf16.msra.mxu0 %v769
          %847 = vmatprep.subr.bf16.mxu0 %v766
          %848 = vmatpush1.bf16.msra.mxu0 %v765
          %849 = vmatprep.subr.bf16.mxu0 %v762
          %850 = vmatpush1.bf16.msra.mxu0 %v761
          %851 = vmatprep.subr.bf16.mxu0 %v758
          %852 = vmatpush1.bf16.msra.mxu0 %v757
          %853 = vmatprep.subr.bf16.mxu0 %v754
          %854 = vmatpush1.bf16.msra.mxu0 %v753
          %855 = vmatprep.subr.bf16.mxu0 %v814
          %856 = vmatpush2.bf16.msra.mxu0 %v813
          %857 = vmatprep.subr.bf16.mxu0 %v810
          %858 = vmatpush2.bf16.msra.mxu0 %v809
          %859 = vmatprep.subr.bf16.mxu0 %v806
          %860 = vmatpush2.bf16.msra.mxu0 %v805
          %861 = vmatprep.subr.bf16.mxu0 %v802
          %862 = vmatpush2.bf16.msra.mxu0 %v801
          %863 = vmatprep.subr.bf16.mxu0 %v798
          %864 = vmatpush2.bf16.msra.mxu0 %v797
          %865 = vmatprep.subr.bf16.mxu0 %v794
          %866 = vmatpush2.bf16.msra.mxu0 %v793
          %867 = vmatprep.subr.bf16.mxu0 %v790
          %868 = vmatpush2.bf16.msra.mxu0 %v789
          %869 = vmatprep.subr.bf16.mxu0 %v786
          %870 = vmatpush2.bf16.msra.mxu0 %v785
          %871 = vmatprep.mubr.bf16.mxu0 %v562
          %872 = vmatmul.mubr.bf16.gmra.mxu0 %v561
          %v873 = vpop.f32.mrf.mxu0
          %v874 = vadd.f32 %v822, %v873
          %v875 = vpop.f32.mrf.mxu0
          %v876 = vadd.f32 %v826, %v875
          %v877 = vpop.f32.mrf.mxu0
          %v878 = vadd.f32 %v822, %v877
          %v879 = vpop.f32.mrf.mxu0
          %v880 = vadd.f32 %v826, %v879
          %881 = vmatprep.mubr.bf16.mxu0 %v564
          %882 = vmatmul.mubr.bf16.gmra.mxu0 %v563
          %v883 = vpop.f32.mrf.mxu0
          %v884 = vadd.f32 %v822, %v883
          %v885 = vpop.f32.mrf.mxu0
          %v886 = vadd.f32 %v826, %v885
          %v887 = vpop.f32.mrf.mxu0
          %v888 = vadd.f32 %v822, %v887
          %v889 = vpop.f32.mrf.mxu0
          %v890 = vadd.f32 %v826, %v889
          %891 = vmatprep.mubr.bf16.mxu0 %v566
          %892 = vmatmul.mubr.bf16.gmra.mxu0 %v565
          %v893 = vpop.f32.mrf.mxu0
          %v894 = vadd.f32 %v822, %v893
          %v895 = vpop.f32.mrf.mxu0
          %v896 = vadd.f32 %v826, %v895
          %v897 = vpop.f32.mrf.mxu0
          %v898 = vadd.f32 %v822, %v897
          %v899 = vpop.f32.mrf.mxu0
          %v900 = vadd.f32 %v826, %v899
          %901 = vmatprep.mubr.bf16.mxu0 %v568
          %902 = vmatmul.mubr.bf16.gmra.mxu0 %v567
          %v903 = vpop.f32.mrf.mxu0
          %v904 = vadd.f32 %v822, %v903
          %v905 = vpop.f32.mrf.mxu0
          %v906 = vadd.f32 %v826, %v905
          %v907 = vpop.f32.mrf.mxu0
          %v908 = vadd.f32 %v822, %v907
          %v909 = vpop.f32.mrf.mxu0
          %v910 = vadd.f32 %v826, %v909
          %911 = vmatprep.mubr.bf16.mxu0 %v570
          %912 = vmatmul.mubr.bf16.gmra.mxu0 %v569
          %v913 = vpop.f32.mrf.mxu0
          %v914 = vadd.f32 %v822, %v913
          %v915 = vpop.f32.mrf.mxu0
          %v916 = vadd.f32 %v826, %v915
          %v917 = vpop.f32.mrf.mxu0
          %v918 = vadd.f32 %v822, %v917
          %v919 = vpop.f32.mrf.mxu0
          %v920 = vadd.f32 %v826, %v919
          %921 = vmatprep.mubr.bf16.mxu0 %v572
          %922 = vmatmul.mubr.bf16.gmra.mxu0 %v571
          %v923 = vpop.f32.mrf.mxu0
          %v924 = vadd.f32 %v822, %v923
          %v925 = vpop.f32.mrf.mxu0
          %v926 = vadd.f32 %v826, %v925
          %v927 = vpop.f32.mrf.mxu0
          %v928 = vadd.f32 %v822, %v927
          %v929 = vpop.f32.mrf.mxu0
          %v930 = vadd.f32 %v826, %v929
          %931 = vmatprep.mubr.bf16.mxu0 %v574
          %932 = vmatmul.mubr.bf16.gmra.mxu0 %v573
          %v933 = vpop.f32.mrf.mxu0
          %v934 = vadd.f32 %v822, %v933
          %v935 = vpop.f32.mrf.mxu0
          %v936 = vadd.f32 %v826, %v935
          %v937 = vpop.f32.mrf.mxu0
          %v938 = vadd.f32 %v822, %v937
          %v939 = vpop.f32.mrf.mxu0
          %v940 = vadd.f32 %v826, %v939
          %941 = vmatprep.mubr.bf16.mxu0 %v576
          %942 = vmatmul.mubr.bf16.gmra.mxu0 %v575
          %v943 = vpop.f32.mrf.mxu0
          %v944 = vadd.f32 %v822, %v943
          %v945 = vpop.f32.mrf.mxu0
          %v946 = vadd.f32 %v826, %v945
          %v947 = vpop.f32.mrf.mxu0
          %v948 = vadd.f32 %v822, %v947
          %v949 = vpop.f32.mrf.mxu0
          %v950 = vadd.f32 %v826, %v949
          %951 = vmatprep.mubr.bf16.mxu0 %v578
          %952 = vmatmul.mubr.bf16.gmra.mxu0 %v577
          %v953 = vpop.f32.mrf.mxu0
          %v954 = vadd.f32 %v822, %v953
          %v955 = vpop.f32.mrf.mxu0
          %v956 = vadd.f32 %v826, %v955
          %v957 = vpop.f32.mrf.mxu0
          %v958 = vadd.f32 %v822, %v957
          %v959 = vpop.f32.mrf.mxu0
          %v960 = vadd.f32 %v826, %v959
          %961 = vmatprep.mubr.bf16.mxu0 %v580
          %962 = vmatmul.mubr.bf16.gmra.mxu0 %v579
          %v963 = vpop.f32.mrf.mxu0
          %v964 = vadd.f32 %v822, %v963
          %v965 = vpop.f32.mrf.mxu0
          %v966 = vadd.f32 %v826, %v965
          %v967 = vpop.f32.mrf.mxu0
          %v968 = vadd.f32 %v822, %v967
          %v969 = vpop.f32.mrf.mxu0
          %v970 = vadd.f32 %v826, %v969
          %971 = vmatprep.mubr.bf16.mxu0 %v582
          %972 = vmatmul.mubr.bf16.gmra.mxu0 %v581
          %v973 = vpop.f32.mrf.mxu0
          %v974 = vadd.f32 %v822, %v973
          %v975 = vpop.f32.mrf.mxu0
          %v976 = vadd.f32 %v826, %v975
          %v977 = vpop.f32.mrf.mxu0
          %v978 = vadd.f32 %v822, %v977
          %v979 = vpop.f32.mrf.mxu0
          %v980 = vadd.f32 %v826, %v979
          %981 = vmatprep.mubr.bf16.mxu0 %v584
          %982 = vmatmul.mubr.bf16.gmra.mxu0 %v583
          %v983 = vpop.f32.mrf.mxu0
          %v984 = vadd.f32 %v822, %v983
          %v985 = vpop.f32.mrf.mxu0
          %v986 = vadd.f32 %v826, %v985
          %v987 = vpop.f32.mrf.mxu0
          %v988 = vadd.f32 %v822, %v987
          %v989 = vpop.f32.mrf.mxu0
          %v990 = vadd.f32 %v826, %v989
          %991 = vmatprep.mubr.bf16.mxu0 %v586
          %992 = vmatmul.mubr.bf16.gmra.mxu0 %v585
          %v993 = vpop.f32.mrf.mxu0
          %v994 = vadd.f32 %v822, %v993
          %v995 = vpop.f32.mrf.mxu0
          %v996 = vadd.f32 %v826, %v995
          %v997 = vpop.f32.mrf.mxu0
          %v998 = vadd.f32 %v822, %v997
          %v999 = vpop.f32.mrf.mxu0
          %v1000 = vadd.f32 %v826, %v999
          %1001 = vmatprep.mubr.bf16.mxu0 %v588
          %1002 = vmatmul.mubr.bf16.gmra.mxu0 %v587
          %v1003 = vpop.f32.mrf.mxu0
          %v1004 = vadd.f32 %v822, %v1003
          %v1005 = vpop.f32.mrf.mxu0
          %v1006 = vadd.f32 %v826, %v1005
          %v1007 = vpop.f32.mrf.mxu0
          %v1008 = vadd.f32 %v822, %v1007
          %v1009 = vpop.f32.mrf.mxu0
          %v1010 = vadd.f32 %v826, %v1009
          %1011 = vmatprep.mubr.bf16.mxu0 %v590
          %1012 = vmatmul.mubr.bf16.gmra.mxu0 %v589
          %v1013 = vpop.f32.mrf.mxu0
          %v1014 = vadd.f32 %v822, %v1013
          %v1015 = vpop.f32.mrf.mxu0
          %v1016 = vadd.f32 %v826, %v1015
          %v1017 = vpop.f32.mrf.mxu0
          %v1018 = vadd.f32 %v822, %v1017
          %v1019 = vpop.f32.mrf.mxu0
          %v1020 = vadd.f32 %v826, %v1019
          %1021 = vmatprep.mubr.bf16.mxu0 %v592
          %1022 = vmatmul.mubr.bf16.gmra.mxu0 %v591
          %v1023 = vpop.f32.mrf.mxu0
          %v1024 = vadd.f32 %v822, %v1023
          %v1025 = vpop.f32.mrf.mxu0
          %v1026 = vadd.f32 %v826, %v1025
          %v1027 = vpop.f32.mrf.mxu0
          %v1028 = vadd.f32 %v822, %v1027
          %v1029 = vpop.f32.mrf.mxu0
          %v1030 = vadd.f32 %v826, %v1029
          %1031 = vmatprep.mubr.bf16.mxu0 %v594
          %1032 = vmatmul.mubr.bf16.gmra.mxu0 %v593
          %v1033 = vpop.f32.mrf.mxu0
          %v1034 = vadd.f32 %v822, %v1033
          %v1035 = vpop.f32.mrf.mxu0
          %v1036 = vadd.f32 %v826, %v1035
          %v1037 = vpop.f32.mrf.mxu0
          %v1038 = vadd.f32 %v822, %v1037
          %v1039 = vpop.f32.mrf.mxu0
          %v1040 = vadd.f32 %v826, %v1039
          %1041 = vmatprep.mubr.bf16.mxu0 %v596
          %1042 = vmatmul.mubr.bf16.gmra.mxu0 %v595
          %v1043 = vpop.f32.mrf.mxu0
          %v1044 = vadd.f32 %v822, %v1043
          %v1045 = vpop.f32.mrf.mxu0
          %v1046 = vadd.f32 %v826, %v1045
          %v1047 = vpop.f32.mrf.mxu0
          %v1048 = vadd.f32 %v822, %v1047
          %v1049 = vpop.f32.mrf.mxu0
          %v1050 = vadd.f32 %v826, %v1049
          %1051 = vmatprep.mubr.bf16.mxu0 %v598
          %1052 = vmatmul.mubr.bf16.gmra.mxu0 %v597
          %v1053 = vpop.f32.mrf.mxu0
          %v1054 = vadd.f32 %v822, %v1053
          %v1055 = vpop.f32.mrf.mxu0
          %v1056 = vadd.f32 %v826, %v1055
          %v1057 = vpop.f32.mrf.mxu0
          %v1058 = vadd.f32 %v822, %v1057
          %v1059 = vpop.f32.mrf.mxu0
          %v1060 = vadd.f32 %v826, %v1059
          %1061 = vmatprep.mubr.bf16.mxu0 %v600
          %1062 = vmatmul.mubr.bf16.gmra.mxu0 %v599
          %v1063 = vpop.f32.mrf.mxu0
          %v1064 = vadd.f32 %v822, %v1063
          %v1065 = vpop.f32.mrf.mxu0
          %v1066 = vadd.f32 %v826, %v1065
          %v1067 = vpop.f32.mrf.mxu0
          %v1068 = vadd.f32 %v822, %v1067
          %v1069 = vpop.f32.mrf.mxu0
          %v1070 = vadd.f32 %v826, %v1069
          %1071 = vmatprep.mubr.bf16.mxu0 %v602
          %1072 = vmatmul.mubr.bf16.gmra.mxu0 %v601
          %v1073 = vpop.f32.mrf.mxu0
          %v1074 = vadd.f32 %v822, %v1073
          %v1075 = vpop.f32.mrf.mxu0
          %v1076 = vadd.f32 %v826, %v1075
          %v1077 = vpop.f32.mrf.mxu0
          %v1078 = vadd.f32 %v822, %v1077
          %v1079 = vpop.f32.mrf.mxu0
          %v1080 = vadd.f32 %v826, %v1079
          %1081 = vmatprep.mubr.bf16.mxu0 %v604
          %1082 = vmatmul.mubr.bf16.gmra.mxu0 %v603
          %v1083 = vpop.f32.mrf.mxu0
          %v1084 = vadd.f32 %v822, %v1083
          %v1085 = vpop.f32.mrf.mxu0
          %v1086 = vadd.f32 %v826, %v1085
          %v1087 = vpop.f32.mrf.mxu0
          %v1088 = vadd.f32 %v822, %v1087
          %v1089 = vpop.f32.mrf.mxu0
          %v1090 = vadd.f32 %v826, %v1089
          %1091 = vmatprep.mubr.bf16.mxu0 %v606
          %1092 = vmatmul.mubr.bf16.gmra.mxu0 %v605
          %v1093 = vpop.f32.mrf.mxu0
          %v1094 = vadd.f32 %v822, %v1093
          %v1095 = vpop.f32.mrf.mxu0
          %v1096 = vadd.f32 %v826, %v1095
          %v1097 = vpop.f32.mrf.mxu0
          %v1098 = vadd.f32 %v822, %v1097
          %v1099 = vpop.f32.mrf.mxu0
          %v1100 = vadd.f32 %v826, %v1099
          %1101 = vmatprep.mubr.bf16.mxu0 %v608
          %1102 = vmatmul.mubr.bf16.gmra.mxu0 %v607
          %v1103 = vpop.f32.mrf.mxu0
          %v1104 = vadd.f32 %v822, %v1103
          %v1105 = vpop.f32.mrf.mxu0
          %v1106 = vadd.f32 %v826, %v1105
          %v1107 = vpop.f32.mrf.mxu0
          %v1108 = vadd.f32 %v822, %v1107
          %v1109 = vpop.f32.mrf.mxu0
          %v1110 = vadd.f32 %v826, %v1109
          %1111 = vmatprep.mubr.bf16.mxu0 %v610
          %1112 = vmatmul.mubr.bf16.gmra.mxu0 %v609
          %v1113 = vpop.f32.mrf.mxu0
          %v1114 = vadd.f32 %v822, %v1113
          %v1115 = vpop.f32.mrf.mxu0
          %v1116 = vadd.f32 %v826, %v1115
          %v1117 = vpop.f32.mrf.mxu0
          %v1118 = vadd.f32 %v822, %v1117
          %v1119 = vpop.f32.mrf.mxu0
          %v1120 = vadd.f32 %v826, %v1119
          %1121 = vmatprep.mubr.bf16.mxu0 %v612
          %1122 = vmatmul.mubr.bf16.gmra.mxu0 %v611
          %v1123 = vpop.f32.mrf.mxu0
          %v1124 = vadd.f32 %v822, %v1123
          %v1125 = vpop.f32.mrf.mxu0
          %v1126 = vadd.f32 %v826, %v1125
          %v1127 = vpop.f32.mrf.mxu0
          %v1128 = vadd.f32 %v822, %v1127
          %v1129 = vpop.f32.mrf.mxu0
          %v1130 = vadd.f32 %v826, %v1129
          %1131 = vmatprep.mubr.bf16.mxu0 %v614
          %1132 = vmatmul.mubr.bf16.gmra.mxu0 %v613
          %v1133 = vpop.f32.mrf.mxu0
          %v1134 = vadd.f32 %v822, %v1133
          %v1135 = vpop.f32.mrf.mxu0
          %v1136 = vadd.f32 %v826, %v1135
          %v1137 = vpop.f32.mrf.mxu0
          %v1138 = vadd.f32 %v822, %v1137
          %v1139 = vpop.f32.mrf.mxu0
          %v1140 = vadd.f32 %v826, %v1139
          %1141 = vmatprep.mubr.bf16.mxu0 %v616
          %1142 = vmatmul.mubr.bf16.gmra.mxu0 %v615
          %v1143 = vpop.f32.mrf.mxu0
          %v1144 = vadd.f32 %v822, %v1143
          %v1145 = vpop.f32.mrf.mxu0
          %v1146 = vadd.f32 %v826, %v1145
          %v1147 = vpop.f32.mrf.mxu0
          %v1148 = vadd.f32 %v822, %v1147
          %v1149 = vpop.f32.mrf.mxu0
          %v1150 = vadd.f32 %v826, %v1149
          %1151 = vmatprep.mubr.bf16.mxu0 %v618
          %1152 = vmatmul.mubr.bf16.gmra.mxu0 %v617
          %v1153 = vpop.f32.mrf.mxu0
          %v1154 = vadd.f32 %v822, %v1153
          %v1155 = vpop.f32.mrf.mxu0
          %v1156 = vadd.f32 %v826, %v1155
          %v1157 = vpop.f32.mrf.mxu0
          %v1158 = vadd.f32 %v822, %v1157
          %v1159 = vpop.f32.mrf.mxu0
          %v1160 = vadd.f32 %v826, %v1159
          %1161 = vmatprep.mubr.bf16.mxu0 %v620
          %1162 = vmatmul.mubr.bf16.gmra.mxu0 %v619
          %v1163 = vpop.f32.mrf.mxu0
          %v1164 = vadd.f32 %v822, %v1163
          %v1165 = vpop.f32.mrf.mxu0
          %v1166 = vadd.f32 %v826, %v1165
          %v1167 = vpop.f32.mrf.mxu0
          %v1168 = vadd.f32 %v822, %v1167
          %v1169 = vpop.f32.mrf.mxu0
          %v1170 = vadd.f32 %v826, %v1169
          %1171 = vmatprep.mubr.bf16.mxu0 %v622
          %1172 = vmatmul.mubr.bf16.gmra.mxu0 %v621
          %v1173 = vpop.f32.mrf.mxu0
          %v1174 = vadd.f32 %v822, %v1173
          %v1175 = vpop.f32.mrf.mxu0
          %v1176 = vadd.f32 %v826, %v1175
          %v1177 = vpop.f32.mrf.mxu0
          %v1178 = vadd.f32 %v822, %v1177
          %v1179 = vpop.f32.mrf.mxu0
          %v1180 = vadd.f32 %v826, %v1179
          %1181 = vmatprep.mubr.bf16.mxu0 %v624
          %1182 = vmatmul.mubr.bf16.gmra.mxu0 %v623
          %v1183 = vpop.f32.mrf.mxu0
          %v1184 = vadd.f32 %v822, %v1183
          %v1185 = vpop.f32.mrf.mxu0
          %v1186 = vadd.f32 %v826, %v1185
          %v1187 = vpop.f32.mrf.mxu0
          %v1188 = vadd.f32 %v822, %v1187
          %v1189 = vpop.f32.mrf.mxu0
          %v1190 = vadd.f32 %v826, %v1189
          %1191 = vdwg.mxu0
          %1192 = vmatprep.subr.bf16.mxu0 %v784
          %1193 = vmatpush1.bf16.msra.mxu0 %v783
          %1194 = vmatprep.subr.bf16.mxu0 %v780
          %1195 = vmatpush1.bf16.msra.mxu0 %v779
          %1196 = vmatprep.subr.bf16.mxu0 %v776
          %1197 = vmatpush1.bf16.msra.mxu0 %v775
          %1198 = vmatprep.subr.bf16.mxu0 %v772
          %1199 = vmatpush1.bf16.msra.mxu0 %v771
          %1200 = vmatprep.subr.bf16.mxu0 %v768
          %1201 = vmatpush1.bf16.msra.mxu0 %v767
          %1202 = vmatprep.subr.bf16.mxu0 %v764
          %1203 = vmatpush1.bf16.msra.mxu0 %v763
          %1204 = vmatprep.subr.bf16.mxu0 %v760
          %1205 = vmatpush1.bf16.msra.mxu0 %v759
          %1206 = vmatprep.subr.bf16.mxu0 %v756
          %1207 = vmatpush1.bf16.msra.mxu0 %v755
          %1208 = vmatprep.subr.bf16.mxu0 %v816
          %1209 = vmatpush2.bf16.msra.mxu0 %v815
          %1210 = vmatprep.subr.bf16.mxu0 %v812
          %1211 = vmatpush2.bf16.msra.mxu0 %v811
          %1212 = vmatprep.subr.bf16.mxu0 %v808
          %1213 = vmatpush2.bf16.msra.mxu0 %v807
          %1214 = vmatprep.subr.bf16.mxu0 %v804
          %1215 = vmatpush2.bf16.msra.mxu0 %v803
          %1216 = vmatprep.subr.bf16.mxu0 %v800
          %1217 = vmatpush2.bf16.msra.mxu0 %v799
          %1218 = vmatprep.subr.bf16.mxu0 %v796
          %1219 = vmatpush2.bf16.msra.mxu0 %v795
          %1220 = vmatprep.subr.bf16.mxu0 %v792
          %1221 = vmatpush2.bf16.msra.mxu0 %v791
          %1222 = vmatprep.subr.bf16.mxu0 %v788
          %1223 = vmatpush2.bf16.msra.mxu0 %v787
          %1224 = vmatprep.mubr.bf16.mxu0 %v562
          %1225 = vmatmul.mubr.bf16.gmra.mxu0 %v561
          %v1226 = vpop.f32.mrf.mxu0
          %v1227 = vadd.f32 %v830, %v1226
          %v1228 = vpop.f32.mrf.mxu0
          %v1229 = vadd.f32 %v834, %v1228
          %v1230 = vpop.f32.mrf.mxu0
          %v1231 = vadd.f32 %v830, %v1230
          %v1232 = vpop.f32.mrf.mxu0
          %v1233 = vadd.f32 %v834, %v1232
          %1234 = vmatprep.mubr.bf16.mxu0 %v564
          %1235 = vmatmul.mubr.bf16.gmra.mxu0 %v563
          %v1236 = vpop.f32.mrf.mxu0
          %v1237 = vadd.f32 %v830, %v1236
          %v1238 = vpop.f32.mrf.mxu0
          %v1239 = vadd.f32 %v834, %v1238
          %v1240 = vpop.f32.mrf.mxu0
          %v1241 = vadd.f32 %v830, %v1240
          %v1242 = vpop.f32.mrf.mxu0
          %v1243 = vadd.f32 %v834, %v1242
          %1244 = vmatprep.mubr.bf16.mxu0 %v566
          %1245 = vmatmul.mubr.bf16.gmra.mxu0 %v565
          %v1246 = vpop.f32.mrf.mxu0
          %v1247 = vadd.f32 %v830, %v1246
          %v1248 = vpop.f32.mrf.mxu0
          %v1249 = vadd.f32 %v834, %v1248
          %v1250 = vpop.f32.mrf.mxu0
          %v1251 = vadd.f32 %v830, %v1250
          %v1252 = vpop.f32.mrf.mxu0
          %v1253 = vadd.f32 %v834, %v1252
          %1254 = vmatprep.mubr.bf16.mxu0 %v568
          %1255 = vmatmul.mubr.bf16.gmra.mxu0 %v567
          %v1256 = vpop.f32.mrf.mxu0
          %v1257 = vadd.f32 %v830, %v1256
          %v1258 = vpop.f32.mrf.mxu0
          %v1259 = vadd.f32 %v834, %v1258
          %v1260 = vpop.f32.mrf.mxu0
          %v1261 = vadd.f32 %v830, %v1260
          %v1262 = vpop.f32.mrf.mxu0
          %v1263 = vadd.f32 %v834, %v1262
          %1264 = vmatprep.mubr.bf16.mxu0 %v570
          %1265 = vmatmul.mubr.bf16.gmra.mxu0 %v569
          %v1266 = vpop.f32.mrf.mxu0
          %v1267 = vadd.f32 %v830, %v1266
          %v1268 = vpop.f32.mrf.mxu0
          %v1269 = vadd.f32 %v834, %v1268
          %v1270 = vpop.f32.mrf.mxu0
          %v1271 = vadd.f32 %v830, %v1270
          %v1272 = vpop.f32.mrf.mxu0
          %v1273 = vadd.f32 %v834, %v1272
          %1274 = vmatprep.mubr.bf16.mxu0 %v572
          %1275 = vmatmul.mubr.bf16.gmra.mxu0 %v571
          %v1276 = vpop.f32.mrf.mxu0
          %v1277 = vadd.f32 %v830, %v1276
          %v1278 = vpop.f32.mrf.mxu0
          %v1279 = vadd.f32 %v834, %v1278
          %v1280 = vpop.f32.mrf.mxu0
          %v1281 = vadd.f32 %v830, %v1280
          %v1282 = vpop.f32.mrf.mxu0
          %v1283 = vadd.f32 %v834, %v1282
          %1284 = vmatprep.mubr.bf16.mxu0 %v574
          %1285 = vmatmul.mubr.bf16.gmra.mxu0 %v573
          %v1286 = vpop.f32.mrf.mxu0
          %v1287 = vadd.f32 %v830, %v1286
          %v1288 = vpop.f32.mrf.mxu0
          %v1289 = vadd.f32 %v834, %v1288
          %v1290 = vpop.f32.mrf.mxu0
          %v1291 = vadd.f32 %v830, %v1290
          %v1292 = vpop.f32.mrf.mxu0
          %v1293 = vadd.f32 %v834, %v1292
          %1294 = vmatprep.mubr.bf16.mxu0 %v576
          %1295 = vmatmul.mubr.bf16.gmra.mxu0 %v575
          %v1296 = vpop.f32.mrf.mxu0
          %v1297 = vadd.f32 %v830, %v1296
          %v1298 = vpop.f32.mrf.mxu0
          %v1299 = vadd.f32 %v834, %v1298
          %v1300 = vpop.f32.mrf.mxu0
          %v1301 = vadd.f32 %v830, %v1300
          %v1302 = vpop.f32.mrf.mxu0
          %v1303 = vadd.f32 %v834, %v1302
          %1304 = vmatprep.mubr.bf16.mxu0 %v578
          %1305 = vmatmul.mubr.bf16.gmra.mxu0 %v577
          %v1306 = vpop.f32.mrf.mxu0
          %v1307 = vadd.f32 %v830, %v1306
          %v1308 = vpop.f32.mrf.mxu0
          %v1309 = vadd.f32 %v834, %v1308
          %v1310 = vpop.f32.mrf.mxu0
          %v1311 = vadd.f32 %v830, %v1310
          %v1312 = vpop.f32.mrf.mxu0
          %v1313 = vadd.f32 %v834, %v1312
          %1314 = vmatprep.mubr.bf16.mxu0 %v580
          %1315 = vmatmul.mubr.bf16.gmra.mxu0 %v579
          %v1316 = vpop.f32.mrf.mxu0
          %v1317 = vadd.f32 %v830, %v1316
          %v1318 = vpop.f32.mrf.mxu0
          %v1319 = vadd.f32 %v834, %v1318
          %v1320 = vpop.f32.mrf.mxu0
          %v1321 = vadd.f32 %v830, %v1320
          %v1322 = vpop.f32.mrf.mxu0
          %v1323 = vadd.f32 %v834, %v1322
          %1324 = vmatprep.mubr.bf16.mxu0 %v582
          %1325 = vmatmul.mubr.bf16.gmra.mxu0 %v581
          %v1326 = vpop.f32.mrf.mxu0
          %v1327 = vadd.f32 %v830, %v1326
          %v1328 = vpop.f32.mrf.mxu0
          %v1329 = vadd.f32 %v834, %v1328
          %v1330 = vpop.f32.mrf.mxu0
          %v1331 = vadd.f32 %v830, %v1330
          %v1332 = vpop.f32.mrf.mxu0
          %v1333 = vadd.f32 %v834, %v1332
          %1334 = vmatprep.mubr.bf16.mxu0 %v584
          %1335 = vmatmul.mubr.bf16.gmra.mxu0 %v583
          %v1336 = vpop.f32.mrf.mxu0
          %v1337 = vadd.f32 %v830, %v1336
          %v1338 = vpop.f32.mrf.mxu0
          %v1339 = vadd.f32 %v834, %v1338
          %v1340 = vpop.f32.mrf.mxu0
          %v1341 = vadd.f32 %v830, %v1340
          %v1342 = vpop.f32.mrf.mxu0
          %v1343 = vadd.f32 %v834, %v1342
          %1344 = vmatprep.mubr.bf16.mxu0 %v586
          %1345 = vmatmul.mubr.bf16.gmra.mxu0 %v585
          %v1346 = vpop.f32.mrf.mxu0
          %v1347 = vadd.f32 %v830, %v1346
          %v1348 = vpop.f32.mrf.mxu0
          %v1349 = vadd.f32 %v834, %v1348
          %v1350 = vpop.f32.mrf.mxu0
          %v1351 = vadd.f32 %v830, %v1350
          %v1352 = vpop.f32.mrf.mxu0
          %v1353 = vadd.f32 %v834, %v1352
          %1354 = vmatprep.mubr.bf16.mxu0 %v588
          %1355 = vmatmul.mubr.bf16.gmra.mxu0 %v587
          %v1356 = vpop.f32.mrf.mxu0
          %v1357 = vadd.f32 %v830, %v1356
          %v1358 = vpop.f32.mrf.mxu0
          %v1359 = vadd.f32 %v834, %v1358
          %v1360 = vpop.f32.mrf.mxu0
          %v1361 = vadd.f32 %v830, %v1360
          %v1362 = vpop.f32.mrf.mxu0
          %v1363 = vadd.f32 %v834, %v1362
          %1364 = vmatprep.mubr.bf16.mxu0 %v590
          %1365 = vmatmul.mubr.bf16.gmra.mxu0 %v589
          %v1366 = vpop.f32.mrf.mxu0
          %v1367 = vadd.f32 %v830, %v1366
          %v1368 = vpop.f32.mrf.mxu0
          %v1369 = vadd.f32 %v834, %v1368
          %v1370 = vpop.f32.mrf.mxu0
          %v1371 = vadd.f32 %v830, %v1370
          %v1372 = vpop.f32.mrf.mxu0
          %v1373 = vadd.f32 %v834, %v1372
          %1374 = vmatprep.mubr.bf16.mxu0 %v592
          %1375 = vmatmul.mubr.bf16.gmra.mxu0 %v591
          %v1376 = vpop.f32.mrf.mxu0
          %v1377 = vadd.f32 %v830, %v1376
          %v1378 = vpop.f32.mrf.mxu0
          %v1379 = vadd.f32 %v834, %v1378
          %v1380 = vpop.f32.mrf.mxu0
          %v1381 = vadd.f32 %v830, %v1380
          %v1382 = vpop.f32.mrf.mxu0
          %v1383 = vadd.f32 %v834, %v1382
          %1384 = vmatprep.mubr.bf16.mxu0 %v594
          %1385 = vmatmul.mubr.bf16.gmra.mxu0 %v593
          %v1386 = vpop.f32.mrf.mxu0
          %v1387 = vadd.f32 %v830, %v1386
          %v1388 = vpop.f32.mrf.mxu0
          %v1389 = vadd.f32 %v834, %v1388
          %v1390 = vpop.f32.mrf.mxu0
          %v1391 = vadd.f32 %v830, %v1390
          %v1392 = vpop.f32.mrf.mxu0
          %v1393 = vadd.f32 %v834, %v1392
          %1394 = vmatprep.mubr.bf16.mxu0 %v596
          %1395 = vmatmul.mubr.bf16.gmra.mxu0 %v595
          %v1396 = vpop.f32.mrf.mxu0
          %v1397 = vadd.f32 %v830, %v1396
          %v1398 = vpop.f32.mrf.mxu0
          %v1399 = vadd.f32 %v834, %v1398
          %v1400 = vpop.f32.mrf.mxu0
          %v1401 = vadd.f32 %v830, %v1400
          %v1402 = vpop.f32.mrf.mxu0
          %v1403 = vadd.f32 %v834, %v1402
          %1404 = vmatprep.mubr.bf16.mxu0 %v598
          %1405 = vmatmul.mubr.bf16.gmra.mxu0 %v597
          %v1406 = vpop.f32.mrf.mxu0
          %v1407 = vadd.f32 %v830, %v1406
          %v1408 = vpop.f32.mrf.mxu0
          %v1409 = vadd.f32 %v834, %v1408
          %v1410 = vpop.f32.mrf.mxu0
          %v1411 = vadd.f32 %v830, %v1410
          %v1412 = vpop.f32.mrf.mxu0
          %v1413 = vadd.f32 %v834, %v1412
          %1414 = vmatprep.mubr.bf16.mxu0 %v600
          %1415 = vmatmul.mubr.bf16.gmra.mxu0 %v599
          %v1416 = vpop.f32.mrf.mxu0
          %v1417 = vadd.f32 %v830, %v1416
          %v1418 = vpop.f32.mrf.mxu0
          %v1419 = vadd.f32 %v834, %v1418
          %v1420 = vpop.f32.mrf.mxu0
          %v1421 = vadd.f32 %v830, %v1420
          %v1422 = vpop.f32.mrf.mxu0
          %v1423 = vadd.f32 %v834, %v1422
          %1424 = vmatprep.mubr.bf16.mxu0 %v602
          %1425 = vmatmul.mubr.bf16.gmra.mxu0 %v601
          %v1426 = vpop.f32.mrf.mxu0
          %v1427 = vadd.f32 %v830, %v1426
          %v1428 = vpop.f32.mrf.mxu0
          %v1429 = vadd.f32 %v834, %v1428
          %v1430 = vpop.f32.mrf.mxu0
          %v1431 = vadd.f32 %v830, %v1430
          %v1432 = vpop.f32.mrf.mxu0
          %v1433 = vadd.f32 %v834, %v1432
          %1434 = vmatprep.mubr.bf16.mxu0 %v604
          %1435 = vmatmul.mubr.bf16.gmra.mxu0 %v603
          %v1436 = vpop.f32.mrf.mxu0
          %v1437 = vadd.f32 %v830, %v1436
          %v1438 = vpop.f32.mrf.mxu0
          %v1439 = vadd.f32 %v834, %v1438
          %v1440 = vpop.f32.mrf.mxu0
          %v1441 = vadd.f32 %v830, %v1440
          %v1442 = vpop.f32.mrf.mxu0
          %v1443 = vadd.f32 %v834, %v1442
          %1444 = vmatprep.mubr.bf16.mxu0 %v606
          %1445 = vmatmul.mubr.bf16.gmra.mxu0 %v605
          %v1446 = vpop.f32.mrf.mxu0
          %v1447 = vadd.f32 %v830, %v1446
          %v1448 = vpop.f32.mrf.mxu0
          %v1449 = vadd.f32 %v834, %v1448
          %v1450 = vpop.f32.mrf.mxu0
          %v1451 = vadd.f32 %v830, %v1450
          %v1452 = vpop.f32.mrf.mxu0
          %v1453 = vadd.f32 %v834, %v1452
          %1454 = vmatprep.mubr.bf16.mxu0 %v608
          %1455 = vmatmul.mubr.bf16.gmra.mxu0 %v607
          %v1456 = vpop.f32.mrf.mxu0
          %v1457 = vadd.f32 %v830, %v1456
          %v1458 = vpop.f32.mrf.mxu0
          %v1459 = vadd.f32 %v834, %v1458
          %v1460 = vpop.f32.mrf.mxu0
          %v1461 = vadd.f32 %v830, %v1460
          %v1462 = vpop.f32.mrf.mxu0
          %v1463 = vadd.f32 %v834, %v1462
          %1464 = vmatprep.mubr.bf16.mxu0 %v610
          %1465 = vmatmul.mubr.bf16.gmra.mxu0 %v609
          %v1466 = vpop.f32.mrf.mxu0
          %v1467 = vadd.f32 %v830, %v1466
          %v1468 = vpop.f32.mrf.mxu0
          %v1469 = vadd.f32 %v834, %v1468
          %v1470 = vpop.f32.mrf.mxu0
          %v1471 = vadd.f32 %v830, %v1470
          %v1472 = vpop.f32.mrf.mxu0
          %v1473 = vadd.f32 %v834, %v1472
          %1474 = vmatprep.mubr.bf16.mxu0 %v612
          %1475 = vmatmul.mubr.bf16.gmra.mxu0 %v611
          %v1476 = vpop.f32.mrf.mxu0
          %v1477 = vadd.f32 %v830, %v1476
          %v1478 = vpop.f32.mrf.mxu0
          %v1479 = vadd.f32 %v834, %v1478
          %v1480 = vpop.f32.mrf.mxu0
          %v1481 = vadd.f32 %v830, %v1480
          %v1482 = vpop.f32.mrf.mxu0
          %v1483 = vadd.f32 %v834, %v1482
          %1484 = vmatprep.mubr.bf16.mxu0 %v614
          %1485 = vmatmul.mubr.bf16.gmra.mxu0 %v613
          %v1486 = vpop.f32.mrf.mxu0
          %v1487 = vadd.f32 %v830, %v1486
          %v1488 = vpop.f32.mrf.mxu0
          %v1489 = vadd.f32 %v834, %v1488
          %v1490 = vpop.f32.mrf.mxu0
          %v1491 = vadd.f32 %v830, %v1490
          %v1492 = vpop.f32.mrf.mxu0
          %v1493 = vadd.f32 %v834, %v1492
          %1494 = vmatprep.mubr.bf16.mxu0 %v616
          %1495 = vmatmul.mubr.bf16.gmra.mxu0 %v615
          %v1496 = vpop.f32.mrf.mxu0
          %v1497 = vadd.f32 %v830, %v1496
          %v1498 = vpop.f32.mrf.mxu0
          %v1499 = vadd.f32 %v834, %v1498
          %v1500 = vpop.f32.mrf.mxu0
          %v1501 = vadd.f32 %v830, %v1500
          %v1502 = vpop.f32.mrf.mxu0
          %v1503 = vadd.f32 %v834, %v1502
          %1504 = vmatprep.mubr.bf16.mxu0 %v618
          %1505 = vmatmul.mubr.bf16.gmra.mxu0 %v617
          %v1506 = vpop.f32.mrf.mxu0
          %v1507 = vadd.f32 %v830, %v1506
          %v1508 = vpop.f32.mrf.mxu0
          %v1509 = vadd.f32 %v834, %v1508
          %v1510 = vpop.f32.mrf.mxu0
          %v1511 = vadd.f32 %v830, %v1510
          %v1512 = vpop.f32.mrf.mxu0
          %v1513 = vadd.f32 %v834, %v1512
          %1514 = vmatprep.mubr.bf16.mxu0 %v620
          %1515 = vmatmul.mubr.bf16.gmra.mxu0 %v619
          %v1516 = vpop.f32.mrf.mxu0
          %v1517 = vadd.f32 %v830, %v1516
          %v1518 = vpop.f32.mrf.mxu0
          %v1519 = vadd.f32 %v834, %v1518
          %v1520 = vpop.f32.mrf.mxu0
          %v1521 = vadd.f32 %v830, %v1520
          %v1522 = vpop.f32.mrf.mxu0
          %v1523 = vadd.f32 %v834, %v1522
          %1524 = vmatprep.mubr.bf16.mxu0 %v622
          %1525 = vmatmul.mubr.bf16.gmra.mxu0 %v621
          %v1526 = vpop.f32.mrf.mxu0
          %v1527 = vadd.f32 %v830, %v1526
          %v1528 = vpop.f32.mrf.mxu0
          %v1529 = vadd.f32 %v834, %v1528
          %v1530 = vpop.f32.mrf.mxu0
          %v1531 = vadd.f32 %v830, %v1530
          %v1532 = vpop.f32.mrf.mxu0
          %v1533 = vadd.f32 %v834, %v1532
          %1534 = vmatprep.mubr.bf16.mxu0 %v624
          %1535 = vmatmul.mubr.bf16.gmra.mxu0 %v623
          %v1536 = vpop.f32.mrf.mxu0
          %v1537 = vadd.f32 %v830, %v1536
          %v1538 = vpop.f32.mrf.mxu0
          %v1539 = vadd.f32 %v834, %v1538
          %v1540 = vpop.f32.mrf.mxu0
          %v1541 = vadd.f32 %v830, %v1540
          %v1542 = vpop.f32.mrf.mxu0
          %v1543 = vadd.f32 %v834, %v1542
          %1544 = vdwg.mxu0
          %v1545 = vpack.c.bf16 %v878, %v874
          %v1546 = vpack.c.bf16 %v880, %v876
          %v1547 = vpack.c.bf16 %v1231, %v1227
          %v1548 = vpack.c.bf16 %v1233, %v1229
          %v1549 = vpack.c.bf16 %v888, %v884
          %v1550 = vpack.c.bf16 %v890, %v886
          %v1551 = vpack.c.bf16 %v1241, %v1237
          %v1552 = vpack.c.bf16 %v1243, %v1239
          %v1553 = vpack.c.bf16 %v898, %v894
          %v1554 = vpack.c.bf16 %v900, %v896
          %v1555 = vpack.c.bf16 %v1251, %v1247
          %v1556 = vpack.c.bf16 %v1253, %v1249
          %v1557 = vpack.c.bf16 %v908, %v904
          %v1558 = vpack.c.bf16 %v910, %v906
          %v1559 = vpack.c.bf16 %v1261, %v1257
          %v1560 = vpack.c.bf16 %v1263, %v1259
          %v1561 = vpack.c.bf16 %v918, %v914
          %v1562 = vpack.c.bf16 %v920, %v916
          %v1563 = vpack.c.bf16 %v1271, %v1267
          %v1564 = vpack.c.bf16 %v1273, %v1269
          %v1565 = vpack.c.bf16 %v928, %v924
          %v1566 = vpack.c.bf16 %v930, %v926
          %v1567 = vpack.c.bf16 %v1281, %v1277
          %v1568 = vpack.c.bf16 %v1283, %v1279
          %v1569 = vpack.c.bf16 %v938, %v934
          %v1570 = vpack.c.bf16 %v940, %v936
          %v1571 = vpack.c.bf16 %v1291, %v1287
          %v1572 = vpack.c.bf16 %v1293, %v1289
          %v1573 = vpack.c.bf16 %v948, %v944
          %v1574 = vpack.c.bf16 %v950, %v946
          %v1575 = vpack.c.bf16 %v1301, %v1297
          %v1576 = vpack.c.bf16 %v1303, %v1299
          %v1577 = vpack.c.bf16 %v958, %v954
          %v1578 = vpack.c.bf16 %v960, %v956
          %v1579 = vpack.c.bf16 %v1311, %v1307
          %v1580 = vpack.c.bf16 %v1313, %v1309
          %v1581 = vpack.c.bf16 %v968, %v964
          %v1582 = vpack.c.bf16 %v970, %v966
          %v1583 = vpack.c.bf16 %v1321, %v1317
          %v1584 = vpack.c.bf16 %v1323, %v1319
          %v1585 = vpack.c.bf16 %v978, %v974
          %v1586 = vpack.c.bf16 %v980, %v976
          %v1587 = vpack.c.bf16 %v1331, %v1327
          %v1588 = vpack.c.bf16 %v1333, %v1329
          %v1589 = vpack.c.bf16 %v988, %v984
          %v1590 = vpack.c.bf16 %v990, %v986
          %v1591 = vpack.c.bf16 %v1341, %v1337
          %v1592 = vpack.c.bf16 %v1343, %v1339
          %v1593 = vpack.c.bf16 %v998, %v994
          %v1594 = vpack.c.bf16 %v1000, %v996
          %v1595 = vpack.c.bf16 %v1351, %v1347
          %v1596 = vpack.c.bf16 %v1353, %v1349
          %v1597 = vpack.c.bf16 %v1008, %v1004
          %v1598 = vpack.c.bf16 %v1010, %v1006
          %v1599 = vpack.c.bf16 %v1361, %v1357
          %v1600 = vpack.c.bf16 %v1363, %v1359
          %v1601 = vpack.c.bf16 %v1018, %v1014
          %v1602 = vpack.c.bf16 %v1020, %v1016
          %v1603 = vpack.c.bf16 %v1371, %v1367
          %v1604 = vpack.c.bf16 %v1373, %v1369
          %v1605 = vpack.c.bf16 %v1028, %v1024
          %v1606 = vpack.c.bf16 %v1030, %v1026
          %v1607 = vpack.c.bf16 %v1381, %v1377
          %v1608 = vpack.c.bf16 %v1383, %v1379
          %v1609 = vpack.c.bf16 %v1038, %v1034
          %v1610 = vpack.c.bf16 %v1040, %v1036
          %v1611 = vpack.c.bf16 %v1391, %v1387
          %v1612 = vpack.c.bf16 %v1393, %v1389
          %v1613 = vpack.c.bf16 %v1048, %v1044
          %v1614 = vpack.c.bf16 %v1050, %v1046
          %v1615 = vpack.c.bf16 %v1401, %v1397
          %v1616 = vpack.c.bf16 %v1403, %v1399
          %v1617 = vpack.c.bf16 %v1058, %v1054
          %v1618 = vpack.c.bf16 %v1060, %v1056
          %v1619 = vpack.c.bf16 %v1411, %v1407
          %v1620 = vpack.c.bf16 %v1413, %v1409
          %v1621 = vpack.c.bf16 %v1068, %v1064
          %v1622 = vpack.c.bf16 %v1070, %v1066
          %v1623 = vpack.c.bf16 %v1421, %v1417
          %v1624 = vpack.c.bf16 %v1423, %v1419
          %v1625 = vpack.c.bf16 %v1078, %v1074
          %v1626 = vpack.c.bf16 %v1080, %v1076
          %v1627 = vpack.c.bf16 %v1431, %v1427
          %v1628 = vpack.c.bf16 %v1433, %v1429
          %v1629 = vpack.c.bf16 %v1088, %v1084
          %v1630 = vpack.c.bf16 %v1090, %v1086
          %v1631 = vpack.c.bf16 %v1441, %v1437
          %v1632 = vpack.c.bf16 %v1443, %v1439
          %v1633 = vpack.c.bf16 %v1098, %v1094
          %v1634 = vpack.c.bf16 %v1100, %v1096
          %v1635 = vpack.c.bf16 %v1451, %v1447
          %v1636 = vpack.c.bf16 %v1453, %v1449
          %v1637 = vpack.c.bf16 %v1108, %v1104
          %v1638 = vpack.c.bf16 %v1110, %v1106
          %v1639 = vpack.c.bf16 %v1461, %v1457
          %v1640 = vpack.c.bf16 %v1463, %v1459
          %v1641 = vpack.c.bf16 %v1118, %v1114
          %v1642 = vpack.c.bf16 %v1120, %v1116
          %v1643 = vpack.c.bf16 %v1471, %v1467
          %v1644 = vpack.c.bf16 %v1473, %v1469
          %v1645 = vpack.c.bf16 %v1128, %v1124
          %v1646 = vpack.c.bf16 %v1130, %v1126
          %v1647 = vpack.c.bf16 %v1481, %v1477
          %v1648 = vpack.c.bf16 %v1483, %v1479
          %v1649 = vpack.c.bf16 %v1138, %v1134
          %v1650 = vpack.c.bf16 %v1140, %v1136
          %v1651 = vpack.c.bf16 %v1491, %v1487
          %v1652 = vpack.c.bf16 %v1493, %v1489
          %v1653 = vpack.c.bf16 %v1148, %v1144
          %v1654 = vpack.c.bf16 %v1150, %v1146
          %v1655 = vpack.c.bf16 %v1501, %v1497
          %v1656 = vpack.c.bf16 %v1503, %v1499
          %v1657 = vpack.c.bf16 %v1158, %v1154
          %v1658 = vpack.c.bf16 %v1160, %v1156
          %v1659 = vpack.c.bf16 %v1511, %v1507
          %v1660 = vpack.c.bf16 %v1513, %v1509
          %v1661 = vpack.c.bf16 %v1168, %v1164
          %v1662 = vpack.c.bf16 %v1170, %v1166
          %v1663 = vpack.c.bf16 %v1521, %v1517
          %v1664 = vpack.c.bf16 %v1523, %v1519
          %v1665 = vpack.c.bf16 %v1178, %v1174
          %v1666 = vpack.c.bf16 %v1180, %v1176
          %v1667 = vpack.c.bf16 %v1531, %v1527
          %v1668 = vpack.c.bf16 %v1533, %v1529
          %v1669 = vpack.c.bf16 %v1188, %v1184
          %v1670 = vpack.c.bf16 %v1190, %v1186
          %v1671 = vpack.c.bf16 %v1541, %v1537
          %v1672 = vpack.c.bf16 %v1543, %v1539
          %v1801 = vunpack.c.l.b16 %v1545
          %v1802 = vunpack.c.l.b16 %v1546
          %v1803 = vunpack.c.l.b16 %v1547
          %v1804 = vunpack.c.l.b16 %v1548
          %v1805 = vunpack.c.h.b16 %v1545
          %v1806 = vunpack.c.h.b16 %v1546
          %v1807 = vunpack.c.h.b16 %v1547
          %v1808 = vunpack.c.h.b16 %v1548
          %v1809 = vunpack.c.l.b16 %v1549
          %v1810 = vunpack.c.l.b16 %v1550
          %v1811 = vunpack.c.l.b16 %v1551
          %v1812 = vunpack.c.l.b16 %v1552
          %v1813 = vunpack.c.h.b16 %v1549
          %v1814 = vunpack.c.h.b16 %v1550
          %v1815 = vunpack.c.h.b16 %v1551
          %v1816 = vunpack.c.h.b16 %v1552
          %v1817 = vunpack.c.l.b16 %v1553
          %v1818 = vunpack.c.l.b16 %v1554
          %v1819 = vunpack.c.l.b16 %v1555
          %v1820 = vunpack.c.l.b16 %v1556
          %v1821 = vunpack.c.h.b16 %v1553
          %v1822 = vunpack.c.h.b16 %v1554
          %v1823 = vunpack.c.h.b16 %v1555
          %v1824 = vunpack.c.h.b16 %v1556
          %v1825 = vunpack.c.l.b16 %v1557
          %v1826 = vunpack.c.l.b16 %v1558
          %v1827 = vunpack.c.l.b16 %v1559
          %v1828 = vunpack.c.l.b16 %v1560
          %v1829 = vunpack.c.h.b16 %v1557
          %v1830 = vunpack.c.h.b16 %v1558
          %v1831 = vunpack.c.h.b16 %v1559
          %v1832 = vunpack.c.h.b16 %v1560
          %v1833 = vunpack.c.l.b16 %v1561
          %v1834 = vunpack.c.l.b16 %v1562
          %v1835 = vunpack.c.l.b16 %v1563
          %v1836 = vunpack.c.l.b16 %v1564
          %v1837 = vunpack.c.h.b16 %v1561
          %v1838 = vunpack.c.h.b16 %v1562
          %v1839 = vunpack.c.h.b16 %v1563
          %v1840 = vunpack.c.h.b16 %v1564
          %v1841 = vunpack.c.l.b16 %v1565
          %v1842 = vunpack.c.l.b16 %v1566
          %v1843 = vunpack.c.l.b16 %v1567
          %v1844 = vunpack.c.l.b16 %v1568
          %v1845 = vunpack.c.h.b16 %v1565
          %v1846 = vunpack.c.h.b16 %v1566
          %v1847 = vunpack.c.h.b16 %v1567
          %v1848 = vunpack.c.h.b16 %v1568
          %v1849 = vunpack.c.l.b16 %v1569
          %v1850 = vunpack.c.l.b16 %v1570
          %v1851 = vunpack.c.l.b16 %v1571
          %v1852 = vunpack.c.l.b16 %v1572
          %v1853 = vunpack.c.h.b16 %v1569
          %v1854 = vunpack.c.h.b16 %v1570
          %v1855 = vunpack.c.h.b16 %v1571
          %v1856 = vunpack.c.h.b16 %v1572
          %v1857 = vunpack.c.l.b16 %v1573
          %v1858 = vunpack.c.l.b16 %v1574
          %v1859 = vunpack.c.l.b16 %v1575
          %v1860 = vunpack.c.l.b16 %v1576
          %v1861 = vunpack.c.h.b16 %v1573
          %v1862 = vunpack.c.h.b16 %v1574
          %v1863 = vunpack.c.h.b16 %v1575
          %v1864 = vunpack.c.h.b16 %v1576
          %v1865 = vunpack.c.l.b16 %v1577
          %v1866 = vunpack.c.l.b16 %v1578
          %v1867 = vunpack.c.l.b16 %v1579
          %v1868 = vunpack.c.l.b16 %v1580
          %v1869 = vunpack.c.h.b16 %v1577
          %v1870 = vunpack.c.h.b16 %v1578
          %v1871 = vunpack.c.h.b16 %v1579
          %v1872 = vunpack.c.h.b16 %v1580
          %v1873 = vunpack.c.l.b16 %v1581
          %v1874 = vunpack.c.l.b16 %v1582
          %v1875 = vunpack.c.l.b16 %v1583
          %v1876 = vunpack.c.l.b16 %v1584
          %v1877 = vunpack.c.h.b16 %v1581
          %v1878 = vunpack.c.h.b16 %v1582
          %v1879 = vunpack.c.h.b16 %v1583
          %v1880 = vunpack.c.h.b16 %v1584
          %v1881 = vunpack.c.l.b16 %v1585
          %v1882 = vunpack.c.l.b16 %v1586
          %v1883 = vunpack.c.l.b16 %v1587
          %v1884 = vunpack.c.l.b16 %v1588
          %v1885 = vunpack.c.h.b16 %v1585
          %v1886 = vunpack.c.h.b16 %v1586
          %v1887 = vunpack.c.h.b16 %v1587
          %v1888 = vunpack.c.h.b16 %v1588
          %v1889 = vunpack.c.l.b16 %v1589
          %v1890 = vunpack.c.l.b16 %v1590
          %v1891 = vunpack.c.l.b16 %v1591
          %v1892 = vunpack.c.l.b16 %v1592
          %v1893 = vunpack.c.h.b16 %v1589
          %v1894 = vunpack.c.h.b16 %v1590
          %v1895 = vunpack.c.h.b16 %v1591
          %v1896 = vunpack.c.h.b16 %v1592
          %v1897 = vunpack.c.l.b16 %v1593
          %v1898 = vunpack.c.l.b16 %v1594
          %v1899 = vunpack.c.l.b16 %v1595
          %v1900 = vunpack.c.l.b16 %v1596
          %v1901 = vunpack.c.h.b16 %v1593
          %v1902 = vunpack.c.h.b16 %v1594
          %v1903 = vunpack.c.h.b16 %v1595
          %v1904 = vunpack.c.h.b16 %v1596
          %v1905 = vunpack.c.l.b16 %v1597
          %v1906 = vunpack.c.l.b16 %v1598
          %v1907 = vunpack.c.l.b16 %v1599
          %v1908 = vunpack.c.l.b16 %v1600
          %v1909 = vunpack.c.h.b16 %v1597
          %v1910 = vunpack.c.h.b16 %v1598
          %v1911 = vunpack.c.h.b16 %v1599
          %v1912 = vunpack.c.h.b16 %v1600
          %v1913 = vunpack.c.l.b16 %v1601
          %v1914 = vunpack.c.l.b16 %v1602
          %v1915 = vunpack.c.l.b16 %v1603
          %v1916 = vunpack.c.l.b16 %v1604
          %v1917 = vunpack.c.h.b16 %v1601
          %v1918 = vunpack.c.h.b16 %v1602
          %v1919 = vunpack.c.h.b16 %v1603
          %v1920 = vunpack.c.h.b16 %v1604
          %v1921 = vunpack.c.l.b16 %v1605
          %v1922 = vunpack.c.l.b16 %v1606
          %v1923 = vunpack.c.l.b16 %v1607
          %v1924 = vunpack.c.l.b16 %v1608
          %v1925 = vunpack.c.h.b16 %v1605
          %v1926 = vunpack.c.h.b16 %v1606
          %v1927 = vunpack.c.h.b16 %v1607
          %v1928 = vunpack.c.h.b16 %v1608
          %v1929 = vunpack.c.l.b16 %v1609
          %v1930 = vunpack.c.l.b16 %v1610
          %v1931 = vunpack.c.l.b16 %v1611
          %v1932 = vunpack.c.l.b16 %v1612
          %v1933 = vunpack.c.h.b16 %v1609
          %v1934 = vunpack.c.h.b16 %v1610
          %v1935 = vunpack.c.h.b16 %v1611
          %v1936 = vunpack.c.h.b16 %v1612
          %v1937 = vunpack.c.l.b16 %v1613
          %v1938 = vunpack.c.l.b16 %v1614
          %v1939 = vunpack.c.l.b16 %v1615
          %v1940 = vunpack.c.l.b16 %v1616
          %v1941 = vunpack.c.h.b16 %v1613
          %v1942 = vunpack.c.h.b16 %v1614
          %v1943 = vunpack.c.h.b16 %v1615
          %v1944 = vunpack.c.h.b16 %v1616
          %v1945 = vunpack.c.l.b16 %v1617
          %v1946 = vunpack.c.l.b16 %v1618
          %v1947 = vunpack.c.l.b16 %v1619
          %v1948 = vunpack.c.l.b16 %v1620
          %v1949 = vunpack.c.h.b16 %v1617
          %v1950 = vunpack.c.h.b16 %v1618
          %v1951 = vunpack.c.h.b16 %v1619
          %v1952 = vunpack.c.h.b16 %v1620
          %v1953 = vunpack.c.l.b16 %v1621
          %v1954 = vunpack.c.l.b16 %v1622
          %v1955 = vunpack.c.l.b16 %v1623
          %v1956 = vunpack.c.l.b16 %v1624
          %v1957 = vunpack.c.h.b16 %v1621
          %v1958 = vunpack.c.h.b16 %v1622
          %v1959 = vunpack.c.h.b16 %v1623
          %v1960 = vunpack.c.h.b16 %v1624
          %v1961 = vunpack.c.l.b16 %v1625
          %v1962 = vunpack.c.l.b16 %v1626
          %v1963 = vunpack.c.l.b16 %v1627
          %v1964 = vunpack.c.l.b16 %v1628
          %v1965 = vunpack.c.h.b16 %v1625
          %v1966 = vunpack.c.h.b16 %v1626
          %v1967 = vunpack.c.h.b16 %v1627
          %v1968 = vunpack.c.h.b16 %v1628
          %v1969 = vunpack.c.l.b16 %v1629
          %v1970 = vunpack.c.l.b16 %v1630
          %v1971 = vunpack.c.l.b16 %v1631
          %v1972 = vunpack.c.l.b16 %v1632
          %v1973 = vunpack.c.h.b16 %v1629
          %v1974 = vunpack.c.h.b16 %v1630
          %v1975 = vunpack.c.h.b16 %v1631
          %v1976 = vunpack.c.h.b16 %v1632
          %v1977 = vunpack.c.l.b16 %v1633
          %v1978 = vunpack.c.l.b16 %v1634
          %v1979 = vunpack.c.l.b16 %v1635
          %v1980 = vunpack.c.l.b16 %v1636
          %v1981 = vunpack.c.h.b16 %v1633
          %v1982 = vunpack.c.h.b16 %v1634
          %v1983 = vunpack.c.h.b16 %v1635
          %v1984 = vunpack.c.h.b16 %v1636
          %v1985 = vunpack.c.l.b16 %v1637
          %v1986 = vunpack.c.l.b16 %v1638
          %v1987 = vunpack.c.l.b16 %v1639
          %v1988 = vunpack.c.l.b16 %v1640
          %v1989 = vunpack.c.h.b16 %v1637
          %v1990 = vunpack.c.h.b16 %v1638
          %v1991 = vunpack.c.h.b16 %v1639
          %v1992 = vunpack.c.h.b16 %v1640
          %v1993 = vunpack.c.l.b16 %v1641
          %v1994 = vunpack.c.l.b16 %v1642
          %v1995 = vunpack.c.l.b16 %v1643
          %v1996 = vunpack.c.l.b16 %v1644
          %v1997 = vunpack.c.h.b16 %v1641
          %v1998 = vunpack.c.h.b16 %v1642
          %v1999 = vunpack.c.h.b16 %v1643
          %v2000 = vunpack.c.h.b16 %v1644
          %v2001 = vunpack.c.l.b16 %v1645
          %v2002 = vunpack.c.l.b16 %v1646
          %v2003 = vunpack.c.l.b16 %v1647
          %v2004 = vunpack.c.l.b16 %v1648
          %v2005 = vunpack.c.h.b16 %v1645
          %v2006 = vunpack.c.h.b16 %v1646
          %v2007 = vunpack.c.h.b16 %v1647
          %v2008 = vunpack.c.h.b16 %v1648
          %v2009 = vunpack.c.l.b16 %v1649
          %v2010 = vunpack.c.l.b16 %v1650
          %v2011 = vunpack.c.l.b16 %v1651
          %v2012 = vunpack.c.l.b16 %v1652
          %v2013 = vunpack.c.h.b16 %v1649
          %v2014 = vunpack.c.h.b16 %v1650
          %v2015 = vunpack.c.h.b16 %v1651
          %v2016 = vunpack.c.h.b16 %v1652
          %v2017 = vunpack.c.l.b16 %v1653
          %v2018 = vunpack.c.l.b16 %v1654
          %v2019 = vunpack.c.l.b16 %v1655
          %v2020 = vunpack.c.l.b16 %v1656
          %v2021 = vunpack.c.h.b16 %v1653
          %v2022 = vunpack.c.h.b16 %v1654
          %v2023 = vunpack.c.h.b16 %v1655
          %v2024 = vunpack.c.h.b16 %v1656
          %v2025 = vunpack.c.l.b16 %v1657
          %v2026 = vunpack.c.l.b16 %v1658
          %v2027 = vunpack.c.l.b16 %v1659
          %v2028 = vunpack.c.l.b16 %v1660
          %v2029 = vunpack.c.h.b16 %v1657
          %v2030 = vunpack.c.h.b16 %v1658
          %v2031 = vunpack.c.h.b16 %v1659
          %v2032 = vunpack.c.h.b16 %v1660
          %v2033 = vunpack.c.l.b16 %v1661
          %v2034 = vunpack.c.l.b16 %v1662
          %v2035 = vunpack.c.l.b16 %v1663
          %v2036 = vunpack.c.l.b16 %v1664
          %v2037 = vunpack.c.h.b16 %v1661
          %v2038 = vunpack.c.h.b16 %v1662
          %v2039 = vunpack.c.h.b16 %v1663
          %v2040 = vunpack.c.h.b16 %v1664
          %v2041 = vunpack.c.l.b16 %v1665
          %v2042 = vunpack.c.l.b16 %v1666
          %v2043 = vunpack.c.l.b16 %v1667
          %v2044 = vunpack.c.l.b16 %v1668
          %v2045 = vunpack.c.h.b16 %v1665
          %v2046 = vunpack.c.h.b16 %v1666
          %v2047 = vunpack.c.h.b16 %v1667
          %v2048 = vunpack.c.h.b16 %v1668
          %v2049 = vunpack.c.l.b16 %v1669
          %v2050 = vunpack.c.l.b16 %v1670
          %v2051 = vunpack.c.l.b16 %v1671
          %v2052 = vunpack.c.l.b16 %v1672
          %v2053 = vunpack.c.h.b16 %v1669
          %v2054 = vunpack.c.h.b16 %v1670
          %v2055 = vunpack.c.h.b16 %v1671
          %v2056 = vunpack.c.h.b16 %v1672
          %v2057 = vpack.c.b16 %v1802, %v1801
          %v2058 = vpack.c.b16 %v1804, %v1803
          %v2059 = vpack.c.b16 %v1806, %v1805
          %v2060 = vpack.c.b16 %v1808, %v1807
          %v2061 = vpack.c.b16 %v1810, %v1809
          %v2062 = vpack.c.b16 %v1812, %v1811
          %v2063 = vpack.c.b16 %v1814, %v1813
          %v2064 = vpack.c.b16 %v1816, %v1815
          %v2065 = vpack.c.b16 %v1818, %v1817
          %v2066 = vpack.c.b16 %v1820, %v1819
          %v2067 = vpack.c.b16 %v1822, %v1821
          %v2068 = vpack.c.b16 %v1824, %v1823
          %v2069 = vpack.c.b16 %v1826, %v1825
          %v2070 = vpack.c.b16 %v1828, %v1827
          %v2071 = vpack.c.b16 %v1830, %v1829
          %v2072 = vpack.c.b16 %v1832, %v1831
          %v2073 = vpack.c.b16 %v1834, %v1833
          %v2074 = vpack.c.b16 %v1836, %v1835
          %v2075 = vpack.c.b16 %v1838, %v1837
          %v2076 = vpack.c.b16 %v1840, %v1839
          %v2077 = vpack.c.b16 %v1842, %v1841
          %v2078 = vpack.c.b16 %v1844, %v1843
          %v2079 = vpack.c.b16 %v1846, %v1845
          %v2080 = vpack.c.b16 %v1848, %v1847
          %v2081 = vpack.c.b16 %v1850, %v1849
          %v2082 = vpack.c.b16 %v1852, %v1851
          %v2083 = vpack.c.b16 %v1854, %v1853
          %v2084 = vpack.c.b16 %v1856, %v1855
          %v2085 = vpack.c.b16 %v1858, %v1857
          %v2086 = vpack.c.b16 %v1860, %v1859
          %v2087 = vpack.c.b16 %v1862, %v1861
          %v2088 = vpack.c.b16 %v1864, %v1863
          %v2089 = vpack.c.b16 %v1866, %v1865
          %v2090 = vpack.c.b16 %v1868, %v1867
          %v2091 = vpack.c.b16 %v1870, %v1869
          %v2092 = vpack.c.b16 %v1872, %v1871
          %v2093 = vpack.c.b16 %v1874, %v1873
          %v2094 = vpack.c.b16 %v1876, %v1875
          %v2095 = vpack.c.b16 %v1878, %v1877
          %v2096 = vpack.c.b16 %v1880, %v1879
          %v2097 = vpack.c.b16 %v1882, %v1881
          %v2098 = vpack.c.b16 %v1884, %v1883
          %v2099 = vpack.c.b16 %v1886, %v1885
          %v2100 = vpack.c.b16 %v1888, %v1887
          %v2101 = vpack.c.b16 %v1890, %v1889
          %v2102 = vpack.c.b16 %v1892, %v1891
          %v2103 = vpack.c.b16 %v1894, %v1893
          %v2104 = vpack.c.b16 %v1896, %v1895
          %v2105 = vpack.c.b16 %v1898, %v1897
          %v2106 = vpack.c.b16 %v1900, %v1899
          %v2107 = vpack.c.b16 %v1902, %v1901
          %v2108 = vpack.c.b16 %v1904, %v1903
          %v2109 = vpack.c.b16 %v1906, %v1905
          %v2110 = vpack.c.b16 %v1908, %v1907
          %v2111 = vpack.c.b16 %v1910, %v1909
          %v2112 = vpack.c.b16 %v1912, %v1911
          %v2113 = vpack.c.b16 %v1914, %v1913
          %v2114 = vpack.c.b16 %v1916, %v1915
          %v2115 = vpack.c.b16 %v1918, %v1917
          %v2116 = vpack.c.b16 %v1920, %v1919
          %v2117 = vpack.c.b16 %v1922, %v1921
          %v2118 = vpack.c.b16 %v1924, %v1923
          %v2119 = vpack.c.b16 %v1926, %v1925
          %v2120 = vpack.c.b16 %v1928, %v1927
          %v2121 = vpack.c.b16 %v1930, %v1929
          %v2122 = vpack.c.b16 %v1932, %v1931
          %v2123 = vpack.c.b16 %v1934, %v1933
          %v2124 = vpack.c.b16 %v1936, %v1935
          %v2125 = vpack.c.b16 %v1938, %v1937
          %v2126 = vpack.c.b16 %v1940, %v1939
          %v2127 = vpack.c.b16 %v1942, %v1941
          %v2128 = vpack.c.b16 %v1944, %v1943
          %v2129 = vpack.c.b16 %v1946, %v1945
          %v2130 = vpack.c.b16 %v1948, %v1947
          %v2131 = vpack.c.b16 %v1950, %v1949
          %v2132 = vpack.c.b16 %v1952, %v1951
          %v2133 = vpack.c.b16 %v1954, %v1953
          %v2134 = vpack.c.b16 %v1956, %v1955
          %v2135 = vpack.c.b16 %v1958, %v1957
          %v2136 = vpack.c.b16 %v1960, %v1959
          %v2137 = vpack.c.b16 %v1962, %v1961
          %v2138 = vpack.c.b16 %v1964, %v1963
          %v2139 = vpack.c.b16 %v1966, %v1965
          %v2140 = vpack.c.b16 %v1968, %v1967
          %v2141 = vpack.c.b16 %v1970, %v1969
          %v2142 = vpack.c.b16 %v1972, %v1971
          %v2143 = vpack.c.b16 %v1974, %v1973
          %v2144 = vpack.c.b16 %v1976, %v1975
          %v2145 = vpack.c.b16 %v1978, %v1977
          %v2146 = vpack.c.b16 %v1980, %v1979
          %v2147 = vpack.c.b16 %v1982, %v1981
          %v2148 = vpack.c.b16 %v1984, %v1983
          %v2149 = vpack.c.b16 %v1986, %v1985
          %v2150 = vpack.c.b16 %v1988, %v1987
          %v2151 = vpack.c.b16 %v1990, %v1989
          %v2152 = vpack.c.b16 %v1992, %v1991
          %v2153 = vpack.c.b16 %v1994, %v1993
          %v2154 = vpack.c.b16 %v1996, %v1995
          %v2155 = vpack.c.b16 %v1998, %v1997
          %v2156 = vpack.c.b16 %v2000, %v1999
          %v2157 = vpack.c.b16 %v2002, %v2001
          %v2158 = vpack.c.b16 %v2004, %v2003
          %v2159 = vpack.c.b16 %v2006, %v2005
          %v2160 = vpack.c.b16 %v2008, %v2007
          %v2161 = vpack.c.b16 %v2010, %v2009
          %v2162 = vpack.c.b16 %v2012, %v2011
          %v2163 = vpack.c.b16 %v2014, %v2013
          %v2164 = vpack.c.b16 %v2016, %v2015
          %v2165 = vpack.c.b16 %v2018, %v2017
          %v2166 = vpack.c.b16 %v2020, %v2019
          %v2167 = vpack.c.b16 %v2022, %v2021
          %v2168 = vpack.c.b16 %v2024, %v2023
          %v2169 = vpack.c.b16 %v2026, %v2025
          %v2170 = vpack.c.b16 %v2028, %v2027
          %v2171 = vpack.c.b16 %v2030, %v2029
          %v2172 = vpack.c.b16 %v2032, %v2031
          %v2173 = vpack.c.b16 %v2034, %v2033
          %v2174 = vpack.c.b16 %v2036, %v2035
          %v2175 = vpack.c.b16 %v2038, %v2037
          %v2176 = vpack.c.b16 %v2040, %v2039
          %v2177 = vpack.c.b16 %v2042, %v2041
          %v2178 = vpack.c.b16 %v2044, %v2043
          %v2179 = vpack.c.b16 %v2046, %v2045
          %v2180 = vpack.c.b16 %v2048, %v2047
          %v2181 = vpack.c.b16 %v2050, %v2049
          %v2182 = vpack.c.b16 %v2052, %v2051
          %v2183 = vpack.c.b16 %v2054, %v2053
          %v2184 = vpack.c.b16 %v2056, %v2055
          %2313 = vst [vmem:[#allocation2] sm:$0xff] %v2057
          %2314 = vst [vmem:[#allocation2 + $0x8] sm:$0xff] %v2058
          %2315 = vst [vmem:[#allocation2 + $0x10] sm:$0xff] %v2059
          %2316 = vst [vmem:[#allocation2 + $0x18] sm:$0xff] %v2060
          %2317 = vst [vmem:[#allocation2 + $0x20] sm:$0xff] %v2061
          %2318 = vst [vmem:[#allocation2 + $0x28] sm:$0xff] %v2062
          %2319 = vst [vmem:[#allocation2 + $0x30] sm:$0xff] %v2063
          %2320 = vst [vmem:[#allocation2 + $0x38] sm:$0xff] %v2064
          %2321 = vst [vmem:[#allocation2 + $0x40] sm:$0xff] %v2065
          %2322 = vst [vmem:[#allocation2 + $0x48] sm:$0xff] %v2066
          %2323 = vst [vmem:[#allocation2 + $0x50] sm:$0xff] %v2067
          %2324 = vst [vmem:[#allocation2 + $0x58] sm:$0xff] %v2068
          %2325 = vst [vmem:[#allocation2 + $0x60] sm:$0xff] %v2069
          %2326 = vst [vmem:[#allocation2 + $0x68] sm:$0xff] %v2070
          %2327 = vst [vmem:[#allocation2 + $0x70] sm:$0xff] %v2071
          %2328 = vst [vmem:[#allocation2 + $0x78] sm:$0xff] %v2072
          %2329 = vst [vmem:[#allocation2 + $0x80] sm:$0xff] %v2073
          %2330 = vst [vmem:[#allocation2 + $0x88] sm:$0xff] %v2074
          %2331 = vst [vmem:[#allocation2 + $0x90] sm:$0xff] %v2075
          %2332 = vst [vmem:[#allocation2 + $0x98] sm:$0xff] %v2076
          %2333 = vst [vmem:[#allocation2 + $0xa0] sm:$0xff] %v2077
          %2334 = vst [vmem:[#allocation2 + $0xa8] sm:$0xff] %v2078
          %2335 = vst [vmem:[#allocation2 + $0xb0] sm:$0xff] %v2079
          %2336 = vst [vmem:[#allocation2 + $0xb8] sm:$0xff] %v2080
          %2337 = vst [vmem:[#allocation2 + $0xc0] sm:$0xff] %v2081
          %2338 = vst [vmem:[#allocation2 + $0xc8] sm:$0xff] %v2082
          %2339 = vst [vmem:[#allocation2 + $0xd0] sm:$0xff] %v2083
          %2340 = vst [vmem:[#allocation2 + $0xd8] sm:$0xff] %v2084
          %2341 = vst [vmem:[#allocation2 + $0xe0] sm:$0xff] %v2085
          %2342 = vst [vmem:[#allocation2 + $0xe8] sm:$0xff] %v2086
          %2343 = vst [vmem:[#allocation2 + $0xf0] sm:$0xff] %v2087
          %2344 = vst [vmem:[#allocation2 + $0xf8] sm:$0xff] %v2088
          %2345 = vst [vmem:[#allocation2 + $0x100] sm:$0xff] %v2089
          %2346 = vst [vmem:[#allocation2 + $0x108] sm:$0xff] %v2090
          %2347 = vst [vmem:[#allocation2 + $0x110] sm:$0xff] %v2091
          %2348 = vst [vmem:[#allocation2 + $0x118] sm:$0xff] %v2092
          %2349 = vst [vmem:[#allocation2 + $0x120] sm:$0xff] %v2093
          %2350 = vst [vmem:[#allocation2 + $0x128] sm:$0xff] %v2094
          %2351 = vst [vmem:[#allocation2 + $0x130] sm:$0xff] %v2095
          %2352 = vst [vmem:[#allocation2 + $0x138] sm:$0xff] %v2096
          %2353 = vst [vmem:[#allocation2 + $0x140] sm:$0xff] %v2097
          %2354 = vst [vmem:[#allocation2 + $0x148] sm:$0xff] %v2098
          %2355 = vst [vmem:[#allocation2 + $0x150] sm:$0xff] %v2099
          %2356 = vst [vmem:[#allocation2 + $0x158] sm:$0xff] %v2100
          %2357 = vst [vmem:[#allocation2 + $0x160] sm:$0xff] %v2101
          %2358 = vst [vmem:[#allocation2 + $0x168] sm:$0xff] %v2102
          %2359 = vst [vmem:[#allocation2 + $0x170] sm:$0xff] %v2103
          %2360 = vst [vmem:[#allocation2 + $0x178] sm:$0xff] %v2104
          %2361 = vst [vmem:[#allocation2 + $0x180] sm:$0xff] %v2105
          %2362 = vst [vmem:[#allocation2 + $0x188] sm:$0xff] %v2106
          %2363 = vst [vmem:[#allocation2 + $0x190] sm:$0xff] %v2107
          %2364 = vst [vmem:[#allocation2 + $0x198] sm:$0xff] %v2108
          %2365 = vst [vmem:[#allocation2 + $0x1a0] sm:$0xff] %v2109
          %2366 = vst [vmem:[#allocation2 + $0x1a8] sm:$0xff] %v2110
          %2367 = vst [vmem:[#allocation2 + $0x1b0] sm:$0xff] %v2111
          %2368 = vst [vmem:[#allocation2 + $0x1b8] sm:$0xff] %v2112
          %2369 = vst [vmem:[#allocation2 + $0x1c0] sm:$0xff] %v2113
          %2370 = vst [vmem:[#allocation2 + $0x1c8] sm:$0xff] %v2114
          %2371 = vst [vmem:[#allocation2 + $0x1d0] sm:$0xff] %v2115
          %2372 = vst [vmem:[#allocation2 + $0x1d8] sm:$0xff] %v2116
          %2373 = vst [vmem:[#allocation2 + $0x1e0] sm:$0xff] %v2117
          %2374 = vst [vmem:[#allocation2 + $0x1e8] sm:$0xff] %v2118
          %2375 = vst [vmem:[#allocation2 + $0x1f0] sm:$0xff] %v2119
          %2376 = vst [vmem:[#allocation2 + $0x1f8] sm:$0xff] %v2120
          %2377 = vst [vmem:[#allocation2 + $0x200] sm:$0xff] %v2121
          %2378 = vst [vmem:[#allocation2 + $0x208] sm:$0xff] %v2122
          %2379 = vst [vmem:[#allocation2 + $0x210] sm:$0xff] %v2123
          %2380 = vst [vmem:[#allocation2 + $0x218] sm:$0xff] %v2124
          %2381 = vst [vmem:[#allocation2 + $0x220] sm:$0xff] %v2125
          %2382 = vst [vmem:[#allocation2 + $0x228] sm:$0xff] %v2126
          %2383 = vst [vmem:[#allocation2 + $0x230] sm:$0xff] %v2127
          %2384 = vst [vmem:[#allocation2 + $0x238] sm:$0xff] %v2128
          %2385 = vst [vmem:[#allocation2 + $0x240] sm:$0xff] %v2129
          %2386 = vst [vmem:[#allocation2 + $0x248] sm:$0xff] %v2130
          %2387 = vst [vmem:[#allocation2 + $0x250] sm:$0xff] %v2131
          %2388 = vst [vmem:[#allocation2 + $0x258] sm:$0xff] %v2132
          %2389 = vst [vmem:[#allocation2 + $0x260] sm:$0xff] %v2133
          %2390 = vst [vmem:[#allocation2 + $0x268] sm:$0xff] %v2134
          %2391 = vst [vmem:[#allocation2 + $0x270] sm:$0xff] %v2135
          %2392 = vst [vmem:[#allocation2 + $0x278] sm:$0xff] %v2136
          %2393 = vst [vmem:[#allocation2 + $0x280] sm:$0xff] %v2137
          %2394 = vst [vmem:[#allocation2 + $0x288] sm:$0xff] %v2138
          %2395 = vst [vmem:[#allocation2 + $0x290] sm:$0xff] %v2139
          %2396 = vst [vmem:[#allocation2 + $0x298] sm:$0xff] %v2140
          %2397 = vst [vmem:[#allocation2 + $0x2a0] sm:$0xff] %v2141
          %2398 = vst [vmem:[#allocation2 + $0x2a8] sm:$0xff] %v2142
          %2399 = vst [vmem:[#allocation2 + $0x2b0] sm:$0xff] %v2143
          %2400 = vst [vmem:[#allocation2 + $0x2b8] sm:$0xff] %v2144
          %2401 = vst [vmem:[#allocation2 + $0x2c0] sm:$0xff] %v2145
          %2402 = vst [vmem:[#allocation2 + $0x2c8] sm:$0xff] %v2146
          %2403 = vst [vmem:[#allocation2 + $0x2d0] sm:$0xff] %v2147
          %2404 = vst [vmem:[#allocation2 + $0x2d8] sm:$0xff] %v2148
          %2405 = vst [vmem:[#allocation2 + $0x2e0] sm:$0xff] %v2149
          %2406 = vst [vmem:[#allocation2 + $0x2e8] sm:$0xff] %v2150
          %2407 = vst [vmem:[#allocation2 + $0x2f0] sm:$0xff] %v2151
          %2408 = vst [vmem:[#allocation2 + $0x2f8] sm:$0xff] %v2152
          %2409 = vst [vmem:[#allocation2 + $0x300] sm:$0xff] %v2153
          %2410 = vst [vmem:[#allocation2 + $0x308] sm:$0xff] %v2154
          %2411 = vst [vmem:[#allocation2 + $0x310] sm:$0xff] %v2155
          %2412 = vst [vmem:[#allocation2 + $0x318] sm:$0xff] %v2156
          %2413 = vst [vmem:[#allocation2 + $0x320] sm:$0xff] %v2157
          %2414 = vst [vmem:[#allocation2 + $0x328] sm:$0xff] %v2158
          %2415 = vst [vmem:[#allocation2 + $0x330] sm:$0xff] %v2159
          %2416 = vst [vmem:[#allocation2 + $0x338] sm:$0xff] %v2160
          %2417 = vst [vmem:[#allocation2 + $0x340] sm:$0xff] %v2161
          %2418 = vst [vmem:[#allocation2 + $0x348] sm:$0xff] %v2162
          %2419 = vst [vmem:[#allocation2 + $0x350] sm:$0xff] %v2163
          %2420 = vst [vmem:[#allocation2 + $0x358] sm:$0xff] %v2164
          %2421 = vst [vmem:[#allocation2 + $0x360] sm:$0xff] %v2165
          %2422 = vst [vmem:[#allocation2 + $0x368] sm:$0xff] %v2166
          %2423 = vst [vmem:[#allocation2 + $0x370] sm:$0xff] %v2167
          %2424 = vst [vmem:[#allocation2 + $0x378] sm:$0xff] %v2168
          %2425 = vst [vmem:[#allocation2 + $0x380] sm:$0xff] %v2169
          %2426 = vst [vmem:[#allocation2 + $0x388] sm:$0xff] %v2170
          %2427 = vst [vmem:[#allocation2 + $0x390] sm:$0xff] %v2171
          %2428 = vst [vmem:[#allocation2 + $0x398] sm:$0xff] %v2172
          %2429 = vst [vmem:[#allocation2 + $0x3a0] sm:$0xff] %v2173
          %2430 = vst [vmem:[#allocation2 + $0x3a8] sm:$0xff] %v2174
          %2431 = vst [vmem:[#allocation2 + $0x3b0] sm:$0xff] %v2175
          %2432 = vst [vmem:[#allocation2 + $0x3b8] sm:$0xff] %v2176
          %2433 = vst [vmem:[#allocation2 + $0x3c0] sm:$0xff] %v2177
          %2434 = vst [vmem:[#allocation2 + $0x3c8] sm:$0xff] %v2178
          %2435 = vst [vmem:[#allocation2 + $0x3d0] sm:$0xff] %v2179
          %2436 = vst [vmem:[#allocation2 + $0x3d8] sm:$0xff] %v2180
          %2437 = vst [vmem:[#allocation2 + $0x3e0] sm:$0xff] %v2181
          %2438 = vst [vmem:[#allocation2 + $0x3e8] sm:$0xff] %v2182
          %2439 = vst [vmem:[#allocation2 + $0x3f0] sm:$0xff] %v2183
          %2440 = vst [vmem:[#allocation2 + $0x3f8] sm:$0xff] %v2184
        $region76: #{tpu_custom_call.1} parent=51 // pred_fallthru
          _
        %v2441 = vld [vmem:[%s367] sm:$0xff]
        %v2442 = vld [vmem:[%s367 + $0x8] sm:$0xff]
        %v2443 = vld [vmem:[%s367 + $0x10] sm:$0xff]
        %v2444 = vld [vmem:[%s367 + $0x18] sm:$0xff]
        %v2445 = vld [vmem:[%s367 + $0x20] sm:$0xff]
        %v2446 = vld [vmem:[%s367 + $0x28] sm:$0xff]
        %v2447 = vld [vmem:[%s367 + $0x30] sm:$0xff]
        %v2448 = vld [vmem:[%s367 + $0x38] sm:$0xff]
        %v2449 = vld [vmem:[%s367 + $0x40] sm:$0xff]
        %v2450 = vld [vmem:[%s367 + $0x48] sm:$0xff]
        %v2451 = vld [vmem:[%s367 + $0x50] sm:$0xff]
        %v2452 = vld [vmem:[%s367 + $0x58] sm:$0xff]
        %v2453 = vld [vmem:[%s367 + $0x60] sm:$0xff]
        %v2454 = vld [vmem:[%s367 + $0x68] sm:$0xff]
        %v2455 = vld [vmem:[%s367 + $0x70] sm:$0xff]
        %v2456 = vld [vmem:[%s367 + $0x78] sm:$0xff]
        %v2457 = vld [vmem:[%s367 + $0x80] sm:$0xff]
        %v2458 = vld [vmem:[%s367 + $0x88] sm:$0xff]
        %v2459 = vld [vmem:[%s367 + $0x90] sm:$0xff]
        %v2460 = vld [vmem:[%s367 + $0x98] sm:$0xff]
        %v2461 = vld [vmem:[%s367 + $0xa0] sm:$0xff]
        %v2462 = vld [vmem:[%s367 + $0xa8] sm:$0xff]
        %v2463 = vld [vmem:[%s367 + $0xb0] sm:$0xff]
        %v2464 = vld [vmem:[%s367 + $0xb8] sm:$0xff]
        %v2465 = vld [vmem:[%s367 + $0xc0] sm:$0xff]
        %v2466 = vld [vmem:[%s367 + $0xc8] sm:$0xff]
        %v2467 = vld [vmem:[%s367 + $0xd0] sm:$0xff]
        %v2468 = vld [vmem:[%s367 + $0xd8] sm:$0xff]
        %v2469 = vld [vmem:[%s367 + $0xe0] sm:$0xff]
        %v2470 = vld [vmem:[%s367 + $0xe8] sm:$0xff]
        %v2471 = vld [vmem:[%s367 + $0xf0] sm:$0xff]
        %v2472 = vld [vmem:[%s367 + $0xf8] sm:$0xff]
        %v2473 = vld [vmem:[%s367 + $0x100] sm:$0xff]
        %v2474 = vld [vmem:[%s367 + $0x108] sm:$0xff]
        %v2475 = vld [vmem:[%s367 + $0x110] sm:$0xff]
        %v2476 = vld [vmem:[%s367 + $0x118] sm:$0xff]
        %v2477 = vld [vmem:[%s367 + $0x120] sm:$0xff]
        %v2478 = vld [vmem:[%s367 + $0x128] sm:$0xff]
        %v2479 = vld [vmem:[%s367 + $0x130] sm:$0xff]
        %v2480 = vld [vmem:[%s367 + $0x138] sm:$0xff]
        %v2481 = vld [vmem:[%s367 + $0x140] sm:$0xff]
        %v2482 = vld [vmem:[%s367 + $0x148] sm:$0xff]
        %v2483 = vld [vmem:[%s367 + $0x150] sm:$0xff]
        %v2484 = vld [vmem:[%s367 + $0x158] sm:$0xff]
        %v2485 = vld [vmem:[%s367 + $0x160] sm:$0xff]
        %v2486 = vld [vmem:[%s367 + $0x168] sm:$0xff]
        %v2487 = vld [vmem:[%s367 + $0x170] sm:$0xff]
        %v2488 = vld [vmem:[%s367 + $0x178] sm:$0xff]
        %v2489 = vld [vmem:[%s367 + $0x180] sm:$0xff]
        %v2490 = vld [vmem:[%s367 + $0x188] sm:$0xff]
        %v2491 = vld [vmem:[%s367 + $0x190] sm:$0xff]
        %v2492 = vld [vmem:[%s367 + $0x198] sm:$0xff]
        %v2493 = vld [vmem:[%s367 + $0x1a0] sm:$0xff]
        %v2494 = vld [vmem:[%s367 + $0x1a8] sm:$0xff]
        %v2495 = vld [vmem:[%s367 + $0x1b0] sm:$0xff]
        %v2496 = vld [vmem:[%s367 + $0x1b8] sm:$0xff]
        %v2497 = vld [vmem:[%s367 + $0x1c0] sm:$0xff]
        %v2498 = vld [vmem:[%s367 + $0x1c8] sm:$0xff]
        %v2499 = vld [vmem:[%s367 + $0x1d0] sm:$0xff]
        %v2500 = vld [vmem:[%s367 + $0x1d8] sm:$0xff]
        %v2501 = vld [vmem:[%s367 + $0x1e0] sm:$0xff]
        %v2502 = vld [vmem:[%s367 + $0x1e8] sm:$0xff]
        %v2503 = vld [vmem:[%s367 + $0x1f0] sm:$0xff]
        %v2504 = vld [vmem:[%s367 + $0x1f8] sm:$0xff]
        %v2505 = vpack.c.bf16 %v2443, %v2441
        %v2506 = vpack.c.bf16 %v2444, %v2442
        %v2507 = vpack.c.bf16 %v2447, %v2445
        %v2508 = vpack.c.bf16 %v2448, %v2446
        %v2509 = vpack.c.bf16 %v2451, %v2449
        %v2510 = vpack.c.bf16 %v2452, %v2450
        %v2511 = vpack.c.bf16 %v2455, %v2453
        %v2512 = vpack.c.bf16 %v2456, %v2454
        %v2513 = vpack.c.bf16 %v2459, %v2457
        %v2514 = vpack.c.bf16 %v2460, %v2458
        %v2515 = vpack.c.bf16 %v2463, %v2461
        %v2516 = vpack.c.bf16 %v2464, %v2462
        %v2517 = vpack.c.bf16 %v2467, %v2465
        %v2518 = vpack.c.bf16 %v2468, %v2466
        %v2519 = vpack.c.bf16 %v2471, %v2469
        %v2520 = vpack.c.bf16 %v2472, %v2470
        %v2521 = vpack.c.bf16 %v2475, %v2473
        %v2522 = vpack.c.bf16 %v2476, %v2474
        %v2523 = vpack.c.bf16 %v2479, %v2477
        %v2524 = vpack.c.bf16 %v2480, %v2478
        %v2525 = vpack.c.bf16 %v2483, %v2481
        %v2526 = vpack.c.bf16 %v2484, %v2482
        %v2527 = vpack.c.bf16 %v2487, %v2485
        %v2528 = vpack.c.bf16 %v2488, %v2486
        %v2529 = vpack.c.bf16 %v2491, %v2489
        %v2530 = vpack.c.bf16 %v2492, %v2490
        %v2531 = vpack.c.bf16 %v2495, %v2493
        %v2532 = vpack.c.bf16 %v2496, %v2494
        %v2533 = vpack.c.bf16 %v2499, %v2497
        %v2534 = vpack.c.bf16 %v2500, %v2498
        %v2535 = vpack.c.bf16 %v2503, %v2501
        %v2536 = vpack.c.bf16 %v2504, %v2502
        %v2537 = vld [vmem:[#allocation8] sm:$0xff]
        %v2538 = vld [vmem:[#allocation8 + $0x8] sm:$0xff]
        %v2539 = vld [vmem:[#allocation8 + $0x10] sm:$0xff]
        %v2540 = vld [vmem:[#allocation8 + $0x18] sm:$0xff]
        %v2541 = vld [vmem:[#allocation8 + $0x20] sm:$0xff]
        %v2542 = vld [vmem:[#allocation8 + $0x28] sm:$0xff]
        %v2543 = vld [vmem:[#allocation8 + $0x30] sm:$0xff]
        %v2544 = vld [vmem:[#allocation8 + $0x38] sm:$0xff]
        %v2545 = vld [vmem:[#allocation8 + $0x40] sm:$0xff]
        %v2546 = vld [vmem:[#allocation8 + $0x48] sm:$0xff]
        %v2547 = vld [vmem:[#allocation8 + $0x50] sm:$0xff]
        %v2548 = vld [vmem:[#allocation8 + $0x58] sm:$0xff]
        %v2549 = vld [vmem:[#allocation8 + $0x60] sm:$0xff]
        %v2550 = vld [vmem:[#allocation8 + $0x68] sm:$0xff]
        %v2551 = vld [vmem:[#allocation8 + $0x70] sm:$0xff]
        %v2552 = vld [vmem:[#allocation8 + $0x78] sm:$0xff]
        %v2553 = vld [vmem:[#allocation8 + $0x80] sm:$0xff]
        %v2554 = vld [vmem:[#allocation8 + $0x88] sm:$0xff]
        %v2555 = vld [vmem:[#allocation8 + $0x90] sm:$0xff]
        %v2556 = vld [vmem:[#allocation8 + $0x98] sm:$0xff]
        %v2557 = vld [vmem:[#allocation8 + $0xa0] sm:$0xff]
        %v2558 = vld [vmem:[#allocation8 + $0xa8] sm:$0xff]
        %v2559 = vld [vmem:[#allocation8 + $0xb0] sm:$0xff]
        %v2560 = vld [vmem:[#allocation8 + $0xb8] sm:$0xff]
        %v2561 = vld [vmem:[#allocation8 + $0xc0] sm:$0xff]
        %v2562 = vld [vmem:[#allocation8 + $0xc8] sm:$0xff]
        %v2563 = vld [vmem:[#allocation8 + $0xd0] sm:$0xff]
        %v2564 = vld [vmem:[#allocation8 + $0xd8] sm:$0xff]
        %v2565 = vld [vmem:[#allocation8 + $0xe0] sm:$0xff]
        %v2566 = vld [vmem:[#allocation8 + $0xe8] sm:$0xff]
        %v2567 = vld [vmem:[#allocation8 + $0xf0] sm:$0xff]
        %v2568 = vld [vmem:[#allocation8 + $0xf8] sm:$0xff]
        %v2569 = vld [vmem:[#allocation8 + $0x100] sm:$0xff]
        %v2570 = vld [vmem:[#allocation8 + $0x108] sm:$0xff]
        %v2571 = vld [vmem:[#allocation8 + $0x110] sm:$0xff]
        %v2572 = vld [vmem:[#allocation8 + $0x118] sm:$0xff]
        %v2573 = vld [vmem:[#allocation8 + $0x120] sm:$0xff]
        %v2574 = vld [vmem:[#allocation8 + $0x128] sm:$0xff]
        %v2575 = vld [vmem:[#allocation8 + $0x130] sm:$0xff]
        %v2576 = vld [vmem:[#allocation8 + $0x138] sm:$0xff]
        %v2577 = vld [vmem:[#allocation8 + $0x140] sm:$0xff]
        %v2578 = vld [vmem:[#allocation8 + $0x148] sm:$0xff]
        %v2579 = vld [vmem:[#allocation8 + $0x150] sm:$0xff]
        %v2580 = vld [vmem:[#allocation8 + $0x158] sm:$0xff]
        %v2581 = vld [vmem:[#allocation8 + $0x160] sm:$0xff]
        %v2582 = vld [vmem:[#allocation8 + $0x168] sm:$0xff]
        %v2583 = vld [vmem:[#allocation8 + $0x170] sm:$0xff]
        %v2584 = vld [vmem:[#allocation8 + $0x178] sm:$0xff]
        %v2585 = vld [vmem:[#allocation8 + $0x180] sm:$0xff]
        %v2586 = vld [vmem:[#allocation8 + $0x188] sm:$0xff]
        %v2587 = vld [vmem:[#allocation8 + $0x190] sm:$0xff]
        %v2588 = vld [vmem:[#allocation8 + $0x198] sm:$0xff]
        %v2589 = vld [vmem:[#allocation8 + $0x1a0] sm:$0xff]
        %v2590 = vld [vmem:[#allocation8 + $0x1a8] sm:$0xff]
        %v2591 = vld [vmem:[#allocation8 + $0x1b0] sm:$0xff]
        %v2592 = vld [vmem:[#allocation8 + $0x1b8] sm:$0xff]
        %v2593 = vld [vmem:[#allocation8 + $0x1c0] sm:$0xff]
        %v2594 = vld [vmem:[#allocation8 + $0x1c8] sm:$0xff]
        %v2595 = vld [vmem:[#allocation8 + $0x1d0] sm:$0xff]
        %v2596 = vld [vmem:[#allocation8 + $0x1d8] sm:$0xff]
        %v2597 = vld [vmem:[#allocation8 + $0x1e0] sm:$0xff]
        %v2598 = vld [vmem:[#allocation8 + $0x1e8] sm:$0xff]
        %v2599 = vld [vmem:[#allocation8 + $0x1f0] sm:$0xff]
        %v2600 = vld [vmem:[#allocation8 + $0x1f8] sm:$0xff]
        %v2601 = vpack.c.bf16 %v2539, %v2537
        %v2602 = vpack.c.bf16 %v2540, %v2538
        %v2603 = vpack.c.bf16 %v2543, %v2541
        %v2604 = vpack.c.bf16 %v2544, %v2542
        %v2605 = vpack.c.bf16 %v2547, %v2545
        %v2606 = vpack.c.bf16 %v2548, %v2546
        %v2607 = vpack.c.bf16 %v2551, %v2549
        %v2608 = vpack.c.bf16 %v2552, %v2550
        %v2609 = vpack.c.bf16 %v2555, %v2553
        %v2610 = vpack.c.bf16 %v2556, %v2554
        %v2611 = vpack.c.bf16 %v2559, %v2557
        %v2612 = vpack.c.bf16 %v2560, %v2558
        %v2613 = vpack.c.bf16 %v2563, %v2561
        %v2614 = vpack.c.bf16 %v2564, %v2562
        %v2615 = vpack.c.bf16 %v2567, %v2565
        %v2616 = vpack.c.bf16 %v2568, %v2566
        %v2617 = vpack.c.bf16 %v2571, %v2569
        %v2618 = vpack.c.bf16 %v2572, %v2570
        %v2619 = vpack.c.bf16 %v2575, %v2573
        %v2620 = vpack.c.bf16 %v2576, %v2574
        %v2621 = vpack.c.bf16 %v2579, %v2577
        %v2622 = vpack.c.bf16 %v2580, %v2578
        %v2623 = vpack.c.bf16 %v2583, %v2581
        %v2624 = vpack.c.bf16 %v2584, %v2582
        %v2625 = vpack.c.bf16 %v2587, %v2585
        %v2626 = vpack.c.bf16 %v2588, %v2586
        %v2627 = vpack.c.bf16 %v2591, %v2589
        %v2628 = vpack.c.bf16 %v2592, %v2590
        %v2629 = vpack.c.bf16 %v2595, %v2593
        %v2630 = vpack.c.bf16 %v2596, %v2594
        %v2631 = vpack.c.bf16 %v2599, %v2597
        %v2632 = vpack.c.bf16 %v2600, %v2598
        %v2633 = vld [vmem:[%s3] sm:$0x3]
        %v2635 = vlaneseq
        %v2636 = vshrl.u32 %v2635, 7
        %v2637 = vsub.s32 0, %v2636
        %v2638 = vrot.slane %v2633, %v2637
        %v2639 = vlaneseq
        %v2640 = vshrl.u32 %v2639, 7
        %v2641 = vsub.s32 1, %v2640
        %v2642 = vrot.slane %v2633, %v2641
        %2645 = vmatprep.subr.bf16.mxu0 %v2616
        %2646 = vmatpush1.bf16.msra.mxu0 %v2615
        %2647 = vmatprep.subr.bf16.mxu0 %v2614
        %2648 = vmatpush1.bf16.msra.mxu0 %v2613
        %2649 = vmatprep.subr.bf16.mxu0 %v2612
        %2650 = vmatpush1.bf16.msra.mxu0 %v2611
        %2651 = vmatprep.subr.bf16.mxu0 %v2610
        %2652 = vmatpush1.bf16.msra.mxu0 %v2609
        %2653 = vmatprep.subr.bf16.mxu0 %v2608
        %2654 = vmatpush1.bf16.msra.mxu0 %v2607
        %2655 = vmatprep.subr.bf16.mxu0 %v2606
        %2656 = vmatpush1.bf16.msra.mxu0 %v2605
        %2657 = vmatprep.subr.bf16.mxu0 %v2604
        %2658 = vmatpush1.bf16.msra.mxu0 %v2603
        %2659 = vmatprep.subr.bf16.mxu0 %v2602
        %2660 = vmatpush1.bf16.msra.mxu0 %v2601
        %2661 = vmatprep.subr.bf16.mxu0 %v2632
        %2662 = vmatpush2.bf16.msra.mxu0 %v2631
        %2663 = vmatprep.subr.bf16.mxu0 %v2630
        %2664 = vmatpush2.bf16.msra.mxu0 %v2629
        %2665 = vmatprep.subr.bf16.mxu0 %v2628
        %2666 = vmatpush2.bf16.msra.mxu0 %v2627
        %2667 = vmatprep.subr.bf16.mxu0 %v2626
        %2668 = vmatpush2.bf16.msra.mxu0 %v2625
        %2669 = vmatprep.subr.bf16.mxu0 %v2624
        %2670 = vmatpush2.bf16.msra.mxu0 %v2623
        %2671 = vmatprep.subr.bf16.mxu0 %v2622
        %2672 = vmatpush2.bf16.msra.mxu0 %v2621
        %2673 = vmatprep.subr.bf16.mxu0 %v2620
        %2674 = vmatpush2.bf16.msra.mxu0 %v2619
        %2675 = vmatprep.subr.bf16.mxu0 %v2618
        %2676 = vmatpush2.bf16.msra.mxu0 %v2617
        %2677 = vmatprep.mubr.bf16.mxu0 %v2506
        %2678 = vmatmul.mubr.bf16.gmra.mxu0 %v2505
        %v2679 = vpop.f32.mrf.mxu0
        %v2680 = vadd.f32 %v2638, %v2679
        %v2681 = vpop.f32.mrf.mxu0
        %v2682 = vadd.f32 %v2642, %v2681
        %v2683 = vpop.f32.mrf.mxu0
        %v2684 = vadd.f32 %v2638, %v2683
        %v2685 = vpop.f32.mrf.mxu0
        %v2686 = vadd.f32 %v2642, %v2685
        %2687 = vmatprep.mubr.bf16.mxu0 %v2508
        %2688 = vmatmul.mubr.bf16.gmra.mxu0 %v2507
        %v2689 = vpop.f32.mrf.mxu0
        %v2690 = vadd.f32 %v2638, %v2689
        %v2691 = vpop.f32.mrf.mxu0
        %v2692 = vadd.f32 %v2642, %v2691
        %v2693 = vpop.f32.mrf.mxu0
        %v2694 = vadd.f32 %v2638, %v2693
        %v2695 = vpop.f32.mrf.mxu0
        %v2696 = vadd.f32 %v2642, %v2695
        %2697 = vmatprep.mubr.bf16.mxu0 %v2510
        %2698 = vmatmul.mubr.bf16.gmra.mxu0 %v2509
        %v2699 = vpop.f32.mrf.mxu0
        %v2700 = vadd.f32 %v2638, %v2699
        %v2701 = vpop.f32.mrf.mxu0
        %v2702 = vadd.f32 %v2642, %v2701
        %v2703 = vpop.f32.mrf.mxu0
        %v2704 = vadd.f32 %v2638, %v2703
        %v2705 = vpop.f32.mrf.mxu0
        %v2706 = vadd.f32 %v2642, %v2705
        %2707 = vmatprep.mubr.bf16.mxu0 %v2512
        %2708 = vmatmul.mubr.bf16.gmra.mxu0 %v2511
        %v2709 = vpop.f32.mrf.mxu0
        %v2710 = vadd.f32 %v2638, %v2709
        %v2711 = vpop.f32.mrf.mxu0
        %v2712 = vadd.f32 %v2642, %v2711
        %v2713 = vpop.f32.mrf.mxu0
        %v2714 = vadd.f32 %v2638, %v2713
        %v2715 = vpop.f32.mrf.mxu0
        %v2716 = vadd.f32 %v2642, %v2715
        %2717 = vmatprep.mubr.bf16.mxu0 %v2514
        %2718 = vmatmul.mubr.bf16.gmra.mxu0 %v2513
        %v2719 = vpop.f32.mrf.mxu0
        %v2720 = vadd.f32 %v2638, %v2719
        %v2721 = vpop.f32.mrf.mxu0
        %v2722 = vadd.f32 %v2642, %v2721
        %v2723 = vpop.f32.mrf.mxu0
        %v2724 = vadd.f32 %v2638, %v2723
        %v2725 = vpop.f32.mrf.mxu0
        %v2726 = vadd.f32 %v2642, %v2725
        %2727 = vmatprep.mubr.bf16.mxu0 %v2516
        %2728 = vmatmul.mubr.bf16.gmra.mxu0 %v2515
        %v2729 = vpop.f32.mrf.mxu0
        %v2730 = vadd.f32 %v2638, %v2729
        %v2731 = vpop.f32.mrf.mxu0
        %v2732 = vadd.f32 %v2642, %v2731
        %v2733 = vpop.f32.mrf.mxu0
        %v2734 = vadd.f32 %v2638, %v2733
        %v2735 = vpop.f32.mrf.mxu0
        %v2736 = vadd.f32 %v2642, %v2735
        %2737 = vmatprep.mubr.bf16.mxu0 %v2518
        %2738 = vmatmul.mubr.bf16.gmra.mxu0 %v2517
        %v2739 = vpop.f32.mrf.mxu0
        %v2740 = vadd.f32 %v2638, %v2739
        %v2741 = vpop.f32.mrf.mxu0
        %v2742 = vadd.f32 %v2642, %v2741
        %v2743 = vpop.f32.mrf.mxu0
        %v2744 = vadd.f32 %v2638, %v2743
        %v2745 = vpop.f32.mrf.mxu0
        %v2746 = vadd.f32 %v2642, %v2745
        %2747 = vmatprep.mubr.bf16.mxu0 %v2520
        %2748 = vmatmul.mubr.bf16.gmra.mxu0 %v2519
        %v2749 = vpop.f32.mrf.mxu0
        %v2750 = vadd.f32 %v2638, %v2749
        %v2751 = vpop.f32.mrf.mxu0
        %v2752 = vadd.f32 %v2642, %v2751
        %v2753 = vpop.f32.mrf.mxu0
        %v2754 = vadd.f32 %v2638, %v2753
        %v2755 = vpop.f32.mrf.mxu0
        %v2756 = vadd.f32 %v2642, %v2755
        %2757 = vmatprep.mubr.bf16.mxu0 %v2522
        %2758 = vmatmul.mubr.bf16.gmra.mxu0 %v2521
        %v2759 = vpop.f32.mrf.mxu0
        %v2760 = vadd.f32 %v2638, %v2759
        %v2761 = vpop.f32.mrf.mxu0
        %v2762 = vadd.f32 %v2642, %v2761
        %v2763 = vpop.f32.mrf.mxu0
        %v2764 = vadd.f32 %v2638, %v2763
        %v2765 = vpop.f32.mrf.mxu0
        %v2766 = vadd.f32 %v2642, %v2765
        %2767 = vmatprep.mubr.bf16.mxu0 %v2524
        %2768 = vmatmul.mubr.bf16.gmra.mxu0 %v2523
        %v2769 = vpop.f32.mrf.mxu0
        %v2770 = vadd.f32 %v2638, %v2769
        %v2771 = vpop.f32.mrf.mxu0
        %v2772 = vadd.f32 %v2642, %v2771
        %v2773 = vpop.f32.mrf.mxu0
        %v2774 = vadd.f32 %v2638, %v2773
        %v2775 = vpop.f32.mrf.mxu0
        %v2776 = vadd.f32 %v2642, %v2775
        %2777 = vmatprep.mubr.bf16.mxu0 %v2526
        %2778 = vmatmul.mubr.bf16.gmra.mxu0 %v2525
        %v2779 = vpop.f32.mrf.mxu0
        %v2780 = vadd.f32 %v2638, %v2779
        %v2781 = vpop.f32.mrf.mxu0
        %v2782 = vadd.f32 %v2642, %v2781
        %v2783 = vpop.f32.mrf.mxu0
        %v2784 = vadd.f32 %v2638, %v2783
        %v2785 = vpop.f32.mrf.mxu0
        %v2786 = vadd.f32 %v2642, %v2785
        %2787 = vmatprep.mubr.bf16.mxu0 %v2528
        %2788 = vmatmul.mubr.bf16.gmra.mxu0 %v2527
        %v2789 = vpop.f32.mrf.mxu0
        %v2790 = vadd.f32 %v2638, %v2789
        %v2791 = vpop.f32.mrf.mxu0
        %v2792 = vadd.f32 %v2642, %v2791
        %v2793 = vpop.f32.mrf.mxu0
        %v2794 = vadd.f32 %v2638, %v2793
        %v2795 = vpop.f32.mrf.mxu0
        %v2796 = vadd.f32 %v2642, %v2795
        %2797 = vmatprep.mubr.bf16.mxu0 %v2530
        %2798 = vmatmul.mubr.bf16.gmra.mxu0 %v2529
        %v2799 = vpop.f32.mrf.mxu0
        %v2800 = vadd.f32 %v2638, %v2799
        %v2801 = vpop.f32.mrf.mxu0
        %v2802 = vadd.f32 %v2642, %v2801
        %v2803 = vpop.f32.mrf.mxu0
        %v2804 = vadd.f32 %v2638, %v2803
        %v2805 = vpop.f32.mrf.mxu0
        %v2806 = vadd.f32 %v2642, %v2805
        %2807 = vmatprep.mubr.bf16.mxu0 %v2532
        %2808 = vmatmul.mubr.bf16.gmra.mxu0 %v2531
        %v2809 = vpop.f32.mrf.mxu0
        %v2810 = vadd.f32 %v2638, %v2809
        %v2811 = vpop.f32.mrf.mxu0
        %v2812 = vadd.f32 %v2642, %v2811
        %v2813 = vpop.f32.mrf.mxu0
        %v2814 = vadd.f32 %v2638, %v2813
        %v2815 = vpop.f32.mrf.mxu0
        %v2816 = vadd.f32 %v2642, %v2815
        %2817 = vmatprep.mubr.bf16.mxu0 %v2534
        %2818 = vmatmul.mubr.bf16.gmra.mxu0 %v2533
        %v2819 = vpop.f32.mrf.mxu0
        %v2820 = vadd.f32 %v2638, %v2819
        %v2821 = vpop.f32.mrf.mxu0
        %v2822 = vadd.f32 %v2642, %v2821
        %v2823 = vpop.f32.mrf.mxu0
        %v2824 = vadd.f32 %v2638, %v2823
        %v2825 = vpop.f32.mrf.mxu0
        %v2826 = vadd.f32 %v2642, %v2825
        %2827 = vmatprep.mubr.bf16.mxu0 %v2536
        %2828 = vmatmul.mubr.bf16.gmra.mxu0 %v2535
        %v2829 = vpop.f32.mrf.mxu0
        %v2830 = vadd.f32 %v2638, %v2829
        %v2831 = vpop.f32.mrf.mxu0
        %v2832 = vadd.f32 %v2642, %v2831
        %v2833 = vpop.f32.mrf.mxu0
        %v2834 = vadd.f32 %v2638, %v2833
        %v2835 = vpop.f32.mrf.mxu0
        %v2836 = vadd.f32 %v2642, %v2835
        %2837 = vdwg.mxu0
        %v2838 = vpack.c.bf16 %v2684, %v2680
        %v2839 = vpack.c.bf16 %v2686, %v2682
        %v2840 = vpack.c.bf16 %v2694, %v2690
        %v2841 = vpack.c.bf16 %v2696, %v2692
        %v2842 = vpack.c.bf16 %v2704, %v2700
        %v2843 = vpack.c.bf16 %v2706, %v2702
        %v2844 = vpack.c.bf16 %v2714, %v2710
        %v2845 = vpack.c.bf16 %v2716, %v2712
        %v2846 = vpack.c.bf16 %v2724, %v2720
        %v2847 = vpack.c.bf16 %v2726, %v2722
        %v2848 = vpack.c.bf16 %v2734, %v2730
        %v2849 = vpack.c.bf16 %v2736, %v2732
        %v2850 = vpack.c.bf16 %v2744, %v2740
        %v2851 = vpack.c.bf16 %v2746, %v2742
        %v2852 = vpack.c.bf16 %v2754, %v2750
        %v2853 = vpack.c.bf16 %v2756, %v2752
        %v2854 = vpack.c.bf16 %v2764, %v2760
        %v2855 = vpack.c.bf16 %v2766, %v2762
        %v2856 = vpack.c.bf16 %v2774, %v2770
        %v2857 = vpack.c.bf16 %v2776, %v2772
        %v2858 = vpack.c.bf16 %v2784, %v2780
        %v2859 = vpack.c.bf16 %v2786, %v2782
        %v2860 = vpack.c.bf16 %v2794, %v2790
        %v2861 = vpack.c.bf16 %v2796, %v2792
        %v2862 = vpack.c.bf16 %v2804, %v2800
        %v2863 = vpack.c.bf16 %v2806, %v2802
        %v2864 = vpack.c.bf16 %v2814, %v2810
        %v2865 = vpack.c.bf16 %v2816, %v2812
        %v2866 = vpack.c.bf16 %v2824, %v2820
        %v2867 = vpack.c.bf16 %v2826, %v2822
        %v2868 = vpack.c.bf16 %v2834, %v2830
        %v2869 = vpack.c.bf16 %v2836, %v2832
        %v2870 = vld [vmem:[#allocation11] sm:$0xff]
        %v2871 = vld [vmem:[#allocation11 + $0x8] sm:$0xff]
        %v2872 = vld [vmem:[#allocation11 + $0x10] sm:$0xff]
        %v2873 = vld [vmem:[#allocation11 + $0x18] sm:$0xff]
        %v2874 = vld [vmem:[#allocation11 + $0x20] sm:$0xff]
        %v2875 = vld [vmem:[#allocation11 + $0x28] sm:$0xff]
        %v2876 = vld [vmem:[#allocation11 + $0x30] sm:$0xff]
        %v2877 = vld [vmem:[#allocation11 + $0x38] sm:$0xff]
        %v2878 = vld [vmem:[#allocation11 + $0x40] sm:$0xff]
        %v2879 = vld [vmem:[#allocation11 + $0x48] sm:$0xff]
        %v2880 = vld [vmem:[#allocation11 + $0x50] sm:$0xff]
        %v2881 = vld [vmem:[#allocation11 + $0x58] sm:$0xff]
        %v2882 = vld [vmem:[#allocation11 + $0x60] sm:$0xff]
        %v2883 = vld [vmem:[#allocation11 + $0x68] sm:$0xff]
        %v2884 = vld [vmem:[#allocation11 + $0x70] sm:$0xff]
        %v2885 = vld [vmem:[#allocation11 + $0x78] sm:$0xff]
        %v2886 = vld [vmem:[#allocation11 + $0x80] sm:$0xff]
        %v2887 = vld [vmem:[#allocation11 + $0x88] sm:$0xff]
        %v2888 = vld [vmem:[#allocation11 + $0x90] sm:$0xff]
        %v2889 = vld [vmem:[#allocation11 + $0x98] sm:$0xff]
        %v2890 = vld [vmem:[#allocation11 + $0xa0] sm:$0xff]
        %v2891 = vld [vmem:[#allocation11 + $0xa8] sm:$0xff]
        %v2892 = vld [vmem:[#allocation11 + $0xb0] sm:$0xff]
        %v2893 = vld [vmem:[#allocation11 + $0xb8] sm:$0xff]
        %v2894 = vld [vmem:[#allocation11 + $0xc0] sm:$0xff]
        %v2895 = vld [vmem:[#allocation11 + $0xc8] sm:$0xff]
        %v2896 = vld [vmem:[#allocation11 + $0xd0] sm:$0xff]
        %v2897 = vld [vmem:[#allocation11 + $0xd8] sm:$0xff]
        %v2898 = vld [vmem:[#allocation11 + $0xe0] sm:$0xff]
        %v2899 = vld [vmem:[#allocation11 + $0xe8] sm:$0xff]
        %v2900 = vld [vmem:[#allocation11 + $0xf0] sm:$0xff]
        %v2901 = vld [vmem:[#allocation11 + $0xf8] sm:$0xff]
        %v2902 = vld [vmem:[#allocation11 + $0x100] sm:$0xff]
        %v2903 = vld [vmem:[#allocation11 + $0x108] sm:$0xff]
        %v2904 = vld [vmem:[#allocation11 + $0x110] sm:$0xff]
        %v2905 = vld [vmem:[#allocation11 + $0x118] sm:$0xff]
        %v2906 = vld [vmem:[#allocation11 + $0x120] sm:$0xff]
        %v2907 = vld [vmem:[#allocation11 + $0x128] sm:$0xff]
        %v2908 = vld [vmem:[#allocation11 + $0x130] sm:$0xff]
        %v2909 = vld [vmem:[#allocation11 + $0x138] sm:$0xff]
        %v2910 = vld [vmem:[#allocation11 + $0x140] sm:$0xff]
        %v2911 = vld [vmem:[#allocation11 + $0x148] sm:$0xff]
        %v2912 = vld [vmem:[#allocation11 + $0x150] sm:$0xff]
        %v2913 = vld [vmem:[#allocation11 + $0x158] sm:$0xff]
        %v2914 = vld [vmem:[#allocation11 + $0x160] sm:$0xff]
        %v2915 = vld [vmem:[#allocation11 + $0x168] sm:$0xff]
        %v2916 = vld [vmem:[#allocation11 + $0x170] sm:$0xff]
        %v2917 = vld [vmem:[#allocation11 + $0x178] sm:$0xff]
        %v2918 = vld [vmem:[#allocation11 + $0x180] sm:$0xff]
        %v2919 = vld [vmem:[#allocation11 + $0x188] sm:$0xff]
        %v2920 = vld [vmem:[#allocation11 + $0x190] sm:$0xff]
        %v2921 = vld [vmem:[#allocation11 + $0x198] sm:$0xff]
        %v2922 = vld [vmem:[#allocation11 + $0x1a0] sm:$0xff]
        %v2923 = vld [vmem:[#allocation11 + $0x1a8] sm:$0xff]
        %v2924 = vld [vmem:[#allocation11 + $0x1b0] sm:$0xff]
        %v2925 = vld [vmem:[#allocation11 + $0x1b8] sm:$0xff]
        %v2926 = vld [vmem:[#allocation11 + $0x1c0] sm:$0xff]
        %v2927 = vld [vmem:[#allocation11 + $0x1c8] sm:$0xff]
        %v2928 = vld [vmem:[#allocation11 + $0x1d0] sm:$0xff]
        %v2929 = vld [vmem:[#allocation11 + $0x1d8] sm:$0xff]
        %v2930 = vld [vmem:[#allocation11 + $0x1e0] sm:$0xff]
        %v2931 = vld [vmem:[#allocation11 + $0x1e8] sm:$0xff]
        %v2932 = vld [vmem:[#allocation11 + $0x1f0] sm:$0xff]
        %v2933 = vld [vmem:[#allocation11 + $0x1f8] sm:$0xff]
        %v2934 = vpack.c.bf16 %v2872, %v2870
        %v2935 = vpack.c.bf16 %v2873, %v2871
        %v2936 = vpack.c.bf16 %v2876, %v2874
        %v2937 = vpack.c.bf16 %v2877, %v2875
        %v2938 = vpack.c.bf16 %v2880, %v2878
        %v2939 = vpack.c.bf16 %v2881, %v2879
        %v2940 = vpack.c.bf16 %v2884, %v2882
        %v2941 = vpack.c.bf16 %v2885, %v2883
        %v2942 = vpack.c.bf16 %v2888, %v2886
        %v2943 = vpack.c.bf16 %v2889, %v2887
        %v2944 = vpack.c.bf16 %v2892, %v2890
        %v2945 = vpack.c.bf16 %v2893, %v2891
        %v2946 = vpack.c.bf16 %v2896, %v2894
        %v2947 = vpack.c.bf16 %v2897, %v2895
        %v2948 = vpack.c.bf16 %v2900, %v2898
        %v2949 = vpack.c.bf16 %v2901, %v2899
        %v2950 = vpack.c.bf16 %v2904, %v2902
        %v2951 = vpack.c.bf16 %v2905, %v2903
        %v2952 = vpack.c.bf16 %v2908, %v2906
        %v2953 = vpack.c.bf16 %v2909, %v2907
        %v2954 = vpack.c.bf16 %v2912, %v2910
        %v2955 = vpack.c.bf16 %v2913, %v2911
        %v2956 = vpack.c.bf16 %v2916, %v2914
        %v2957 = vpack.c.bf16 %v2917, %v2915
        %v2958 = vpack.c.bf16 %v2920, %v2918
        %v2959 = vpack.c.bf16 %v2921, %v2919
        %v2960 = vpack.c.bf16 %v2924, %v2922
        %v2961 = vpack.c.bf16 %v2925, %v2923
        %v2962 = vpack.c.bf16 %v2928, %v2926
        %v2963 = vpack.c.bf16 %v2929, %v2927
        %v2964 = vpack.c.bf16 %v2932, %v2930
        %v2965 = vpack.c.bf16 %v2933, %v2931
        %v2966 = vld [vmem:[#allocation2] sm:$0xf]
        %v2967 = vld [vmem:[#allocation2 + $0x10] sm:$0xf]
        %v2968 = vld [vmem:[#allocation2 + $0x20] sm:$0xf]
        %v2969 = vld [vmem:[#allocation2 + $0x30] sm:$0xf]
        %v2970 = vld [vmem:[#allocation2 + $0x40] sm:$0xf]
        %v2971 = vld [vmem:[#allocation2 + $0x50] sm:$0xf]
        %v2972 = vld [vmem:[#allocation2 + $0x60] sm:$0xf]
        %v2973 = vld [vmem:[#allocation2 + $0x70] sm:$0xf]
        %v2974 = vld [vmem:[#allocation2 + $0x80] sm:$0xf]
        %v2975 = vld [vmem:[#allocation2 + $0x90] sm:$0xf]
        %v2976 = vld [vmem:[#allocation2 + $0xa0] sm:$0xf]
        %v2977 = vld [vmem:[#allocation2 + $0xb0] sm:$0xf]
        %v2978 = vld [vmem:[#allocation2 + $0xc0] sm:$0xf]
        %v2979 = vld [vmem:[#allocation2 + $0xd0] sm:$0xf]
        %v2980 = vld [vmem:[#allocation2 + $0xe0] sm:$0xf]
        %v2981 = vld [vmem:[#allocation2 + $0xf0] sm:$0xf]
        %v2982 = vld [vmem:[#allocation2 + $0x100] sm:$0xf]
        %v2983 = vld [vmem:[#allocation2 + $0x110] sm:$0xf]
        %v2984 = vld [vmem:[#allocation2 + $0x120] sm:$0xf]
        %v2985 = vld [vmem:[#allocation2 + $0x130] sm:$0xf]
        %v2986 = vld [vmem:[#allocation2 + $0x140] sm:$0xf]
        %v2987 = vld [vmem:[#allocation2 + $0x150] sm:$0xf]
        %v2988 = vld [vmem:[#allocation2 + $0x160] sm:$0xf]
        %v2989 = vld [vmem:[#allocation2 + $0x170] sm:$0xf]
        %v2990 = vld [vmem:[#allocation2 + $0x180] sm:$0xf]
        %v2991 = vld [vmem:[#allocation2 + $0x190] sm:$0xf]
        %v2992 = vld [vmem:[#allocation2 + $0x1a0] sm:$0xf]
        %v2993 = vld [vmem:[#allocation2 + $0x1b0] sm:$0xf]
        %v2994 = vld [vmem:[#allocation2 + $0x1c0] sm:$0xf]
        %v2995 = vld [vmem:[#allocation2 + $0x1d0] sm:$0xf]
        %v2996 = vld [vmem:[#allocation2 + $0x1e0] sm:$0xf]
        %v2997 = vld [vmem:[#allocation2 + $0x1f0] sm:$0xf]
        %v2998 = vld [vmem:[#allocation2 + $0x200] sm:$0xf]
        %v2999 = vld [vmem:[#allocation2 + $0x210] sm:$0xf]
        %v3000 = vld [vmem:[#allocation2 + $0x220] sm:$0xf]
        %v3001 = vld [vmem:[#allocation2 + $0x230] sm:$0xf]
        %v3002 = vld [vmem:[#allocation2 + $0x240] sm:$0xf]
        %v3003 = vld [vmem:[#allocation2 + $0x250] sm:$0xf]
        %v3004 = vld [vmem:[#allocation2 + $0x260] sm:$0xf]
        %v3005 = vld [vmem:[#allocation2 + $0x270] sm:$0xf]
        %v3006 = vld [vmem:[#allocation2 + $0x280] sm:$0xf]
        %v3007 = vld [vmem:[#allocation2 + $0x290] sm:$0xf]
        %v3008 = vld [vmem:[#allocation2 + $0x2a0] sm:$0xf]
        %v3009 = vld [vmem:[#allocation2 + $0x2b0] sm:$0xf]
        %v3010 = vld [vmem:[#allocation2 + $0x2c0] sm:$0xf]
        %v3011 = vld [vmem:[#allocation2 + $0x2d0] sm:$0xf]
        %v3012 = vld [vmem:[#allocation2 + $0x2e0] sm:$0xf]
        %v3013 = vld [vmem:[#allocation2 + $0x2f0] sm:$0xf]
        %v3014 = vld [vmem:[#allocation2 + $0x300] sm:$0xf]
        %v3015 = vld [vmem:[#allocation2 + $0x310] sm:$0xf]
        %v3016 = vld [vmem:[#allocation2 + $0x320] sm:$0xf]
        %v3017 = vld [vmem:[#allocation2 + $0x330] sm:$0xf]
        %v3018 = vld [vmem:[#allocation2 + $0x340] sm:$0xf]
        %v3019 = vld [vmem:[#allocation2 + $0x350] sm:$0xf]
        %v3020 = vld [vmem:[#allocation2 + $0x360] sm:$0xf]
        %v3021 = vld [vmem:[#allocation2 + $0x370] sm:$0xf]
        %v3022 = vld [vmem:[#allocation2 + $0x380] sm:$0xf]
        %v3023 = vld [vmem:[#allocation2 + $0x390] sm:$0xf]
        %v3024 = vld [vmem:[#allocation2 + $0x3a0] sm:$0xf]
        %v3025 = vld [vmem:[#allocation2 + $0x3b0] sm:$0xf]
        %v3026 = vld [vmem:[#allocation2 + $0x3c0] sm:$0xf]
        %v3027 = vld [vmem:[#allocation2 + $0x3d0] sm:$0xf]
        %v3028 = vld [vmem:[#allocation2 + $0x3e0] sm:$0xf]
        %v3029 = vld [vmem:[#allocation2 + $0x3f0] sm:$0xf]
        %v3030 = vld [vmem:[#allocation2 + $0x8] sm:$0xf]
        %v3031 = vld [vmem:[#allocation2 + $0x18] sm:$0xf]
        %v3032 = vld [vmem:[#allocation2 + $0x28] sm:$0xf]
        %v3033 = vld [vmem:[#allocation2 + $0x38] sm:$0xf]
        %v3034 = vld [vmem:[#allocation2 + $0x48] sm:$0xf]
        %v3035 = vld [vmem:[#allocation2 + $0x58] sm:$0xf]
        %v3036 = vld [vmem:[#allocation2 + $0x68] sm:$0xf]
        %v3037 = vld [vmem:[#allocation2 + $0x78] sm:$0xf]
        %v3038 = vld [vmem:[#allocation2 + $0x88] sm:$0xf]
        %v3039 = vld [vmem:[#allocation2 + $0x98] sm:$0xf]
        %v3040 = vld [vmem:[#allocation2 + $0xa8] sm:$0xf]
        %v3041 = vld [vmem:[#allocation2 + $0xb8] sm:$0xf]
        %v3042 = vld [vmem:[#allocation2 + $0xc8] sm:$0xf]
        %v3043 = vld [vmem:[#allocation2 + $0xd8] sm:$0xf]
        %v3044 = vld [vmem:[#allocation2 + $0xe8] sm:$0xf]
        %v3045 = vld [vmem:[#allocation2 + $0xf8] sm:$0xf]
        %v3046 = vld [vmem:[#allocation2 + $0x108] sm:$0xf]
        %v3047 = vld [vmem:[#allocation2 + $0x118] sm:$0xf]
        %v3048 = vld [vmem:[#allocation2 + $0x128] sm:$0xf]
        %v3049 = vld [vmem:[#allocation2 + $0x138] sm:$0xf]
        %v3050 = vld [vmem:[#allocation2 + $0x148] sm:$0xf]
        %v3051 = vld [vmem:[#allocation2 + $0x158] sm:$0xf]
        %v3052 = vld [vmem:[#allocation2 + $0x168] sm:$0xf]
        %v3053 = vld [vmem:[#allocation2 + $0x178] sm:$0xf]
        %v3054 = vld [vmem:[#allocation2 + $0x188] sm:$0xf]
        %v3055 = vld [vmem:[#allocation2 + $0x198] sm:$0xf]
        %v3056 = vld [vmem:[#allocation2 + $0x1a8] sm:$0xf]
        %v3057 = vld [vmem:[#allocation2 + $0x1b8] sm:$0xf]
        %v3058 = vld [vmem:[#allocation2 + $0x1c8] sm:$0xf]
        %v3059 = vld [vmem:[#allocation2 + $0x1d8] sm:$0xf]
        %v3060 = vld [vmem:[#allocation2 + $0x1e8] sm:$0xf]
        %v3061 = vld [vmem:[#allocation2 + $0x1f8] sm:$0xf]
        %v3062 = vld [vmem:[#allocation2 + $0x208] sm:$0xf]
        %v3063 = vld [vmem:[#allocation2 + $0x218] sm:$0xf]
        %v3064 = vld [vmem:[#allocation2 + $0x228] sm:$0xf]
        %v3065 = vld [vmem:[#allocation2 + $0x238] sm:$0xf]
        %v3066 = vld [vmem:[#allocation2 + $0x248] sm:$0xf]
        %v3067 = vld [vmem:[#allocation2 + $0x258] sm:$0xf]
        %v3068 = vld [vmem:[#allocation2 + $0x268] sm:$0xf]
        %v3069 = vld [vmem:[#allocation2 + $0x278] sm:$0xf]
        %v3070 = vld [vmem:[#allocation2 + $0x288] sm:$0xf]
        %v3071 = vld [vmem:[#allocation2 + $0x298] sm:$0xf]
        %v3072 = vld [vmem:[#allocation2 + $0x2a8] sm:$0xf]
        %v3073 = vld [vmem:[#allocation2 + $0x2b8] sm:$0xf]
        %v3074 = vld [vmem:[#allocation2 + $0x2c8] sm:$0xf]
        %v3075 = vld [vmem:[#allocation2 + $0x2d8] sm:$0xf]
        %v3076 = vld [vmem:[#allocation2 + $0x2e8] sm:$0xf]
        %v3077 = vld [vmem:[#allocation2 + $0x2f8] sm:$0xf]
        %v3078 = vld [vmem:[#allocation2 + $0x308] sm:$0xf]
        %v3079 = vld [vmem:[#allocation2 + $0x318] sm:$0xf]
        %v3080 = vld [vmem:[#allocation2 + $0x328] sm:$0xf]
        %v3081 = vld [vmem:[#allocation2 + $0x338] sm:$0xf]
        %v3082 = vld [vmem:[#allocation2 + $0x348] sm:$0xf]
        %v3083 = vld [vmem:[#allocation2 + $0x358] sm:$0xf]
        %v3084 = vld [vmem:[#allocation2 + $0x368] sm:$0xf]
        %v3085 = vld [vmem:[#allocation2 + $0x378] sm:$0xf]
        %v3086 = vld [vmem:[#allocation2 + $0x388] sm:$0xf]
        %v3087 = vld [vmem:[#allocation2 + $0x398] sm:$0xf]
        %v3088 = vld [vmem:[#allocation2 + $0x3a8] sm:$0xf]
        %v3089 = vld [vmem:[#allocation2 + $0x3b8] sm:$0xf]
        %v3090 = vld [vmem:[#allocation2 + $0x3c8] sm:$0xf]
        %v3091 = vld [vmem:[#allocation2 + $0x3d8] sm:$0xf]
        %v3092 = vld [vmem:[#allocation2 + $0x3e8] sm:$0xf]
        %v3093 = vld [vmem:[#allocation2 + $0x3f8] sm:$0xf]
        %v3158 = vunpack.c.l.b16 %v2966
        %v3159 = vunpack.c.l.b16 %v2967
        %v3160 = vunpack.c.l.b16 %v2968
        %v3161 = vunpack.c.l.b16 %v2969
        %v3162 = vunpack.c.l.b16 %v2970
        %v3163 = vunpack.c.l.b16 %v2971
        %v3164 = vunpack.c.l.b16 %v2972
        %v3165 = vunpack.c.l.b16 %v2973
        %v3166 = vunpack.c.l.b16 %v2974
        %v3167 = vunpack.c.l.b16 %v2975
        %v3168 = vunpack.c.l.b16 %v2976
        %v3169 = vunpack.c.l.b16 %v2977
        %v3170 = vunpack.c.l.b16 %v2978
        %v3171 = vunpack.c.l.b16 %v2979
        %v3172 = vunpack.c.l.b16 %v2980
        %v3173 = vunpack.c.l.b16 %v2981
        %v3174 = vunpack.c.l.b16 %v2982
        %v3175 = vunpack.c.l.b16 %v2983
        %v3176 = vunpack.c.l.b16 %v2984
        %v3177 = vunpack.c.l.b16 %v2985
        %v3178 = vunpack.c.l.b16 %v2986
        %v3179 = vunpack.c.l.b16 %v2987
        %v3180 = vunpack.c.l.b16 %v2988
        %v3181 = vunpack.c.l.b16 %v2989
        %v3182 = vunpack.c.l.b16 %v2990
        %v3183 = vunpack.c.l.b16 %v2991
        %v3184 = vunpack.c.l.b16 %v2992
        %v3185 = vunpack.c.l.b16 %v2993
        %v3186 = vunpack.c.l.b16 %v2994
        %v3187 = vunpack.c.l.b16 %v2995
        %v3188 = vunpack.c.l.b16 %v2996
        %v3189 = vunpack.c.l.b16 %v2997
        %v3190 = vunpack.c.l.b16 %v2998
        %v3191 = vunpack.c.l.b16 %v2999
        %v3192 = vunpack.c.l.b16 %v3000
        %v3193 = vunpack.c.l.b16 %v3001
        %v3194 = vunpack.c.l.b16 %v3002
        %v3195 = vunpack.c.l.b16 %v3003
        %v3196 = vunpack.c.l.b16 %v3004
        %v3197 = vunpack.c.l.b16 %v3005
        %v3198 = vunpack.c.l.b16 %v3006
        %v3199 = vunpack.c.l.b16 %v3007
        %v3200 = vunpack.c.l.b16 %v3008
        %v3201 = vunpack.c.l.b16 %v3009
        %v3202 = vunpack.c.l.b16 %v3010
        %v3203 = vunpack.c.l.b16 %v3011
        %v3204 = vunpack.c.l.b16 %v3012
        %v3205 = vunpack.c.l.b16 %v3013
        %v3206 = vunpack.c.l.b16 %v3014
        %v3207 = vunpack.c.l.b16 %v3015
        %v3208 = vunpack.c.l.b16 %v3016
        %v3209 = vunpack.c.l.b16 %v3017
        %v3210 = vunpack.c.l.b16 %v3018
        %v3211 = vunpack.c.l.b16 %v3019
        %v3212 = vunpack.c.l.b16 %v3020
        %v3213 = vunpack.c.l.b16 %v3021
        %v3214 = vunpack.c.l.b16 %v3022
        %v3215 = vunpack.c.l.b16 %v3023
        %v3216 = vunpack.c.l.b16 %v3024
        %v3217 = vunpack.c.l.b16 %v3025
        %v3218 = vunpack.c.l.b16 %v3026
        %v3219 = vunpack.c.l.b16 %v3027
        %v3220 = vunpack.c.l.b16 %v3028
        %v3221 = vunpack.c.l.b16 %v3029
        %v3222 = vpack.c.b16 %v3159, %v3158
        %v3223 = vpack.c.b16 %v3161, %v3160
        %v3224 = vpack.c.b16 %v3163, %v3162
        %v3225 = vpack.c.b16 %v3165, %v3164
        %v3226 = vpack.c.b16 %v3167, %v3166
        %v3227 = vpack.c.b16 %v3169, %v3168
        %v3228 = vpack.c.b16 %v3171, %v3170
        %v3229 = vpack.c.b16 %v3173, %v3172
        %v3230 = vpack.c.b16 %v3175, %v3174
        %v3231 = vpack.c.b16 %v3177, %v3176
        %v3232 = vpack.c.b16 %v3179, %v3178
        %v3233 = vpack.c.b16 %v3181, %v3180
        %v3234 = vpack.c.b16 %v3183, %v3182
        %v3235 = vpack.c.b16 %v3185, %v3184
        %v3236 = vpack.c.b16 %v3187, %v3186
        %v3237 = vpack.c.b16 %v3189, %v3188
        %v3238 = vpack.c.b16 %v3191, %v3190
        %v3239 = vpack.c.b16 %v3193, %v3192
        %v3240 = vpack.c.b16 %v3195, %v3194
        %v3241 = vpack.c.b16 %v3197, %v3196
        %v3242 = vpack.c.b16 %v3199, %v3198
        %v3243 = vpack.c.b16 %v3201, %v3200
        %v3244 = vpack.c.b16 %v3203, %v3202
        %v3245 = vpack.c.b16 %v3205, %v3204
        %v3246 = vpack.c.b16 %v3207, %v3206
        %v3247 = vpack.c.b16 %v3209, %v3208
        %v3248 = vpack.c.b16 %v3211, %v3210
        %v3249 = vpack.c.b16 %v3213, %v3212
        %v3250 = vpack.c.b16 %v3215, %v3214
        %v3251 = vpack.c.b16 %v3217, %v3216
        %v3252 = vpack.c.b16 %v3219, %v3218
        %v3253 = vpack.c.b16 %v3221, %v3220
        %3286 = vmatprep.subr.bf16.mxu0 0
        %3287 = vmatpush1.bf16.xpose.msra.mxu0 %v3229
        %3288 = vmatprep.subr.bf16.mxu0 0
        %3289 = vmatpush1.bf16.xpose.msra.mxu0 %v3228
        %3290 = vmatprep.subr.bf16.mxu0 0
        %3291 = vmatpush1.bf16.xpose.msra.mxu0 %v3227
        %3292 = vmatprep.subr.bf16.mxu0 0
        %3293 = vmatpush1.bf16.xpose.msra.mxu0 %v3226
        %3294 = vmatprep.subr.bf16.mxu0 0
        %3295 = vmatpush1.bf16.xpose.msra.mxu0 %v3225
        %3296 = vmatprep.subr.bf16.mxu0 0
        %3297 = vmatpush1.bf16.xpose.msra.mxu0 %v3224
        %3298 = vmatprep.subr.bf16.mxu0 0
        %3299 = vmatpush1.bf16.xpose.msra.mxu0 %v3223
        %3300 = vmatprep.subr.bf16.mxu0 0
        %3301 = vmatpush1.bf16.xpose.msra.mxu0 %v3222
        %3302 = vmatprep.subr.bf16.mxu0 0
        %3303 = vmatpush2.bf16.xpose.msra.mxu0 %v3237
        %3304 = vmatprep.subr.bf16.mxu0 0
        %3305 = vmatpush2.bf16.xpose.msra.mxu0 %v3236
        %3306 = vmatprep.subr.bf16.mxu0 0
        %3307 = vmatpush2.bf16.xpose.msra.mxu0 %v3235
        %3308 = vmatprep.subr.bf16.mxu0 0
        %3309 = vmatpush2.bf16.xpose.msra.mxu0 %v3234
        %3310 = vmatprep.subr.bf16.mxu0 0
        %3311 = vmatpush2.bf16.xpose.msra.mxu0 %v3233
        %3312 = vmatprep.subr.bf16.mxu0 0
        %3313 = vmatpush2.bf16.xpose.msra.mxu0 %v3232
        %3314 = vmatprep.subr.bf16.mxu0 0
        %3315 = vmatpush2.bf16.xpose.msra.mxu0 %v3231
        %3316 = vmatprep.subr.bf16.mxu0 0
        %3317 = vmatpush2.bf16.xpose.msra.mxu0 %v3230
        %3318 = vmatprep.mubr.bf16.mxu0 0
        %3319 = vmatmul.mubr.bf16.gmra.mxu0 %v2838
        %v3320 = vpop.f32.mrf.mxu0
        %v3321 = vadd.f32 0.0, %v3320
        %v3322 = vpop.f32.mrf.mxu0
        %v3323 = vadd.f32 0.0, %v3322
        %v3324 = vpop.f32.mrf.mxu0
        %v3325 = vadd.f32 0.0, %v3324
        %v3326 = vpop.f32.mrf.mxu0
        %v3327 = vadd.f32 0.0, %v3326
        %3328 = vmatprep.mubr.bf16.mxu0 0
        %3329 = vmatmul.mubr.bf16.gmra.mxu0 %v2840
        %v3330 = vpop.f32.mrf.mxu0
        %v3331 = vadd.f32 0.0, %v3330
        %v3332 = vpop.f32.mrf.mxu0
        %v3333 = vadd.f32 0.0, %v3332
        %v3334 = vpop.f32.mrf.mxu0
        %v3335 = vadd.f32 0.0, %v3334
        %v3336 = vpop.f32.mrf.mxu0
        %v3337 = vadd.f32 0.0, %v3336
        %3338 = vmatprep.mubr.bf16.mxu0 0
        %3339 = vmatmul.mubr.bf16.gmra.mxu0 %v2842
        %v3340 = vpop.f32.mrf.mxu0
        %v3341 = vadd.f32 0.0, %v3340
        %v3342 = vpop.f32.mrf.mxu0
        %v3343 = vadd.f32 0.0, %v3342
        %v3344 = vpop.f32.mrf.mxu0
        %v3345 = vadd.f32 0.0, %v3344
        %v3346 = vpop.f32.mrf.mxu0
        %v3347 = vadd.f32 0.0, %v3346
        %3348 = vmatprep.mubr.bf16.mxu0 0
        %3349 = vmatmul.mubr.bf16.gmra.mxu0 %v2844
        %v3350 = vpop.f32.mrf.mxu0
        %v3351 = vadd.f32 0.0, %v3350
        %v3352 = vpop.f32.mrf.mxu0
        %v3353 = vadd.f32 0.0, %v3352
        %v3354 = vpop.f32.mrf.mxu0
        %v3355 = vadd.f32 0.0, %v3354
        %v3356 = vpop.f32.mrf.mxu0
        %v3357 = vadd.f32 0.0, %v3356
        %3358 = vmatprep.mubr.bf16.mxu0 0
        %3359 = vmatmul.mubr.bf16.gmra.mxu0 %v2846
        %v3360 = vpop.f32.mrf.mxu0
        %v3361 = vadd.f32 0.0, %v3360
        %v3362 = vpop.f32.mrf.mxu0
        %v3363 = vadd.f32 0.0, %v3362
        %v3364 = vpop.f32.mrf.mxu0
        %v3365 = vadd.f32 0.0, %v3364
        %v3366 = vpop.f32.mrf.mxu0
        %v3367 = vadd.f32 0.0, %v3366
        %3368 = vmatprep.mubr.bf16.mxu0 0
        %3369 = vmatmul.mubr.bf16.gmra.mxu0 %v2848
        %v3370 = vpop.f32.mrf.mxu0
        %v3371 = vadd.f32 0.0, %v3370
        %v3372 = vpop.f32.mrf.mxu0
        %v3373 = vadd.f32 0.0, %v3372
        %v3374 = vpop.f32.mrf.mxu0
        %v3375 = vadd.f32 0.0, %v3374
        %v3376 = vpop.f32.mrf.mxu0
        %v3377 = vadd.f32 0.0, %v3376
        %3378 = vmatprep.mubr.bf16.mxu0 0
        %3379 = vmatmul.mubr.bf16.gmra.mxu0 %v2850
        %v3380 = vpop.f32.mrf.mxu0
        %v3381 = vadd.f32 0.0, %v3380
        %v3382 = vpop.f32.mrf.mxu0
        %v3383 = vadd.f32 0.0, %v3382
        %v3384 = vpop.f32.mrf.mxu0
        %v3385 = vadd.f32 0.0, %v3384
        %v3386 = vpop.f32.mrf.mxu0
        %v3387 = vadd.f32 0.0, %v3386
        %3388 = vmatprep.mubr.bf16.mxu0 0
        %3389 = vmatmul.mubr.bf16.gmra.mxu0 %v2852
        %v3390 = vpop.f32.mrf.mxu0
        %v3391 = vadd.f32 0.0, %v3390
        %v3392 = vpop.f32.mrf.mxu0
        %v3393 = vadd.f32 0.0, %v3392
        %v3394 = vpop.f32.mrf.mxu0
        %v3395 = vadd.f32 0.0, %v3394
        %v3396 = vpop.f32.mrf.mxu0
        %v3397 = vadd.f32 0.0, %v3396
        %3398 = vmatprep.mubr.bf16.mxu0 0
        %3399 = vmatmul.mubr.bf16.gmra.mxu0 %v2854
        %v3400 = vpop.f32.mrf.mxu0
        %v3401 = vadd.f32 0.0, %v3400
        %v3402 = vpop.f32.mrf.mxu0
        %v3403 = vadd.f32 0.0, %v3402
        %v3404 = vpop.f32.mrf.mxu0
        %v3405 = vadd.f32 0.0, %v3404
        %v3406 = vpop.f32.mrf.mxu0
        %v3407 = vadd.f32 0.0, %v3406
        %3408 = vmatprep.mubr.bf16.mxu0 0
        %3409 = vmatmul.mubr.bf16.gmra.mxu0 %v2856
        %v3410 = vpop.f32.mrf.mxu0
        %v3411 = vadd.f32 0.0, %v3410
        %v3412 = vpop.f32.mrf.mxu0
        %v3413 = vadd.f32 0.0, %v3412
        %v3414 = vpop.f32.mrf.mxu0
        %v3415 = vadd.f32 0.0, %v3414
        %v3416 = vpop.f32.mrf.mxu0
        %v3417 = vadd.f32 0.0, %v3416
        %3418 = vmatprep.mubr.bf16.mxu0 0
        %3419 = vmatmul.mubr.bf16.gmra.mxu0 %v2858
        %v3420 = vpop.f32.mrf.mxu0
        %v3421 = vadd.f32 0.0, %v3420
        %v3422 = vpop.f32.mrf.mxu0
        %v3423 = vadd.f32 0.0, %v3422
        %v3424 = vpop.f32.mrf.mxu0
        %v3425 = vadd.f32 0.0, %v3424
        %v3426 = vpop.f32.mrf.mxu0
        %v3427 = vadd.f32 0.0, %v3426
        %3428 = vmatprep.mubr.bf16.mxu0 0
        %3429 = vmatmul.mubr.bf16.gmra.mxu0 %v2860
        %v3430 = vpop.f32.mrf.mxu0
        %v3431 = vadd.f32 0.0, %v3430
        %v3432 = vpop.f32.mrf.mxu0
        %v3433 = vadd.f32 0.0, %v3432
        %v3434 = vpop.f32.mrf.mxu0
        %v3435 = vadd.f32 0.0, %v3434
        %v3436 = vpop.f32.mrf.mxu0
        %v3437 = vadd.f32 0.0, %v3436
        %3438 = vmatprep.mubr.bf16.mxu0 0
        %3439 = vmatmul.mubr.bf16.gmra.mxu0 %v2862
        %v3440 = vpop.f32.mrf.mxu0
        %v3441 = vadd.f32 0.0, %v3440
        %v3442 = vpop.f32.mrf.mxu0
        %v3443 = vadd.f32 0.0, %v3442
        %v3444 = vpop.f32.mrf.mxu0
        %v3445 = vadd.f32 0.0, %v3444
        %v3446 = vpop.f32.mrf.mxu0
        %v3447 = vadd.f32 0.0, %v3446
        %3448 = vmatprep.mubr.bf16.mxu0 0
        %3449 = vmatmul.mubr.bf16.gmra.mxu0 %v2864
        %v3450 = vpop.f32.mrf.mxu0
        %v3451 = vadd.f32 0.0, %v3450
        %v3452 = vpop.f32.mrf.mxu0
        %v3453 = vadd.f32 0.0, %v3452
        %v3454 = vpop.f32.mrf.mxu0
        %v3455 = vadd.f32 0.0, %v3454
        %v3456 = vpop.f32.mrf.mxu0
        %v3457 = vadd.f32 0.0, %v3456
        %3458 = vmatprep.mubr.bf16.mxu0 0
        %3459 = vmatmul.mubr.bf16.gmra.mxu0 %v2866
        %v3460 = vpop.f32.mrf.mxu0
        %v3461 = vadd.f32 0.0, %v3460
        %v3462 = vpop.f32.mrf.mxu0
        %v3463 = vadd.f32 0.0, %v3462
        %v3464 = vpop.f32.mrf.mxu0
        %v3465 = vadd.f32 0.0, %v3464
        %v3466 = vpop.f32.mrf.mxu0
        %v3467 = vadd.f32 0.0, %v3466
        %3468 = vmatprep.mubr.bf16.mxu0 0
        %3469 = vmatmul.mubr.bf16.gmra.mxu0 %v2868
        %v3470 = vpop.f32.mrf.mxu0
        %v3471 = vadd.f32 0.0, %v3470
        %v3472 = vpop.f32.mrf.mxu0
        %v3473 = vadd.f32 0.0, %v3472
        %v3474 = vpop.f32.mrf.mxu0
        %v3475 = vadd.f32 0.0, %v3474
        %v3476 = vpop.f32.mrf.mxu0
        %v3477 = vadd.f32 0.0, %v3476
        %3478 = vdwg.mxu0
        %3479 = vmatprep.subr.bf16.mxu0 0
        %3480 = vmatpush1.bf16.xpose.msra.mxu0 %v3245
        %3481 = vmatprep.subr.bf16.mxu0 0
        %3482 = vmatpush1.bf16.xpose.msra.mxu0 %v3244
        %3483 = vmatprep.subr.bf16.mxu0 0
        %3484 = vmatpush1.bf16.xpose.msra.mxu0 %v3243
        %3485 = vmatprep.subr.bf16.mxu0 0
        %3486 = vmatpush1.bf16.xpose.msra.mxu0 %v3242
        %3487 = vmatprep.subr.bf16.mxu0 0
        %3488 = vmatpush1.bf16.xpose.msra.mxu0 %v3241
        %3489 = vmatprep.subr.bf16.mxu0 0
        %3490 = vmatpush1.bf16.xpose.msra.mxu0 %v3240
        %3491 = vmatprep.subr.bf16.mxu0 0
        %3492 = vmatpush1.bf16.xpose.msra.mxu0 %v3239
        %3493 = vmatprep.subr.bf16.mxu0 0
        %3494 = vmatpush1.bf16.xpose.msra.mxu0 %v3238
        %3495 = vmatprep.subr.bf16.mxu0 0
        %3496 = vmatpush2.bf16.xpose.msra.mxu0 %v3253
        %3497 = vmatprep.subr.bf16.mxu0 0
        %3498 = vmatpush2.bf16.xpose.msra.mxu0 %v3252
        %3499 = vmatprep.subr.bf16.mxu0 0
        %3500 = vmatpush2.bf16.xpose.msra.mxu0 %v3251
        %3501 = vmatprep.subr.bf16.mxu0 0
        %3502 = vmatpush2.bf16.xpose.msra.mxu0 %v3250
        %3503 = vmatprep.subr.bf16.mxu0 0
        %3504 = vmatpush2.bf16.xpose.msra.mxu0 %v3249
        %3505 = vmatprep.subr.bf16.mxu0 0
        %3506 = vmatpush2.bf16.xpose.msra.mxu0 %v3248
        %3507 = vmatprep.subr.bf16.mxu0 0
        %3508 = vmatpush2.bf16.xpose.msra.mxu0 %v3247
        %3509 = vmatprep.subr.bf16.mxu0 0
        %3510 = vmatpush2.bf16.xpose.msra.mxu0 %v3246
        %3511 = vmatprep.mubr.bf16.mxu0 0
        %3512 = vmatmul.mubr.bf16.gmra.mxu0 %v2838
        %v3513 = vpop.f32.mrf.mxu0
        %v3514 = vadd.f32 0.0, %v3513
        %v3515 = vpop.f32.mrf.mxu0
        %v3516 = vadd.f32 0.0, %v3515
        %v3517 = vpop.f32.mrf.mxu0
        %v3518 = vadd.f32 0.0, %v3517
        %v3519 = vpop.f32.mrf.mxu0
        %v3520 = vadd.f32 0.0, %v3519
        %3521 = vmatprep.mubr.bf16.mxu0 0
        %3522 = vmatmul.mubr.bf16.gmra.mxu0 %v2840
        %v3523 = vpop.f32.mrf.mxu0
        %v3524 = vadd.f32 0.0, %v3523
        %v3525 = vpop.f32.mrf.mxu0
        %v3526 = vadd.f32 0.0, %v3525
        %v3527 = vpop.f32.mrf.mxu0
        %v3528 = vadd.f32 0.0, %v3527
        %v3529 = vpop.f32.mrf.mxu0
        %v3530 = vadd.f32 0.0, %v3529
        %3531 = vmatprep.mubr.bf16.mxu0 0
        %3532 = vmatmul.mubr.bf16.gmra.mxu0 %v2842
        %v3533 = vpop.f32.mrf.mxu0
        %v3534 = vadd.f32 0.0, %v3533
        %v3535 = vpop.f32.mrf.mxu0
        %v3536 = vadd.f32 0.0, %v3535
        %v3537 = vpop.f32.mrf.mxu0
        %v3538 = vadd.f32 0.0, %v3537
        %v3539 = vpop.f32.mrf.mxu0
        %v3540 = vadd.f32 0.0, %v3539
        %3541 = vmatprep.mubr.bf16.mxu0 0
        %3542 = vmatmul.mubr.bf16.gmra.mxu0 %v2844
        %v3543 = vpop.f32.mrf.mxu0
        %v3544 = vadd.f32 0.0, %v3543
        %v3545 = vpop.f32.mrf.mxu0
        %v3546 = vadd.f32 0.0, %v3545
        %v3547 = vpop.f32.mrf.mxu0
        %v3548 = vadd.f32 0.0, %v3547
        %v3549 = vpop.f32.mrf.mxu0
        %v3550 = vadd.f32 0.0, %v3549
        %3551 = vmatprep.mubr.bf16.mxu0 0
        %3552 = vmatmul.mubr.bf16.gmra.mxu0 %v2846
        %v3553 = vpop.f32.mrf.mxu0
        %v3554 = vadd.f32 0.0, %v3553
        %v3555 = vpop.f32.mrf.mxu0
        %v3556 = vadd.f32 0.0, %v3555
        %v3557 = vpop.f32.mrf.mxu0
        %v3558 = vadd.f32 0.0, %v3557
        %v3559 = vpop.f32.mrf.mxu0
        %v3560 = vadd.f32 0.0, %v3559
        %3561 = vmatprep.mubr.bf16.mxu0 0
        %3562 = vmatmul.mubr.bf16.gmra.mxu0 %v2848
        %v3563 = vpop.f32.mrf.mxu0
        %v3564 = vadd.f32 0.0, %v3563
        %v3565 = vpop.f32.mrf.mxu0
        %v3566 = vadd.f32 0.0, %v3565
        %v3567 = vpop.f32.mrf.mxu0
        %v3568 = vadd.f32 0.0, %v3567
        %v3569 = vpop.f32.mrf.mxu0
        %v3570 = vadd.f32 0.0, %v3569
        %3571 = vmatprep.mubr.bf16.mxu0 0
        %3572 = vmatmul.mubr.bf16.gmra.mxu0 %v2850
        %v3573 = vpop.f32.mrf.mxu0
        %v3574 = vadd.f32 0.0, %v3573
        %v3575 = vpop.f32.mrf.mxu0
        %v3576 = vadd.f32 0.0, %v3575
        %v3577 = vpop.f32.mrf.mxu0
        %v3578 = vadd.f32 0.0, %v3577
        %v3579 = vpop.f32.mrf.mxu0
        %v3580 = vadd.f32 0.0, %v3579
        %3581 = vmatprep.mubr.bf16.mxu0 0
        %3582 = vmatmul.mubr.bf16.gmra.mxu0 %v2852
        %v3583 = vpop.f32.mrf.mxu0
        %v3584 = vadd.f32 0.0, %v3583
        %v3585 = vpop.f32.mrf.mxu0
        %v3586 = vadd.f32 0.0, %v3585
        %v3587 = vpop.f32.mrf.mxu0
        %v3588 = vadd.f32 0.0, %v3587
        %v3589 = vpop.f32.mrf.mxu0
        %v3590 = vadd.f32 0.0, %v3589
        %3591 = vmatprep.mubr.bf16.mxu0 0
        %3592 = vmatmul.mubr.bf16.gmra.mxu0 %v2854
        %v3593 = vpop.f32.mrf.mxu0
        %v3594 = vadd.f32 0.0, %v3593
        %v3595 = vpop.f32.mrf.mxu0
        %v3596 = vadd.f32 0.0, %v3595
        %v3597 = vpop.f32.mrf.mxu0
        %v3598 = vadd.f32 0.0, %v3597
        %v3599 = vpop.f32.mrf.mxu0
        %v3600 = vadd.f32 0.0, %v3599
        %3601 = vmatprep.mubr.bf16.mxu0 0
        %3602 = vmatmul.mubr.bf16.gmra.mxu0 %v2856
        %v3603 = vpop.f32.mrf.mxu0
        %v3604 = vadd.f32 0.0, %v3603
        %v3605 = vpop.f32.mrf.mxu0
        %v3606 = vadd.f32 0.0, %v3605
        %v3607 = vpop.f32.mrf.mxu0
        %v3608 = vadd.f32 0.0, %v3607
        %v3609 = vpop.f32.mrf.mxu0
        %v3610 = vadd.f32 0.0, %v3609
        %3611 = vmatprep.mubr.bf16.mxu0 0
        %3612 = vmatmul.mubr.bf16.gmra.mxu0 %v2858
        %v3613 = vpop.f32.mrf.mxu0
        %v3614 = vadd.f32 0.0, %v3613
        %v3615 = vpop.f32.mrf.mxu0
        %v3616 = vadd.f32 0.0, %v3615
        %v3617 = vpop.f32.mrf.mxu0
        %v3618 = vadd.f32 0.0, %v3617
        %v3619 = vpop.f32.mrf.mxu0
        %v3620 = vadd.f32 0.0, %v3619
        %3621 = vmatprep.mubr.bf16.mxu0 0
        %3622 = vmatmul.mubr.bf16.gmra.mxu0 %v2860
        %v3623 = vpop.f32.mrf.mxu0
        %v3624 = vadd.f32 0.0, %v3623
        %v3625 = vpop.f32.mrf.mxu0
        %v3626 = vadd.f32 0.0, %v3625
        %v3627 = vpop.f32.mrf.mxu0
        %v3628 = vadd.f32 0.0, %v3627
        %v3629 = vpop.f32.mrf.mxu0
        %v3630 = vadd.f32 0.0, %v3629
        %3631 = vmatprep.mubr.bf16.mxu0 0
        %3632 = vmatmul.mubr.bf16.gmra.mxu0 %v2862
        %v3633 = vpop.f32.mrf.mxu0
        %v3634 = vadd.f32 0.0, %v3633
        %v3635 = vpop.f32.mrf.mxu0
        %v3636 = vadd.f32 0.0, %v3635
        %v3637 = vpop.f32.mrf.mxu0
        %v3638 = vadd.f32 0.0, %v3637
        %v3639 = vpop.f32.mrf.mxu0
        %v3640 = vadd.f32 0.0, %v3639
        %3641 = vmatprep.mubr.bf16.mxu0 0
        %3642 = vmatmul.mubr.bf16.gmra.mxu0 %v2864
        %v3643 = vpop.f32.mrf.mxu0
        %v3644 = vadd.f32 0.0, %v3643
        %v3645 = vpop.f32.mrf.mxu0
        %v3646 = vadd.f32 0.0, %v3645
        %v3647 = vpop.f32.mrf.mxu0
        %v3648 = vadd.f32 0.0, %v3647
        %v3649 = vpop.f32.mrf.mxu0
        %v3650 = vadd.f32 0.0, %v3649
        %3651 = vmatprep.mubr.bf16.mxu0 0
        %3652 = vmatmul.mubr.bf16.gmra.mxu0 %v2866
        %v3653 = vpop.f32.mrf.mxu0
        %v3654 = vadd.f32 0.0, %v3653
        %v3655 = vpop.f32.mrf.mxu0
        %v3656 = vadd.f32 0.0, %v3655
        %v3657 = vpop.f32.mrf.mxu0
        %v3658 = vadd.f32 0.0, %v3657
        %v3659 = vpop.f32.mrf.mxu0
        %v3660 = vadd.f32 0.0, %v3659
        %3661 = vmatprep.mubr.bf16.mxu0 0
        %3662 = vmatmul.mubr.bf16.gmra.mxu0 %v2868
        %v3663 = vpop.f32.mrf.mxu0
        %v3664 = vadd.f32 0.0, %v3663
        %v3665 = vpop.f32.mrf.mxu0
        %v3666 = vadd.f32 0.0, %v3665
        %v3667 = vpop.f32.mrf.mxu0
        %v3668 = vadd.f32 0.0, %v3667
        %v3669 = vpop.f32.mrf.mxu0
        %v3670 = vadd.f32 0.0, %v3669
        %3671 = vdwg.mxu0
        %v3672 = vmax.f32 %v3321, %v3323
        %v3673 = vmax.f32 %v3672, %v3514
        %v3674 = vmax.f32 %v3673, %v3516
        %3675 = vmax.xlane.f32.xlu0 %v3674
        %v3676 = vpop.xlane.xlu0 %3675
        %v3677 = vmax.f32 %v3325, %v3327
        %v3678 = vmax.f32 %v3677, %v3518
        %v3679 = vmax.f32 %v3678, %v3520
        %3680 = vmax.xlane.f32.xlu0 %v3679
        %v3681 = vpop.xlane.xlu0 %3680
        %v3682 = vmax.f32 %v3331, %v3333
        %v3683 = vmax.f32 %v3682, %v3524
        %v3684 = vmax.f32 %v3683, %v3526
        %3685 = vmax.xlane.f32.xlu0 %v3684
        %v3686 = vpop.xlane.xlu0 %3685
        %v3687 = vmax.f32 %v3335, %v3337
        %v3688 = vmax.f32 %v3687, %v3528
        %v3689 = vmax.f32 %v3688, %v3530
        %3690 = vmax.xlane.f32.xlu0 %v3689
        %v3691 = vpop.xlane.xlu0 %3690
        %v3692 = vmax.f32 %v3341, %v3343
        %v3693 = vmax.f32 %v3692, %v3534
        %v3694 = vmax.f32 %v3693, %v3536
        %3695 = vmax.xlane.f32.xlu0 %v3694
        %v3696 = vpop.xlane.xlu0 %3695
        %v3697 = vmax.f32 %v3345, %v3347
        %v3698 = vmax.f32 %v3697, %v3538
        %v3699 = vmax.f32 %v3698, %v3540
        %3700 = vmax.xlane.f32.xlu0 %v3699
        %v3701 = vpop.xlane.xlu0 %3700
        %v3702 = vmax.f32 %v3351, %v3353
        %v3703 = vmax.f32 %v3702, %v3544
        %v3704 = vmax.f32 %v3703, %v3546
        %3705 = vmax.xlane.f32.xlu0 %v3704
        %v3706 = vpop.xlane.xlu0 %3705
        %v3707 = vmax.f32 %v3355, %v3357
        %v3708 = vmax.f32 %v3707, %v3548
        %v3709 = vmax.f32 %v3708, %v3550
        %3710 = vmax.xlane.f32.xlu0 %v3709
        %v3711 = vpop.xlane.xlu0 %3710
        %v3712 = vmax.f32 %v3361, %v3363
        %v3713 = vmax.f32 %v3712, %v3554
        %v3714 = vmax.f32 %v3713, %v3556
        %3715 = vmax.xlane.f32.xlu0 %v3714
        %v3716 = vpop.xlane.xlu0 %3715
        %v3717 = vmax.f32 %v3365, %v3367
        %v3718 = vmax.f32 %v3717, %v3558
        %v3719 = vmax.f32 %v3718, %v3560
        %3720 = vmax.xlane.f32.xlu0 %v3719
        %v3721 = vpop.xlane.xlu0 %3720
        %v3722 = vmax.f32 %v3371, %v3373
        %v3723 = vmax.f32 %v3722, %v3564
        %v3724 = vmax.f32 %v3723, %v3566
        %3725 = vmax.xlane.f32.xlu0 %v3724
        %v3726 = vpop.xlane.xlu0 %3725
        %v3727 = vmax.f32 %v3375, %v3377
        %v3728 = vmax.f32 %v3727, %v3568
        %v3729 = vmax.f32 %v3728, %v3570
        %3730 = vmax.xlane.f32.xlu0 %v3729
        %v3731 = vpop.xlane.xlu0 %3730
        %v3732 = vmax.f32 %v3381, %v3383
        %v3733 = vmax.f32 %v3732, %v3574
        %v3734 = vmax.f32 %v3733, %v3576
        %3735 = vmax.xlane.f32.xlu0 %v3734
        %v3736 = vpop.xlane.xlu0 %3735
        %v3737 = vmax.f32 %v3385, %v3387
        %v3738 = vmax.f32 %v3737, %v3578
        %v3739 = vmax.f32 %v3738, %v3580
        %3740 = vmax.xlane.f32.xlu0 %v3739
        %v3741 = vpop.xlane.xlu0 %3740
        %v3742 = vmax.f32 %v3391, %v3393
        %v3743 = vmax.f32 %v3742, %v3584
        %v3744 = vmax.f32 %v3743, %v3586
        %3745 = vmax.xlane.f32.xlu0 %v3744
        %v3746 = vpop.xlane.xlu0 %3745
        %v3747 = vmax.f32 %v3395, %v3397
        %v3748 = vmax.f32 %v3747, %v3588
        %v3749 = vmax.f32 %v3748, %v3590
        %3750 = vmax.xlane.f32.xlu0 %v3749
        %v3751 = vpop.xlane.xlu0 %3750
        %v3752 = vmax.f32 %v3401, %v3403
        %v3753 = vmax.f32 %v3752, %v3594
        %v3754 = vmax.f32 %v3753, %v3596
        %3755 = vmax.xlane.f32.xlu0 %v3754
        %v3756 = vpop.xlane.xlu0 %3755
        %v3757 = vmax.f32 %v3405, %v3407
        %v3758 = vmax.f32 %v3757, %v3598
        %v3759 = vmax.f32 %v3758, %v3600
        %3760 = vmax.xlane.f32.xlu0 %v3759
        %v3761 = vpop.xlane.xlu0 %3760
        %v3762 = vmax.f32 %v3411, %v3413
        %v3763 = vmax.f32 %v3762, %v3604
        %v3764 = vmax.f32 %v3763, %v3606
        %3765 = vmax.xlane.f32.xlu0 %v3764
        %v3766 = vpop.xlane.xlu0 %3765
        %v3767 = vmax.f32 %v3415, %v3417
        %v3768 = vmax.f32 %v3767, %v3608
        %v3769 = vmax.f32 %v3768, %v3610
        %3770 = vmax.xlane.f32.xlu0 %v3769
        %v3771 = vpop.xlane.xlu0 %3770
        %v3772 = vmax.f32 %v3421, %v3423
        %v3773 = vmax.f32 %v3772, %v3614
        %v3774 = vmax.f32 %v3773, %v3616
        %3775 = vmax.xlane.f32.xlu0 %v3774
        %v3776 = vpop.xlane.xlu0 %3775
        %v3777 = vmax.f32 %v3425, %v3427
        %v3778 = vmax.f32 %v3777, %v3618
        %v3779 = vmax.f32 %v3778, %v3620
        %3780 = vmax.xlane.f32.xlu0 %v3779
        %v3781 = vpop.xlane.xlu0 %3780
        %v3782 = vmax.f32 %v3431, %v3433
        %v3783 = vmax.f32 %v3782, %v3624
        %v3784 = vmax.f32 %v3783, %v3626
        %3785 = vmax.xlane.f32.xlu0 %v3784
        %v3786 = vpop.xlane.xlu0 %3785
        %v3787 = vmax.f32 %v3435, %v3437
        %v3788 = vmax.f32 %v3787, %v3628
        %v3789 = vmax.f32 %v3788, %v3630
        %3790 = vmax.xlane.f32.xlu0 %v3789
        %v3791 = vpop.xlane.xlu0 %3790
        %v3792 = vmax.f32 %v3441, %v3443
        %v3793 = vmax.f32 %v3792, %v3634
        %v3794 = vmax.f32 %v3793, %v3636
        %3795 = vmax.xlane.f32.xlu0 %v3794
        %v3796 = vpop.xlane.xlu0 %3795
        %v3797 = vmax.f32 %v3445, %v3447
        %v3798 = vmax.f32 %v3797, %v3638
        %v3799 = vmax.f32 %v3798, %v3640
        %3800 = vmax.xlane.f32.xlu0 %v3799
        %v3801 = vpop.xlane.xlu0 %3800
        %v3802 = vmax.f32 %v3451, %v3453
        %v3803 = vmax.f32 %v3802, %v3644
        %v3804 = vmax.f32 %v3803, %v3646
        %3805 = vmax.xlane.f32.xlu0 %v3804
        %v3806 = vpop.xlane.xlu0 %3805
        %v3807 = vmax.f32 %v3455, %v3457
        %v3808 = vmax.f32 %v3807, %v3648
        %v3809 = vmax.f32 %v3808, %v3650
        %3810 = vmax.xlane.f32.xlu0 %v3809
        %v3811 = vpop.xlane.xlu0 %3810
        %v3812 = vmax.f32 %v3461, %v3463
        %v3813 = vmax.f32 %v3812, %v3654
        %v3814 = vmax.f32 %v3813, %v3656
        %3815 = vmax.xlane.f32.xlu0 %v3814
        %v3816 = vpop.xlane.xlu0 %3815
        %v3817 = vmax.f32 %v3465, %v3467
        %v3818 = vmax.f32 %v3817, %v3658
        %v3819 = vmax.f32 %v3818, %v3660
        %3820 = vmax.xlane.f32.xlu0 %v3819
        %v3821 = vpop.xlane.xlu0 %3820
        %v3822 = vmax.f32 %v3471, %v3473
        %v3823 = vmax.f32 %v3822, %v3664
        %v3824 = vmax.f32 %v3823, %v3666
        %3825 = vmax.xlane.f32.xlu0 %v3824
        %v3826 = vpop.xlane.xlu0 %3825
        %v3827 = vmax.f32 %v3475, %v3477
        %v3828 = vmax.f32 %v3827, %v3668
        %v3829 = vmax.f32 %v3828, %v3670
        %3830 = vmax.xlane.f32.xlu0 %v3829
        %v3831 = vpop.xlane.xlu0 %3830
        %v3832 = vsub.f32 %v3321, %v3676
        %v3833 = vsub.f32 %v3323, %v3676
        %v3834 = vsub.f32 %v3514, %v3676
        %v3835 = vsub.f32 %v3516, %v3676
        %v3836 = vsub.f32 %v3325, %v3681
        %v3837 = vsub.f32 %v3327, %v3681
        %v3838 = vsub.f32 %v3518, %v3681
        %v3839 = vsub.f32 %v3520, %v3681
        %v3840 = vsub.f32 %v3331, %v3686
        %v3841 = vsub.f32 %v3333, %v3686
        %v3842 = vsub.f32 %v3524, %v3686
        %v3843 = vsub.f32 %v3526, %v3686
        %v3844 = vsub.f32 %v3335, %v3691
        %v3845 = vsub.f32 %v3337, %v3691
        %v3846 = vsub.f32 %v3528, %v3691
        %v3847 = vsub.f32 %v3530, %v3691
        %v3848 = vsub.f32 %v3341, %v3696
        %v3849 = vsub.f32 %v3343, %v3696
        %v3850 = vsub.f32 %v3534, %v3696
        %v3851 = vsub.f32 %v3536, %v3696
        %v3852 = vsub.f32 %v3345, %v3701
        %v3853 = vsub.f32 %v3347, %v3701
        %v3854 = vsub.f32 %v3538, %v3701
        %v3855 = vsub.f32 %v3540, %v3701
        %v3856 = vsub.f32 %v3351, %v3706
        %v3857 = vsub.f32 %v3353, %v3706
        %v3858 = vsub.f32 %v3544, %v3706
        %v3859 = vsub.f32 %v3546, %v3706
        %v3860 = vsub.f32 %v3355, %v3711
        %v3861 = vsub.f32 %v3357, %v3711
        %v3862 = vsub.f32 %v3548, %v3711
        %v3863 = vsub.f32 %v3550, %v3711
        %v3864 = vsub.f32 %v3361, %v3716
        %v3865 = vsub.f32 %v3363, %v3716
        %v3866 = vsub.f32 %v3554, %v3716
        %v3867 = vsub.f32 %v3556, %v3716
        %v3868 = vsub.f32 %v3365, %v3721
        %v3869 = vsub.f32 %v3367, %v3721
        %v3870 = vsub.f32 %v3558, %v3721
        %v3871 = vsub.f32 %v3560, %v3721
        %v3872 = vsub.f32 %v3371, %v3726
        %v3873 = vsub.f32 %v3373, %v3726
        %v3874 = vsub.f32 %v3564, %v3726
        %v3875 = vsub.f32 %v3566, %v3726
        %v3876 = vsub.f32 %v3375, %v3731
        %v3877 = vsub.f32 %v3377, %v3731
        %v3878 = vsub.f32 %v3568, %v3731
        %v3879 = vsub.f32 %v3570, %v3731
        %v3880 = vsub.f32 %v3381, %v3736
        %v3881 = vsub.f32 %v3383, %v3736
        %v3882 = vsub.f32 %v3574, %v3736
        %v3883 = vsub.f32 %v3576, %v3736
        %v3884 = vsub.f32 %v3385, %v3741
        %v3885 = vsub.f32 %v3387, %v3741
        %v3886 = vsub.f32 %v3578, %v3741
        %v3887 = vsub.f32 %v3580, %v3741
        %v3888 = vsub.f32 %v3391, %v3746
        %v3889 = vsub.f32 %v3393, %v3746
        %v3890 = vsub.f32 %v3584, %v3746
        %v3891 = vsub.f32 %v3586, %v3746
        %v3892 = vsub.f32 %v3395, %v3751
        %v3893 = vsub.f32 %v3397, %v3751
        %v3894 = vsub.f32 %v3588, %v3751
        %v3895 = vsub.f32 %v3590, %v3751
        %v3896 = vsub.f32 %v3401, %v3756
        %v3897 = vsub.f32 %v3403, %v3756
        %v3898 = vsub.f32 %v3594, %v3756
        %v3899 = vsub.f32 %v3596, %v3756
        %v3900 = vsub.f32 %v3405, %v3761
        %v3901 = vsub.f32 %v3407, %v3761
        %v3902 = vsub.f32 %v3598, %v3761
        %v3903 = vsub.f32 %v3600, %v3761
        %v3904 = vsub.f32 %v3411, %v3766
        %v3905 = vsub.f32 %v3413, %v3766
        %v3906 = vsub.f32 %v3604, %v3766
        %v3907 = vsub.f32 %v3606, %v3766
        %v3908 = vsub.f32 %v3415, %v3771
        %v3909 = vsub.f32 %v3417, %v3771
        %v3910 = vsub.f32 %v3608, %v3771
        %v3911 = vsub.f32 %v3610, %v3771
        %v3912 = vsub.f32 %v3421, %v3776
        %v3913 = vsub.f32 %v3423, %v3776
        %v3914 = vsub.f32 %v3614, %v3776
        %v3915 = vsub.f32 %v3616, %v3776
        %v3916 = vsub.f32 %v3425, %v3781
        %v3917 = vsub.f32 %v3427, %v3781
        %v3918 = vsub.f32 %v3618, %v3781
        %v3919 = vsub.f32 %v3620, %v3781
        %v3920 = vsub.f32 %v3431, %v3786
        %v3921 = vsub.f32 %v3433, %v3786
        %v3922 = vsub.f32 %v3624, %v3786
        %v3923 = vsub.f32 %v3626, %v3786
        %v3924 = vsub.f32 %v3435, %v3791
        %v3925 = vsub.f32 %v3437, %v3791
        %v3926 = vsub.f32 %v3628, %v3791
        %v3927 = vsub.f32 %v3630, %v3791
        %v3928 = vsub.f32 %v3441, %v3796
        %v3929 = vsub.f32 %v3443, %v3796
        %v3930 = vsub.f32 %v3634, %v3796
        %v3931 = vsub.f32 %v3636, %v3796
        %v3932 = vsub.f32 %v3445, %v3801
        %v3933 = vsub.f32 %v3447, %v3801
        %v3934 = vsub.f32 %v3638, %v3801
        %v3935 = vsub.f32 %v3640, %v3801
        %v3936 = vsub.f32 %v3451, %v3806
        %v3937 = vsub.f32 %v3453, %v3806
        %v3938 = vsub.f32 %v3644, %v3806
        %v3939 = vsub.f32 %v3646, %v3806
        %v3940 = vsub.f32 %v3455, %v3811
        %v3941 = vsub.f32 %v3457, %v3811
        %v3942 = vsub.f32 %v3648, %v3811
        %v3943 = vsub.f32 %v3650, %v3811
        %v3944 = vsub.f32 %v3461, %v3816
        %v3945 = vsub.f32 %v3463, %v3816
        %v3946 = vsub.f32 %v3654, %v3816
        %v3947 = vsub.f32 %v3656, %v3816
        %v3948 = vsub.f32 %v3465, %v3821
        %v3949 = vsub.f32 %v3467, %v3821
        %v3950 = vsub.f32 %v3658, %v3821
        %v3951 = vsub.f32 %v3660, %v3821
        %v3952 = vsub.f32 %v3471, %v3826
        %v3953 = vsub.f32 %v3473, %v3826
        %v3954 = vsub.f32 %v3664, %v3826
        %v3955 = vsub.f32 %v3666, %v3826
        %v3956 = vsub.f32 %v3475, %v3831
        %v3957 = vsub.f32 %v3477, %v3831
        %v3958 = vsub.f32 %v3668, %v3831
        %v3959 = vsub.f32 %v3670, %v3831
        %v3960 = vmul.f32 %v3832, 1.442695
        %v3961 = vpow.pop %v3960
        %v3962 = vmul.f32 %v3833, 1.442695
        %v3963 = vpow.pop %v3962
        %v3964 = vmul.f32 %v3834, 1.442695
        %v3965 = vpow.pop %v3964
        %v3966 = vmul.f32 %v3835, 1.442695
        %v3967 = vpow.pop %v3966
        %v3968 = vmul.f32 %v3836, 1.442695
        %v3969 = vpow.pop %v3968
        %v3970 = vmul.f32 %v3837, 1.442695
        %v3971 = vpow.pop %v3970
        %v3972 = vmul.f32 %v3838, 1.442695
        %v3973 = vpow.pop %v3972
        %v3974 = vmul.f32 %v3839, 1.442695
        %v3975 = vpow.pop %v3974
        %v3976 = vmul.f32 %v3840, 1.442695
        %v3977 = vpow.pop %v3976
        %v3978 = vmul.f32 %v3841, 1.442695
        %v3979 = vpow.pop %v3978
        %v3980 = vmul.f32 %v3842, 1.442695
        %v3981 = vpow.pop %v3980
        %v3982 = vmul.f32 %v3843, 1.442695
        %v3983 = vpow.pop %v3982
        %v3984 = vmul.f32 %v3844, 1.442695
        %v3985 = vpow.pop %v3984
        %v3986 = vmul.f32 %v3845, 1.442695
        %v3987 = vpow.pop %v3986
        %v3988 = vmul.f32 %v3846, 1.442695
        %v3989 = vpow.pop %v3988
        %v3990 = vmul.f32 %v3847, 1.442695
        %v3991 = vpow.pop %v3990
        %v3992 = vmul.f32 %v3848, 1.442695
        %v3993 = vpow.pop %v3992
        %v3994 = vmul.f32 %v3849, 1.442695
        %v3995 = vpow.pop %v3994
        %v3996 = vmul.f32 %v3850, 1.442695
        %v3997 = vpow.pop %v3996
        %v3998 = vmul.f32 %v3851, 1.442695
        %v3999 = vpow.pop %v3998
        %v4000 = vmul.f32 %v3852, 1.442695
        %v4001 = vpow.pop %v4000
        %v4002 = vmul.f32 %v3853, 1.442695
        %v4003 = vpow.pop %v4002
        %v4004 = vmul.f32 %v3854, 1.442695
        %v4005 = vpow.pop %v4004
        %v4006 = vmul.f32 %v3855, 1.442695
        %v4007 = vpow.pop %v4006
        %v4008 = vmul.f32 %v3856, 1.442695
        %v4009 = vpow.pop %v4008
        %v4010 = vmul.f32 %v3857, 1.442695
        %v4011 = vpow.pop %v4010
        %v4012 = vmul.f32 %v3858, 1.442695
        %v4013 = vpow.pop %v4012
        %v4014 = vmul.f32 %v3859, 1.442695
        %v4015 = vpow.pop %v4014
        %v4016 = vmul.f32 %v3860, 1.442695
        %v4017 = vpow.pop %v4016
        %v4018 = vmul.f32 %v3861, 1.442695
        %v4019 = vpow.pop %v4018
        %v4020 = vmul.f32 %v3862, 1.442695
        %v4021 = vpow.pop %v4020
        %v4022 = vmul.f32 %v3863, 1.442695
        %v4023 = vpow.pop %v4022
        %v4024 = vmul.f32 %v3864, 1.442695
        %v4025 = vpow.pop %v4024
        %v4026 = vmul.f32 %v3865, 1.442695
        %v4027 = vpow.pop %v4026
        %v4028 = vmul.f32 %v3866, 1.442695
        %v4029 = vpow.pop %v4028
        %v4030 = vmul.f32 %v3867, 1.442695
        %v4031 = vpow.pop %v4030
        %v4032 = vmul.f32 %v3868, 1.442695
        %v4033 = vpow.pop %v4032
        %v4034 = vmul.f32 %v3869, 1.442695
        %v4035 = vpow.pop %v4034
        %v4036 = vmul.f32 %v3870, 1.442695
        %v4037 = vpow.pop %v4036
        %v4038 = vmul.f32 %v3871, 1.442695
        %v4039 = vpow.pop %v4038
        %v4040 = vmul.f32 %v3872, 1.442695
        %v4041 = vpow.pop %v4040
        %v4042 = vmul.f32 %v3873, 1.442695
        %v4043 = vpow.pop %v4042
        %v4044 = vmul.f32 %v3874, 1.442695
        %v4045 = vpow.pop %v4044
        %v4046 = vmul.f32 %v3875, 1.442695
        %v4047 = vpow.pop %v4046
        %v4048 = vmul.f32 %v3876, 1.442695
        %v4049 = vpow.pop %v4048
        %v4050 = vmul.f32 %v3877, 1.442695
        %v4051 = vpow.pop %v4050
        %v4052 = vmul.f32 %v3878, 1.442695
        %v4053 = vpow.pop %v4052
        %v4054 = vmul.f32 %v3879, 1.442695
        %v4055 = vpow.pop %v4054
        %v4056 = vmul.f32 %v3880, 1.442695
        %v4057 = vpow.pop %v4056
        %v4058 = vmul.f32 %v3881, 1.442695
        %v4059 = vpow.pop %v4058
        %v4060 = vmul.f32 %v3882, 1.442695
        %v4061 = vpow.pop %v4060
        %v4062 = vmul.f32 %v3883, 1.442695
        %v4063 = vpow.pop %v4062
        %v4064 = vmul.f32 %v3884, 1.442695
        %v4065 = vpow.pop %v4064
        %v4066 = vmul.f32 %v3885, 1.442695
        %v4067 = vpow.pop %v4066
        %v4068 = vmul.f32 %v3886, 1.442695
        %v4069 = vpow.pop %v4068
        %v4070 = vmul.f32 %v3887, 1.442695
        %v4071 = vpow.pop %v4070
        %v4072 = vmul.f32 %v3888, 1.442695
        %v4073 = vpow.pop %v4072
        %v4074 = vmul.f32 %v3889, 1.442695
        %v4075 = vpow.pop %v4074
        %v4076 = vmul.f32 %v3890, 1.442695
        %v4077 = vpow.pop %v4076
        %v4078 = vmul.f32 %v3891, 1.442695
        %v4079 = vpow.pop %v4078
        %v4080 = vmul.f32 %v3892, 1.442695
        %v4081 = vpow.pop %v4080
        %v4082 = vmul.f32 %v3893, 1.442695
        %v4083 = vpow.pop %v4082
        %v4084 = vmul.f32 %v3894, 1.442695
        %v4085 = vpow.pop %v4084
        %v4086 = vmul.f32 %v3895, 1.442695
        %v4087 = vpow.pop %v4086
        %v4088 = vmul.f32 %v3896, 1.442695
        %v4089 = vpow.pop %v4088
        %v4090 = vmul.f32 %v3897, 1.442695
        %v4091 = vpow.pop %v4090
        %v4092 = vmul.f32 %v3898, 1.442695
        %v4093 = vpow.pop %v4092
        %v4094 = vmul.f32 %v3899, 1.442695
        %v4095 = vpow.pop %v4094
        %v4096 = vmul.f32 %v3900, 1.442695
        %v4097 = vpow.pop %v4096
        %v4098 = vmul.f32 %v3901, 1.442695
        %v4099 = vpow.pop %v4098
        %v4100 = vmul.f32 %v3902, 1.442695
        %v4101 = vpow.pop %v4100
        %v4102 = vmul.f32 %v3903, 1.442695
        %v4103 = vpow.pop %v4102
        %v4104 = vmul.f32 %v3904, 1.442695
        %v4105 = vpow.pop %v4104
        %v4106 = vmul.f32 %v3905, 1.442695
        %v4107 = vpow.pop %v4106
        %v4108 = vmul.f32 %v3906, 1.442695
        %v4109 = vpow.pop %v4108
        %v4110 = vmul.f32 %v3907, 1.442695
        %v4111 = vpow.pop %v4110
        %v4112 = vmul.f32 %v3908, 1.442695
        %v4113 = vpow.pop %v4112
        %v4114 = vmul.f32 %v3909, 1.442695
        %v4115 = vpow.pop %v4114
        %v4116 = vmul.f32 %v3910, 1.442695
        %v4117 = vpow.pop %v4116
        %v4118 = vmul.f32 %v3911, 1.442695
        %v4119 = vpow.pop %v4118
        %v4120 = vmul.f32 %v3912, 1.442695
        %v4121 = vpow.pop %v4120
        %v4122 = vmul.f32 %v3913, 1.442695
        %v4123 = vpow.pop %v4122
        %v4124 = vmul.f32 %v3914, 1.442695
        %v4125 = vpow.pop %v4124
        %v4126 = vmul.f32 %v3915, 1.442695
        %v4127 = vpow.pop %v4126
        %v4128 = vmul.f32 %v3916, 1.442695
        %v4129 = vpow.pop %v4128
        %v4130 = vmul.f32 %v3917, 1.442695
        %v4131 = vpow.pop %v4130
        %v4132 = vmul.f32 %v3918, 1.442695
        %v4133 = vpow.pop %v4132
        %v4134 = vmul.f32 %v3919, 1.442695
        %v4135 = vpow.pop %v4134
        %v4136 = vmul.f32 %v3920, 1.442695
        %v4137 = vpow.pop %v4136
        %v4138 = vmul.f32 %v3921, 1.442695
        %v4139 = vpow.pop %v4138
        %v4140 = vmul.f32 %v3922, 1.442695
        %v4141 = vpow.pop %v4140
        %v4142 = vmul.f32 %v3923, 1.442695
        %v4143 = vpow.pop %v4142
        %v4144 = vmul.f32 %v3924, 1.442695
        %v4145 = vpow.pop %v4144
        %v4146 = vmul.f32 %v3925, 1.442695
        %v4147 = vpow.pop %v4146
        %v4148 = vmul.f32 %v3926, 1.442695
        %v4149 = vpow.pop %v4148
        %v4150 = vmul.f32 %v3927, 1.442695
        %v4151 = vpow.pop %v4150
        %v4152 = vmul.f32 %v3928, 1.442695
        %v4153 = vpow.pop %v4152
        %v4154 = vmul.f32 %v3929, 1.442695
        %v4155 = vpow.pop %v4154
        %v4156 = vmul.f32 %v3930, 1.442695
        %v4157 = vpow.pop %v4156
        %v4158 = vmul.f32 %v3931, 1.442695
        %v4159 = vpow.pop %v4158
        %v4160 = vmul.f32 %v3932, 1.442695
        %v4161 = vpow.pop %v4160
        %v4162 = vmul.f32 %v3933, 1.442695
        %v4163 = vpow.pop %v4162
        %v4164 = vmul.f32 %v3934, 1.442695
        %v4165 = vpow.pop %v4164
        %v4166 = vmul.f32 %v3935, 1.442695
        %v4167 = vpow.pop %v4166
        %v4168 = vmul.f32 %v3936, 1.442695
        %v4169 = vpow.pop %v4168
        %v4170 = vmul.f32 %v3937, 1.442695
        %v4171 = vpow.pop %v4170
        %v4172 = vmul.f32 %v3938, 1.442695
        %v4173 = vpow.pop %v4172
        %v4174 = vmul.f32 %v3939, 1.442695
        %v4175 = vpow.pop %v4174
        %v4176 = vmul.f32 %v3940, 1.442695
        %v4177 = vpow.pop %v4176
        %v4178 = vmul.f32 %v3941, 1.442695
        %v4179 = vpow.pop %v4178
        %v4180 = vmul.f32 %v3942, 1.442695
        %v4181 = vpow.pop %v4180
        %v4182 = vmul.f32 %v3943, 1.442695
        %v4183 = vpow.pop %v4182
        %v4184 = vmul.f32 %v3944, 1.442695
        %v4185 = vpow.pop %v4184
        %v4186 = vmul.f32 %v3945, 1.442695
        %v4187 = vpow.pop %v4186
        %v4188 = vmul.f32 %v3946, 1.442695
        %v4189 = vpow.pop %v4188
        %v4190 = vmul.f32 %v3947, 1.442695
        %v4191 = vpow.pop %v4190
        %v4192 = vmul.f32 %v3948, 1.442695
        %v4193 = vpow.pop %v4192
        %v4194 = vmul.f32 %v3949, 1.442695
        %v4195 = vpow.pop %v4194
        %v4196 = vmul.f32 %v3950, 1.442695
        %v4197 = vpow.pop %v4196
        %v4198 = vmul.f32 %v3951, 1.442695
        %v4199 = vpow.pop %v4198
        %v4200 = vmul.f32 %v3952, 1.442695
        %v4201 = vpow.pop %v4200
        %v4202 = vmul.f32 %v3953, 1.442695
        %v4203 = vpow.pop %v4202
        %v4204 = vmul.f32 %v3954, 1.442695
        %v4205 = vpow.pop %v4204
        %v4206 = vmul.f32 %v3955, 1.442695
        %v4207 = vpow.pop %v4206
        %v4208 = vmul.f32 %v3956, 1.442695
        %v4209 = vpow.pop %v4208
        %v4210 = vmul.f32 %v3957, 1.442695
        %v4211 = vpow.pop %v4210
        %v4212 = vmul.f32 %v3958, 1.442695
        %v4213 = vpow.pop %v4212
        %v4214 = vmul.f32 %v3959, 1.442695
        %v4215 = vpow.pop %v4214
        %v4216 = vadd.f32 %v3961, %v3963
        %v4217 = vadd.f32 %v4216, %v3965
        %v4218 = vadd.f32 %v4217, %v3967
        %4219 = vadd.xlane.f32.xlu0 %v4218
        %v4220 = vpop.xlane.xlu0 %4219
        %v4221 = vadd.f32 %v3969, %v3971
        %v4222 = vadd.f32 %v4221, %v3973
        %v4223 = vadd.f32 %v4222, %v3975
        %4224 = vadd.xlane.f32.xlu0 %v4223
        %v4225 = vpop.xlane.xlu0 %4224
        %v4226 = vadd.f32 %v3977, %v3979
        %v4227 = vadd.f32 %v4226, %v3981
        %v4228 = vadd.f32 %v4227, %v3983
        %4229 = vadd.xlane.f32.xlu0 %v4228
        %v4230 = vpop.xlane.xlu0 %4229
        %v4231 = vadd.f32 %v3985, %v3987
        %v4232 = vadd.f32 %v4231, %v3989
        %v4233 = vadd.f32 %v4232, %v3991
        %4234 = vadd.xlane.f32.xlu0 %v4233
        %v4235 = vpop.xlane.xlu0 %4234
        %v4236 = vadd.f32 %v3993, %v3995
        %v4237 = vadd.f32 %v4236, %v3997
        %v4238 = vadd.f32 %v4237, %v3999
        %4239 = vadd.xlane.f32.xlu0 %v4238
        %v4240 = vpop.xlane.xlu0 %4239
        %v4241 = vadd.f32 %v4001, %v4003
        %v4242 = vadd.f32 %v4241, %v4005
        %v4243 = vadd.f32 %v4242, %v4007
        %4244 = vadd.xlane.f32.xlu0 %v4243
        %v4245 = vpop.xlane.xlu0 %4244
        %v4246 = vadd.f32 %v4009, %v4011
        %v4247 = vadd.f32 %v4246, %v4013
        %v4248 = vadd.f32 %v4247, %v4015
        %4249 = vadd.xlane.f32.xlu0 %v4248
        %v4250 = vpop.xlane.xlu0 %4249
        %v4251 = vadd.f32 %v4017, %v4019
        %v4252 = vadd.f32 %v4251, %v4021
        %v4253 = vadd.f32 %v4252, %v4023
        %4254 = vadd.xlane.f32.xlu0 %v4253
        %v4255 = vpop.xlane.xlu0 %4254
        %v4256 = vadd.f32 %v4025, %v4027
        %v4257 = vadd.f32 %v4256, %v4029
        %v4258 = vadd.f32 %v4257, %v4031
        %4259 = vadd.xlane.f32.xlu0 %v4258
        %v4260 = vpop.xlane.xlu0 %4259
        %v4261 = vadd.f32 %v4033, %v4035
        %v4262 = vadd.f32 %v4261, %v4037
        %v4263 = vadd.f32 %v4262, %v4039
        %4264 = vadd.xlane.f32.xlu0 %v4263
        %v4265 = vpop.xlane.xlu0 %4264
        %v4266 = vadd.f32 %v4041, %v4043
        %v4267 = vadd.f32 %v4266, %v4045
        %v4268 = vadd.f32 %v4267, %v4047
        %4269 = vadd.xlane.f32.xlu0 %v4268
        %v4270 = vpop.xlane.xlu0 %4269
        %v4271 = vadd.f32 %v4049, %v4051
        %v4272 = vadd.f32 %v4271, %v4053
        %v4273 = vadd.f32 %v4272, %v4055
        %4274 = vadd.xlane.f32.xlu0 %v4273
        %v4275 = vpop.xlane.xlu0 %4274
        %v4276 = vadd.f32 %v4057, %v4059
        %v4277 = vadd.f32 %v4276, %v4061
        %v4278 = vadd.f32 %v4277, %v4063
        %4279 = vadd.xlane.f32.xlu0 %v4278
        %v4280 = vpop.xlane.xlu0 %4279
        %v4281 = vadd.f32 %v4065, %v4067
        %v4282 = vadd.f32 %v4281, %v4069
        %v4283 = vadd.f32 %v4282, %v4071
        %4284 = vadd.xlane.f32.xlu0 %v4283
        %v4285 = vpop.xlane.xlu0 %4284
        %v4286 = vadd.f32 %v4073, %v4075
        %v4287 = vadd.f32 %v4286, %v4077
        %v4288 = vadd.f32 %v4287, %v4079
        %4289 = vadd.xlane.f32.xlu0 %v4288
        %v4290 = vpop.xlane.xlu0 %4289
        %v4291 = vadd.f32 %v4081, %v4083
        %v4292 = vadd.f32 %v4291, %v4085
        %v4293 = vadd.f32 %v4292, %v4087
        %4294 = vadd.xlane.f32.xlu0 %v4293
        %v4295 = vpop.xlane.xlu0 %4294
        %v4296 = vadd.f32 %v4089, %v4091
        %v4297 = vadd.f32 %v4296, %v4093
        %v4298 = vadd.f32 %v4297, %v4095
        %4299 = vadd.xlane.f32.xlu0 %v4298
        %v4300 = vpop.xlane.xlu0 %4299
        %v4301 = vadd.f32 %v4097, %v4099
        %v4302 = vadd.f32 %v4301, %v4101
        %v4303 = vadd.f32 %v4302, %v4103
        %4304 = vadd.xlane.f32.xlu0 %v4303
        %v4305 = vpop.xlane.xlu0 %4304
        %v4306 = vadd.f32 %v4105, %v4107
        %v4307 = vadd.f32 %v4306, %v4109
        %v4308 = vadd.f32 %v4307, %v4111
        %4309 = vadd.xlane.f32.xlu0 %v4308
        %v4310 = vpop.xlane.xlu0 %4309
        %v4311 = vadd.f32 %v4113, %v4115
        %v4312 = vadd.f32 %v4311, %v4117
        %v4313 = vadd.f32 %v4312, %v4119
        %4314 = vadd.xlane.f32.xlu0 %v4313
        %v4315 = vpop.xlane.xlu0 %4314
        %v4316 = vadd.f32 %v4121, %v4123
        %v4317 = vadd.f32 %v4316, %v4125
        %v4318 = vadd.f32 %v4317, %v4127
        %4319 = vadd.xlane.f32.xlu0 %v4318
        %v4320 = vpop.xlane.xlu0 %4319
        %v4321 = vadd.f32 %v4129, %v4131
        %v4322 = vadd.f32 %v4321, %v4133
        %v4323 = vadd.f32 %v4322, %v4135
        %4324 = vadd.xlane.f32.xlu0 %v4323
        %v4325 = vpop.xlane.xlu0 %4324
        %v4326 = vadd.f32 %v4137, %v4139
        %v4327 = vadd.f32 %v4326, %v4141
        %v4328 = vadd.f32 %v4327, %v4143
        %4329 = vadd.xlane.f32.xlu0 %v4328
        %v4330 = vpop.xlane.xlu0 %4329
        %v4331 = vadd.f32 %v4145, %v4147
        %v4332 = vadd.f32 %v4331, %v4149
        %v4333 = vadd.f32 %v4332, %v4151
        %4334 = vadd.xlane.f32.xlu0 %v4333
        %v4335 = vpop.xlane.xlu0 %4334
        %v4336 = vadd.f32 %v4153, %v4155
        %v4337 = vadd.f32 %v4336, %v4157
        %v4338 = vadd.f32 %v4337, %v4159
        %4339 = vadd.xlane.f32.xlu0 %v4338
        %v4340 = vpop.xlane.xlu0 %4339
        %v4341 = vadd.f32 %v4161, %v4163
        %v4342 = vadd.f32 %v4341, %v4165
        %v4343 = vadd.f32 %v4342, %v4167
        %4344 = vadd.xlane.f32.xlu0 %v4343
        %v4345 = vpop.xlane.xlu0 %4344
        %v4346 = vadd.f32 %v4169, %v4171
        %v4347 = vadd.f32 %v4346, %v4173
        %v4348 = vadd.f32 %v4347, %v4175
        %4349 = vadd.xlane.f32.xlu0 %v4348
        %v4350 = vpop.xlane.xlu0 %4349
        %v4351 = vadd.f32 %v4177, %v4179
        %v4352 = vadd.f32 %v4351, %v4181
        %v4353 = vadd.f32 %v4352, %v4183
        %4354 = vadd.xlane.f32.xlu0 %v4353
        %v4355 = vpop.xlane.xlu0 %4354
        %v4356 = vadd.f32 %v4185, %v4187
        %v4357 = vadd.f32 %v4356, %v4189
        %v4358 = vadd.f32 %v4357, %v4191
        %4359 = vadd.xlane.f32.xlu0 %v4358
        %v4360 = vpop.xlane.xlu0 %4359
        %v4361 = vadd.f32 %v4193, %v4195
        %v4362 = vadd.f32 %v4361, %v4197
        %v4363 = vadd.f32 %v4362, %v4199
        %4364 = vadd.xlane.f32.xlu0 %v4363
        %v4365 = vpop.xlane.xlu0 %4364
        %v4366 = vadd.f32 %v4201, %v4203
        %v4367 = vadd.f32 %v4366, %v4205
        %v4368 = vadd.f32 %v4367, %v4207
        %4369 = vadd.xlane.f32.xlu0 %v4368
        %v4370 = vpop.xlane.xlu0 %4369
        %v4371 = vadd.f32 %v4209, %v4211
        %v4372 = vadd.f32 %v4371, %v4213
        %v4373 = vadd.f32 %v4372, %v4215
        %4374 = vadd.xlane.f32.xlu0 %v4373
        %v4375 = vpop.xlane.xlu0 %4374
        %v4376 = vrcp.pop %v4220
        %v4377 = vrcp.pop %v4225
        %v4378 = vrcp.pop %v4230
        %v4379 = vrcp.pop %v4235
        %v4380 = vrcp.pop %v4240
        %v4381 = vrcp.pop %v4245
        %v4382 = vrcp.pop %v4250
        %v4383 = vrcp.pop %v4255
        %v4384 = vrcp.pop %v4260
        %v4385 = vrcp.pop %v4265
        %v4386 = vrcp.pop %v4270
        %v4387 = vrcp.pop %v4275
        %v4388 = vrcp.pop %v4280
        %v4389 = vrcp.pop %v4285
        %v4390 = vrcp.pop %v4290
        %v4391 = vrcp.pop %v4295
        %v4392 = vrcp.pop %v4300
        %v4393 = vrcp.pop %v4305
        %v4394 = vrcp.pop %v4310
        %v4395 = vrcp.pop %v4315
        %v4396 = vrcp.pop %v4320
        %v4397 = vrcp.pop %v4325
        %v4398 = vrcp.pop %v4330
        %v4399 = vrcp.pop %v4335
        %v4400 = vrcp.pop %v4340
        %v4401 = vrcp.pop %v4345
        %v4402 = vrcp.pop %v4350
        %v4403 = vrcp.pop %v4355
        %v4404 = vrcp.pop %v4360
        %v4405 = vrcp.pop %v4365
        %v4406 = vrcp.pop %v4370
        %v4407 = vrcp.pop %v4375
        %v4408 = vmul.f32 %v3961, %v4376
        %v4409 = vmul.f32 %v3963, %v4376
        %v4410 = vmul.f32 %v3965, %v4376
        %v4411 = vmul.f32 %v3967, %v4376
        %v4412 = vmul.f32 %v3969, %v4377
        %v4413 = vmul.f32 %v3971, %v4377
        %v4414 = vmul.f32 %v3973, %v4377
        %v4415 = vmul.f32 %v3975, %v4377
        %v4416 = vmul.f32 %v3977, %v4378
        %v4417 = vmul.f32 %v3979, %v4378
        %v4418 = vmul.f32 %v3981, %v4378
        %v4419 = vmul.f32 %v3983, %v4378
        %v4420 = vmul.f32 %v3985, %v4379
        %v4421 = vmul.f32 %v3987, %v4379
        %v4422 = vmul.f32 %v3989, %v4379
        %v4423 = vmul.f32 %v3991, %v4379
        %v4424 = vmul.f32 %v3993, %v4380
        %v4425 = vmul.f32 %v3995, %v4380
        %v4426 = vmul.f32 %v3997, %v4380
        %v4427 = vmul.f32 %v3999, %v4380
        %v4428 = vmul.f32 %v4001, %v4381
        %v4429 = vmul.f32 %v4003, %v4381
        %v4430 = vmul.f32 %v4005, %v4381
        %v4431 = vmul.f32 %v4007, %v4381
        %v4432 = vmul.f32 %v4009, %v4382
        %v4433 = vmul.f32 %v4011, %v4382
        %v4434 = vmul.f32 %v4013, %v4382
        %v4435 = vmul.f32 %v4015, %v4382
        %v4436 = vmul.f32 %v4017, %v4383
        %v4437 = vmul.f32 %v4019, %v4383
        %v4438 = vmul.f32 %v4021, %v4383
        %v4439 = vmul.f32 %v4023, %v4383
        %v4440 = vmul.f32 %v4025, %v4384
        %v4441 = vmul.f32 %v4027, %v4384
        %v4442 = vmul.f32 %v4029, %v4384
        %v4443 = vmul.f32 %v4031, %v4384
        %v4444 = vmul.f32 %v4033, %v4385
        %v4445 = vmul.f32 %v4035, %v4385
        %v4446 = vmul.f32 %v4037, %v4385
        %v4447 = vmul.f32 %v4039, %v4385
        %v4448 = vmul.f32 %v4041, %v4386
        %v4449 = vmul.f32 %v4043, %v4386
        %v4450 = vmul.f32 %v4045, %v4386
        %v4451 = vmul.f32 %v4047, %v4386
        %v4452 = vmul.f32 %v4049, %v4387
        %v4453 = vmul.f32 %v4051, %v4387
        %v4454 = vmul.f32 %v4053, %v4387
        %v4455 = vmul.f32 %v4055, %v4387
        %v4456 = vmul.f32 %v4057, %v4388
        %v4457 = vmul.f32 %v4059, %v4388
        %v4458 = vmul.f32 %v4061, %v4388
        %v4459 = vmul.f32 %v4063, %v4388
        %v4460 = vmul.f32 %v4065, %v4389
        %v4461 = vmul.f32 %v4067, %v4389
        %v4462 = vmul.f32 %v4069, %v4389
        %v4463 = vmul.f32 %v4071, %v4389
        %v4464 = vmul.f32 %v4073, %v4390
        %v4465 = vmul.f32 %v4075, %v4390
        %v4466 = vmul.f32 %v4077, %v4390
        %v4467 = vmul.f32 %v4079, %v4390
        %v4468 = vmul.f32 %v4081, %v4391
        %v4469 = vmul.f32 %v4083, %v4391
        %v4470 = vmul.f32 %v4085, %v4391
        %v4471 = vmul.f32 %v4087, %v4391
        %v4472 = vmul.f32 %v4089, %v4392
        %v4473 = vmul.f32 %v4091, %v4392
        %v4474 = vmul.f32 %v4093, %v4392
        %v4475 = vmul.f32 %v4095, %v4392
        %v4476 = vmul.f32 %v4097, %v4393
        %v4477 = vmul.f32 %v4099, %v4393
        %v4478 = vmul.f32 %v4101, %v4393
        %v4479 = vmul.f32 %v4103, %v4393
        %v4480 = vmul.f32 %v4105, %v4394
        %v4481 = vmul.f32 %v4107, %v4394
        %v4482 = vmul.f32 %v4109, %v4394
        %v4483 = vmul.f32 %v4111, %v4394
        %v4484 = vmul.f32 %v4113, %v4395
        %v4485 = vmul.f32 %v4115, %v4395
        %v4486 = vmul.f32 %v4117, %v4395
        %v4487 = vmul.f32 %v4119, %v4395
        %v4488 = vmul.f32 %v4121, %v4396
        %v4489 = vmul.f32 %v4123, %v4396
        %v4490 = vmul.f32 %v4125, %v4396
        %v4491 = vmul.f32 %v4127, %v4396
        %v4492 = vmul.f32 %v4129, %v4397
        %v4493 = vmul.f32 %v4131, %v4397
        %v4494 = vmul.f32 %v4133, %v4397
        %v4495 = vmul.f32 %v4135, %v4397
        %v4496 = vmul.f32 %v4137, %v4398
        %v4497 = vmul.f32 %v4139, %v4398
        %v4498 = vmul.f32 %v4141, %v4398
        %v4499 = vmul.f32 %v4143, %v4398
        %v4500 = vmul.f32 %v4145, %v4399
        %v4501 = vmul.f32 %v4147, %v4399
        %v4502 = vmul.f32 %v4149, %v4399
        %v4503 = vmul.f32 %v4151, %v4399
        %v4504 = vmul.f32 %v4153, %v4400
        %v4505 = vmul.f32 %v4155, %v4400
        %v4506 = vmul.f32 %v4157, %v4400
        %v4507 = vmul.f32 %v4159, %v4400
        %v4508 = vmul.f32 %v4161, %v4401
        %v4509 = vmul.f32 %v4163, %v4401
        %v4510 = vmul.f32 %v4165, %v4401
        %v4511 = vmul.f32 %v4167, %v4401
        %v4512 = vmul.f32 %v4169, %v4402
        %v4513 = vmul.f32 %v4171, %v4402
        %v4514 = vmul.f32 %v4173, %v4402
        %v4515 = vmul.f32 %v4175, %v4402
        %v4516 = vmul.f32 %v4177, %v4403
        %v4517 = vmul.f32 %v4179, %v4403
        %v4518 = vmul.f32 %v4181, %v4403
        %v4519 = vmul.f32 %v4183, %v4403
        %v4520 = vmul.f32 %v4185, %v4404
        %v4521 = vmul.f32 %v4187, %v4404
        %v4522 = vmul.f32 %v4189, %v4404
        %v4523 = vmul.f32 %v4191, %v4404
        %v4524 = vmul.f32 %v4193, %v4405
        %v4525 = vmul.f32 %v4195, %v4405
        %v4526 = vmul.f32 %v4197, %v4405
        %v4527 = vmul.f32 %v4199, %v4405
        %v4528 = vmul.f32 %v4201, %v4406
        %v4529 = vmul.f32 %v4203, %v4406
        %v4530 = vmul.f32 %v4205, %v4406
        %v4531 = vmul.f32 %v4207, %v4406
        %v4532 = vmul.f32 %v4209, %v4407
        %v4533 = vmul.f32 %v4211, %v4407
        %v4534 = vmul.f32 %v4213, %v4407
        %v4535 = vmul.f32 %v4215, %v4407
        %v4536 = vpack.c.bf16 %v4412, %v4408
        %v4537 = vpack.c.bf16 %v4413, %v4409
        %v4538 = vpack.c.bf16 %v4414, %v4410
        %v4539 = vpack.c.bf16 %v4415, %v4411
        %v4540 = vpack.c.bf16 %v4420, %v4416
        %v4541 = vpack.c.bf16 %v4421, %v4417
        %v4542 = vpack.c.bf16 %v4422, %v4418
        %v4543 = vpack.c.bf16 %v4423, %v4419
        %v4544 = vpack.c.bf16 %v4428, %v4424
        %v4545 = vpack.c.bf16 %v4429, %v4425
        %v4546 = vpack.c.bf16 %v4430, %v4426
        %v4547 = vpack.c.bf16 %v4431, %v4427
        %v4548 = vpack.c.bf16 %v4436, %v4432
        %v4549 = vpack.c.bf16 %v4437, %v4433
        %v4550 = vpack.c.bf16 %v4438, %v4434
        %v4551 = vpack.c.bf16 %v4439, %v4435
        %v4552 = vpack.c.bf16 %v4444, %v4440
        %v4553 = vpack.c.bf16 %v4445, %v4441
        %v4554 = vpack.c.bf16 %v4446, %v4442
        %v4555 = vpack.c.bf16 %v4447, %v4443
        %v4556 = vpack.c.bf16 %v4452, %v4448
        %v4557 = vpack.c.bf16 %v4453, %v4449
        %v4558 = vpack.c.bf16 %v4454, %v4450
        %v4559 = vpack.c.bf16 %v4455, %v4451
        %v4560 = vpack.c.bf16 %v4460, %v4456
        %v4561 = vpack.c.bf16 %v4461, %v4457
        %v4562 = vpack.c.bf16 %v4462, %v4458
        %v4563 = vpack.c.bf16 %v4463, %v4459
        %v4564 = vpack.c.bf16 %v4468, %v4464
        %v4565 = vpack.c.bf16 %v4469, %v4465
        %v4566 = vpack.c.bf16 %v4470, %v4466
        %v4567 = vpack.c.bf16 %v4471, %v4467
        %v4568 = vpack.c.bf16 %v4476, %v4472
        %v4569 = vpack.c.bf16 %v4477, %v4473
        %v4570 = vpack.c.bf16 %v4478, %v4474
        %v4571 = vpack.c.bf16 %v4479, %v4475
        %v4572 = vpack.c.bf16 %v4484, %v4480
        %v4573 = vpack.c.bf16 %v4485, %v4481
        %v4574 = vpack.c.bf16 %v4486, %v4482
        %v4575 = vpack.c.bf16 %v4487, %v4483
        %v4576 = vpack.c.bf16 %v4492, %v4488
        %v4577 = vpack.c.bf16 %v4493, %v4489
        %v4578 = vpack.c.bf16 %v4494, %v4490
        %v4579 = vpack.c.bf16 %v4495, %v4491
        %v4580 = vpack.c.bf16 %v4500, %v4496
        %v4581 = vpack.c.bf16 %v4501, %v4497
        %v4582 = vpack.c.bf16 %v4502, %v4498
        %v4583 = vpack.c.bf16 %v4503, %v4499
        %v4584 = vpack.c.bf16 %v4508, %v4504
        %v4585 = vpack.c.bf16 %v4509, %v4505
        %v4586 = vpack.c.bf16 %v4510, %v4506
        %v4587 = vpack.c.bf16 %v4511, %v4507
        %v4588 = vpack.c.bf16 %v4516, %v4512
        %v4589 = vpack.c.bf16 %v4517, %v4513
        %v4590 = vpack.c.bf16 %v4518, %v4514
        %v4591 = vpack.c.bf16 %v4519, %v4515
        %v4592 = vpack.c.bf16 %v4524, %v4520
        %v4593 = vpack.c.bf16 %v4525, %v4521
        %v4594 = vpack.c.bf16 %v4526, %v4522
        %v4595 = vpack.c.bf16 %v4527, %v4523
        %v4596 = vpack.c.bf16 %v4532, %v4528
        %v4597 = vpack.c.bf16 %v4533, %v4529
        %v4598 = vpack.c.bf16 %v4534, %v4530
        %v4599 = vpack.c.bf16 %v4535, %v4531
        %v4664 = vunpack.c.l.b16 %v3030
        %v4665 = vunpack.c.l.b16 %v3031
        %v4666 = vunpack.c.l.b16 %v3032
        %v4667 = vunpack.c.l.b16 %v3033
        %v4668 = vunpack.c.l.b16 %v3034
        %v4669 = vunpack.c.l.b16 %v3035
        %v4670 = vunpack.c.l.b16 %v3036
        %v4671 = vunpack.c.l.b16 %v3037
        %v4672 = vunpack.c.l.b16 %v3038
        %v4673 = vunpack.c.l.b16 %v3039
        %v4674 = vunpack.c.l.b16 %v3040
        %v4675 = vunpack.c.l.b16 %v3041
        %v4676 = vunpack.c.l.b16 %v3042
        %v4677 = vunpack.c.l.b16 %v3043
        %v4678 = vunpack.c.l.b16 %v3044
        %v4679 = vunpack.c.l.b16 %v3045
        %v4680 = vunpack.c.l.b16 %v3046
        %v4681 = vunpack.c.l.b16 %v3047
        %v4682 = vunpack.c.l.b16 %v3048
        %v4683 = vunpack.c.l.b16 %v3049
        %v4684 = vunpack.c.l.b16 %v3050
        %v4685 = vunpack.c.l.b16 %v3051
        %v4686 = vunpack.c.l.b16 %v3052
        %v4687 = vunpack.c.l.b16 %v3053
        %v4688 = vunpack.c.l.b16 %v3054
        %v4689 = vunpack.c.l.b16 %v3055
        %v4690 = vunpack.c.l.b16 %v3056
        %v4691 = vunpack.c.l.b16 %v3057
        %v4692 = vunpack.c.l.b16 %v3058
        %v4693 = vunpack.c.l.b16 %v3059
        %v4694 = vunpack.c.l.b16 %v3060
        %v4695 = vunpack.c.l.b16 %v3061
        %v4696 = vunpack.c.l.b16 %v3062
        %v4697 = vunpack.c.l.b16 %v3063
        %v4698 = vunpack.c.l.b16 %v3064
        %v4699 = vunpack.c.l.b16 %v3065
        %v4700 = vunpack.c.l.b16 %v3066
        %v4701 = vunpack.c.l.b16 %v3067
        %v4702 = vunpack.c.l.b16 %v3068
        %v4703 = vunpack.c.l.b16 %v3069
        %v4704 = vunpack.c.l.b16 %v3070
        %v4705 = vunpack.c.l.b16 %v3071
        %v4706 = vunpack.c.l.b16 %v3072
        %v4707 = vunpack.c.l.b16 %v3073
        %v4708 = vunpack.c.l.b16 %v3074
        %v4709 = vunpack.c.l.b16 %v3075
        %v4710 = vunpack.c.l.b16 %v3076
        %v4711 = vunpack.c.l.b16 %v3077
        %v4712 = vunpack.c.l.b16 %v3078
        %v4713 = vunpack.c.l.b16 %v3079
        %v4714 = vunpack.c.l.b16 %v3080
        %v4715 = vunpack.c.l.b16 %v3081
        %v4716 = vunpack.c.l.b16 %v3082
        %v4717 = vunpack.c.l.b16 %v3083
        %v4718 = vunpack.c.l.b16 %v3084
        %v4719 = vunpack.c.l.b16 %v3085
        %v4720 = vunpack.c.l.b16 %v3086
        %v4721 = vunpack.c.l.b16 %v3087
        %v4722 = vunpack.c.l.b16 %v3088
        %v4723 = vunpack.c.l.b16 %v3089
        %v4724 = vunpack.c.l.b16 %v3090
        %v4725 = vunpack.c.l.b16 %v3091
        %v4726 = vunpack.c.l.b16 %v3092
        %v4727 = vunpack.c.l.b16 %v3093
        %v4728 = vpack.c.b16 %v4665, %v4664
        %v4729 = vpack.c.b16 %v4667, %v4666
        %v4730 = vpack.c.b16 %v4669, %v4668
        %v4731 = vpack.c.b16 %v4671, %v4670
        %v4732 = vpack.c.b16 %v4673, %v4672
        %v4733 = vpack.c.b16 %v4675, %v4674
        %v4734 = vpack.c.b16 %v4677, %v4676
        %v4735 = vpack.c.b16 %v4679, %v4678
        %v4736 = vpack.c.b16 %v4681, %v4680
        %v4737 = vpack.c.b16 %v4683, %v4682
        %v4738 = vpack.c.b16 %v4685, %v4684
        %v4739 = vpack.c.b16 %v4687, %v4686
        %v4740 = vpack.c.b16 %v4689, %v4688
        %v4741 = vpack.c.b16 %v4691, %v4690
        %v4742 = vpack.c.b16 %v4693, %v4692
        %v4743 = vpack.c.b16 %v4695, %v4694
        %v4744 = vpack.c.b16 %v4697, %v4696
        %v4745 = vpack.c.b16 %v4699, %v4698
        %v4746 = vpack.c.b16 %v4701, %v4700
        %v4747 = vpack.c.b16 %v4703, %v4702
        %v4748 = vpack.c.b16 %v4705, %v4704
        %v4749 = vpack.c.b16 %v4707, %v4706
        %v4750 = vpack.c.b16 %v4709, %v4708
        %v4751 = vpack.c.b16 %v4711, %v4710
        %v4752 = vpack.c.b16 %v4713, %v4712
        %v4753 = vpack.c.b16 %v4715, %v4714
        %v4754 = vpack.c.b16 %v4717, %v4716
        %v4755 = vpack.c.b16 %v4719, %v4718
        %v4756 = vpack.c.b16 %v4721, %v4720
        %v4757 = vpack.c.b16 %v4723, %v4722
        %v4758 = vpack.c.b16 %v4725, %v4724
        %v4759 = vpack.c.b16 %v4727, %v4726
        %4792 = vmatprep.subr.bf16.mxu0 0
        %4793 = vmatpush1.bf16.msra.mxu0 %v4735
        %4794 = vmatprep.subr.bf16.mxu0 0
        %4795 = vmatpush1.bf16.msra.mxu0 %v4734
        %4796 = vmatprep.subr.bf16.mxu0 0
        %4797 = vmatpush1.bf16.msra.mxu0 %v4733
        %4798 = vmatprep.subr.bf16.mxu0 0
        %4799 = vmatpush1.bf16.msra.mxu0 %v4732
        %4800 = vmatprep.subr.bf16.mxu0 0
        %4801 = vmatpush1.bf16.msra.mxu0 %v4731
        %4802 = vmatprep.subr.bf16.mxu0 0
        %4803 = vmatpush1.bf16.msra.mxu0 %v4730
        %4804 = vmatprep.subr.bf16.mxu0 0
        %4805 = vmatpush1.bf16.msra.mxu0 %v4729
        %4806 = vmatprep.subr.bf16.mxu0 0
        %4807 = vmatpush1.bf16.msra.mxu0 %v4728
        %4808 = vmatprep.subr.bf16.mxu0 0
        %4809 = vmatpush2.bf16.msra.mxu0 %v4743
        %4810 = vmatprep.subr.bf16.mxu0 0
        %4811 = vmatpush2.bf16.msra.mxu0 %v4742
        %4812 = vmatprep.subr.bf16.mxu0 0
        %4813 = vmatpush2.bf16.msra.mxu0 %v4741
        %4814 = vmatprep.subr.bf16.mxu0 0
        %4815 = vmatpush2.bf16.msra.mxu0 %v4740
        %4816 = vmatprep.subr.bf16.mxu0 0
        %4817 = vmatpush2.bf16.msra.mxu0 %v4739
        %4818 = vmatprep.subr.bf16.mxu0 0
        %4819 = vmatpush2.bf16.msra.mxu0 %v4738
        %4820 = vmatprep.subr.bf16.mxu0 0
        %4821 = vmatpush2.bf16.msra.mxu0 %v4737
        %4822 = vmatprep.subr.bf16.mxu0 0
        %4823 = vmatpush2.bf16.msra.mxu0 %v4736
        %4824 = vmatprep.mubr.bf16.mxu0 %v4537
        %4825 = vmatmul.mubr.bf16.gmra.mxu0 %v4536
        %v4826 = vpop.f32.mrf.mxu0
        %v4827 = vadd.f32 0.0, %v4826
        %v4828 = vpop.f32.mrf.mxu0
        %v4829 = vpop.f32.mrf.mxu0
        %v4830 = vadd.f32 0.0, %v4829
        %v4831 = vpop.f32.mrf.mxu0
        %4832 = vmatprep.mubr.bf16.mxu0 %v4541
        %4833 = vmatmul.mubr.bf16.gmra.mxu0 %v4540
        %v4834 = vpop.f32.mrf.mxu0
        %v4835 = vadd.f32 0.0, %v4834
        %v4836 = vpop.f32.mrf.mxu0
        %v4837 = vpop.f32.mrf.mxu0
        %v4838 = vadd.f32 0.0, %v4837
        %v4839 = vpop.f32.mrf.mxu0
        %4840 = vmatprep.mubr.bf16.mxu0 %v4545
        %4841 = vmatmul.mubr.bf16.gmra.mxu0 %v4544
        %v4842 = vpop.f32.mrf.mxu0
        %v4843 = vadd.f32 0.0, %v4842
        %v4844 = vpop.f32.mrf.mxu0
        %v4845 = vpop.f32.mrf.mxu0
        %v4846 = vadd.f32 0.0, %v4845
        %v4847 = vpop.f32.mrf.mxu0
        %4848 = vmatprep.mubr.bf16.mxu0 %v4549
        %4849 = vmatmul.mubr.bf16.gmra.mxu0 %v4548
        %v4850 = vpop.f32.mrf.mxu0
        %v4851 = vadd.f32 0.0, %v4850
        %v4852 = vpop.f32.mrf.mxu0
        %v4853 = vpop.f32.mrf.mxu0
        %v4854 = vadd.f32 0.0, %v4853
        %v4855 = vpop.f32.mrf.mxu0
        %4856 = vmatprep.mubr.bf16.mxu0 %v4553
        %4857 = vmatmul.mubr.bf16.gmra.mxu0 %v4552
        %v4858 = vpop.f32.mrf.mxu0
        %v4859 = vadd.f32 0.0, %v4858
        %v4860 = vpop.f32.mrf.mxu0
        %v4861 = vpop.f32.mrf.mxu0
        %v4862 = vadd.f32 0.0, %v4861
        %v4863 = vpop.f32.mrf.mxu0
        %4864 = vmatprep.mubr.bf16.mxu0 %v4557
        %4865 = vmatmul.mubr.bf16.gmra.mxu0 %v4556
        %v4866 = vpop.f32.mrf.mxu0
        %v4867 = vadd.f32 0.0, %v4866
        %v4868 = vpop.f32.mrf.mxu0
        %v4869 = vpop.f32.mrf.mxu0
        %v4870 = vadd.f32 0.0, %v4869
        %v4871 = vpop.f32.mrf.mxu0
        %4872 = vmatprep.mubr.bf16.mxu0 %v4561
        %4873 = vmatmul.mubr.bf16.gmra.mxu0 %v4560
        %v4874 = vpop.f32.mrf.mxu0
        %v4875 = vadd.f32 0.0, %v4874
        %v4876 = vpop.f32.mrf.mxu0
        %v4877 = vpop.f32.mrf.mxu0
        %v4878 = vadd.f32 0.0, %v4877
        %v4879 = vpop.f32.mrf.mxu0
        %4880 = vmatprep.mubr.bf16.mxu0 %v4565
        %4881 = vmatmul.mubr.bf16.gmra.mxu0 %v4564
        %v4882 = vpop.f32.mrf.mxu0
        %v4883 = vadd.f32 0.0, %v4882
        %v4884 = vpop.f32.mrf.mxu0
        %v4885 = vpop.f32.mrf.mxu0
        %v4886 = vadd.f32 0.0, %v4885
        %v4887 = vpop.f32.mrf.mxu0
        %4888 = vmatprep.mubr.bf16.mxu0 %v4569
        %4889 = vmatmul.mubr.bf16.gmra.mxu0 %v4568
        %v4890 = vpop.f32.mrf.mxu0
        %v4891 = vadd.f32 0.0, %v4890
        %v4892 = vpop.f32.mrf.mxu0
        %v4893 = vpop.f32.mrf.mxu0
        %v4894 = vadd.f32 0.0, %v4893
        %v4895 = vpop.f32.mrf.mxu0
        %4896 = vmatprep.mubr.bf16.mxu0 %v4573
        %4897 = vmatmul.mubr.bf16.gmra.mxu0 %v4572
        %v4898 = vpop.f32.mrf.mxu0
        %v4899 = vadd.f32 0.0, %v4898
        %v4900 = vpop.f32.mrf.mxu0
        %v4901 = vpop.f32.mrf.mxu0
        %v4902 = vadd.f32 0.0, %v4901
        %v4903 = vpop.f32.mrf.mxu0
        %4904 = vmatprep.mubr.bf16.mxu0 %v4577
        %4905 = vmatmul.mubr.bf16.gmra.mxu0 %v4576
        %v4906 = vpop.f32.mrf.mxu0
        %v4907 = vadd.f32 0.0, %v4906
        %v4908 = vpop.f32.mrf.mxu0
        %v4909 = vpop.f32.mrf.mxu0
        %v4910 = vadd.f32 0.0, %v4909
        %v4911 = vpop.f32.mrf.mxu0
        %4912 = vmatprep.mubr.bf16.mxu0 %v4581
        %4913 = vmatmul.mubr.bf16.gmra.mxu0 %v4580
        %v4914 = vpop.f32.mrf.mxu0
        %v4915 = vadd.f32 0.0, %v4914
        %v4916 = vpop.f32.mrf.mxu0
        %v4917 = vpop.f32.mrf.mxu0
        %v4918 = vadd.f32 0.0, %v4917
        %v4919 = vpop.f32.mrf.mxu0
        %4920 = vmatprep.mubr.bf16.mxu0 %v4585
        %4921 = vmatmul.mubr.bf16.gmra.mxu0 %v4584
        %v4922 = vpop.f32.mrf.mxu0
        %v4923 = vadd.f32 0.0, %v4922
        %v4924 = vpop.f32.mrf.mxu0
        %v4925 = vpop.f32.mrf.mxu0
        %v4926 = vadd.f32 0.0, %v4925
        %v4927 = vpop.f32.mrf.mxu0
        %4928 = vmatprep.mubr.bf16.mxu0 %v4589
        %4929 = vmatmul.mubr.bf16.gmra.mxu0 %v4588
        %v4930 = vpop.f32.mrf.mxu0
        %v4931 = vadd.f32 0.0, %v4930
        %v4932 = vpop.f32.mrf.mxu0
        %v4933 = vpop.f32.mrf.mxu0
        %v4934 = vadd.f32 0.0, %v4933
        %v4935 = vpop.f32.mrf.mxu0
        %4936 = vmatprep.mubr.bf16.mxu0 %v4593
        %4937 = vmatmul.mubr.bf16.gmra.mxu0 %v4592
        %v4938 = vpop.f32.mrf.mxu0
        %v4939 = vadd.f32 0.0, %v4938
        %v4940 = vpop.f32.mrf.mxu0
        %v4941 = vpop.f32.mrf.mxu0
        %v4942 = vadd.f32 0.0, %v4941
        %v4943 = vpop.f32.mrf.mxu0
        %4944 = vmatprep.mubr.bf16.mxu0 %v4597
        %4945 = vmatmul.mubr.bf16.gmra.mxu0 %v4596
        %v4946 = vpop.f32.mrf.mxu0
        %v4947 = vadd.f32 0.0, %v4946
        %v4948 = vpop.f32.mrf.mxu0
        %v4949 = vpop.f32.mrf.mxu0
        %v4950 = vadd.f32 0.0, %v4949
        %v4951 = vpop.f32.mrf.mxu0
        %4952 = vdwg.mxu0
        %4953 = vmatprep.subr.bf16.mxu0 0
        %4954 = vmatpush1.bf16.msra.mxu0 %v4751
        %4955 = vmatprep.subr.bf16.mxu0 0
        %4956 = vmatpush1.bf16.msra.mxu0 %v4750
        %4957 = vmatprep.subr.bf16.mxu0 0
        %4958 = vmatpush1.bf16.msra.mxu0 %v4749
        %4959 = vmatprep.subr.bf16.mxu0 0
        %4960 = vmatpush1.bf16.msra.mxu0 %v4748
        %4961 = vmatprep.subr.bf16.mxu0 0
        %4962 = vmatpush1.bf16.msra.mxu0 %v4747
        %4963 = vmatprep.subr.bf16.mxu0 0
        %4964 = vmatpush1.bf16.msra.mxu0 %v4746
        %4965 = vmatprep.subr.bf16.mxu0 0
        %4966 = vmatpush1.bf16.msra.mxu0 %v4745
        %4967 = vmatprep.subr.bf16.mxu0 0
        %4968 = vmatpush1.bf16.msra.mxu0 %v4744
        %4969 = vmatprep.subr.bf16.mxu0 0
        %4970 = vmatpush2.bf16.msra.mxu0 %v4759
        %4971 = vmatprep.subr.bf16.mxu0 0
        %4972 = vmatpush2.bf16.msra.mxu0 %v4758
        %4973 = vmatprep.subr.bf16.mxu0 0
        %4974 = vmatpush2.bf16.msra.mxu0 %v4757
        %4975 = vmatprep.subr.bf16.mxu0 0
        %4976 = vmatpush2.bf16.msra.mxu0 %v4756
        %4977 = vmatprep.subr.bf16.mxu0 0
        %4978 = vmatpush2.bf16.msra.mxu0 %v4755
        %4979 = vmatprep.subr.bf16.mxu0 0
        %4980 = vmatpush2.bf16.msra.mxu0 %v4754
        %4981 = vmatprep.subr.bf16.mxu0 0
        %4982 = vmatpush2.bf16.msra.mxu0 %v4753
        %4983 = vmatprep.subr.bf16.mxu0 0
        %4984 = vmatpush2.bf16.msra.mxu0 %v4752
        %4985 = vmatprep.mubr.bf16.mxu0 %v4539
        %4986 = vmatmul.mubr.bf16.gmra.mxu0 %v4538
        %v4987 = vpop.f32.mrf.mxu0
        %v4988 = vadd.f32 %v4827, %v4987
        %v4989 = vpop.f32.mrf.mxu0
        %v4990 = vpop.f32.mrf.mxu0
        %v4991 = vadd.f32 %v4830, %v4990
        %v4992 = vpop.f32.mrf.mxu0
        %4993 = vmatprep.mubr.bf16.mxu0 %v4543
        %4994 = vmatmul.mubr.bf16.gmra.mxu0 %v4542
        %v4995 = vpop.f32.mrf.mxu0
        %v4996 = vadd.f32 %v4835, %v4995
        %v4997 = vpop.f32.mrf.mxu0
        %v4998 = vpop.f32.mrf.mxu0
        %v4999 = vadd.f32 %v4838, %v4998
        %v5000 = vpop.f32.mrf.mxu0
        %5001 = vmatprep.mubr.bf16.mxu0 %v4547
        %5002 = vmatmul.mubr.bf16.gmra.mxu0 %v4546
        %v5003 = vpop.f32.mrf.mxu0
        %v5004 = vadd.f32 %v4843, %v5003
        %v5005 = vpop.f32.mrf.mxu0
        %v5006 = vpop.f32.mrf.mxu0
        %v5007 = vadd.f32 %v4846, %v5006
        %v5008 = vpop.f32.mrf.mxu0
        %5009 = vmatprep.mubr.bf16.mxu0 %v4551
        %5010 = vmatmul.mubr.bf16.gmra.mxu0 %v4550
        %v5011 = vpop.f32.mrf.mxu0
        %v5012 = vadd.f32 %v4851, %v5011
        %v5013 = vpop.f32.mrf.mxu0
        %v5014 = vpop.f32.mrf.mxu0
        %v5015 = vadd.f32 %v4854, %v5014
        %v5016 = vpop.f32.mrf.mxu0
        %5017 = vmatprep.mubr.bf16.mxu0 %v4555
        %5018 = vmatmul.mubr.bf16.gmra.mxu0 %v4554
        %v5019 = vpop.f32.mrf.mxu0
        %v5020 = vadd.f32 %v4859, %v5019
        %v5021 = vpop.f32.mrf.mxu0
        %v5022 = vpop.f32.mrf.mxu0
        %v5023 = vadd.f32 %v4862, %v5022
        %v5024 = vpop.f32.mrf.mxu0
        %5025 = vmatprep.mubr.bf16.mxu0 %v4559
        %5026 = vmatmul.mubr.bf16.gmra.mxu0 %v4558
        %v5027 = vpop.f32.mrf.mxu0
        %v5028 = vadd.f32 %v4867, %v5027
        %v5029 = vpop.f32.mrf.mxu0
        %v5030 = vpop.f32.mrf.mxu0
        %v5031 = vadd.f32 %v4870, %v5030
        %v5032 = vpop.f32.mrf.mxu0
        %5033 = vmatprep.mubr.bf16.mxu0 %v4563
        %5034 = vmatmul.mubr.bf16.gmra.mxu0 %v4562
        %v5035 = vpop.f32.mrf.mxu0
        %v5036 = vadd.f32 %v4875, %v5035
        %v5037 = vpop.f32.mrf.mxu0
        %v5038 = vpop.f32.mrf.mxu0
        %v5039 = vadd.f32 %v4878, %v5038
        %v5040 = vpop.f32.mrf.mxu0
        %5041 = vmatprep.mubr.bf16.mxu0 %v4567
        %5042 = vmatmul.mubr.bf16.gmra.mxu0 %v4566
        %v5043 = vpop.f32.mrf.mxu0
        %v5044 = vadd.f32 %v4883, %v5043
        %v5045 = vpop.f32.mrf.mxu0
        %v5046 = vpop.f32.mrf.mxu0
        %v5047 = vadd.f32 %v4886, %v5046
        %v5048 = vpop.f32.mrf.mxu0
        %5049 = vmatprep.mubr.bf16.mxu0 %v4571
        %5050 = vmatmul.mubr.bf16.gmra.mxu0 %v4570
        %v5051 = vpop.f32.mrf.mxu0
        %v5052 = vadd.f32 %v4891, %v5051
        %v5053 = vpop.f32.mrf.mxu0
        %v5054 = vpop.f32.mrf.mxu0
        %v5055 = vadd.f32 %v4894, %v5054
        %v5056 = vpop.f32.mrf.mxu0
        %5057 = vmatprep.mubr.bf16.mxu0 %v4575
        %5058 = vmatmul.mubr.bf16.gmra.mxu0 %v4574
        %v5059 = vpop.f32.mrf.mxu0
        %v5060 = vadd.f32 %v4899, %v5059
        %v5061 = vpop.f32.mrf.mxu0
        %v5062 = vpop.f32.mrf.mxu0
        %v5063 = vadd.f32 %v4902, %v5062
        %v5064 = vpop.f32.mrf.mxu0
        %5065 = vmatprep.mubr.bf16.mxu0 %v4579
        %5066 = vmatmul.mubr.bf16.gmra.mxu0 %v4578
        %v5067 = vpop.f32.mrf.mxu0
        %v5068 = vadd.f32 %v4907, %v5067
        %v5069 = vpop.f32.mrf.mxu0
        %v5070 = vpop.f32.mrf.mxu0
        %v5071 = vadd.f32 %v4910, %v5070
        %v5072 = vpop.f32.mrf.mxu0
        %5073 = vmatprep.mubr.bf16.mxu0 %v4583
        %5074 = vmatmul.mubr.bf16.gmra.mxu0 %v4582
        %v5075 = vpop.f32.mrf.mxu0
        %v5076 = vadd.f32 %v4915, %v5075
        %v5077 = vpop.f32.mrf.mxu0
        %v5078 = vpop.f32.mrf.mxu0
        %v5079 = vadd.f32 %v4918, %v5078
        %v5080 = vpop.f32.mrf.mxu0
        %5081 = vmatprep.mubr.bf16.mxu0 %v4587
        %5082 = vmatmul.mubr.bf16.gmra.mxu0 %v4586
        %v5083 = vpop.f32.mrf.mxu0
        %v5084 = vadd.f32 %v4923, %v5083
        %v5085 = vpop.f32.mrf.mxu0
        %v5086 = vpop.f32.mrf.mxu0
        %v5087 = vadd.f32 %v4926, %v5086
        %v5088 = vpop.f32.mrf.mxu0
        %5089 = vmatprep.mubr.bf16.mxu0 %v4591
        %5090 = vmatmul.mubr.bf16.gmra.mxu0 %v4590
        %v5091 = vpop.f32.mrf.mxu0
        %v5092 = vadd.f32 %v4931, %v5091
        %v5093 = vpop.f32.mrf.mxu0
        %v5094 = vpop.f32.mrf.mxu0
        %v5095 = vadd.f32 %v4934, %v5094
        %v5096 = vpop.f32.mrf.mxu0
        %5097 = vmatprep.mubr.bf16.mxu0 %v4595
        %5098 = vmatmul.mubr.bf16.gmra.mxu0 %v4594
        %v5099 = vpop.f32.mrf.mxu0
        %v5100 = vadd.f32 %v4939, %v5099
        %v5101 = vpop.f32.mrf.mxu0
        %v5102 = vpop.f32.mrf.mxu0
        %v5103 = vadd.f32 %v4942, %v5102
        %v5104 = vpop.f32.mrf.mxu0
        %5105 = vmatprep.mubr.bf16.mxu0 %v4599
        %5106 = vmatmul.mubr.bf16.gmra.mxu0 %v4598
        %v5107 = vpop.f32.mrf.mxu0
        %v5108 = vadd.f32 %v4947, %v5107
        %v5109 = vpop.f32.mrf.mxu0
        %v5110 = vpop.f32.mrf.mxu0
        %v5111 = vadd.f32 %v4950, %v5110
        %v5112 = vpop.f32.mrf.mxu0
        %5113 = vdwg.mxu0
        %v5114 = vpack.c.bf16 %v4991, %v4988
        %v5115 = vpack.c.bf16 %v4999, %v4996
        %v5116 = vpack.c.bf16 %v5007, %v5004
        %v5117 = vpack.c.bf16 %v5015, %v5012
        %v5118 = vpack.c.bf16 %v5023, %v5020
        %v5119 = vpack.c.bf16 %v5031, %v5028
        %v5120 = vpack.c.bf16 %v5039, %v5036
        %v5121 = vpack.c.bf16 %v5047, %v5044
        %v5122 = vpack.c.bf16 %v5055, %v5052
        %v5123 = vpack.c.bf16 %v5063, %v5060
        %v5124 = vpack.c.bf16 %v5071, %v5068
        %v5125 = vpack.c.bf16 %v5079, %v5076
        %v5126 = vpack.c.bf16 %v5087, %v5084
        %v5127 = vpack.c.bf16 %v5095, %v5092
        %v5128 = vpack.c.bf16 %v5103, %v5100
        %v5129 = vpack.c.bf16 %v5111, %v5108
        %v5130 = vld [vmem:[#allocation2 + $0x4] sm:$0xf]
        %v5131 = vld [vmem:[#allocation2 + $0x14] sm:$0xf]
        %v5132 = vld [vmem:[#allocation2 + $0x24] sm:$0xf]
        %v5133 = vld [vmem:[#allocation2 + $0x34] sm:$0xf]
        %v5134 = vld [vmem:[#allocation2 + $0x44] sm:$0xf]
        %v5135 = vld [vmem:[#allocation2 + $0x54] sm:$0xf]
        %v5136 = vld [vmem:[#allocation2 + $0x64] sm:$0xf]
        %v5137 = vld [vmem:[#allocation2 + $0x74] sm:$0xf]
        %v5138 = vld [vmem:[#allocation2 + $0x84] sm:$0xf]
        %v5139 = vld [vmem:[#allocation2 + $0x94] sm:$0xf]
        %v5140 = vld [vmem:[#allocation2 + $0xa4] sm:$0xf]
        %v5141 = vld [vmem:[#allocation2 + $0xb4] sm:$0xf]
        %v5142 = vld [vmem:[#allocation2 + $0xc4] sm:$0xf]
        %v5143 = vld [vmem:[#allocation2 + $0xd4] sm:$0xf]
        %v5144 = vld [vmem:[#allocation2 + $0xe4] sm:$0xf]
        %v5145 = vld [vmem:[#allocation2 + $0xf4] sm:$0xf]
        %v5146 = vld [vmem:[#allocation2 + $0x104] sm:$0xf]
        %v5147 = vld [vmem:[#allocation2 + $0x114] sm:$0xf]
        %v5148 = vld [vmem:[#allocation2 + $0x124] sm:$0xf]
        %v5149 = vld [vmem:[#allocation2 + $0x134] sm:$0xf]
        %v5150 = vld [vmem:[#allocation2 + $0x144] sm:$0xf]
        %v5151 = vld [vmem:[#allocation2 + $0x154] sm:$0xf]
        %v5152 = vld [vmem:[#allocation2 + $0x164] sm:$0xf]
        %v5153 = vld [vmem:[#allocation2 + $0x174] sm:$0xf]
        %v5154 = vld [vmem:[#allocation2 + $0x184] sm:$0xf]
        %v5155 = vld [vmem:[#allocation2 + $0x194] sm:$0xf]
        %v5156 = vld [vmem:[#allocation2 + $0x1a4] sm:$0xf]
        %v5157 = vld [vmem:[#allocation2 + $0x1b4] sm:$0xf]
        %v5158 = vld [vmem:[#allocation2 + $0x1c4] sm:$0xf]
        %v5159 = vld [vmem:[#allocation2 + $0x1d4] sm:$0xf]
        %v5160 = vld [vmem:[#allocation2 + $0x1e4] sm:$0xf]
        %v5161 = vld [vmem:[#allocation2 + $0x1f4] sm:$0xf]
        %v5162 = vld [vmem:[#allocation2 + $0x204] sm:$0xf]
        %v5163 = vld [vmem:[#allocation2 + $0x214] sm:$0xf]
        %v5164 = vld [vmem:[#allocation2 + $0x224] sm:$0xf]
        %v5165 = vld [vmem:[#allocation2 + $0x234] sm:$0xf]
        %v5166 = vld [vmem:[#allocation2 + $0x244] sm:$0xf]
        %v5167 = vld [vmem:[#allocation2 + $0x254] sm:$0xf]
        %v5168 = vld [vmem:[#allocation2 + $0x264] sm:$0xf]
        %v5169 = vld [vmem:[#allocation2 + $0x274] sm:$0xf]
        %v5170 = vld [vmem:[#allocation2 + $0x284] sm:$0xf]
        %v5171 = vld [vmem:[#allocation2 + $0x294] sm:$0xf]
        %v5172 = vld [vmem:[#allocation2 + $0x2a4] sm:$0xf]
        %v5173 = vld [vmem:[#allocation2 + $0x2b4] sm:$0xf]
        %v5174 = vld [vmem:[#allocation2 + $0x2c4] sm:$0xf]
        %v5175 = vld [vmem:[#allocation2 + $0x2d4] sm:$0xf]
        %v5176 = vld [vmem:[#allocation2 + $0x2e4] sm:$0xf]
        %v5177 = vld [vmem:[#allocation2 + $0x2f4] sm:$0xf]
        %v5178 = vld [vmem:[#allocation2 + $0x304] sm:$0xf]
        %v5179 = vld [vmem:[#allocation2 + $0x314] sm:$0xf]
        %v5180 = vld [vmem:[#allocation2 + $0x324] sm:$0xf]
        %v5181 = vld [vmem:[#allocation2 + $0x334] sm:$0xf]
        %v5182 = vld [vmem:[#allocation2 + $0x344] sm:$0xf]
        %v5183 = vld [vmem:[#allocation2 + $0x354] sm:$0xf]
        %v5184 = vld [vmem:[#allocation2 + $0x364] sm:$0xf]
        %v5185 = vld [vmem:[#allocation2 + $0x374] sm:$0xf]
        %v5186 = vld [vmem:[#allocation2 + $0x384] sm:$0xf]
        %v5187 = vld [vmem:[#allocation2 + $0x394] sm:$0xf]
        %v5188 = vld [vmem:[#allocation2 + $0x3a4] sm:$0xf]
        %v5189 = vld [vmem:[#allocation2 + $0x3b4] sm:$0xf]
        %v5190 = vld [vmem:[#allocation2 + $0x3c4] sm:$0xf]
        %v5191 = vld [vmem:[#allocation2 + $0x3d4] sm:$0xf]
        %v5192 = vld [vmem:[#allocation2 + $0x3e4] sm:$0xf]
        %v5193 = vld [vmem:[#allocation2 + $0x3f4] sm:$0xf]
        %v5194 = vld [vmem:[#allocation2 + $0xc] sm:$0xf]
        %v5195 = vld [vmem:[#allocation2 + $0x1c] sm:$0xf]
        %v5196 = vld [vmem:[#allocation2 + $0x2c] sm:$0xf]
        %v5197 = vld [vmem:[#allocation2 + $0x3c] sm:$0xf]
        %v5198 = vld [vmem:[#allocation2 + $0x4c] sm:$0xf]
        %v5199 = vld [vmem:[#allocation2 + $0x5c] sm:$0xf]
        %v5200 = vld [vmem:[#allocation2 + $0x6c] sm:$0xf]
        %v5201 = vld [vmem:[#allocation2 + $0x7c] sm:$0xf]
        %v5202 = vld [vmem:[#allocation2 + $0x8c] sm:$0xf]
        %v5203 = vld [vmem:[#allocation2 + $0x9c] sm:$0xf]
        %v5204 = vld [vmem:[#allocation2 + $0xac] sm:$0xf]
        %v5205 = vld [vmem:[#allocation2 + $0xbc] sm:$0xf]
        %v5206 = vld [vmem:[#allocation2 + $0xcc] sm:$0xf]
        %v5207 = vld [vmem:[#allocation2 + $0xdc] sm:$0xf]
        %v5208 = vld [vmem:[#allocation2 + $0xec] sm:$0xf]
        %v5209 = vld [vmem:[#allocation2 + $0xfc] sm:$0xf]
        %v5210 = vld [vmem:[#allocation2 + $0x10c] sm:$0xf]
        %v5211 = vld [vmem:[#allocation2 + $0x11c] sm:$0xf]
        %v5212 = vld [vmem:[#allocation2 + $0x12c] sm:$0xf]
        %v5213 = vld [vmem:[#allocation2 + $0x13c] sm:$0xf]
        %v5214 = vld [vmem:[#allocation2 + $0x14c] sm:$0xf]
        %v5215 = vld [vmem:[#allocation2 + $0x15c] sm:$0xf]
        %v5216 = vld [vmem:[#allocation2 + $0x16c] sm:$0xf]
        %v5217 = vld [vmem:[#allocation2 + $0x17c] sm:$0xf]
        %v5218 = vld [vmem:[#allocation2 + $0x18c] sm:$0xf]
        %v5219 = vld [vmem:[#allocation2 + $0x19c] sm:$0xf]
        %v5220 = vld [vmem:[#allocation2 + $0x1ac] sm:$0xf]
        %v5221 = vld [vmem:[#allocation2 + $0x1bc] sm:$0xf]
        %v5222 = vld [vmem:[#allocation2 + $0x1cc] sm:$0xf]
        %v5223 = vld [vmem:[#allocation2 + $0x1dc] sm:$0xf]
        %v5224 = vld [vmem:[#allocation2 + $0x1ec] sm:$0xf]
        %v5225 = vld [vmem:[#allocation2 + $0x1fc] sm:$0xf]
        %v5226 = vld [vmem:[#allocation2 + $0x20c] sm:$0xf]
        %v5227 = vld [vmem:[#allocation2 + $0x21c] sm:$0xf]
        %v5228 = vld [vmem:[#allocation2 + $0x22c] sm:$0xf]
        %v5229 = vld [vmem:[#allocation2 + $0x23c] sm:$0xf]
        %v5230 = vld [vmem:[#allocation2 + $0x24c] sm:$0xf]
        %v5231 = vld [vmem:[#allocation2 + $0x25c] sm:$0xf]
        %v5232 = vld [vmem:[#allocation2 + $0x26c] sm:$0xf]
        %v5233 = vld [vmem:[#allocation2 + $0x27c] sm:$0xf]
        %v5234 = vld [vmem:[#allocation2 + $0x28c] sm:$0xf]
        %v5235 = vld [vmem:[#allocation2 + $0x29c] sm:$0xf]
        %v5236 = vld [vmem:[#allocation2 + $0x2ac] sm:$0xf]
        %v5237 = vld [vmem:[#allocation2 + $0x2bc] sm:$0xf]
        %v5238 = vld [vmem:[#allocation2 + $0x2cc] sm:$0xf]
        %v5239 = vld [vmem:[#allocation2 + $0x2dc] sm:$0xf]
        %v5240 = vld [vmem:[#allocation2 + $0x2ec] sm:$0xf]
        %v5241 = vld [vmem:[#allocation2 + $0x2fc] sm:$0xf]
        %v5242 = vld [vmem:[#allocation2 + $0x30c] sm:$0xf]
        %v5243 = vld [vmem:[#allocation2 + $0x31c] sm:$0xf]
        %v5244 = vld [vmem:[#allocation2 + $0x32c] sm:$0xf]
        %v5245 = vld [vmem:[#allocation2 + $0x33c] sm:$0xf]
        %v5246 = vld [vmem:[#allocation2 + $0x34c] sm:$0xf]
        %v5247 = vld [vmem:[#allocation2 + $0x35c] sm:$0xf]
        %v5248 = vld [vmem:[#allocation2 + $0x36c] sm:$0xf]
        %v5249 = vld [vmem:[#allocation2 + $0x37c] sm:$0xf]
        %v5250 = vld [vmem:[#allocation2 + $0x38c] sm:$0xf]
        %v5251 = vld [vmem:[#allocation2 + $0x39c] sm:$0xf]
        %v5252 = vld [vmem:[#allocation2 + $0x3ac] sm:$0xf]
        %v5253 = vld [vmem:[#allocation2 + $0x3bc] sm:$0xf]
        %v5254 = vld [vmem:[#allocation2 + $0x3cc] sm:$0xf]
        %v5255 = vld [vmem:[#allocation2 + $0x3dc] sm:$0xf]
        %v5256 = vld [vmem:[#allocation2 + $0x3ec] sm:$0xf]
        %v5257 = vld [vmem:[#allocation2 + $0x3fc] sm:$0xf]
        %v5322 = vunpack.c.l.b16 %v5130
        %v5323 = vunpack.c.l.b16 %v5131
        %v5324 = vunpack.c.l.b16 %v5132
        %v5325 = vunpack.c.l.b16 %v5133
        %v5326 = vunpack.c.l.b16 %v5134
        %v5327 = vunpack.c.l.b16 %v5135
        %v5328 = vunpack.c.l.b16 %v5136
        %v5329 = vunpack.c.l.b16 %v5137
        %v5330 = vunpack.c.l.b16 %v5138
        %v5331 = vunpack.c.l.b16 %v5139
        %v5332 = vunpack.c.l.b16 %v5140
        %v5333 = vunpack.c.l.b16 %v5141
        %v5334 = vunpack.c.l.b16 %v5142
        %v5335 = vunpack.c.l.b16 %v5143
        %v5336 = vunpack.c.l.b16 %v5144
        %v5337 = vunpack.c.l.b16 %v5145
        %v5338 = vunpack.c.l.b16 %v5146
        %v5339 = vunpack.c.l.b16 %v5147
        %v5340 = vunpack.c.l.b16 %v5148
        %v5341 = vunpack.c.l.b16 %v5149
        %v5342 = vunpack.c.l.b16 %v5150
        %v5343 = vunpack.c.l.b16 %v5151
        %v5344 = vunpack.c.l.b16 %v5152
        %v5345 = vunpack.c.l.b16 %v5153
        %v5346 = vunpack.c.l.b16 %v5154
        %v5347 = vunpack.c.l.b16 %v5155
        %v5348 = vunpack.c.l.b16 %v5156
        %v5349 = vunpack.c.l.b16 %v5157
        %v5350 = vunpack.c.l.b16 %v5158
        %v5351 = vunpack.c.l.b16 %v5159
        %v5352 = vunpack.c.l.b16 %v5160
        %v5353 = vunpack.c.l.b16 %v5161
        %v5354 = vunpack.c.l.b16 %v5162
        %v5355 = vunpack.c.l.b16 %v5163
        %v5356 = vunpack.c.l.b16 %v5164
        %v5357 = vunpack.c.l.b16 %v5165
        %v5358 = vunpack.c.l.b16 %v5166
        %v5359 = vunpack.c.l.b16 %v5167
        %v5360 = vunpack.c.l.b16 %v5168
        %v5361 = vunpack.c.l.b16 %v5169
        %v5362 = vunpack.c.l.b16 %v5170
        %v5363 = vunpack.c.l.b16 %v5171
        %v5364 = vunpack.c.l.b16 %v5172
        %v5365 = vunpack.c.l.b16 %v5173
        %v5366 = vunpack.c.l.b16 %v5174
        %v5367 = vunpack.c.l.b16 %v5175
        %v5368 = vunpack.c.l.b16 %v5176
        %v5369 = vunpack.c.l.b16 %v5177
        %v5370 = vunpack.c.l.b16 %v5178
        %v5371 = vunpack.c.l.b16 %v5179
        %v5372 = vunpack.c.l.b16 %v5180
        %v5373 = vunpack.c.l.b16 %v5181
        %v5374 = vunpack.c.l.b16 %v5182
        %v5375 = vunpack.c.l.b16 %v5183
        %v5376 = vunpack.c.l.b16 %v5184
        %v5377 = vunpack.c.l.b16 %v5185
        %v5378 = vunpack.c.l.b16 %v5186
        %v5379 = vunpack.c.l.b16 %v5187
        %v5380 = vunpack.c.l.b16 %v5188
        %v5381 = vunpack.c.l.b16 %v5189
        %v5382 = vunpack.c.l.b16 %v5190
        %v5383 = vunpack.c.l.b16 %v5191
        %v5384 = vunpack.c.l.b16 %v5192
        %v5385 = vunpack.c.l.b16 %v5193
        %v5386 = vpack.c.b16 %v5323, %v5322
        %v5387 = vpack.c.b16 %v5325, %v5324
        %v5388 = vpack.c.b16 %v5327, %v5326
        %v5389 = vpack.c.b16 %v5329, %v5328
        %v5390 = vpack.c.b16 %v5331, %v5330
        %v5391 = vpack.c.b16 %v5333, %v5332
        %v5392 = vpack.c.b16 %v5335, %v5334
        %v5393 = vpack.c.b16 %v5337, %v5336
        %v5394 = vpack.c.b16 %v5339, %v5338
        %v5395 = vpack.c.b16 %v5341, %v5340
        %v5396 = vpack.c.b16 %v5343, %v5342
        %v5397 = vpack.c.b16 %v5345, %v5344
        %v5398 = vpack.c.b16 %v5347, %v5346
        %v5399 = vpack.c.b16 %v5349, %v5348
        %v5400 = vpack.c.b16 %v5351, %v5350
        %v5401 = vpack.c.b16 %v5353, %v5352
        %v5402 = vpack.c.b16 %v5355, %v5354
        %v5403 = vpack.c.b16 %v5357, %v5356
        %v5404 = vpack.c.b16 %v5359, %v5358
        %v5405 = vpack.c.b16 %v5361, %v5360
        %v5406 = vpack.c.b16 %v5363, %v5362
        %v5407 = vpack.c.b16 %v5365, %v5364
        %v5408 = vpack.c.b16 %v5367, %v5366
        %v5409 = vpack.c.b16 %v5369, %v5368
        %v5410 = vpack.c.b16 %v5371, %v5370
        %v5411 = vpack.c.b16 %v5373, %v5372
        %v5412 = vpack.c.b16 %v5375, %v5374
        %v5413 = vpack.c.b16 %v5377, %v5376
        %v5414 = vpack.c.b16 %v5379, %v5378
        %v5415 = vpack.c.b16 %v5381, %v5380
        %v5416 = vpack.c.b16 %v5383, %v5382
        %v5417 = vpack.c.b16 %v5385, %v5384
        %5450 = vmatprep.subr.bf16.mxu0 0
        %5451 = vmatpush1.bf16.xpose.msra.mxu0 %v5393
        %5452 = vmatprep.subr.bf16.mxu0 0
        %5453 = vmatpush1.bf16.xpose.msra.mxu0 %v5392
        %5454 = vmatprep.subr.bf16.mxu0 0
        %5455 = vmatpush1.bf16.xpose.msra.mxu0 %v5391
        %5456 = vmatprep.subr.bf16.mxu0 0
        %5457 = vmatpush1.bf16.xpose.msra.mxu0 %v5390
        %5458 = vmatprep.subr.bf16.mxu0 0
        %5459 = vmatpush1.bf16.xpose.msra.mxu0 %v5389
        %5460 = vmatprep.subr.bf16.mxu0 0
        %5461 = vmatpush1.bf16.xpose.msra.mxu0 %v5388
        %5462 = vmatprep.subr.bf16.mxu0 0
        %5463 = vmatpush1.bf16.xpose.msra.mxu0 %v5387
        %5464 = vmatprep.subr.bf16.mxu0 0
        %5465 = vmatpush1.bf16.xpose.msra.mxu0 %v5386
        %5466 = vmatprep.subr.bf16.mxu0 0
        %5467 = vmatpush2.bf16.xpose.msra.mxu0 %v5401
        %5468 = vmatprep.subr.bf16.mxu0 0
        %5469 = vmatpush2.bf16.xpose.msra.mxu0 %v5400
        %5470 = vmatprep.subr.bf16.mxu0 0
        %5471 = vmatpush2.bf16.xpose.msra.mxu0 %v5399
        %5472 = vmatprep.subr.bf16.mxu0 0
        %5473 = vmatpush2.bf16.xpose.msra.mxu0 %v5398
        %5474 = vmatprep.subr.bf16.mxu0 0
        %5475 = vmatpush2.bf16.xpose.msra.mxu0 %v5397
        %5476 = vmatprep.subr.bf16.mxu0 0
        %5477 = vmatpush2.bf16.xpose.msra.mxu0 %v5396
        %5478 = vmatprep.subr.bf16.mxu0 0
        %5479 = vmatpush2.bf16.xpose.msra.mxu0 %v5395
        %5480 = vmatprep.subr.bf16.mxu0 0
        %5481 = vmatpush2.bf16.xpose.msra.mxu0 %v5394
        %5482 = vmatprep.mubr.bf16.mxu0 0
        %5483 = vmatmul.mubr.bf16.gmra.mxu0 %v2839
        %v5484 = vpop.f32.mrf.mxu0
        %v5485 = vadd.f32 0.0, %v5484
        %v5486 = vpop.f32.mrf.mxu0
        %v5487 = vadd.f32 0.0, %v5486
        %v5488 = vpop.f32.mrf.mxu0
        %v5489 = vadd.f32 0.0, %v5488
        %v5490 = vpop.f32.mrf.mxu0
        %v5491 = vadd.f32 0.0, %v5490
        %5492 = vmatprep.mubr.bf16.mxu0 0
        %5493 = vmatmul.mubr.bf16.gmra.mxu0 %v2841
        %v5494 = vpop.f32.mrf.mxu0
        %v5495 = vadd.f32 0.0, %v5494
        %v5496 = vpop.f32.mrf.mxu0
        %v5497 = vadd.f32 0.0, %v5496
        %v5498 = vpop.f32.mrf.mxu0
        %v5499 = vadd.f32 0.0, %v5498
        %v5500 = vpop.f32.mrf.mxu0
        %v5501 = vadd.f32 0.0, %v5500
        %5502 = vmatprep.mubr.bf16.mxu0 0
        %5503 = vmatmul.mubr.bf16.gmra.mxu0 %v2843
        %v5504 = vpop.f32.mrf.mxu0
        %v5505 = vadd.f32 0.0, %v5504
        %v5506 = vpop.f32.mrf.mxu0
        %v5507 = vadd.f32 0.0, %v5506
        %v5508 = vpop.f32.mrf.mxu0
        %v5509 = vadd.f32 0.0, %v5508
        %v5510 = vpop.f32.mrf.mxu0
        %v5511 = vadd.f32 0.0, %v5510
        %5512 = vmatprep.mubr.bf16.mxu0 0
        %5513 = vmatmul.mubr.bf16.gmra.mxu0 %v2845
        %v5514 = vpop.f32.mrf.mxu0
        %v5515 = vadd.f32 0.0, %v5514
        %v5516 = vpop.f32.mrf.mxu0
        %v5517 = vadd.f32 0.0, %v5516
        %v5518 = vpop.f32.mrf.mxu0
        %v5519 = vadd.f32 0.0, %v5518
        %v5520 = vpop.f32.mrf.mxu0
        %v5521 = vadd.f32 0.0, %v5520
        %5522 = vmatprep.mubr.bf16.mxu0 0
        %5523 = vmatmul.mubr.bf16.gmra.mxu0 %v2847
        %v5524 = vpop.f32.mrf.mxu0
        %v5525 = vadd.f32 0.0, %v5524
        %v5526 = vpop.f32.mrf.mxu0
        %v5527 = vadd.f32 0.0, %v5526
        %v5528 = vpop.f32.mrf.mxu0
        %v5529 = vadd.f32 0.0, %v5528
        %v5530 = vpop.f32.mrf.mxu0
        %v5531 = vadd.f32 0.0, %v5530
        %5532 = vmatprep.mubr.bf16.mxu0 0
        %5533 = vmatmul.mubr.bf16.gmra.mxu0 %v2849
        %v5534 = vpop.f32.mrf.mxu0
        %v5535 = vadd.f32 0.0, %v5534
        %v5536 = vpop.f32.mrf.mxu0
        %v5537 = vadd.f32 0.0, %v5536
        %v5538 = vpop.f32.mrf.mxu0
        %v5539 = vadd.f32 0.0, %v5538
        %v5540 = vpop.f32.mrf.mxu0
        %v5541 = vadd.f32 0.0, %v5540
        %5542 = vmatprep.mubr.bf16.mxu0 0
        %5543 = vmatmul.mubr.bf16.gmra.mxu0 %v2851
        %v5544 = vpop.f32.mrf.mxu0
        %v5545 = vadd.f32 0.0, %v5544
        %v5546 = vpop.f32.mrf.mxu0
        %v5547 = vadd.f32 0.0, %v5546
        %v5548 = vpop.f32.mrf.mxu0
        %v5549 = vadd.f32 0.0, %v5548
        %v5550 = vpop.f32.mrf.mxu0
        %v5551 = vadd.f32 0.0, %v5550
        %5552 = vmatprep.mubr.bf16.mxu0 0
        %5553 = vmatmul.mubr.bf16.gmra.mxu0 %v2853
        %v5554 = vpop.f32.mrf.mxu0
        %v5555 = vadd.f32 0.0, %v5554
        %v5556 = vpop.f32.mrf.mxu0
        %v5557 = vadd.f32 0.0, %v5556
        %v5558 = vpop.f32.mrf.mxu0
        %v5559 = vadd.f32 0.0, %v5558
        %v5560 = vpop.f32.mrf.mxu0
        %v5561 = vadd.f32 0.0, %v5560
        %5562 = vmatprep.mubr.bf16.mxu0 0
        %5563 = vmatmul.mubr.bf16.gmra.mxu0 %v2855
        %v5564 = vpop.f32.mrf.mxu0
        %v5565 = vadd.f32 0.0, %v5564
        %v5566 = vpop.f32.mrf.mxu0
        %v5567 = vadd.f32 0.0, %v5566
        %v5568 = vpop.f32.mrf.mxu0
        %v5569 = vadd.f32 0.0, %v5568
        %v5570 = vpop.f32.mrf.mxu0
        %v5571 = vadd.f32 0.0, %v5570
        %5572 = vmatprep.mubr.bf16.mxu0 0
        %5573 = vmatmul.mubr.bf16.gmra.mxu0 %v2857
        %v5574 = vpop.f32.mrf.mxu0
        %v5575 = vadd.f32 0.0, %v5574
        %v5576 = vpop.f32.mrf.mxu0
        %v5577 = vadd.f32 0.0, %v5576
        %v5578 = vpop.f32.mrf.mxu0
        %v5579 = vadd.f32 0.0, %v5578
        %v5580 = vpop.f32.mrf.mxu0
        %v5581 = vadd.f32 0.0, %v5580
        %5582 = vmatprep.mubr.bf16.mxu0 0
        %5583 = vmatmul.mubr.bf16.gmra.mxu0 %v2859
        %v5584 = vpop.f32.mrf.mxu0
        %v5585 = vadd.f32 0.0, %v5584
        %v5586 = vpop.f32.mrf.mxu0
        %v5587 = vadd.f32 0.0, %v5586
        %v5588 = vpop.f32.mrf.mxu0
        %v5589 = vadd.f32 0.0, %v5588
        %v5590 = vpop.f32.mrf.mxu0
        %v5591 = vadd.f32 0.0, %v5590
        %5592 = vmatprep.mubr.bf16.mxu0 0
        %5593 = vmatmul.mubr.bf16.gmra.mxu0 %v2861
        %v5594 = vpop.f32.mrf.mxu0
        %v5595 = vadd.f32 0.0, %v5594
        %v5596 = vpop.f32.mrf.mxu0
        %v5597 = vadd.f32 0.0, %v5596
        %v5598 = vpop.f32.mrf.mxu0
        %v5599 = vadd.f32 0.0, %v5598
        %v5600 = vpop.f32.mrf.mxu0
        %v5601 = vadd.f32 0.0, %v5600
        %5602 = vmatprep.mubr.bf16.mxu0 0
        %5603 = vmatmul.mubr.bf16.gmra.mxu0 %v2863
        %v5604 = vpop.f32.mrf.mxu0
        %v5605 = vadd.f32 0.0, %v5604
        %v5606 = vpop.f32.mrf.mxu0
        %v5607 = vadd.f32 0.0, %v5606
        %v5608 = vpop.f32.mrf.mxu0
        %v5609 = vadd.f32 0.0, %v5608
        %v5610 = vpop.f32.mrf.mxu0
        %v5611 = vadd.f32 0.0, %v5610
        %5612 = vmatprep.mubr.bf16.mxu0 0
        %5613 = vmatmul.mubr.bf16.gmra.mxu0 %v2865
        %v5614 = vpop.f32.mrf.mxu0
        %v5615 = vadd.f32 0.0, %v5614
        %v5616 = vpop.f32.mrf.mxu0
        %v5617 = vadd.f32 0.0, %v5616
        %v5618 = vpop.f32.mrf.mxu0
        %v5619 = vadd.f32 0.0, %v5618
        %v5620 = vpop.f32.mrf.mxu0
        %v5621 = vadd.f32 0.0, %v5620
        %5622 = vmatprep.mubr.bf16.mxu0 0
        %5623 = vmatmul.mubr.bf16.gmra.mxu0 %v2867
        %v5624 = vpop.f32.mrf.mxu0
        %v5625 = vadd.f32 0.0, %v5624
        %v5626 = vpop.f32.mrf.mxu0
        %v5627 = vadd.f32 0.0, %v5626
        %v5628 = vpop.f32.mrf.mxu0
        %v5629 = vadd.f32 0.0, %v5628
        %v5630 = vpop.f32.mrf.mxu0
        %v5631 = vadd.f32 0.0, %v5630
        %5632 = vmatprep.mubr.bf16.mxu0 0
        %5633 = vmatmul.mubr.bf16.gmra.mxu0 %v2869
        %v5634 = vpop.f32.mrf.mxu0
        %v5635 = vadd.f32 0.0, %v5634
        %v5636 = vpop.f32.mrf.mxu0
        %v5637 = vadd.f32 0.0, %v5636
        %v5638 = vpop.f32.mrf.mxu0
        %v5639 = vadd.f32 0.0, %v5638
        %v5640 = vpop.f32.mrf.mxu0
        %v5641 = vadd.f32 0.0, %v5640
        %5642 = vdwg.mxu0
        %5643 = vmatprep.subr.bf16.mxu0 0
        %5644 = vmatpush1.bf16.xpose.msra.mxu0 %v5409
        %5645 = vmatprep.subr.bf16.mxu0 0
        %5646 = vmatpush1.bf16.xpose.msra.mxu0 %v5408
        %5647 = vmatprep.subr.bf16.mxu0 0
        %5648 = vmatpush1.bf16.xpose.msra.mxu0 %v5407
        %5649 = vmatprep.subr.bf16.mxu0 0
        %5650 = vmatpush1.bf16.xpose.msra.mxu0 %v5406
        %5651 = vmatprep.subr.bf16.mxu0 0
        %5652 = vmatpush1.bf16.xpose.msra.mxu0 %v5405
        %5653 = vmatprep.subr.bf16.mxu0 0
        %5654 = vmatpush1.bf16.xpose.msra.mxu0 %v5404
        %5655 = vmatprep.subr.bf16.mxu0 0
        %5656 = vmatpush1.bf16.xpose.msra.mxu0 %v5403
        %5657 = vmatprep.subr.bf16.mxu0 0
        %5658 = vmatpush1.bf16.xpose.msra.mxu0 %v5402
        %5659 = vmatprep.subr.bf16.mxu0 0
        %5660 = vmatpush2.bf16.xpose.msra.mxu0 %v5417
        %5661 = vmatprep.subr.bf16.mxu0 0
        %5662 = vmatpush2.bf16.xpose.msra.mxu0 %v5416
        %5663 = vmatprep.subr.bf16.mxu0 0
        %5664 = vmatpush2.bf16.xpose.msra.mxu0 %v5415
        %5665 = vmatprep.subr.bf16.mxu0 0
        %5666 = vmatpush2.bf16.xpose.msra.mxu0 %v5414
        %5667 = vmatprep.subr.bf16.mxu0 0
        %5668 = vmatpush2.bf16.xpose.msra.mxu0 %v5413
        %5669 = vmatprep.subr.bf16.mxu0 0
        %5670 = vmatpush2.bf16.xpose.msra.mxu0 %v5412
        %5671 = vmatprep.subr.bf16.mxu0 0
        %5672 = vmatpush2.bf16.xpose.msra.mxu0 %v5411
        %5673 = vmatprep.subr.bf16.mxu0 0
        %5674 = vmatpush2.bf16.xpose.msra.mxu0 %v5410
        %5675 = vmatprep.mubr.bf16.mxu0 0
        %5676 = vmatmul.mubr.bf16.gmra.mxu0 %v2839
        %v5677 = vpop.f32.mrf.mxu0
        %v5678 = vadd.f32 0.0, %v5677
        %v5679 = vpop.f32.mrf.mxu0
        %v5680 = vadd.f32 0.0, %v5679
        %v5681 = vpop.f32.mrf.mxu0
        %v5682 = vadd.f32 0.0, %v5681
        %v5683 = vpop.f32.mrf.mxu0
        %v5684 = vadd.f32 0.0, %v5683
        %5685 = vmatprep.mubr.bf16.mxu0 0
        %5686 = vmatmul.mubr.bf16.gmra.mxu0 %v2841
        %v5687 = vpop.f32.mrf.mxu0
        %v5688 = vadd.f32 0.0, %v5687
        %v5689 = vpop.f32.mrf.mxu0
        %v5690 = vadd.f32 0.0, %v5689
        %v5691 = vpop.f32.mrf.mxu0
        %v5692 = vadd.f32 0.0, %v5691
        %v5693 = vpop.f32.mrf.mxu0
        %v5694 = vadd.f32 0.0, %v5693
        %5695 = vmatprep.mubr.bf16.mxu0 0
        %5696 = vmatmul.mubr.bf16.gmra.mxu0 %v2843
        %v5697 = vpop.f32.mrf.mxu0
        %v5698 = vadd.f32 0.0, %v5697
        %v5699 = vpop.f32.mrf.mxu0
        %v5700 = vadd.f32 0.0, %v5699
        %v5701 = vpop.f32.mrf.mxu0
        %v5702 = vadd.f32 0.0, %v5701
        %v5703 = vpop.f32.mrf.mxu0
        %v5704 = vadd.f32 0.0, %v5703
        %5705 = vmatprep.mubr.bf16.mxu0 0
        %5706 = vmatmul.mubr.bf16.gmra.mxu0 %v2845
        %v5707 = vpop.f32.mrf.mxu0
        %v5708 = vadd.f32 0.0, %v5707
        %v5709 = vpop.f32.mrf.mxu0
        %v5710 = vadd.f32 0.0, %v5709
        %v5711 = vpop.f32.mrf.mxu0
        %v5712 = vadd.f32 0.0, %v5711
        %v5713 = vpop.f32.mrf.mxu0
        %v5714 = vadd.f32 0.0, %v5713
        %5715 = vmatprep.mubr.bf16.mxu0 0
        %5716 = vmatmul.mubr.bf16.gmra.mxu0 %v2847
        %v5717 = vpop.f32.mrf.mxu0
        %v5718 = vadd.f32 0.0, %v5717
        %v5719 = vpop.f32.mrf.mxu0
        %v5720 = vadd.f32 0.0, %v5719
        %v5721 = vpop.f32.mrf.mxu0
        %v5722 = vadd.f32 0.0, %v5721
        %v5723 = vpop.f32.mrf.mxu0
        %v5724 = vadd.f32 0.0, %v5723
        %5725 = vmatprep.mubr.bf16.mxu0 0
        %5726 = vmatmul.mubr.bf16.gmra.mxu0 %v2849
        %v5727 = vpop.f32.mrf.mxu0
        %v5728 = vadd.f32 0.0, %v5727
        %v5729 = vpop.f32.mrf.mxu0
        %v5730 = vadd.f32 0.0, %v5729
        %v5731 = vpop.f32.mrf.mxu0
        %v5732 = vadd.f32 0.0, %v5731
        %v5733 = vpop.f32.mrf.mxu0
        %v5734 = vadd.f32 0.0, %v5733
        %5735 = vmatprep.mubr.bf16.mxu0 0
        %5736 = vmatmul.mubr.bf16.gmra.mxu0 %v2851
        %v5737 = vpop.f32.mrf.mxu0
        %v5738 = vadd.f32 0.0, %v5737
        %v5739 = vpop.f32.mrf.mxu0
        %v5740 = vadd.f32 0.0, %v5739
        %v5741 = vpop.f32.mrf.mxu0
        %v5742 = vadd.f32 0.0, %v5741
        %v5743 = vpop.f32.mrf.mxu0
        %v5744 = vadd.f32 0.0, %v5743
        %5745 = vmatprep.mubr.bf16.mxu0 0
        %5746 = vmatmul.mubr.bf16.gmra.mxu0 %v2853
        %v5747 = vpop.f32.mrf.mxu0
        %v5748 = vadd.f32 0.0, %v5747
        %v5749 = vpop.f32.mrf.mxu0
        %v5750 = vadd.f32 0.0, %v5749
        %v5751 = vpop.f32.mrf.mxu0
        %v5752 = vadd.f32 0.0, %v5751
        %v5753 = vpop.f32.mrf.mxu0
        %v5754 = vadd.f32 0.0, %v5753
        %5755 = vmatprep.mubr.bf16.mxu0 0
        %5756 = vmatmul.mubr.bf16.gmra.mxu0 %v2855
        %v5757 = vpop.f32.mrf.mxu0
        %v5758 = vadd.f32 0.0, %v5757
        %v5759 = vpop.f32.mrf.mxu0
        %v5760 = vadd.f32 0.0, %v5759
        %v5761 = vpop.f32.mrf.mxu0
        %v5762 = vadd.f32 0.0, %v5761
        %v5763 = vpop.f32.mrf.mxu0
        %v5764 = vadd.f32 0.0, %v5763
        %5765 = vmatprep.mubr.bf16.mxu0 0
        %5766 = vmatmul.mubr.bf16.gmra.mxu0 %v2857
        %v5767 = vpop.f32.mrf.mxu0
        %v5768 = vadd.f32 0.0, %v5767
        %v5769 = vpop.f32.mrf.mxu0
        %v5770 = vadd.f32 0.0, %v5769
        %v5771 = vpop.f32.mrf.mxu0
        %v5772 = vadd.f32 0.0, %v5771
        %v5773 = vpop.f32.mrf.mxu0
        %v5774 = vadd.f32 0.0, %v5773
        %5775 = vmatprep.mubr.bf16.mxu0 0
        %5776 = vmatmul.mubr.bf16.gmra.mxu0 %v2859
        %v5777 = vpop.f32.mrf.mxu0
        %v5778 = vadd.f32 0.0, %v5777
        %v5779 = vpop.f32.mrf.mxu0
        %v5780 = vadd.f32 0.0, %v5779
        %v5781 = vpop.f32.mrf.mxu0
        %v5782 = vadd.f32 0.0, %v5781
        %v5783 = vpop.f32.mrf.mxu0
        %v5784 = vadd.f32 0.0, %v5783
        %5785 = vmatprep.mubr.bf16.mxu0 0
        %5786 = vmatmul.mubr.bf16.gmra.mxu0 %v2861
        %v5787 = vpop.f32.mrf.mxu0
        %v5788 = vadd.f32 0.0, %v5787
        %v5789 = vpop.f32.mrf.mxu0
        %v5790 = vadd.f32 0.0, %v5789
        %v5791 = vpop.f32.mrf.mxu0
        %v5792 = vadd.f32 0.0, %v5791
        %v5793 = vpop.f32.mrf.mxu0
        %v5794 = vadd.f32 0.0, %v5793
        %5795 = vmatprep.mubr.bf16.mxu0 0
        %5796 = vmatmul.mubr.bf16.gmra.mxu0 %v2863
        %v5797 = vpop.f32.mrf.mxu0
        %v5798 = vadd.f32 0.0, %v5797
        %v5799 = vpop.f32.mrf.mxu0
        %v5800 = vadd.f32 0.0, %v5799
        %v5801 = vpop.f32.mrf.mxu0
        %v5802 = vadd.f32 0.0, %v5801
        %v5803 = vpop.f32.mrf.mxu0
        %v5804 = vadd.f32 0.0, %v5803
        %5805 = vmatprep.mubr.bf16.mxu0 0
        %5806 = vmatmul.mubr.bf16.gmra.mxu0 %v2865
        %v5807 = vpop.f32.mrf.mxu0
        %v5808 = vadd.f32 0.0, %v5807
        %v5809 = vpop.f32.mrf.mxu0
        %v5810 = vadd.f32 0.0, %v5809
        %v5811 = vpop.f32.mrf.mxu0
        %v5812 = vadd.f32 0.0, %v5811
        %v5813 = vpop.f32.mrf.mxu0
        %v5814 = vadd.f32 0.0, %v5813
        %5815 = vmatprep.mubr.bf16.mxu0 0
        %5816 = vmatmul.mubr.bf16.gmra.mxu0 %v2867
        %v5817 = vpop.f32.mrf.mxu0
        %v5818 = vadd.f32 0.0, %v5817
        %v5819 = vpop.f32.mrf.mxu0
        %v5820 = vadd.f32 0.0, %v5819
        %v5821 = vpop.f32.mrf.mxu0
        %v5822 = vadd.f32 0.0, %v5821
        %v5823 = vpop.f32.mrf.mxu0
        %v5824 = vadd.f32 0.0, %v5823
        %5825 = vmatprep.mubr.bf16.mxu0 0
        %5826 = vmatmul.mubr.bf16.gmra.mxu0 %v2869
        %v5827 = vpop.f32.mrf.mxu0
        %v5828 = vadd.f32 0.0, %v5827
        %v5829 = vpop.f32.mrf.mxu0
        %v5830 = vadd.f32 0.0, %v5829
        %v5831 = vpop.f32.mrf.mxu0
        %v5832 = vadd.f32 0.0, %v5831
        %v5833 = vpop.f32.mrf.mxu0
        %v5834 = vadd.f32 0.0, %v5833
        %5835 = vdwg.mxu0
        %v5836 = vmax.f32 %v5485, %v5487
        %v5837 = vmax.f32 %v5836, %v5678
        %v5838 = vmax.f32 %v5837, %v5680
        %5839 = vmax.xlane.f32.xlu0 %v5838
        %v5840 = vpop.xlane.xlu0 %5839
        %v5841 = vmax.f32 %v5489, %v5491
        %v5842 = vmax.f32 %v5841, %v5682
        %v5843 = vmax.f32 %v5842, %v5684
        %5844 = vmax.xlane.f32.xlu0 %v5843
        %v5845 = vpop.xlane.xlu0 %5844
        %v5846 = vmax.f32 %v5495, %v5497
        %v5847 = vmax.f32 %v5846, %v5688
        %v5848 = vmax.f32 %v5847, %v5690
        %5849 = vmax.xlane.f32.xlu0 %v5848
        %v5850 = vpop.xlane.xlu0 %5849
        %v5851 = vmax.f32 %v5499, %v5501
        %v5852 = vmax.f32 %v5851, %v5692
        %v5853 = vmax.f32 %v5852, %v5694
        %5854 = vmax.xlane.f32.xlu0 %v5853
        %v5855 = vpop.xlane.xlu0 %5854
        %v5856 = vmax.f32 %v5505, %v5507
        %v5857 = vmax.f32 %v5856, %v5698
        %v5858 = vmax.f32 %v5857, %v5700
        %5859 = vmax.xlane.f32.xlu0 %v5858
        %v5860 = vpop.xlane.xlu0 %5859
        %v5861 = vmax.f32 %v5509, %v5511
        %v5862 = vmax.f32 %v5861, %v5702
        %v5863 = vmax.f32 %v5862, %v5704
        %5864 = vmax.xlane.f32.xlu0 %v5863
        %v5865 = vpop.xlane.xlu0 %5864
        %v5866 = vmax.f32 %v5515, %v5517
        %v5867 = vmax.f32 %v5866, %v5708
        %v5868 = vmax.f32 %v5867, %v5710
        %5869 = vmax.xlane.f32.xlu0 %v5868
        %v5870 = vpop.xlane.xlu0 %5869
        %v5871 = vmax.f32 %v5519, %v5521
        %v5872 = vmax.f32 %v5871, %v5712
        %v5873 = vmax.f32 %v5872, %v5714
        %5874 = vmax.xlane.f32.xlu0 %v5873
        %v5875 = vpop.xlane.xlu0 %5874
        %v5876 = vmax.f32 %v5525, %v5527
        %v5877 = vmax.f32 %v5876, %v5718
        %v5878 = vmax.f32 %v5877, %v5720
        %5879 = vmax.xlane.f32.xlu0 %v5878
        %v5880 = vpop.xlane.xlu0 %5879
        %v5881 = vmax.f32 %v5529, %v5531
        %v5882 = vmax.f32 %v5881, %v5722
        %v5883 = vmax.f32 %v5882, %v5724
        %5884 = vmax.xlane.f32.xlu0 %v5883
        %v5885 = vpop.xlane.xlu0 %5884
        %v5886 = vmax.f32 %v5535, %v5537
        %v5887 = vmax.f32 %v5886, %v5728
        %v5888 = vmax.f32 %v5887, %v5730
        %5889 = vmax.xlane.f32.xlu0 %v5888
        %v5890 = vpop.xlane.xlu0 %5889
        %v5891 = vmax.f32 %v5539, %v5541
        %v5892 = vmax.f32 %v5891, %v5732
        %v5893 = vmax.f32 %v5892, %v5734
        %5894 = vmax.xlane.f32.xlu0 %v5893
        %v5895 = vpop.xlane.xlu0 %5894
        %v5896 = vmax.f32 %v5545, %v5547
        %v5897 = vmax.f32 %v5896, %v5738
        %v5898 = vmax.f32 %v5897, %v5740
        %5899 = vmax.xlane.f32.xlu0 %v5898
        %v5900 = vpop.xlane.xlu0 %5899
        %v5901 = vmax.f32 %v5549, %v5551
        %v5902 = vmax.f32 %v5901, %v5742
        %v5903 = vmax.f32 %v5902, %v5744
        %5904 = vmax.xlane.f32.xlu0 %v5903
        %v5905 = vpop.xlane.xlu0 %5904
        %v5906 = vmax.f32 %v5555, %v5557
        %v5907 = vmax.f32 %v5906, %v5748
        %v5908 = vmax.f32 %v5907, %v5750
        %5909 = vmax.xlane.f32.xlu0 %v5908
        %v5910 = vpop.xlane.xlu0 %5909
        %v5911 = vmax.f32 %v5559, %v5561
        %v5912 = vmax.f32 %v5911, %v5752
        %v5913 = vmax.f32 %v5912, %v5754
        %5914 = vmax.xlane.f32.xlu0 %v5913
        %v5915 = vpop.xlane.xlu0 %5914
        %v5916 = vmax.f32 %v5565, %v5567
        %v5917 = vmax.f32 %v5916, %v5758
        %v5918 = vmax.f32 %v5917, %v5760
        %5919 = vmax.xlane.f32.xlu0 %v5918
        %v5920 = vpop.xlane.xlu0 %5919
        %v5921 = vmax.f32 %v5569, %v5571
        %v5922 = vmax.f32 %v5921, %v5762
        %v5923 = vmax.f32 %v5922, %v5764
        %5924 = vmax.xlane.f32.xlu0 %v5923
        %v5925 = vpop.xlane.xlu0 %5924
        %v5926 = vmax.f32 %v5575, %v5577
        %v5927 = vmax.f32 %v5926, %v5768
        %v5928 = vmax.f32 %v5927, %v5770
        %5929 = vmax.xlane.f32.xlu0 %v5928
        %v5930 = vpop.xlane.xlu0 %5929
        %v5931 = vmax.f32 %v5579, %v5581
        %v5932 = vmax.f32 %v5931, %v5772
        %v5933 = vmax.f32 %v5932, %v5774
        %5934 = vmax.xlane.f32.xlu0 %v5933
        %v5935 = vpop.xlane.xlu0 %5934
        %v5936 = vmax.f32 %v5585, %v5587
        %v5937 = vmax.f32 %v5936, %v5778
        %v5938 = vmax.f32 %v5937, %v5780
        %5939 = vmax.xlane.f32.xlu0 %v5938
        %v5940 = vpop.xlane.xlu0 %5939
        %v5941 = vmax.f32 %v5589, %v5591
        %v5942 = vmax.f32 %v5941, %v5782
        %v5943 = vmax.f32 %v5942, %v5784
        %5944 = vmax.xlane.f32.xlu0 %v5943
        %v5945 = vpop.xlane.xlu0 %5944
        %v5946 = vmax.f32 %v5595, %v5597
        %v5947 = vmax.f32 %v5946, %v5788
        %v5948 = vmax.f32 %v5947, %v5790
        %5949 = vmax.xlane.f32.xlu0 %v5948
        %v5950 = vpop.xlane.xlu0 %5949
        %v5951 = vmax.f32 %v5599, %v5601
        %v5952 = vmax.f32 %v5951, %v5792
        %v5953 = vmax.f32 %v5952, %v5794
        %5954 = vmax.xlane.f32.xlu0 %v5953
        %v5955 = vpop.xlane.xlu0 %5954
        %v5956 = vmax.f32 %v5605, %v5607
        %v5957 = vmax.f32 %v5956, %v5798
        %v5958 = vmax.f32 %v5957, %v5800
        %5959 = vmax.xlane.f32.xlu0 %v5958
        %v5960 = vpop.xlane.xlu0 %5959
        %v5961 = vmax.f32 %v5609, %v5611
        %v5962 = vmax.f32 %v5961, %v5802
        %v5963 = vmax.f32 %v5962, %v5804
        %5964 = vmax.xlane.f32.xlu0 %v5963
        %v5965 = vpop.xlane.xlu0 %5964
        %v5966 = vmax.f32 %v5615, %v5617
        %v5967 = vmax.f32 %v5966, %v5808
        %v5968 = vmax.f32 %v5967, %v5810
        %5969 = vmax.xlane.f32.xlu0 %v5968
        %v5970 = vpop.xlane.xlu0 %5969
        %v5971 = vmax.f32 %v5619, %v5621
        %v5972 = vmax.f32 %v5971, %v5812
        %v5973 = vmax.f32 %v5972, %v5814
        %5974 = vmax.xlane.f32.xlu0 %v5973
        %v5975 = vpop.xlane.xlu0 %5974
        %v5976 = vmax.f32 %v5625, %v5627
        %v5977 = vmax.f32 %v5976, %v5818
        %v5978 = vmax.f32 %v5977, %v5820
        %5979 = vmax.xlane.f32.xlu0 %v5978
        %v5980 = vpop.xlane.xlu0 %5979
        %v5981 = vmax.f32 %v5629, %v5631
        %v5982 = vmax.f32 %v5981, %v5822
        %v5983 = vmax.f32 %v5982, %v5824
        %5984 = vmax.xlane.f32.xlu0 %v5983
        %v5985 = vpop.xlane.xlu0 %5984
        %v5986 = vmax.f32 %v5635, %v5637
        %v5987 = vmax.f32 %v5986, %v5828
        %v5988 = vmax.f32 %v5987, %v5830
        %5989 = vmax.xlane.f32.xlu0 %v5988
        %v5990 = vpop.xlane.xlu0 %5989
        %v5991 = vmax.f32 %v5639, %v5641
        %v5992 = vmax.f32 %v5991, %v5832
        %v5993 = vmax.f32 %v5992, %v5834
        %5994 = vmax.xlane.f32.xlu0 %v5993
        %v5995 = vpop.xlane.xlu0 %5994
        %v5996 = vsub.f32 %v5485, %v5840
        %v5997 = vsub.f32 %v5487, %v5840
        %v5998 = vsub.f32 %v5678, %v5840
        %v5999 = vsub.f32 %v5680, %v5840
        %v6000 = vsub.f32 %v5489, %v5845
        %v6001 = vsub.f32 %v5491, %v5845
        %v6002 = vsub.f32 %v5682, %v5845
        %v6003 = vsub.f32 %v5684, %v5845
        %v6004 = vsub.f32 %v5495, %v5850
        %v6005 = vsub.f32 %v5497, %v5850
        %v6006 = vsub.f32 %v5688, %v5850
        %v6007 = vsub.f32 %v5690, %v5850
        %v6008 = vsub.f32 %v5499, %v5855
        %v6009 = vsub.f32 %v5501, %v5855
        %v6010 = vsub.f32 %v5692, %v5855
        %v6011 = vsub.f32 %v5694, %v5855
        %v6012 = vsub.f32 %v5505, %v5860
        %v6013 = vsub.f32 %v5507, %v5860
        %v6014 = vsub.f32 %v5698, %v5860
        %v6015 = vsub.f32 %v5700, %v5860
        %v6016 = vsub.f32 %v5509, %v5865
        %v6017 = vsub.f32 %v5511, %v5865
        %v6018 = vsub.f32 %v5702, %v5865
        %v6019 = vsub.f32 %v5704, %v5865
        %v6020 = vsub.f32 %v5515, %v5870
        %v6021 = vsub.f32 %v5517, %v5870
        %v6022 = vsub.f32 %v5708, %v5870
        %v6023 = vsub.f32 %v5710, %v5870
        %v6024 = vsub.f32 %v5519, %v5875
        %v6025 = vsub.f32 %v5521, %v5875
        %v6026 = vsub.f32 %v5712, %v5875
        %v6027 = vsub.f32 %v5714, %v5875
        %v6028 = vsub.f32 %v5525, %v5880
        %v6029 = vsub.f32 %v5527, %v5880
        %v6030 = vsub.f32 %v5718, %v5880
        %v6031 = vsub.f32 %v5720, %v5880
        %v6032 = vsub.f32 %v5529, %v5885
        %v6033 = vsub.f32 %v5531, %v5885
        %v6034 = vsub.f32 %v5722, %v5885
        %v6035 = vsub.f32 %v5724, %v5885
        %v6036 = vsub.f32 %v5535, %v5890
        %v6037 = vsub.f32 %v5537, %v5890
        %v6038 = vsub.f32 %v5728, %v5890
        %v6039 = vsub.f32 %v5730, %v5890
        %v6040 = vsub.f32 %v5539, %v5895
        %v6041 = vsub.f32 %v5541, %v5895
        %v6042 = vsub.f32 %v5732, %v5895
        %v6043 = vsub.f32 %v5734, %v5895
        %v6044 = vsub.f32 %v5545, %v5900
        %v6045 = vsub.f32 %v5547, %v5900
        %v6046 = vsub.f32 %v5738, %v5900
        %v6047 = vsub.f32 %v5740, %v5900
        %v6048 = vsub.f32 %v5549, %v5905
        %v6049 = vsub.f32 %v5551, %v5905
        %v6050 = vsub.f32 %v5742, %v5905
        %v6051 = vsub.f32 %v5744, %v5905
        %v6052 = vsub.f32 %v5555, %v5910
        %v6053 = vsub.f32 %v5557, %v5910
        %v6054 = vsub.f32 %v5748, %v5910
        %v6055 = vsub.f32 %v5750, %v5910
        %v6056 = vsub.f32 %v5559, %v5915
        %v6057 = vsub.f32 %v5561, %v5915
        %v6058 = vsub.f32 %v5752, %v5915
        %v6059 = vsub.f32 %v5754, %v5915
        %v6060 = vsub.f32 %v5565, %v5920
        %v6061 = vsub.f32 %v5567, %v5920
        %v6062 = vsub.f32 %v5758, %v5920
        %v6063 = vsub.f32 %v5760, %v5920
        %v6064 = vsub.f32 %v5569, %v5925
        %v6065 = vsub.f32 %v5571, %v5925
        %v6066 = vsub.f32 %v5762, %v5925
        %v6067 = vsub.f32 %v5764, %v5925
        %v6068 = vsub.f32 %v5575, %v5930
        %v6069 = vsub.f32 %v5577, %v5930
        %v6070 = vsub.f32 %v5768, %v5930
        %v6071 = vsub.f32 %v5770, %v5930
        %v6072 = vsub.f32 %v5579, %v5935
        %v6073 = vsub.f32 %v5581, %v5935
        %v6074 = vsub.f32 %v5772, %v5935
        %v6075 = vsub.f32 %v5774, %v5935
        %v6076 = vsub.f32 %v5585, %v5940
        %v6077 = vsub.f32 %v5587, %v5940
        %v6078 = vsub.f32 %v5778, %v5940
        %v6079 = vsub.f32 %v5780, %v5940
        %v6080 = vsub.f32 %v5589, %v5945
        %v6081 = vsub.f32 %v5591, %v5945
        %v6082 = vsub.f32 %v5782, %v5945
        %v6083 = vsub.f32 %v5784, %v5945
        %v6084 = vsub.f32 %v5595, %v5950
        %v6085 = vsub.f32 %v5597, %v5950
        %v6086 = vsub.f32 %v5788, %v5950
        %v6087 = vsub.f32 %v5790, %v5950
        %v6088 = vsub.f32 %v5599, %v5955
        %v6089 = vsub.f32 %v5601, %v5955
        %v6090 = vsub.f32 %v5792, %v5955
        %v6091 = vsub.f32 %v5794, %v5955
        %v6092 = vsub.f32 %v5605, %v5960
        %v6093 = vsub.f32 %v5607, %v5960
        %v6094 = vsub.f32 %v5798, %v5960
        %v6095 = vsub.f32 %v5800, %v5960
        %v6096 = vsub.f32 %v5609, %v5965
        %v6097 = vsub.f32 %v5611, %v5965
        %v6098 = vsub.f32 %v5802, %v5965
        %v6099 = vsub.f32 %v5804, %v5965
        %v6100 = vsub.f32 %v5615, %v5970
        %v6101 = vsub.f32 %v5617, %v5970
        %v6102 = vsub.f32 %v5808, %v5970
        %v6103 = vsub.f32 %v5810, %v5970
        %v6104 = vsub.f32 %v5619, %v5975
        %v6105 = vsub.f32 %v5621, %v5975
        %v6106 = vsub.f32 %v5812, %v5975
        %v6107 = vsub.f32 %v5814, %v5975
        %v6108 = vsub.f32 %v5625, %v5980
        %v6109 = vsub.f32 %v5627, %v5980
        %v6110 = vsub.f32 %v5818, %v5980
        %v6111 = vsub.f32 %v5820, %v5980
        %v6112 = vsub.f32 %v5629, %v5985
        %v6113 = vsub.f32 %v5631, %v5985
        %v6114 = vsub.f32 %v5822, %v5985
        %v6115 = vsub.f32 %v5824, %v5985
        %v6116 = vsub.f32 %v5635, %v5990
        %v6117 = vsub.f32 %v5637, %v5990
        %v6118 = vsub.f32 %v5828, %v5990
        %v6119 = vsub.f32 %v5830, %v5990
        %v6120 = vsub.f32 %v5639, %v5995
        %v6121 = vsub.f32 %v5641, %v5995
        %v6122 = vsub.f32 %v5832, %v5995
        %v6123 = vsub.f32 %v5834, %v5995
        %v6124 = vmul.f32 %v5996, 1.442695
        %v6125 = vpow.pop %v6124
        %v6126 = vmul.f32 %v5997, 1.442695
        %v6127 = vpow.pop %v6126
        %v6128 = vmul.f32 %v5998, 1.442695
        %v6129 = vpow.pop %v6128
        %v6130 = vmul.f32 %v5999, 1.442695
        %v6131 = vpow.pop %v6130
        %v6132 = vmul.f32 %v6000, 1.442695
        %v6133 = vpow.pop %v6132
        %v6134 = vmul.f32 %v6001, 1.442695
        %v6135 = vpow.pop %v6134
        %v6136 = vmul.f32 %v6002, 1.442695
        %v6137 = vpow.pop %v6136
        %v6138 = vmul.f32 %v6003, 1.442695
        %v6139 = vpow.pop %v6138
        %v6140 = vmul.f32 %v6004, 1.442695
        %v6141 = vpow.pop %v6140
        %v6142 = vmul.f32 %v6005, 1.442695
        %v6143 = vpow.pop %v6142
        %v6144 = vmul.f32 %v6006, 1.442695
        %v6145 = vpow.pop %v6144
        %v6146 = vmul.f32 %v6007, 1.442695
        %v6147 = vpow.pop %v6146
        %v6148 = vmul.f32 %v6008, 1.442695
        %v6149 = vpow.pop %v6148
        %v6150 = vmul.f32 %v6009, 1.442695
        %v6151 = vpow.pop %v6150
        %v6152 = vmul.f32 %v6010, 1.442695
        %v6153 = vpow.pop %v6152
        %v6154 = vmul.f32 %v6011, 1.442695
        %v6155 = vpow.pop %v6154
        %v6156 = vmul.f32 %v6012, 1.442695
        %v6157 = vpow.pop %v6156
        %v6158 = vmul.f32 %v6013, 1.442695
        %v6159 = vpow.pop %v6158
        %v6160 = vmul.f32 %v6014, 1.442695
        %v6161 = vpow.pop %v6160
        %v6162 = vmul.f32 %v6015, 1.442695
        %v6163 = vpow.pop %v6162
        %v6164 = vmul.f32 %v6016, 1.442695
        %v6165 = vpow.pop %v6164
        %v6166 = vmul.f32 %v6017, 1.442695
        %v6167 = vpow.pop %v6166
        %v6168 = vmul.f32 %v6018, 1.442695
        %v6169 = vpow.pop %v6168
        %v6170 = vmul.f32 %v6019, 1.442695
        %v6171 = vpow.pop %v6170
        %v6172 = vmul.f32 %v6020, 1.442695
        %v6173 = vpow.pop %v6172
        %v6174 = vmul.f32 %v6021, 1.442695
        %v6175 = vpow.pop %v6174
        %v6176 = vmul.f32 %v6022, 1.442695
        %v6177 = vpow.pop %v6176
        %v6178 = vmul.f32 %v6023, 1.442695
        %v6179 = vpow.pop %v6178
        %v6180 = vmul.f32 %v6024, 1.442695
        %v6181 = vpow.pop %v6180
        %v6182 = vmul.f32 %v6025, 1.442695
        %v6183 = vpow.pop %v6182
        %v6184 = vmul.f32 %v6026, 1.442695
        %v6185 = vpow.pop %v6184
        %v6186 = vmul.f32 %v6027, 1.442695
        %v6187 = vpow.pop %v6186
        %v6188 = vmul.f32 %v6028, 1.442695
        %v6189 = vpow.pop %v6188
        %v6190 = vmul.f32 %v6029, 1.442695
        %v6191 = vpow.pop %v6190
        %v6192 = vmul.f32 %v6030, 1.442695
        %v6193 = vpow.pop %v6192
        %v6194 = vmul.f32 %v6031, 1.442695
        %v6195 = vpow.pop %v6194
        %v6196 = vmul.f32 %v6032, 1.442695
        %v6197 = vpow.pop %v6196
        %v6198 = vmul.f32 %v6033, 1.442695
        %v6199 = vpow.pop %v6198
        %v6200 = vmul.f32 %v6034, 1.442695
        %v6201 = vpow.pop %v6200
        %v6202 = vmul.f32 %v6035, 1.442695
        %v6203 = vpow.pop %v6202
        %v6204 = vmul.f32 %v6036, 1.442695
        %v6205 = vpow.pop %v6204
        %v6206 = vmul.f32 %v6037, 1.442695
        %v6207 = vpow.pop %v6206
        %v6208 = vmul.f32 %v6038, 1.442695
        %v6209 = vpow.pop %v6208
        %v6210 = vmul.f32 %v6039, 1.442695
        %v6211 = vpow.pop %v6210
        %v6212 = vmul.f32 %v6040, 1.442695
        %v6213 = vpow.pop %v6212
        %v6214 = vmul.f32 %v6041, 1.442695
        %v6215 = vpow.pop %v6214
        %v6216 = vmul.f32 %v6042, 1.442695
        %v6217 = vpow.pop %v6216
        %v6218 = vmul.f32 %v6043, 1.442695
        %v6219 = vpow.pop %v6218
        %v6220 = vmul.f32 %v6044, 1.442695
        %v6221 = vpow.pop %v6220
        %v6222 = vmul.f32 %v6045, 1.442695
        %v6223 = vpow.pop %v6222
        %v6224 = vmul.f32 %v6046, 1.442695
        %v6225 = vpow.pop %v6224
        %v6226 = vmul.f32 %v6047, 1.442695
        %v6227 = vpow.pop %v6226
        %v6228 = vmul.f32 %v6048, 1.442695
        %v6229 = vpow.pop %v6228
        %v6230 = vmul.f32 %v6049, 1.442695
        %v6231 = vpow.pop %v6230
        %v6232 = vmul.f32 %v6050, 1.442695
        %v6233 = vpow.pop %v6232
        %v6234 = vmul.f32 %v6051, 1.442695
        %v6235 = vpow.pop %v6234
        %v6236 = vmul.f32 %v6052, 1.442695
        %v6237 = vpow.pop %v6236
        %v6238 = vmul.f32 %v6053, 1.442695
        %v6239 = vpow.pop %v6238
        %v6240 = vmul.f32 %v6054, 1.442695
        %v6241 = vpow.pop %v6240
        %v6242 = vmul.f32 %v6055, 1.442695
        %v6243 = vpow.pop %v6242
        %v6244 = vmul.f32 %v6056, 1.442695
        %v6245 = vpow.pop %v6244
        %v6246 = vmul.f32 %v6057, 1.442695
        %v6247 = vpow.pop %v6246
        %v6248 = vmul.f32 %v6058, 1.442695
        %v6249 = vpow.pop %v6248
        %v6250 = vmul.f32 %v6059, 1.442695
        %v6251 = vpow.pop %v6250
        %v6252 = vmul.f32 %v6060, 1.442695
        %v6253 = vpow.pop %v6252
        %v6254 = vmul.f32 %v6061, 1.442695
        %v6255 = vpow.pop %v6254
        %v6256 = vmul.f32 %v6062, 1.442695
        %v6257 = vpow.pop %v6256
        %v6258 = vmul.f32 %v6063, 1.442695
        %v6259 = vpow.pop %v6258
        %v6260 = vmul.f32 %v6064, 1.442695
        %v6261 = vpow.pop %v6260
        %v6262 = vmul.f32 %v6065, 1.442695
        %v6263 = vpow.pop %v6262
        %v6264 = vmul.f32 %v6066, 1.442695
        %v6265 = vpow.pop %v6264
        %v6266 = vmul.f32 %v6067, 1.442695
        %v6267 = vpow.pop %v6266
        %v6268 = vmul.f32 %v6068, 1.442695
        %v6269 = vpow.pop %v6268
        %v6270 = vmul.f32 %v6069, 1.442695
        %v6271 = vpow.pop %v6270
        %v6272 = vmul.f32 %v6070, 1.442695
        %v6273 = vpow.pop %v6272
        %v6274 = vmul.f32 %v6071, 1.442695
        %v6275 = vpow.pop %v6274
        %v6276 = vmul.f32 %v6072, 1.442695
        %v6277 = vpow.pop %v6276
        %v6278 = vmul.f32 %v6073, 1.442695
        %v6279 = vpow.pop %v6278
        %v6280 = vmul.f32 %v6074, 1.442695
        %v6281 = vpow.pop %v6280
        %v6282 = vmul.f32 %v6075, 1.442695
        %v6283 = vpow.pop %v6282
        %v6284 = vmul.f32 %v6076, 1.442695
        %v6285 = vpow.pop %v6284
        %v6286 = vmul.f32 %v6077, 1.442695
        %v6287 = vpow.pop %v6286
        %v6288 = vmul.f32 %v6078, 1.442695
        %v6289 = vpow.pop %v6288
        %v6290 = vmul.f32 %v6079, 1.442695
        %v6291 = vpow.pop %v6290
        %v6292 = vmul.f32 %v6080, 1.442695
        %v6293 = vpow.pop %v6292
        %v6294 = vmul.f32 %v6081, 1.442695
        %v6295 = vpow.pop %v6294
        %v6296 = vmul.f32 %v6082, 1.442695
        %v6297 = vpow.pop %v6296
        %v6298 = vmul.f32 %v6083, 1.442695
        %v6299 = vpow.pop %v6298
        %v6300 = vmul.f32 %v6084, 1.442695
        %v6301 = vpow.pop %v6300
        %v6302 = vmul.f32 %v6085, 1.442695
        %v6303 = vpow.pop %v6302
        %v6304 = vmul.f32 %v6086, 1.442695
        %v6305 = vpow.pop %v6304
        %v6306 = vmul.f32 %v6087, 1.442695
        %v6307 = vpow.pop %v6306
        %v6308 = vmul.f32 %v6088, 1.442695
        %v6309 = vpow.pop %v6308
        %v6310 = vmul.f32 %v6089, 1.442695
        %v6311 = vpow.pop %v6310
        %v6312 = vmul.f32 %v6090, 1.442695
        %v6313 = vpow.pop %v6312
        %v6314 = vmul.f32 %v6091, 1.442695
        %v6315 = vpow.pop %v6314
        %v6316 = vmul.f32 %v6092, 1.442695
        %v6317 = vpow.pop %v6316
        %v6318 = vmul.f32 %v6093, 1.442695
        %v6319 = vpow.pop %v6318
        %v6320 = vmul.f32 %v6094, 1.442695
        %v6321 = vpow.pop %v6320
        %v6322 = vmul.f32 %v6095, 1.442695
        %v6323 = vpow.pop %v6322
        %v6324 = vmul.f32 %v6096, 1.442695
        %v6325 = vpow.pop %v6324
        %v6326 = vmul.f32 %v6097, 1.442695
        %v6327 = vpow.pop %v6326
        %v6328 = vmul.f32 %v6098, 1.442695
        %v6329 = vpow.pop %v6328
        %v6330 = vmul.f32 %v6099, 1.442695
        %v6331 = vpow.pop %v6330
        %v6332 = vmul.f32 %v6100, 1.442695
        %v6333 = vpow.pop %v6332
        %v6334 = vmul.f32 %v6101, 1.442695
        %v6335 = vpow.pop %v6334
        %v6336 = vmul.f32 %v6102, 1.442695
        %v6337 = vpow.pop %v6336
        %v6338 = vmul.f32 %v6103, 1.442695
        %v6339 = vpow.pop %v6338
        %v6340 = vmul.f32 %v6104, 1.442695
        %v6341 = vpow.pop %v6340
        %v6342 = vmul.f32 %v6105, 1.442695
        %v6343 = vpow.pop %v6342
        %v6344 = vmul.f32 %v6106, 1.442695
        %v6345 = vpow.pop %v6344
        %v6346 = vmul.f32 %v6107, 1.442695
        %v6347 = vpow.pop %v6346
        %v6348 = vmul.f32 %v6108, 1.442695
        %v6349 = vpow.pop %v6348
        %v6350 = vmul.f32 %v6109, 1.442695
        %v6351 = vpow.pop %v6350
        %v6352 = vmul.f32 %v6110, 1.442695
        %v6353 = vpow.pop %v6352
        %v6354 = vmul.f32 %v6111, 1.442695
        %v6355 = vpow.pop %v6354
        %v6356 = vmul.f32 %v6112, 1.442695
        %v6357 = vpow.pop %v6356
        %v6358 = vmul.f32 %v6113, 1.442695
        %v6359 = vpow.pop %v6358
        %v6360 = vmul.f32 %v6114, 1.442695
        %v6361 = vpow.pop %v6360
        %v6362 = vmul.f32 %v6115, 1.442695
        %v6363 = vpow.pop %v6362
        %v6364 = vmul.f32 %v6116, 1.442695
        %v6365 = vpow.pop %v6364
        %v6366 = vmul.f32 %v6117, 1.442695
        %v6367 = vpow.pop %v6366
        %v6368 = vmul.f32 %v6118, 1.442695
        %v6369 = vpow.pop %v6368
        %v6370 = vmul.f32 %v6119, 1.442695
        %v6371 = vpow.pop %v6370
        %v6372 = vmul.f32 %v6120, 1.442695
        %v6373 = vpow.pop %v6372
        %v6374 = vmul.f32 %v6121, 1.442695
        %v6375 = vpow.pop %v6374
        %v6376 = vmul.f32 %v6122, 1.442695
        %v6377 = vpow.pop %v6376
        %v6378 = vmul.f32 %v6123, 1.442695
        %v6379 = vpow.pop %v6378
        %v6380 = vadd.f32 %v6125, %v6127
        %v6381 = vadd.f32 %v6380, %v6129
        %v6382 = vadd.f32 %v6381, %v6131
        %6383 = vadd.xlane.f32.xlu0 %v6382
        %v6384 = vpop.xlane.xlu0 %6383
        %v6385 = vadd.f32 %v6133, %v6135
        %v6386 = vadd.f32 %v6385, %v6137
        %v6387 = vadd.f32 %v6386, %v6139
        %6388 = vadd.xlane.f32.xlu0 %v6387
        %v6389 = vpop.xlane.xlu0 %6388
        %v6390 = vadd.f32 %v6141, %v6143
        %v6391 = vadd.f32 %v6390, %v6145
        %v6392 = vadd.f32 %v6391, %v6147
        %6393 = vadd.xlane.f32.xlu0 %v6392
        %v6394 = vpop.xlane.xlu0 %6393
        %v6395 = vadd.f32 %v6149, %v6151
        %v6396 = vadd.f32 %v6395, %v6153
        %v6397 = vadd.f32 %v6396, %v6155
        %6398 = vadd.xlane.f32.xlu0 %v6397
        %v6399 = vpop.xlane.xlu0 %6398
        %v6400 = vadd.f32 %v6157, %v6159
        %v6401 = vadd.f32 %v6400, %v6161
        %v6402 = vadd.f32 %v6401, %v6163
        %6403 = vadd.xlane.f32.xlu0 %v6402
        %v6404 = vpop.xlane.xlu0 %6403
        %v6405 = vadd.f32 %v6165, %v6167
        %v6406 = vadd.f32 %v6405, %v6169
        %v6407 = vadd.f32 %v6406, %v6171
        %6408 = vadd.xlane.f32.xlu0 %v6407
        %v6409 = vpop.xlane.xlu0 %6408
        %v6410 = vadd.f32 %v6173, %v6175
        %v6411 = vadd.f32 %v6410, %v6177
        %v6412 = vadd.f32 %v6411, %v6179
        %6413 = vadd.xlane.f32.xlu0 %v6412
        %v6414 = vpop.xlane.xlu0 %6413
        %v6415 = vadd.f32 %v6181, %v6183
        %v6416 = vadd.f32 %v6415, %v6185
        %v6417 = vadd.f32 %v6416, %v6187
        %6418 = vadd.xlane.f32.xlu0 %v6417
        %v6419 = vpop.xlane.xlu0 %6418
        %v6420 = vadd.f32 %v6189, %v6191
        %v6421 = vadd.f32 %v6420, %v6193
        %v6422 = vadd.f32 %v6421, %v6195
        %6423 = vadd.xlane.f32.xlu0 %v6422
        %v6424 = vpop.xlane.xlu0 %6423
        %v6425 = vadd.f32 %v6197, %v6199
        %v6426 = vadd.f32 %v6425, %v6201
        %v6427 = vadd.f32 %v6426, %v6203
        %6428 = vadd.xlane.f32.xlu0 %v6427
        %v6429 = vpop.xlane.xlu0 %6428
        %v6430 = vadd.f32 %v6205, %v6207
        %v6431 = vadd.f32 %v6430, %v6209
        %v6432 = vadd.f32 %v6431, %v6211
        %6433 = vadd.xlane.f32.xlu0 %v6432
        %v6434 = vpop.xlane.xlu0 %6433
        %v6435 = vadd.f32 %v6213, %v6215
        %v6436 = vadd.f32 %v6435, %v6217
        %v6437 = vadd.f32 %v6436, %v6219
        %6438 = vadd.xlane.f32.xlu0 %v6437
        %v6439 = vpop.xlane.xlu0 %6438
        %v6440 = vadd.f32 %v6221, %v6223
        %v6441 = vadd.f32 %v6440, %v6225
        %v6442 = vadd.f32 %v6441, %v6227
        %6443 = vadd.xlane.f32.xlu0 %v6442
        %v6444 = vpop.xlane.xlu0 %6443
        %v6445 = vadd.f32 %v6229, %v6231
        %v6446 = vadd.f32 %v6445, %v6233
        %v6447 = vadd.f32 %v6446, %v6235
        %6448 = vadd.xlane.f32.xlu0 %v6447
        %v6449 = vpop.xlane.xlu0 %6448
        %v6450 = vadd.f32 %v6237, %v6239
        %v6451 = vadd.f32 %v6450, %v6241
        %v6452 = vadd.f32 %v6451, %v6243
        %6453 = vadd.xlane.f32.xlu0 %v6452
        %v6454 = vpop.xlane.xlu0 %6453
        %v6455 = vadd.f32 %v6245, %v6247
        %v6456 = vadd.f32 %v6455, %v6249
        %v6457 = vadd.f32 %v6456, %v6251
        %6458 = vadd.xlane.f32.xlu0 %v6457
        %v6459 = vpop.xlane.xlu0 %6458
        %v6460 = vadd.f32 %v6253, %v6255
        %v6461 = vadd.f32 %v6460, %v6257
        %v6462 = vadd.f32 %v6461, %v6259
        %6463 = vadd.xlane.f32.xlu0 %v6462
        %v6464 = vpop.xlane.xlu0 %6463
        %v6465 = vadd.f32 %v6261, %v6263
        %v6466 = vadd.f32 %v6465, %v6265
        %v6467 = vadd.f32 %v6466, %v6267
        %6468 = vadd.xlane.f32.xlu0 %v6467
        %v6469 = vpop.xlane.xlu0 %6468
        %v6470 = vadd.f32 %v6269, %v6271
        %v6471 = vadd.f32 %v6470, %v6273
        %v6472 = vadd.f32 %v6471, %v6275
        %6473 = vadd.xlane.f32.xlu0 %v6472
        %v6474 = vpop.xlane.xlu0 %6473
        %v6475 = vadd.f32 %v6277, %v6279
        %v6476 = vadd.f32 %v6475, %v6281
        %v6477 = vadd.f32 %v6476, %v6283
        %6478 = vadd.xlane.f32.xlu0 %v6477
        %v6479 = vpop.xlane.xlu0 %6478
        %v6480 = vadd.f32 %v6285, %v6287
        %v6481 = vadd.f32 %v6480, %v6289
        %v6482 = vadd.f32 %v6481, %v6291
        %6483 = vadd.xlane.f32.xlu0 %v6482
        %v6484 = vpop.xlane.xlu0 %6483
        %v6485 = vadd.f32 %v6293, %v6295
        %v6486 = vadd.f32 %v6485, %v6297
        %v6487 = vadd.f32 %v6486, %v6299
        %6488 = vadd.xlane.f32.xlu0 %v6487
        %v6489 = vpop.xlane.xlu0 %6488
        %v6490 = vadd.f32 %v6301, %v6303
        %v6491 = vadd.f32 %v6490, %v6305
        %v6492 = vadd.f32 %v6491, %v6307
        %6493 = vadd.xlane.f32.xlu0 %v6492
        %v6494 = vpop.xlane.xlu0 %6493
        %v6495 = vadd.f32 %v6309, %v6311
        %v6496 = vadd.f32 %v6495, %v6313
        %v6497 = vadd.f32 %v6496, %v6315
        %6498 = vadd.xlane.f32.xlu0 %v6497
        %v6499 = vpop.xlane.xlu0 %6498
        %v6500 = vadd.f32 %v6317, %v6319
        %v6501 = vadd.f32 %v6500, %v6321
        %v6502 = vadd.f32 %v6501, %v6323
        %6503 = vadd.xlane.f32.xlu0 %v6502
        %v6504 = vpop.xlane.xlu0 %6503
        %v6505 = vadd.f32 %v6325, %v6327
        %v6506 = vadd.f32 %v6505, %v6329
        %v6507 = vadd.f32 %v6506, %v6331
        %6508 = vadd.xlane.f32.xlu0 %v6507
        %v6509 = vpop.xlane.xlu0 %6508
        %v6510 = vadd.f32 %v6333, %v6335
        %v6511 = vadd.f32 %v6510, %v6337
        %v6512 = vadd.f32 %v6511, %v6339
        %6513 = vadd.xlane.f32.xlu0 %v6512
        %v6514 = vpop.xlane.xlu0 %6513
        %v6515 = vadd.f32 %v6341, %v6343
        %v6516 = vadd.f32 %v6515, %v6345
        %v6517 = vadd.f32 %v6516, %v6347
        %6518 = vadd.xlane.f32.xlu0 %v6517
        %v6519 = vpop.xlane.xlu0 %6518
        %v6520 = vadd.f32 %v6349, %v6351
        %v6521 = vadd.f32 %v6520, %v6353
        %v6522 = vadd.f32 %v6521, %v6355
        %6523 = vadd.xlane.f32.xlu0 %v6522
        %v6524 = vpop.xlane.xlu0 %6523
        %v6525 = vadd.f32 %v6357, %v6359
        %v6526 = vadd.f32 %v6525, %v6361
        %v6527 = vadd.f32 %v6526, %v6363
        %6528 = vadd.xlane.f32.xlu0 %v6527
        %v6529 = vpop.xlane.xlu0 %6528
        %v6530 = vadd.f32 %v6365, %v6367
        %v6531 = vadd.f32 %v6530, %v6369
        %v6532 = vadd.f32 %v6531, %v6371
        %6533 = vadd.xlane.f32.xlu0 %v6532
        %v6534 = vpop.xlane.xlu0 %6533
        %v6535 = vadd.f32 %v6373, %v6375
        %v6536 = vadd.f32 %v6535, %v6377
        %v6537 = vadd.f32 %v6536, %v6379
        %6538 = vadd.xlane.f32.xlu0 %v6537
        %v6539 = vpop.xlane.xlu0 %6538
        %v6540 = vrcp.pop %v6384
        %v6541 = vrcp.pop %v6389
        %v6542 = vrcp.pop %v6394
        %v6543 = vrcp.pop %v6399
        %v6544 = vrcp.pop %v6404
        %v6545 = vrcp.pop %v6409
        %v6546 = vrcp.pop %v6414
        %v6547 = vrcp.pop %v6419
        %v6548 = vrcp.pop %v6424
        %v6549 = vrcp.pop %v6429
        %v6550 = vrcp.pop %v6434
        %v6551 = vrcp.pop %v6439
        %v6552 = vrcp.pop %v6444
        %v6553 = vrcp.pop %v6449
        %v6554 = vrcp.pop %v6454
        %v6555 = vrcp.pop %v6459
        %v6556 = vrcp.pop %v6464
        %v6557 = vrcp.pop %v6469
        %v6558 = vrcp.pop %v6474
        %v6559 = vrcp.pop %v6479
        %v6560 = vrcp.pop %v6484
        %v6561 = vrcp.pop %v6489
        %v6562 = vrcp.pop %v6494
        %v6563 = vrcp.pop %v6499
        %v6564 = vrcp.pop %v6504
        %v6565 = vrcp.pop %v6509
        %v6566 = vrcp.pop %v6514
        %v6567 = vrcp.pop %v6519
        %v6568 = vrcp.pop %v6524
        %v6569 = vrcp.pop %v6529
        %v6570 = vrcp.pop %v6534
        %v6571 = vrcp.pop %v6539
        %v6572 = vmul.f32 %v6125, %v6540
        %v6573 = vmul.f32 %v6127, %v6540
        %v6574 = vmul.f32 %v6129, %v6540
        %v6575 = vmul.f32 %v6131, %v6540
        %v6576 = vmul.f32 %v6133, %v6541
        %v6577 = vmul.f32 %v6135, %v6541
        %v6578 = vmul.f32 %v6137, %v6541
        %v6579 = vmul.f32 %v6139, %v6541
        %v6580 = vmul.f32 %v6141, %v6542
        %v6581 = vmul.f32 %v6143, %v6542
        %v6582 = vmul.f32 %v6145, %v6542
        %v6583 = vmul.f32 %v6147, %v6542
        %v6584 = vmul.f32 %v6149, %v6543
        %v6585 = vmul.f32 %v6151, %v6543
        %v6586 = vmul.f32 %v6153, %v6543
        %v6587 = vmul.f32 %v6155, %v6543
        %v6588 = vmul.f32 %v6157, %v6544
        %v6589 = vmul.f32 %v6159, %v6544
        %v6590 = vmul.f32 %v6161, %v6544
        %v6591 = vmul.f32 %v6163, %v6544
        %v6592 = vmul.f32 %v6165, %v6545
        %v6593 = vmul.f32 %v6167, %v6545
        %v6594 = vmul.f32 %v6169, %v6545
        %v6595 = vmul.f32 %v6171, %v6545
        %v6596 = vmul.f32 %v6173, %v6546
        %v6597 = vmul.f32 %v6175, %v6546
        %v6598 = vmul.f32 %v6177, %v6546
        %v6599 = vmul.f32 %v6179, %v6546
        %v6600 = vmul.f32 %v6181, %v6547
        %v6601 = vmul.f32 %v6183, %v6547
        %v6602 = vmul.f32 %v6185, %v6547
        %v6603 = vmul.f32 %v6187, %v6547
        %v6604 = vmul.f32 %v6189, %v6548
        %v6605 = vmul.f32 %v6191, %v6548
        %v6606 = vmul.f32 %v6193, %v6548
        %v6607 = vmul.f32 %v6195, %v6548
        %v6608 = vmul.f32 %v6197, %v6549
        %v6609 = vmul.f32 %v6199, %v6549
        %v6610 = vmul.f32 %v6201, %v6549
        %v6611 = vmul.f32 %v6203, %v6549
        %v6612 = vmul.f32 %v6205, %v6550
        %v6613 = vmul.f32 %v6207, %v6550
        %v6614 = vmul.f32 %v6209, %v6550
        %v6615 = vmul.f32 %v6211, %v6550
        %v6616 = vmul.f32 %v6213, %v6551
        %v6617 = vmul.f32 %v6215, %v6551
        %v6618 = vmul.f32 %v6217, %v6551
        %v6619 = vmul.f32 %v6219, %v6551
        %v6620 = vmul.f32 %v6221, %v6552
        %v6621 = vmul.f32 %v6223, %v6552
        %v6622 = vmul.f32 %v6225, %v6552
        %v6623 = vmul.f32 %v6227, %v6552
        %v6624 = vmul.f32 %v6229, %v6553
        %v6625 = vmul.f32 %v6231, %v6553
        %v6626 = vmul.f32 %v6233, %v6553
        %v6627 = vmul.f32 %v6235, %v6553
        %v6628 = vmul.f32 %v6237, %v6554
        %v6629 = vmul.f32 %v6239, %v6554
        %v6630 = vmul.f32 %v6241, %v6554
        %v6631 = vmul.f32 %v6243, %v6554
        %v6632 = vmul.f32 %v6245, %v6555
        %v6633 = vmul.f32 %v6247, %v6555
        %v6634 = vmul.f32 %v6249, %v6555
        %v6635 = vmul.f32 %v6251, %v6555
        %v6636 = vmul.f32 %v6253, %v6556
        %v6637 = vmul.f32 %v6255, %v6556
        %v6638 = vmul.f32 %v6257, %v6556
        %v6639 = vmul.f32 %v6259, %v6556
        %v6640 = vmul.f32 %v6261, %v6557
        %v6641 = vmul.f32 %v6263, %v6557
        %v6642 = vmul.f32 %v6265, %v6557
        %v6643 = vmul.f32 %v6267, %v6557
        %v6644 = vmul.f32 %v6269, %v6558
        %v6645 = vmul.f32 %v6271, %v6558
        %v6646 = vmul.f32 %v6273, %v6558
        %v6647 = vmul.f32 %v6275, %v6558
        %v6648 = vmul.f32 %v6277, %v6559
        %v6649 = vmul.f32 %v6279, %v6559
        %v6650 = vmul.f32 %v6281, %v6559
        %v6651 = vmul.f32 %v6283, %v6559
        %v6652 = vmul.f32 %v6285, %v6560
        %v6653 = vmul.f32 %v6287, %v6560
        %v6654 = vmul.f32 %v6289, %v6560
        %v6655 = vmul.f32 %v6291, %v6560
        %v6656 = vmul.f32 %v6293, %v6561
        %v6657 = vmul.f32 %v6295, %v6561
        %v6658 = vmul.f32 %v6297, %v6561
        %v6659 = vmul.f32 %v6299, %v6561
        %v6660 = vmul.f32 %v6301, %v6562
        %v6661 = vmul.f32 %v6303, %v6562
        %v6662 = vmul.f32 %v6305, %v6562
        %v6663 = vmul.f32 %v6307, %v6562
        %v6664 = vmul.f32 %v6309, %v6563
        %v6665 = vmul.f32 %v6311, %v6563
        %v6666 = vmul.f32 %v6313, %v6563
        %v6667 = vmul.f32 %v6315, %v6563
        %v6668 = vmul.f32 %v6317, %v6564
        %v6669 = vmul.f32 %v6319, %v6564
        %v6670 = vmul.f32 %v6321, %v6564
        %v6671 = vmul.f32 %v6323, %v6564
        %v6672 = vmul.f32 %v6325, %v6565
        %v6673 = vmul.f32 %v6327, %v6565
        %v6674 = vmul.f32 %v6329, %v6565
        %v6675 = vmul.f32 %v6331, %v6565
        %v6676 = vmul.f32 %v6333, %v6566
        %v6677 = vmul.f32 %v6335, %v6566
        %v6678 = vmul.f32 %v6337, %v6566
        %v6679 = vmul.f32 %v6339, %v6566
        %v6680 = vmul.f32 %v6341, %v6567
        %v6681 = vmul.f32 %v6343, %v6567
        %v6682 = vmul.f32 %v6345, %v6567
        %v6683 = vmul.f32 %v6347, %v6567
        %v6684 = vmul.f32 %v6349, %v6568
        %v6685 = vmul.f32 %v6351, %v6568
        %v6686 = vmul.f32 %v6353, %v6568
        %v6687 = vmul.f32 %v6355, %v6568
        %v6688 = vmul.f32 %v6357, %v6569
        %v6689 = vmul.f32 %v6359, %v6569
        %v6690 = vmul.f32 %v6361, %v6569
        %v6691 = vmul.f32 %v6363, %v6569
        %v6692 = vmul.f32 %v6365, %v6570
        %v6693 = vmul.f32 %v6367, %v6570
        %v6694 = vmul.f32 %v6369, %v6570
        %v6695 = vmul.f32 %v6371, %v6570
        %v6696 = vmul.f32 %v6373, %v6571
        %v6697 = vmul.f32 %v6375, %v6571
        %v6698 = vmul.f32 %v6377, %v6571
        %v6699 = vmul.f32 %v6379, %v6571
        %v6700 = vpack.c.bf16 %v6576, %v6572
        %v6701 = vpack.c.bf16 %v6577, %v6573
        %v6702 = vpack.c.bf16 %v6578, %v6574
        %v6703 = vpack.c.bf16 %v6579, %v6575
        %v6704 = vpack.c.bf16 %v6584, %v6580
        %v6705 = vpack.c.bf16 %v6585, %v6581
        %v6706 = vpack.c.bf16 %v6586, %v6582
        %v6707 = vpack.c.bf16 %v6587, %v6583
        %v6708 = vpack.c.bf16 %v6592, %v6588
        %v6709 = vpack.c.bf16 %v6593, %v6589
        %v6710 = vpack.c.bf16 %v6594, %v6590
        %v6711 = vpack.c.bf16 %v6595, %v6591
        %v6712 = vpack.c.bf16 %v6600, %v6596
        %v6713 = vpack.c.bf16 %v6601, %v6597
        %v6714 = vpack.c.bf16 %v6602, %v6598
        %v6715 = vpack.c.bf16 %v6603, %v6599
        %v6716 = vpack.c.bf16 %v6608, %v6604
        %v6717 = vpack.c.bf16 %v6609, %v6605
        %v6718 = vpack.c.bf16 %v6610, %v6606
        %v6719 = vpack.c.bf16 %v6611, %v6607
        %v6720 = vpack.c.bf16 %v6616, %v6612
        %v6721 = vpack.c.bf16 %v6617, %v6613
        %v6722 = vpack.c.bf16 %v6618, %v6614
        %v6723 = vpack.c.bf16 %v6619, %v6615
        %v6724 = vpack.c.bf16 %v6624, %v6620
        %v6725 = vpack.c.bf16 %v6625, %v6621
        %v6726 = vpack.c.bf16 %v6626, %v6622
        %v6727 = vpack.c.bf16 %v6627, %v6623
        %v6728 = vpack.c.bf16 %v6632, %v6628
        %v6729 = vpack.c.bf16 %v6633, %v6629
        %v6730 = vpack.c.bf16 %v6634, %v6630
        %v6731 = vpack.c.bf16 %v6635, %v6631
        %v6732 = vpack.c.bf16 %v6640, %v6636
        %v6733 = vpack.c.bf16 %v6641, %v6637
        %v6734 = vpack.c.bf16 %v6642, %v6638
        %v6735 = vpack.c.bf16 %v6643, %v6639
        %v6736 = vpack.c.bf16 %v6648, %v6644
        %v6737 = vpack.c.bf16 %v6649, %v6645
        %v6738 = vpack.c.bf16 %v6650, %v6646
        %v6739 = vpack.c.bf16 %v6651, %v6647
        %v6740 = vpack.c.bf16 %v6656, %v6652
        %v6741 = vpack.c.bf16 %v6657, %v6653
        %v6742 = vpack.c.bf16 %v6658, %v6654
        %v6743 = vpack.c.bf16 %v6659, %v6655
        %v6744 = vpack.c.bf16 %v6664, %v6660
        %v6745 = vpack.c.bf16 %v6665, %v6661
        %v6746 = vpack.c.bf16 %v6666, %v6662
        %v6747 = vpack.c.bf16 %v6667, %v6663
        %v6748 = vpack.c.bf16 %v6672, %v6668
        %v6749 = vpack.c.bf16 %v6673, %v6669
        %v6750 = vpack.c.bf16 %v6674, %v6670
        %v6751 = vpack.c.bf16 %v6675, %v6671
        %v6752 = vpack.c.bf16 %v6680, %v6676
        %v6753 = vpack.c.bf16 %v6681, %v6677
        %v6754 = vpack.c.bf16 %v6682, %v6678
        %v6755 = vpack.c.bf16 %v6683, %v6679
        %v6756 = vpack.c.bf16 %v6688, %v6684
        %v6757 = vpack.c.bf16 %v6689, %v6685
        %v6758 = vpack.c.bf16 %v6690, %v6686
        %v6759 = vpack.c.bf16 %v6691, %v6687
        %v6760 = vpack.c.bf16 %v6696, %v6692
        %v6761 = vpack.c.bf16 %v6697, %v6693
        %v6762 = vpack.c.bf16 %v6698, %v6694
        %v6763 = vpack.c.bf16 %v6699, %v6695
        %v6828 = vunpack.c.l.b16 %v5194
        %v6829 = vunpack.c.l.b16 %v5195
        %v6830 = vunpack.c.l.b16 %v5196
        %v6831 = vunpack.c.l.b16 %v5197
        %v6832 = vunpack.c.l.b16 %v5198
        %v6833 = vunpack.c.l.b16 %v5199
        %v6834 = vunpack.c.l.b16 %v5200
        %v6835 = vunpack.c.l.b16 %v5201
        %v6836 = vunpack.c.l.b16 %v5202
        %v6837 = vunpack.c.l.b16 %v5203
        %v6838 = vunpack.c.l.b16 %v5204
        %v6839 = vunpack.c.l.b16 %v5205
        %v6840 = vunpack.c.l.b16 %v5206
        %v6841 = vunpack.c.l.b16 %v5207
        %v6842 = vunpack.c.l.b16 %v5208
        %v6843 = vunpack.c.l.b16 %v5209
        %v6844 = vunpack.c.l.b16 %v5210
        %v6845 = vunpack.c.l.b16 %v5211
        %v6846 = vunpack.c.l.b16 %v5212
        %v6847 = vunpack.c.l.b16 %v5213
        %v6848 = vunpack.c.l.b16 %v5214
        %v6849 = vunpack.c.l.b16 %v5215
        %v6850 = vunpack.c.l.b16 %v5216
        %v6851 = vunpack.c.l.b16 %v5217
        %v6852 = vunpack.c.l.b16 %v5218
        %v6853 = vunpack.c.l.b16 %v5219
        %v6854 = vunpack.c.l.b16 %v5220
        %v6855 = vunpack.c.l.b16 %v5221
        %v6856 = vunpack.c.l.b16 %v5222
        %v6857 = vunpack.c.l.b16 %v5223
        %v6858 = vunpack.c.l.b16 %v5224
        %v6859 = vunpack.c.l.b16 %v5225
        %v6860 = vunpack.c.l.b16 %v5226
        %v6861 = vunpack.c.l.b16 %v5227
        %v6862 = vunpack.c.l.b16 %v5228
        %v6863 = vunpack.c.l.b16 %v5229
        %v6864 = vunpack.c.l.b16 %v5230
        %v6865 = vunpack.c.l.b16 %v5231
        %v6866 = vunpack.c.l.b16 %v5232
        %v6867 = vunpack.c.l.b16 %v5233
        %v6868 = vunpack.c.l.b16 %v5234
        %v6869 = vunpack.c.l.b16 %v5235
        %v6870 = vunpack.c.l.b16 %v5236
        %v6871 = vunpack.c.l.b16 %v5237
        %v6872 = vunpack.c.l.b16 %v5238
        %v6873 = vunpack.c.l.b16 %v5239
        %v6874 = vunpack.c.l.b16 %v5240
        %v6875 = vunpack.c.l.b16 %v5241
        %v6876 = vunpack.c.l.b16 %v5242
        %v6877 = vunpack.c.l.b16 %v5243
        %v6878 = vunpack.c.l.b16 %v5244
        %v6879 = vunpack.c.l.b16 %v5245
        %v6880 = vunpack.c.l.b16 %v5246
        %v6881 = vunpack.c.l.b16 %v5247
        %v6882 = vunpack.c.l.b16 %v5248
        %v6883 = vunpack.c.l.b16 %v5249
        %v6884 = vunpack.c.l.b16 %v5250
        %v6885 = vunpack.c.l.b16 %v5251
        %v6886 = vunpack.c.l.b16 %v5252
        %v6887 = vunpack.c.l.b16 %v5253
        %v6888 = vunpack.c.l.b16 %v5254
        %v6889 = vunpack.c.l.b16 %v5255
        %v6890 = vunpack.c.l.b16 %v5256
        %v6891 = vunpack.c.l.b16 %v5257
        %v6892 = vpack.c.b16 %v6829, %v6828
        %v6893 = vpack.c.b16 %v6831, %v6830
        %v6894 = vpack.c.b16 %v6833, %v6832
        %v6895 = vpack.c.b16 %v6835, %v6834
        %v6896 = vpack.c.b16 %v6837, %v6836
        %v6897 = vpack.c.b16 %v6839, %v6838
        %v6898 = vpack.c.b16 %v6841, %v6840
        %v6899 = vpack.c.b16 %v6843, %v6842
        %v6900 = vpack.c.b16 %v6845, %v6844
        %v6901 = vpack.c.b16 %v6847, %v6846
        %v6902 = vpack.c.b16 %v6849, %v6848
        %v6903 = vpack.c.b16 %v6851, %v6850
        %v6904 = vpack.c.b16 %v6853, %v6852
        %v6905 = vpack.c.b16 %v6855, %v6854
        %v6906 = vpack.c.b16 %v6857, %v6856
        %v6907 = vpack.c.b16 %v6859, %v6858
        %v6908 = vpack.c.b16 %v6861, %v6860
        %v6909 = vpack.c.b16 %v6863, %v6862
        %v6910 = vpack.c.b16 %v6865, %v6864
        %v6911 = vpack.c.b16 %v6867, %v6866
        %v6912 = vpack.c.b16 %v6869, %v6868
        %v6913 = vpack.c.b16 %v6871, %v6870
        %v6914 = vpack.c.b16 %v6873, %v6872
        %v6915 = vpack.c.b16 %v6875, %v6874
        %v6916 = vpack.c.b16 %v6877, %v6876
        %v6917 = vpack.c.b16 %v6879, %v6878
        %v6918 = vpack.c.b16 %v6881, %v6880
        %v6919 = vpack.c.b16 %v6883, %v6882
        %v6920 = vpack.c.b16 %v6885, %v6884
        %v6921 = vpack.c.b16 %v6887, %v6886
        %v6922 = vpack.c.b16 %v6889, %v6888
        %v6923 = vpack.c.b16 %v6891, %v6890
        %6956 = vmatprep.subr.bf16.mxu0 0
        %6957 = vmatpush1.bf16.msra.mxu0 %v6899
        %6958 = vmatprep.subr.bf16.mxu0 0
        %6959 = vmatpush1.bf16.msra.mxu0 %v6898
        %6960 = vmatprep.subr.bf16.mxu0 0
        %6961 = vmatpush1.bf16.msra.mxu0 %v6897
        %6962 = vmatprep.subr.bf16.mxu0 0
        %6963 = vmatpush1.bf16.msra.mxu0 %v6896
        %6964 = vmatprep.subr.bf16.mxu0 0
        %6965 = vmatpush1.bf16.msra.mxu0 %v6895
        %6966 = vmatprep.subr.bf16.mxu0 0
        %6967 = vmatpush1.bf16.msra.mxu0 %v6894
        %6968 = vmatprep.subr.bf16.mxu0 0
        %6969 = vmatpush1.bf16.msra.mxu0 %v6893
        %6970 = vmatprep.subr.bf16.mxu0 0
        %6971 = vmatpush1.bf16.msra.mxu0 %v6892
        %6972 = vmatprep.subr.bf16.mxu0 0
        %6973 = vmatpush2.bf16.msra.mxu0 %v6907
        %6974 = vmatprep.subr.bf16.mxu0 0
        %6975 = vmatpush2.bf16.msra.mxu0 %v6906
        %6976 = vmatprep.subr.bf16.mxu0 0
        %6977 = vmatpush2.bf16.msra.mxu0 %v6905
        %6978 = vmatprep.subr.bf16.mxu0 0
        %6979 = vmatpush2.bf16.msra.mxu0 %v6904
        %6980 = vmatprep.subr.bf16.mxu0 0
        %6981 = vmatpush2.bf16.msra.mxu0 %v6903
        %6982 = vmatprep.subr.bf16.mxu0 0
        %6983 = vmatpush2.bf16.msra.mxu0 %v6902
        %6984 = vmatprep.subr.bf16.mxu0 0
        %6985 = vmatpush2.bf16.msra.mxu0 %v6901
        %6986 = vmatprep.subr.bf16.mxu0 0
        %6987 = vmatpush2.bf16.msra.mxu0 %v6900
        %6988 = vmatprep.mubr.bf16.mxu0 %v6701
        %6989 = vmatmul.mubr.bf16.gmra.mxu0 %v6700
        %v6990 = vpop.f32.mrf.mxu0
        %v6991 = vadd.f32 0.0, %v6990
        %v6992 = vpop.f32.mrf.mxu0
        %v6993 = vpop.f32.mrf.mxu0
        %v6994 = vadd.f32 0.0, %v6993
        %v6995 = vpop.f32.mrf.mxu0
        %6996 = vmatprep.mubr.bf16.mxu0 %v6705
        %6997 = vmatmul.mubr.bf16.gmra.mxu0 %v6704
        %v6998 = vpop.f32.mrf.mxu0
        %v6999 = vadd.f32 0.0, %v6998
        %v7000 = vpop.f32.mrf.mxu0
        %v7001 = vpop.f32.mrf.mxu0
        %v7002 = vadd.f32 0.0, %v7001
        %v7003 = vpop.f32.mrf.mxu0
        %7004 = vmatprep.mubr.bf16.mxu0 %v6709
        %7005 = vmatmul.mubr.bf16.gmra.mxu0 %v6708
        %v7006 = vpop.f32.mrf.mxu0
        %v7007 = vadd.f32 0.0, %v7006
        %v7008 = vpop.f32.mrf.mxu0
        %v7009 = vpop.f32.mrf.mxu0
        %v7010 = vadd.f32 0.0, %v7009
        %v7011 = vpop.f32.mrf.mxu0
        %7012 = vmatprep.mubr.bf16.mxu0 %v6713
        %7013 = vmatmul.mubr.bf16.gmra.mxu0 %v6712
        %v7014 = vpop.f32.mrf.mxu0
        %v7015 = vadd.f32 0.0, %v7014
        %v7016 = vpop.f32.mrf.mxu0
        %v7017 = vpop.f32.mrf.mxu0
        %v7018 = vadd.f32 0.0, %v7017
        %v7019 = vpop.f32.mrf.mxu0
        %7020 = vmatprep.mubr.bf16.mxu0 %v6717
        %7021 = vmatmul.mubr.bf16.gmra.mxu0 %v6716
        %v7022 = vpop.f32.mrf.mxu0
        %v7023 = vadd.f32 0.0, %v7022
        %v7024 = vpop.f32.mrf.mxu0
        %v7025 = vpop.f32.mrf.mxu0
        %v7026 = vadd.f32 0.0, %v7025
        %v7027 = vpop.f32.mrf.mxu0
        %7028 = vmatprep.mubr.bf16.mxu0 %v6721
        %7029 = vmatmul.mubr.bf16.gmra.mxu0 %v6720
        %v7030 = vpop.f32.mrf.mxu0
        %v7031 = vadd.f32 0.0, %v7030
        %v7032 = vpop.f32.mrf.mxu0
        %v7033 = vpop.f32.mrf.mxu0
        %v7034 = vadd.f32 0.0, %v7033
        %v7035 = vpop.f32.mrf.mxu0
        %7036 = vmatprep.mubr.bf16.mxu0 %v6725
        %7037 = vmatmul.mubr.bf16.gmra.mxu0 %v6724
        %v7038 = vpop.f32.mrf.mxu0
        %v7039 = vadd.f32 0.0, %v7038
        %v7040 = vpop.f32.mrf.mxu0
        %v7041 = vpop.f32.mrf.mxu0
        %v7042 = vadd.f32 0.0, %v7041
        %v7043 = vpop.f32.mrf.mxu0
        %7044 = vmatprep.mubr.bf16.mxu0 %v6729
        %7045 = vmatmul.mubr.bf16.gmra.mxu0 %v6728
        %v7046 = vpop.f32.mrf.mxu0
        %v7047 = vadd.f32 0.0, %v7046
        %v7048 = vpop.f32.mrf.mxu0
        %v7049 = vpop.f32.mrf.mxu0
        %v7050 = vadd.f32 0.0, %v7049
        %v7051 = vpop.f32.mrf.mxu0
        %7052 = vmatprep.mubr.bf16.mxu0 %v6733
        %7053 = vmatmul.mubr.bf16.gmra.mxu0 %v6732
        %v7054 = vpop.f32.mrf.mxu0
        %v7055 = vadd.f32 0.0, %v7054
        %v7056 = vpop.f32.mrf.mxu0
        %v7057 = vpop.f32.mrf.mxu0
        %v7058 = vadd.f32 0.0, %v7057
        %v7059 = vpop.f32.mrf.mxu0
        %7060 = vmatprep.mubr.bf16.mxu0 %v6737
        %7061 = vmatmul.mubr.bf16.gmra.mxu0 %v6736
        %v7062 = vpop.f32.mrf.mxu0
        %v7063 = vadd.f32 0.0, %v7062
        %v7064 = vpop.f32.mrf.mxu0
        %v7065 = vpop.f32.mrf.mxu0
        %v7066 = vadd.f32 0.0, %v7065
        %v7067 = vpop.f32.mrf.mxu0
        %7068 = vmatprep.mubr.bf16.mxu0 %v6741
        %7069 = vmatmul.mubr.bf16.gmra.mxu0 %v6740
        %v7070 = vpop.f32.mrf.mxu0
        %v7071 = vadd.f32 0.0, %v7070
        %v7072 = vpop.f32.mrf.mxu0
        %v7073 = vpop.f32.mrf.mxu0
        %v7074 = vadd.f32 0.0, %v7073
        %v7075 = vpop.f32.mrf.mxu0
        %7076 = vmatprep.mubr.bf16.mxu0 %v6745
        %7077 = vmatmul.mubr.bf16.gmra.mxu0 %v6744
        %v7078 = vpop.f32.mrf.mxu0
        %v7079 = vadd.f32 0.0, %v7078
        %v7080 = vpop.f32.mrf.mxu0
        %v7081 = vpop.f32.mrf.mxu0
        %v7082 = vadd.f32 0.0, %v7081
        %v7083 = vpop.f32.mrf.mxu0
        %7084 = vmatprep.mubr.bf16.mxu0 %v6749
        %7085 = vmatmul.mubr.bf16.gmra.mxu0 %v6748
        %v7086 = vpop.f32.mrf.mxu0
        %v7087 = vadd.f32 0.0, %v7086
        %v7088 = vpop.f32.mrf.mxu0
        %v7089 = vpop.f32.mrf.mxu0
        %v7090 = vadd.f32 0.0, %v7089
        %v7091 = vpop.f32.mrf.mxu0
        %7092 = vmatprep.mubr.bf16.mxu0 %v6753
        %7093 = vmatmul.mubr.bf16.gmra.mxu0 %v6752
        %v7094 = vpop.f32.mrf.mxu0
        %v7095 = vadd.f32 0.0, %v7094
        %v7096 = vpop.f32.mrf.mxu0
        %v7097 = vpop.f32.mrf.mxu0
        %v7098 = vadd.f32 0.0, %v7097
        %v7099 = vpop.f32.mrf.mxu0
        %7100 = vmatprep.mubr.bf16.mxu0 %v6757
        %7101 = vmatmul.mubr.bf16.gmra.mxu0 %v6756
        %v7102 = vpop.f32.mrf.mxu0
        %v7103 = vadd.f32 0.0, %v7102
        %v7104 = vpop.f32.mrf.mxu0
        %v7105 = vpop.f32.mrf.mxu0
        %v7106 = vadd.f32 0.0, %v7105
        %v7107 = vpop.f32.mrf.mxu0
        %7108 = vmatprep.mubr.bf16.mxu0 %v6761
        %7109 = vmatmul.mubr.bf16.gmra.mxu0 %v6760
        %v7110 = vpop.f32.mrf.mxu0
        %v7111 = vadd.f32 0.0, %v7110
        %v7112 = vpop.f32.mrf.mxu0
        %v7113 = vpop.f32.mrf.mxu0
        %v7114 = vadd.f32 0.0, %v7113
        %v7115 = vpop.f32.mrf.mxu0
        %7116 = vdwg.mxu0
        %7117 = vmatprep.subr.bf16.mxu0 0
        %7118 = vmatpush1.bf16.msra.mxu0 %v6915
        %7119 = vmatprep.subr.bf16.mxu0 0
        %7120 = vmatpush1.bf16.msra.mxu0 %v6914
        %7121 = vmatprep.subr.bf16.mxu0 0
        %7122 = vmatpush1.bf16.msra.mxu0 %v6913
        %7123 = vmatprep.subr.bf16.mxu0 0
        %7124 = vmatpush1.bf16.msra.mxu0 %v6912
        %7125 = vmatprep.subr.bf16.mxu0 0
        %7126 = vmatpush1.bf16.msra.mxu0 %v6911
        %7127 = vmatprep.subr.bf16.mxu0 0
        %7128 = vmatpush1.bf16.msra.mxu0 %v6910
        %7129 = vmatprep.subr.bf16.mxu0 0
        %7130 = vmatpush1.bf16.msra.mxu0 %v6909
        %7131 = vmatprep.subr.bf16.mxu0 0
        %7132 = vmatpush1.bf16.msra.mxu0 %v6908
        %7133 = vmatprep.subr.bf16.mxu0 0
        %7134 = vmatpush2.bf16.msra.mxu0 %v6923
        %7135 = vmatprep.subr.bf16.mxu0 0
        %7136 = vmatpush2.bf16.msra.mxu0 %v6922
        %7137 = vmatprep.subr.bf16.mxu0 0
        %7138 = vmatpush2.bf16.msra.mxu0 %v6921
        %7139 = vmatprep.subr.bf16.mxu0 0
        %7140 = vmatpush2.bf16.msra.mxu0 %v6920
        %7141 = vmatprep.subr.bf16.mxu0 0
        %7142 = vmatpush2.bf16.msra.mxu0 %v6919
        %7143 = vmatprep.subr.bf16.mxu0 0
        %7144 = vmatpush2.bf16.msra.mxu0 %v6918
        %7145 = vmatprep.subr.bf16.mxu0 0
        %7146 = vmatpush2.bf16.msra.mxu0 %v6917
        %7147 = vmatprep.subr.bf16.mxu0 0
        %7148 = vmatpush2.bf16.msra.mxu0 %v6916
        %7149 = vmatprep.mubr.bf16.mxu0 %v6703
        %7150 = vmatmul.mubr.bf16.gmra.mxu0 %v6702
        %v7151 = vpop.f32.mrf.mxu0
        %v7152 = vadd.f32 %v6991, %v7151
        %v7153 = vpop.f32.mrf.mxu0
        %v7154 = vpop.f32.mrf.mxu0
        %v7155 = vadd.f32 %v6994, %v7154
        %v7156 = vpop.f32.mrf.mxu0
        %7157 = vmatprep.mubr.bf16.mxu0 %v6707
        %7158 = vmatmul.mubr.bf16.gmra.mxu0 %v6706
        %v7159 = vpop.f32.mrf.mxu0
        %v7160 = vadd.f32 %v6999, %v7159
        %v7161 = vpop.f32.mrf.mxu0
        %v7162 = vpop.f32.mrf.mxu0
        %v7163 = vadd.f32 %v7002, %v7162
        %v7164 = vpop.f32.mrf.mxu0
        %7165 = vmatprep.mubr.bf16.mxu0 %v6711
        %7166 = vmatmul.mubr.bf16.gmra.mxu0 %v6710
        %v7167 = vpop.f32.mrf.mxu0
        %v7168 = vadd.f32 %v7007, %v7167
        %v7169 = vpop.f32.mrf.mxu0
        %v7170 = vpop.f32.mrf.mxu0
        %v7171 = vadd.f32 %v7010, %v7170
        %v7172 = vpop.f32.mrf.mxu0
        %7173 = vmatprep.mubr.bf16.mxu0 %v6715
        %7174 = vmatmul.mubr.bf16.gmra.mxu0 %v6714
        %v7175 = vpop.f32.mrf.mxu0
        %v7176 = vadd.f32 %v7015, %v7175
        %v7177 = vpop.f32.mrf.mxu0
        %v7178 = vpop.f32.mrf.mxu0
        %v7179 = vadd.f32 %v7018, %v7178
        %v7180 = vpop.f32.mrf.mxu0
        %7181 = vmatprep.mubr.bf16.mxu0 %v6719
        %7182 = vmatmul.mubr.bf16.gmra.mxu0 %v6718
        %v7183 = vpop.f32.mrf.mxu0
        %v7184 = vadd.f32 %v7023, %v7183
        %v7185 = vpop.f32.mrf.mxu0
        %v7186 = vpop.f32.mrf.mxu0
        %v7187 = vadd.f32 %v7026, %v7186
        %v7188 = vpop.f32.mrf.mxu0
        %7189 = vmatprep.mubr.bf16.mxu0 %v6723
        %7190 = vmatmul.mubr.bf16.gmra.mxu0 %v6722
        %v7191 = vpop.f32.mrf.mxu0
        %v7192 = vadd.f32 %v7031, %v7191
        %v7193 = vpop.f32.mrf.mxu0
        %v7194 = vpop.f32.mrf.mxu0
        %v7195 = vadd.f32 %v7034, %v7194
        %v7196 = vpop.f32.mrf.mxu0
        %7197 = vmatprep.mubr.bf16.mxu0 %v6727
        %7198 = vmatmul.mubr.bf16.gmra.mxu0 %v6726
        %v7199 = vpop.f32.mrf.mxu0
        %v7200 = vadd.f32 %v7039, %v7199
        %v7201 = vpop.f32.mrf.mxu0
        %v7202 = vpop.f32.mrf.mxu0
        %v7203 = vadd.f32 %v7042, %v7202
        %v7204 = vpop.f32.mrf.mxu0
        %7205 = vmatprep.mubr.bf16.mxu0 %v6731
        %7206 = vmatmul.mubr.bf16.gmra.mxu0 %v6730
        %v7207 = vpop.f32.mrf.mxu0
        %v7208 = vadd.f32 %v7047, %v7207
        %v7209 = vpop.f32.mrf.mxu0
        %v7210 = vpop.f32.mrf.mxu0
        %v7211 = vadd.f32 %v7050, %v7210
        %v7212 = vpop.f32.mrf.mxu0
        %7213 = vmatprep.mubr.bf16.mxu0 %v6735
        %7214 = vmatmul.mubr.bf16.gmra.mxu0 %v6734
        %v7215 = vpop.f32.mrf.mxu0
        %v7216 = vadd.f32 %v7055, %v7215
        %v7217 = vpop.f32.mrf.mxu0
        %v7218 = vpop.f32.mrf.mxu0
        %v7219 = vadd.f32 %v7058, %v7218
        %v7220 = vpop.f32.mrf.mxu0
        %7221 = vmatprep.mubr.bf16.mxu0 %v6739
        %7222 = vmatmul.mubr.bf16.gmra.mxu0 %v6738
        %v7223 = vpop.f32.mrf.mxu0
        %v7224 = vadd.f32 %v7063, %v7223
        %v7225 = vpop.f32.mrf.mxu0
        %v7226 = vpop.f32.mrf.mxu0
        %v7227 = vadd.f32 %v7066, %v7226
        %v7228 = vpop.f32.mrf.mxu0
        %7229 = vmatprep.mubr.bf16.mxu0 %v6743
        %7230 = vmatmul.mubr.bf16.gmra.mxu0 %v6742
        %v7231 = vpop.f32.mrf.mxu0
        %v7232 = vadd.f32 %v7071, %v7231
        %v7233 = vpop.f32.mrf.mxu0
        %v7234 = vpop.f32.mrf.mxu0
        %v7235 = vadd.f32 %v7074, %v7234
        %v7236 = vpop.f32.mrf.mxu0
        %7237 = vmatprep.mubr.bf16.mxu0 %v6747
        %7238 = vmatmul.mubr.bf16.gmra.mxu0 %v6746
        %v7239 = vpop.f32.mrf.mxu0
        %v7240 = vadd.f32 %v7079, %v7239
        %v7241 = vpop.f32.mrf.mxu0
        %v7242 = vpop.f32.mrf.mxu0
        %v7243 = vadd.f32 %v7082, %v7242
        %v7244 = vpop.f32.mrf.mxu0
        %7245 = vmatprep.mubr.bf16.mxu0 %v6751
        %7246 = vmatmul.mubr.bf16.gmra.mxu0 %v6750
        %v7247 = vpop.f32.mrf.mxu0
        %v7248 = vadd.f32 %v7087, %v7247
        %v7249 = vpop.f32.mrf.mxu0
        %v7250 = vpop.f32.mrf.mxu0
        %v7251 = vadd.f32 %v7090, %v7250
        %v7252 = vpop.f32.mrf.mxu0
        %7253 = vmatprep.mubr.bf16.mxu0 %v6755
        %7254 = vmatmul.mubr.bf16.gmra.mxu0 %v6754
        %v7255 = vpop.f32.mrf.mxu0
        %v7256 = vadd.f32 %v7095, %v7255
        %v7257 = vpop.f32.mrf.mxu0
        %v7258 = vpop.f32.mrf.mxu0
        %v7259 = vadd.f32 %v7098, %v7258
        %v7260 = vpop.f32.mrf.mxu0
        %7261 = vmatprep.mubr.bf16.mxu0 %v6759
        %7262 = vmatmul.mubr.bf16.gmra.mxu0 %v6758
        %v7263 = vpop.f32.mrf.mxu0
        %v7264 = vadd.f32 %v7103, %v7263
        %v7265 = vpop.f32.mrf.mxu0
        %v7266 = vpop.f32.mrf.mxu0
        %v7267 = vadd.f32 %v7106, %v7266
        %v7268 = vpop.f32.mrf.mxu0
        %7269 = vmatprep.mubr.bf16.mxu0 %v6763
        %7270 = vmatmul.mubr.bf16.gmra.mxu0 %v6762
        %v7271 = vpop.f32.mrf.mxu0
        %v7272 = vadd.f32 %v7111, %v7271
        %v7273 = vpop.f32.mrf.mxu0
        %v7274 = vpop.f32.mrf.mxu0
        %v7275 = vadd.f32 %v7114, %v7274
        %v7276 = vpop.f32.mrf.mxu0
        %7277 = vdwg.mxu0
        %v7278 = vpack.c.bf16 %v7155, %v7152
        %v7279 = vpack.c.bf16 %v7163, %v7160
        %v7280 = vpack.c.bf16 %v7171, %v7168
        %v7281 = vpack.c.bf16 %v7179, %v7176
        %v7282 = vpack.c.bf16 %v7187, %v7184
        %v7283 = vpack.c.bf16 %v7195, %v7192
        %v7284 = vpack.c.bf16 %v7203, %v7200
        %v7285 = vpack.c.bf16 %v7211, %v7208
        %v7286 = vpack.c.bf16 %v7219, %v7216
        %v7287 = vpack.c.bf16 %v7227, %v7224
        %v7288 = vpack.c.bf16 %v7235, %v7232
        %v7289 = vpack.c.bf16 %v7243, %v7240
        %v7290 = vpack.c.bf16 %v7251, %v7248
        %v7291 = vpack.c.bf16 %v7259, %v7256
        %v7292 = vpack.c.bf16 %v7267, %v7264
        %v7293 = vpack.c.bf16 %v7275, %v7272
        %7294 = vmatprep.subr.bf16.mxu0 %v2965
        %7295 = vmatpush1.bf16.msra.mxu0 %v2964
        %7296 = vmatprep.subr.bf16.mxu0 %v2963
        %7297 = vmatpush1.bf16.msra.mxu0 %v2962
        %7298 = vmatprep.subr.bf16.mxu0 %v2961
        %7299 = vmatpush1.bf16.msra.mxu0 %v2960
        %7300 = vmatprep.subr.bf16.mxu0 %v2959
        %7301 = vmatpush1.bf16.msra.mxu0 %v2958
        %7302 = vmatprep.subr.bf16.mxu0 %v2957
        %7303 = vmatpush1.bf16.msra.mxu0 %v2956
        %7304 = vmatprep.subr.bf16.mxu0 %v2955
        %7305 = vmatpush1.bf16.msra.mxu0 %v2954
        %7306 = vmatprep.subr.bf16.mxu0 %v2953
        %7307 = vmatpush1.bf16.msra.mxu0 %v2952
        %7308 = vmatprep.subr.bf16.mxu0 %v2951
        %7309 = vmatpush1.bf16.msra.mxu0 %v2950
        %7310 = vmatprep.subr.bf16.mxu0 0
        %7311 = vmatpush2.bf16.msra.mxu0 0
        %7312 = vmatprep.subr.bf16.mxu0 0
        %7313 = vmatpush2.bf16.msra.mxu0 0
        %7314 = vmatprep.subr.bf16.mxu0 0
        %7315 = vmatpush2.bf16.msra.mxu0 0
        %7316 = vmatprep.subr.bf16.mxu0 0
        %7317 = vmatpush2.bf16.msra.mxu0 0
        %7318 = vmatprep.subr.bf16.mxu0 0
        %7319 = vmatpush2.bf16.msra.mxu0 0
        %7320 = vmatprep.subr.bf16.mxu0 0
        %7321 = vmatpush2.bf16.msra.mxu0 0
        %7322 = vmatprep.subr.bf16.mxu0 0
        %7323 = vmatpush2.bf16.msra.mxu0 0
        %7324 = vmatprep.subr.bf16.mxu0 0
        %7325 = vmatpush2.bf16.msra.mxu0 0
        %7326 = vmatprep.mubr.bf16.mxu0 0
        %7327 = vmatmul.mubr.bf16.gmra.mxu0 %v7278
        %v7328 = vpop.f32.mrf.mxu0
        %v7329 = vadd.f32 0.0, %v7328
        %v7330 = vpop.f32.mrf.mxu0
        %v7331 = vadd.f32 0.0, %v7330
        %v7332 = vpop.f32.mrf.mxu0
        %v7333 = vadd.f32 0.0, %v7332
        %v7334 = vpop.f32.mrf.mxu0
        %v7335 = vadd.f32 0.0, %v7334
        %7336 = vmatprep.mubr.bf16.mxu0 0
        %7337 = vmatmul.mubr.bf16.gmra.mxu0 %v7279
        %v7338 = vpop.f32.mrf.mxu0
        %v7339 = vadd.f32 0.0, %v7338
        %v7340 = vpop.f32.mrf.mxu0
        %v7341 = vadd.f32 0.0, %v7340
        %v7342 = vpop.f32.mrf.mxu0
        %v7343 = vadd.f32 0.0, %v7342
        %v7344 = vpop.f32.mrf.mxu0
        %v7345 = vadd.f32 0.0, %v7344
        %7346 = vmatprep.mubr.bf16.mxu0 0
        %7347 = vmatmul.mubr.bf16.gmra.mxu0 %v7280
        %v7348 = vpop.f32.mrf.mxu0
        %v7349 = vadd.f32 0.0, %v7348
        %v7350 = vpop.f32.mrf.mxu0
        %v7351 = vadd.f32 0.0, %v7350
        %v7352 = vpop.f32.mrf.mxu0
        %v7353 = vadd.f32 0.0, %v7352
        %v7354 = vpop.f32.mrf.mxu0
        %v7355 = vadd.f32 0.0, %v7354
        %7356 = vmatprep.mubr.bf16.mxu0 0
        %7357 = vmatmul.mubr.bf16.gmra.mxu0 %v7281
        %v7358 = vpop.f32.mrf.mxu0
        %v7359 = vadd.f32 0.0, %v7358
        %v7360 = vpop.f32.mrf.mxu0
        %v7361 = vadd.f32 0.0, %v7360
        %v7362 = vpop.f32.mrf.mxu0
        %v7363 = vadd.f32 0.0, %v7362
        %v7364 = vpop.f32.mrf.mxu0
        %v7365 = vadd.f32 0.0, %v7364
        %7366 = vmatprep.mubr.bf16.mxu0 0
        %7367 = vmatmul.mubr.bf16.gmra.mxu0 %v7282
        %v7368 = vpop.f32.mrf.mxu0
        %v7369 = vadd.f32 0.0, %v7368
        %v7370 = vpop.f32.mrf.mxu0
        %v7371 = vadd.f32 0.0, %v7370
        %v7372 = vpop.f32.mrf.mxu0
        %v7373 = vadd.f32 0.0, %v7372
        %v7374 = vpop.f32.mrf.mxu0
        %v7375 = vadd.f32 0.0, %v7374
        %7376 = vmatprep.mubr.bf16.mxu0 0
        %7377 = vmatmul.mubr.bf16.gmra.mxu0 %v7283
        %v7378 = vpop.f32.mrf.mxu0
        %v7379 = vadd.f32 0.0, %v7378
        %v7380 = vpop.f32.mrf.mxu0
        %v7381 = vadd.f32 0.0, %v7380
        %v7382 = vpop.f32.mrf.mxu0
        %v7383 = vadd.f32 0.0, %v7382
        %v7384 = vpop.f32.mrf.mxu0
        %v7385 = vadd.f32 0.0, %v7384
        %7386 = vmatprep.mubr.bf16.mxu0 0
        %7387 = vmatmul.mubr.bf16.gmra.mxu0 %v7284
        %v7388 = vpop.f32.mrf.mxu0
        %v7389 = vadd.f32 0.0, %v7388
        %v7390 = vpop.f32.mrf.mxu0
        %v7391 = vadd.f32 0.0, %v7390
        %v7392 = vpop.f32.mrf.mxu0
        %v7393 = vadd.f32 0.0, %v7392
        %v7394 = vpop.f32.mrf.mxu0
        %v7395 = vadd.f32 0.0, %v7394
        %7396 = vmatprep.mubr.bf16.mxu0 0
        %7397 = vmatmul.mubr.bf16.gmra.mxu0 %v7285
        %v7398 = vpop.f32.mrf.mxu0
        %v7399 = vadd.f32 0.0, %v7398
        %v7400 = vpop.f32.mrf.mxu0
        %v7401 = vadd.f32 0.0, %v7400
        %v7402 = vpop.f32.mrf.mxu0
        %v7403 = vadd.f32 0.0, %v7402
        %v7404 = vpop.f32.mrf.mxu0
        %v7405 = vadd.f32 0.0, %v7404
        %7406 = vmatprep.mubr.bf16.mxu0 0
        %7407 = vmatmul.mubr.bf16.gmra.mxu0 %v7286
        %v7408 = vpop.f32.mrf.mxu0
        %v7409 = vadd.f32 0.0, %v7408
        %v7410 = vpop.f32.mrf.mxu0
        %v7411 = vadd.f32 0.0, %v7410
        %v7412 = vpop.f32.mrf.mxu0
        %v7413 = vadd.f32 0.0, %v7412
        %v7414 = vpop.f32.mrf.mxu0
        %v7415 = vadd.f32 0.0, %v7414
        %7416 = vmatprep.mubr.bf16.mxu0 0
        %7417 = vmatmul.mubr.bf16.gmra.mxu0 %v7287
        %v7418 = vpop.f32.mrf.mxu0
        %v7419 = vadd.f32 0.0, %v7418
        %v7420 = vpop.f32.mrf.mxu0
        %v7421 = vadd.f32 0.0, %v7420
        %v7422 = vpop.f32.mrf.mxu0
        %v7423 = vadd.f32 0.0, %v7422
        %v7424 = vpop.f32.mrf.mxu0
        %v7425 = vadd.f32 0.0, %v7424
        %7426 = vmatprep.mubr.bf16.mxu0 0
        %7427 = vmatmul.mubr.bf16.gmra.mxu0 %v7288
        %v7428 = vpop.f32.mrf.mxu0
        %v7429 = vadd.f32 0.0, %v7428
        %v7430 = vpop.f32.mrf.mxu0
        %v7431 = vadd.f32 0.0, %v7430
        %v7432 = vpop.f32.mrf.mxu0
        %v7433 = vadd.f32 0.0, %v7432
        %v7434 = vpop.f32.mrf.mxu0
        %v7435 = vadd.f32 0.0, %v7434
        %7436 = vmatprep.mubr.bf16.mxu0 0
        %7437 = vmatmul.mubr.bf16.gmra.mxu0 %v7289
        %v7438 = vpop.f32.mrf.mxu0
        %v7439 = vadd.f32 0.0, %v7438
        %v7440 = vpop.f32.mrf.mxu0
        %v7441 = vadd.f32 0.0, %v7440
        %v7442 = vpop.f32.mrf.mxu0
        %v7443 = vadd.f32 0.0, %v7442
        %v7444 = vpop.f32.mrf.mxu0
        %v7445 = vadd.f32 0.0, %v7444
        %7446 = vmatprep.mubr.bf16.mxu0 0
        %7447 = vmatmul.mubr.bf16.gmra.mxu0 %v7290
        %v7448 = vpop.f32.mrf.mxu0
        %v7449 = vadd.f32 0.0, %v7448
        %v7450 = vpop.f32.mrf.mxu0
        %v7451 = vadd.f32 0.0, %v7450
        %v7452 = vpop.f32.mrf.mxu0
        %v7453 = vadd.f32 0.0, %v7452
        %v7454 = vpop.f32.mrf.mxu0
        %v7455 = vadd.f32 0.0, %v7454
        %7456 = vmatprep.mubr.bf16.mxu0 0
        %7457 = vmatmul.mubr.bf16.gmra.mxu0 %v7291
        %v7458 = vpop.f32.mrf.mxu0
        %v7459 = vadd.f32 0.0, %v7458
        %v7460 = vpop.f32.mrf.mxu0
        %v7461 = vadd.f32 0.0, %v7460
        %v7462 = vpop.f32.mrf.mxu0
        %v7463 = vadd.f32 0.0, %v7462
        %v7464 = vpop.f32.mrf.mxu0
        %v7465 = vadd.f32 0.0, %v7464
        %7466 = vmatprep.mubr.bf16.mxu0 0
        %7467 = vmatmul.mubr.bf16.gmra.mxu0 %v7292
        %v7468 = vpop.f32.mrf.mxu0
        %v7469 = vadd.f32 0.0, %v7468
        %v7470 = vpop.f32.mrf.mxu0
        %v7471 = vadd.f32 0.0, %v7470
        %v7472 = vpop.f32.mrf.mxu0
        %v7473 = vadd.f32 0.0, %v7472
        %v7474 = vpop.f32.mrf.mxu0
        %v7475 = vadd.f32 0.0, %v7474
        %7476 = vmatprep.mubr.bf16.mxu0 0
        %7477 = vmatmul.mubr.bf16.gmra.mxu0 %v7293
        %v7478 = vpop.f32.mrf.mxu0
        %v7479 = vadd.f32 0.0, %v7478
        %v7480 = vpop.f32.mrf.mxu0
        %v7481 = vadd.f32 0.0, %v7480
        %v7482 = vpop.f32.mrf.mxu0
        %v7483 = vadd.f32 0.0, %v7482
        %v7484 = vpop.f32.mrf.mxu0
        %v7485 = vadd.f32 0.0, %v7484
        %7486 = vdwg.mxu0
        %7487 = vmatprep.subr.bf16.mxu0 %v2949
        %7488 = vmatpush1.bf16.msra.mxu0 %v2948
        %7489 = vmatprep.subr.bf16.mxu0 %v2947
        %7490 = vmatpush1.bf16.msra.mxu0 %v2946
        %7491 = vmatprep.subr.bf16.mxu0 %v2945
        %7492 = vmatpush1.bf16.msra.mxu0 %v2944
        %7493 = vmatprep.subr.bf16.mxu0 %v2943
        %7494 = vmatpush1.bf16.msra.mxu0 %v2942
        %7495 = vmatprep.subr.bf16.mxu0 %v2941
        %7496 = vmatpush1.bf16.msra.mxu0 %v2940
        %7497 = vmatprep.subr.bf16.mxu0 %v2939
        %7498 = vmatpush1.bf16.msra.mxu0 %v2938
        %7499 = vmatprep.subr.bf16.mxu0 %v2937
        %7500 = vmatpush1.bf16.msra.mxu0 %v2936
        %7501 = vmatprep.subr.bf16.mxu0 %v2935
        %7502 = vmatpush1.bf16.msra.mxu0 %v2934
        %7503 = vmatprep.subr.bf16.mxu0 0
        %7504 = vmatpush2.bf16.msra.mxu0 0
        %7505 = vmatprep.subr.bf16.mxu0 0
        %7506 = vmatpush2.bf16.msra.mxu0 0
        %7507 = vmatprep.subr.bf16.mxu0 0
        %7508 = vmatpush2.bf16.msra.mxu0 0
        %7509 = vmatprep.subr.bf16.mxu0 0
        %7510 = vmatpush2.bf16.msra.mxu0 0
        %7511 = vmatprep.subr.bf16.mxu0 0
        %7512 = vmatpush2.bf16.msra.mxu0 0
        %7513 = vmatprep.subr.bf16.mxu0 0
        %7514 = vmatpush2.bf16.msra.mxu0 0
        %7515 = vmatprep.subr.bf16.mxu0 0
        %7516 = vmatpush2.bf16.msra.mxu0 0
        %7517 = vmatprep.subr.bf16.mxu0 0
        %7518 = vmatpush2.bf16.msra.mxu0 0
        %7519 = vmatprep.mubr.bf16.mxu0 0
        %7520 = vmatmul.mubr.bf16.gmra.mxu0 %v5114
        %v7521 = vpop.f32.mrf.mxu0
        %v7522 = vadd.f32 %v7329, %v7521
        %v7523 = vpop.f32.mrf.mxu0
        %v7524 = vadd.f32 %v7331, %v7523
        %v7525 = vpop.f32.mrf.mxu0
        %v7526 = vadd.f32 %v7333, %v7525
        %v7527 = vpop.f32.mrf.mxu0
        %v7528 = vadd.f32 %v7335, %v7527
        %7529 = vmatprep.mubr.bf16.mxu0 0
        %7530 = vmatmul.mubr.bf16.gmra.mxu0 %v5115
        %v7531 = vpop.f32.mrf.mxu0
        %v7532 = vadd.f32 %v7339, %v7531
        %v7533 = vpop.f32.mrf.mxu0
        %v7534 = vadd.f32 %v7341, %v7533
        %v7535 = vpop.f32.mrf.mxu0
        %v7536 = vadd.f32 %v7343, %v7535
        %v7537 = vpop.f32.mrf.mxu0
        %v7538 = vadd.f32 %v7345, %v7537
        %7539 = vmatprep.mubr.bf16.mxu0 0
        %7540 = vmatmul.mubr.bf16.gmra.mxu0 %v5116
        %v7541 = vpop.f32.mrf.mxu0
        %v7542 = vadd.f32 %v7349, %v7541
        %v7543 = vpop.f32.mrf.mxu0
        %v7544 = vadd.f32 %v7351, %v7543
        %v7545 = vpop.f32.mrf.mxu0
        %v7546 = vadd.f32 %v7353, %v7545
        %v7547 = vpop.f32.mrf.mxu0
        %v7548 = vadd.f32 %v7355, %v7547
        %7549 = vmatprep.mubr.bf16.mxu0 0
        %7550 = vmatmul.mubr.bf16.gmra.mxu0 %v5117
        %v7551 = vpop.f32.mrf.mxu0
        %v7552 = vadd.f32 %v7359, %v7551
        %v7553 = vpop.f32.mrf.mxu0
        %v7554 = vadd.f32 %v7361, %v7553
        %v7555 = vpop.f32.mrf.mxu0
        %v7556 = vadd.f32 %v7363, %v7555
        %v7557 = vpop.f32.mrf.mxu0
        %v7558 = vadd.f32 %v7365, %v7557
        %7559 = vmatprep.mubr.bf16.mxu0 0
        %7560 = vmatmul.mubr.bf16.gmra.mxu0 %v5118
        %v7561 = vpop.f32.mrf.mxu0
        %v7562 = vadd.f32 %v7369, %v7561
        %v7563 = vpop.f32.mrf.mxu0
        %v7564 = vadd.f32 %v7371, %v7563
        %v7565 = vpop.f32.mrf.mxu0
        %v7566 = vadd.f32 %v7373, %v7565
        %v7567 = vpop.f32.mrf.mxu0
        %v7568 = vadd.f32 %v7375, %v7567
        %7569 = vmatprep.mubr.bf16.mxu0 0
        %7570 = vmatmul.mubr.bf16.gmra.mxu0 %v5119
        %v7571 = vpop.f32.mrf.mxu0
        %v7572 = vadd.f32 %v7379, %v7571
        %v7573 = vpop.f32.mrf.mxu0
        %v7574 = vadd.f32 %v7381, %v7573
        %v7575 = vpop.f32.mrf.mxu0
        %v7576 = vadd.f32 %v7383, %v7575
        %v7577 = vpop.f32.mrf.mxu0
        %v7578 = vadd.f32 %v7385, %v7577
        %7579 = vmatprep.mubr.bf16.mxu0 0
        %7580 = vmatmul.mubr.bf16.gmra.mxu0 %v5120
        %v7581 = vpop.f32.mrf.mxu0
        %v7582 = vadd.f32 %v7389, %v7581
        %v7583 = vpop.f32.mrf.mxu0
        %v7584 = vadd.f32 %v7391, %v7583
        %v7585 = vpop.f32.mrf.mxu0
        %v7586 = vadd.f32 %v7393, %v7585
        %v7587 = vpop.f32.mrf.mxu0
        %v7588 = vadd.f32 %v7395, %v7587
        %7589 = vmatprep.mubr.bf16.mxu0 0
        %7590 = vmatmul.mubr.bf16.gmra.mxu0 %v5121
        %v7591 = vpop.f32.mrf.mxu0
        %v7592 = vadd.f32 %v7399, %v7591
        %v7593 = vpop.f32.mrf.mxu0
        %v7594 = vadd.f32 %v7401, %v7593
        %v7595 = vpop.f32.mrf.mxu0
        %v7596 = vadd.f32 %v7403, %v7595
        %v7597 = vpop.f32.mrf.mxu0
        %v7598 = vadd.f32 %v7405, %v7597
        %7599 = vmatprep.mubr.bf16.mxu0 0
        %7600 = vmatmul.mubr.bf16.gmra.mxu0 %v5122
        %v7601 = vpop.f32.mrf.mxu0
        %v7602 = vadd.f32 %v7409, %v7601
        %v7603 = vpop.f32.mrf.mxu0
        %v7604 = vadd.f32 %v7411, %v7603
        %v7605 = vpop.f32.mrf.mxu0
        %v7606 = vadd.f32 %v7413, %v7605
        %v7607 = vpop.f32.mrf.mxu0
        %v7608 = vadd.f32 %v7415, %v7607
        %7609 = vmatprep.mubr.bf16.mxu0 0
        %7610 = vmatmul.mubr.bf16.gmra.mxu0 %v5123
        %v7611 = vpop.f32.mrf.mxu0
        %v7612 = vadd.f32 %v7419, %v7611
        %v7613 = vpop.f32.mrf.mxu0
        %v7614 = vadd.f32 %v7421, %v7613
        %v7615 = vpop.f32.mrf.mxu0
        %v7616 = vadd.f32 %v7423, %v7615
        %v7617 = vpop.f32.mrf.mxu0
        %v7618 = vadd.f32 %v7425, %v7617
        %7619 = vmatprep.mubr.bf16.mxu0 0
        %7620 = vmatmul.mubr.bf16.gmra.mxu0 %v5124
        %v7621 = vpop.f32.mrf.mxu0
        %v7622 = vadd.f32 %v7429, %v7621
        %v7623 = vpop.f32.mrf.mxu0
        %v7624 = vadd.f32 %v7431, %v7623
        %v7625 = vpop.f32.mrf.mxu0
        %v7626 = vadd.f32 %v7433, %v7625
        %v7627 = vpop.f32.mrf.mxu0
        %v7628 = vadd.f32 %v7435, %v7627
        %7629 = vmatprep.mubr.bf16.mxu0 0
        %7630 = vmatmul.mubr.bf16.gmra.mxu0 %v5125
        %v7631 = vpop.f32.mrf.mxu0
        %v7632 = vadd.f32 %v7439, %v7631
        %v7633 = vpop.f32.mrf.mxu0
        %v7634 = vadd.f32 %v7441, %v7633
        %v7635 = vpop.f32.mrf.mxu0
        %v7636 = vadd.f32 %v7443, %v7635
        %v7637 = vpop.f32.mrf.mxu0
        %v7638 = vadd.f32 %v7445, %v7637
        %7639 = vmatprep.mubr.bf16.mxu0 0
        %7640 = vmatmul.mubr.bf16.gmra.mxu0 %v5126
        %v7641 = vpop.f32.mrf.mxu0
        %v7642 = vadd.f32 %v7449, %v7641
        %v7643 = vpop.f32.mrf.mxu0
        %v7644 = vadd.f32 %v7451, %v7643
        %v7645 = vpop.f32.mrf.mxu0
        %v7646 = vadd.f32 %v7453, %v7645
        %v7647 = vpop.f32.mrf.mxu0
        %v7648 = vadd.f32 %v7455, %v7647
        %7649 = vmatprep.mubr.bf16.mxu0 0
        %7650 = vmatmul.mubr.bf16.gmra.mxu0 %v5127
        %v7651 = vpop.f32.mrf.mxu0
        %v7652 = vadd.f32 %v7459, %v7651
        %v7653 = vpop.f32.mrf.mxu0
        %v7654 = vadd.f32 %v7461, %v7653
        %v7655 = vpop.f32.mrf.mxu0
        %v7656 = vadd.f32 %v7463, %v7655
        %v7657 = vpop.f32.mrf.mxu0
        %v7658 = vadd.f32 %v7465, %v7657
        %7659 = vmatprep.mubr.bf16.mxu0 0
        %7660 = vmatmul.mubr.bf16.gmra.mxu0 %v5128
        %v7661 = vpop.f32.mrf.mxu0
        %v7662 = vadd.f32 %v7469, %v7661
        %v7663 = vpop.f32.mrf.mxu0
        %v7664 = vadd.f32 %v7471, %v7663
        %v7665 = vpop.f32.mrf.mxu0
        %v7666 = vadd.f32 %v7473, %v7665
        %v7667 = vpop.f32.mrf.mxu0
        %v7668 = vadd.f32 %v7475, %v7667
        %7669 = vmatprep.mubr.bf16.mxu0 0
        %7670 = vmatmul.mubr.bf16.gmra.mxu0 %v5129
        %v7671 = vpop.f32.mrf.mxu0
        %v7672 = vadd.f32 %v7479, %v7671
        %v7673 = vpop.f32.mrf.mxu0
        %v7674 = vadd.f32 %v7481, %v7673
        %v7675 = vpop.f32.mrf.mxu0
        %v7676 = vadd.f32 %v7483, %v7675
        %v7677 = vpop.f32.mrf.mxu0
        %v7678 = vadd.f32 %v7485, %v7677
        %7679 = vdwg.mxu0
        %v7680 = vld [vmem:[%s7] sm:$0x3]
        %v7682 = vlaneseq
        %v7683 = vshrl.u32 %v7682, 7
        %v7684 = vsub.s32 0, %v7683
        %v7685 = vrot.slane %v7680, %v7684
        %v7686 = vlaneseq
        %v7687 = vshrl.u32 %v7686, 7
        %v7688 = vsub.s32 1, %v7687
        %v7689 = vrot.slane %v7680, %v7688
        %v7692 = vadd.f32 %v7522, %v7685
        %v7693 = vadd.f32 %v7524, %v7689
        %v7694 = vadd.f32 %v7526, %v7685
        %v7695 = vadd.f32 %v7528, %v7689
        %v7696 = vadd.f32 %v7532, %v7685
        %v7697 = vadd.f32 %v7534, %v7689
        %v7698 = vadd.f32 %v7536, %v7685
        %v7699 = vadd.f32 %v7538, %v7689
        %v7700 = vadd.f32 %v7542, %v7685
        %v7701 = vadd.f32 %v7544, %v7689
        %v7702 = vadd.f32 %v7546, %v7685
        %v7703 = vadd.f32 %v7548, %v7689
        %v7704 = vadd.f32 %v7552, %v7685
        %v7705 = vadd.f32 %v7554, %v7689
        %v7706 = vadd.f32 %v7556, %v7685
        %v7707 = vadd.f32 %v7558, %v7689
        %v7708 = vadd.f32 %v7562, %v7685
        %v7709 = vadd.f32 %v7564, %v7689
        %v7710 = vadd.f32 %v7566, %v7685
        %v7711 = vadd.f32 %v7568, %v7689
        %v7712 = vadd.f32 %v7572, %v7685
        %v7713 = vadd.f32 %v7574, %v7689
        %v7714 = vadd.f32 %v7576, %v7685
        %v7715 = vadd.f32 %v7578, %v7689
        %v7716 = vadd.f32 %v7582, %v7685
        %v7717 = vadd.f32 %v7584, %v7689
        %v7718 = vadd.f32 %v7586, %v7685
        %v7719 = vadd.f32 %v7588, %v7689
        %v7720 = vadd.f32 %v7592, %v7685
        %v7721 = vadd.f32 %v7594, %v7689
        %v7722 = vadd.f32 %v7596, %v7685
        %v7723 = vadd.f32 %v7598, %v7689
        %v7724 = vadd.f32 %v7602, %v7685
        %v7725 = vadd.f32 %v7604, %v7689
        %v7726 = vadd.f32 %v7606, %v7685
        %v7727 = vadd.f32 %v7608, %v7689
        %v7728 = vadd.f32 %v7612, %v7685
        %v7729 = vadd.f32 %v7614, %v7689
        %v7730 = vadd.f32 %v7616, %v7685
        %v7731 = vadd.f32 %v7618, %v7689
        %v7732 = vadd.f32 %v7622, %v7685
        %v7733 = vadd.f32 %v7624, %v7689
        %v7734 = vadd.f32 %v7626, %v7685
        %v7735 = vadd.f32 %v7628, %v7689
        %v7736 = vadd.f32 %v7632, %v7685
        %v7737 = vadd.f32 %v7634, %v7689
        %v7738 = vadd.f32 %v7636, %v7685
        %v7739 = vadd.f32 %v7638, %v7689
        %v7740 = vadd.f32 %v7642, %v7685
        %v7741 = vadd.f32 %v7644, %v7689
        %v7742 = vadd.f32 %v7646, %v7685
        %v7743 = vadd.f32 %v7648, %v7689
        %v7744 = vadd.f32 %v7652, %v7685
        %v7745 = vadd.f32 %v7654, %v7689
        %v7746 = vadd.f32 %v7656, %v7685
        %v7747 = vadd.f32 %v7658, %v7689
        %v7748 = vadd.f32 %v7662, %v7685
        %v7749 = vadd.f32 %v7664, %v7689
        %v7750 = vadd.f32 %v7666, %v7685
        %v7751 = vadd.f32 %v7668, %v7689
        %v7752 = vadd.f32 %v7672, %v7685
        %v7753 = vadd.f32 %v7674, %v7689
        %v7754 = vadd.f32 %v7676, %v7685
        %v7755 = vadd.f32 %v7678, %v7689
        %7756 = vst [vmem:[%s425] sm:$0xff] %v7692
        %7757 = vst [vmem:[%s425 + $0x8] sm:$0xff] %v7693
        %7758 = vst [vmem:[%s425 + $0x10] sm:$0xff] %v7694
        %7759 = vst [vmem:[%s425 + $0x18] sm:$0xff] %v7695
        %7760 = vst [vmem:[%s425 + $0x20] sm:$0xff] %v7696
        %7761 = vst [vmem:[%s425 + $0x28] sm:$0xff] %v7697
        %7762 = vst [vmem:[%s425 + $0x30] sm:$0xff] %v7698
        %7763 = vst [vmem:[%s425 + $0x38] sm:$0xff] %v7699
        %7764 = vst [vmem:[%s425 + $0x40] sm:$0xff] %v7700
        %7765 = vst [vmem:[%s425 + $0x48] sm:$0xff] %v7701
        %7766 = vst [vmem:[%s425 + $0x50] sm:$0xff] %v7702
        %7767 = vst [vmem:[%s425 + $0x58] sm:$0xff] %v7703
        %7768 = vst [vmem:[%s425 + $0x60] sm:$0xff] %v7704
        %7769 = vst [vmem:[%s425 + $0x68] sm:$0xff] %v7705
        %7770 = vst [vmem:[%s425 + $0x70] sm:$0xff] %v7706
        %7771 = vst [vmem:[%s425 + $0x78] sm:$0xff] %v7707
        %7772 = vst [vmem:[%s425 + $0x80] sm:$0xff] %v7708
        %7773 = vst [vmem:[%s425 + $0x88] sm:$0xff] %v7709
        %7774 = vst [vmem:[%s425 + $0x90] sm:$0xff] %v7710
        %7775 = vst [vmem:[%s425 + $0x98] sm:$0xff] %v7711
        %7776 = vst [vmem:[%s425 + $0xa0] sm:$0xff] %v7712
        %7777 = vst [vmem:[%s425 + $0xa8] sm:$0xff] %v7713
        %7778 = vst [vmem:[%s425 + $0xb0] sm:$0xff] %v7714
        %7779 = vst [vmem:[%s425 + $0xb8] sm:$0xff] %v7715
        %7780 = vst [vmem:[%s425 + $0xc0] sm:$0xff] %v7716
        %7781 = vst [vmem:[%s425 + $0xc8] sm:$0xff] %v7717
        %7782 = vst [vmem:[%s425 + $0xd0] sm:$0xff] %v7718
        %7783 = vst [vmem:[%s425 + $0xd8] sm:$0xff] %v7719
        %7784 = vst [vmem:[%s425 + $0xe0] sm:$0xff] %v7720
        %7785 = vst [vmem:[%s425 + $0xe8] sm:$0xff] %v7721
        %7786 = vst [vmem:[%s425 + $0xf0] sm:$0xff] %v7722
        %7787 = vst [vmem:[%s425 + $0xf8] sm:$0xff] %v7723
        %7788 = vst [vmem:[%s425 + $0x100] sm:$0xff] %v7724
        %7789 = vst [vmem:[%s425 + $0x108] sm:$0xff] %v7725
        %7790 = vst [vmem:[%s425 + $0x110] sm:$0xff] %v7726
        %7791 = vst [vmem:[%s425 + $0x118] sm:$0xff] %v7727
        %7792 = vst [vmem:[%s425 + $0x120] sm:$0xff] %v7728
        %7793 = vst [vmem:[%s425 + $0x128] sm:$0xff] %v7729
        %7794 = vst [vmem:[%s425 + $0x130] sm:$0xff] %v7730
        %7795 = vst [vmem:[%s425 + $0x138] sm:$0xff] %v7731
        %7796 = vst [vmem:[%s425 + $0x140] sm:$0xff] %v7732
        %7797 = vst [vmem:[%s425 + $0x148] sm:$0xff] %v7733
        %7798 = vst [vmem:[%s425 + $0x150] sm:$0xff] %v7734
        %7799 = vst [vmem:[%s425 + $0x158] sm:$0xff] %v7735
        %7800 = vst [vmem:[%s425 + $0x160] sm:$0xff] %v7736
        %7801 = vst [vmem:[%s425 + $0x168] sm:$0xff] %v7737
        %7802 = vst [vmem:[%s425 + $0x170] sm:$0xff] %v7738
        %7803 = vst [vmem:[%s425 + $0x178] sm:$0xff] %v7739
        %7804 = vst [vmem:[%s425 + $0x180] sm:$0xff] %v7740
        %7805 = vst [vmem:[%s425 + $0x188] sm:$0xff] %v7741
        %7806 = vst [vmem:[%s425 + $0x190] sm:$0xff] %v7742
        %7807 = vst [vmem:[%s425 + $0x198] sm:$0xff] %v7743
        %7808 = vst [vmem:[%s425 + $0x1a0] sm:$0xff] %v7744
        %7809 = vst [vmem:[%s425 + $0x1a8] sm:$0xff] %v7745
        %7810 = vst [vmem:[%s425 + $0x1b0] sm:$0xff] %v7746
        %7811 = vst [vmem:[%s425 + $0x1b8] sm:$0xff] %v7747
        %7812 = vst [vmem:[%s425 + $0x1c0] sm:$0xff] %v7748
        %7813 = vst [vmem:[%s425 + $0x1c8] sm:$0xff] %v7749
        %7814 = vst [vmem:[%s425 + $0x1d0] sm:$0xff] %v7750
        %7815 = vst [vmem:[%s425 + $0x1d8] sm:$0xff] %v7751
        %7816 = vst [vmem:[%s425 + $0x1e0] sm:$0xff] %v7752
        %7817 = vst [vmem:[%s425 + $0x1e8] sm:$0xff] %v7753
        %7818 = vst [vmem:[%s425 + $0x1f0] sm:$0xff] %v7754
        %7819 = vst [vmem:[%s425 + $0x1f8] sm:$0xff] %v7755
        %s7820 = sand.u32 %s231, 1
        %s7821 = scalar_lea.sflag [#allocation5], %s7820
        %s7822 = sand.u32 %s231, 1
        %s7823 = smul.addr %s7822, 512
        %s7824 = scalar_lea.vmem [#allocation12], %s7823
        // Predicated region
        $region77: #{tpu_custom_call.1} parent=51 // pred_check
          %p7825 = pneg %p241
        $region78: #{tpu_custom_call.1} parent=51 // pred_check_branch
          %7827 = sbr.rel (%p7825) target = $region80
        $region79: #{tpu_custom_call.1} parent=51 // pred_region
          %s7828 = smul.u32 32, %s34
          %s7830 = ssub.s32 8192, 8192
          %7831 = vsyncadd %s7821, %s7830
          %s7832 = smul.addr %s7828, 2
          %s7833 = smul.addr %s33, 128
          %s7834 = sadd.s32 %s7832, %s7833
          %s7835 = smul.addr %s7834, 128
          %s7836 = scalar_lea.hbm %s8, %s7835
          %s7837 = sshll.u32 %s7824, 4
          %s7838 = int_to_ptr.vmem [resolvable:$true] %s7837
          %7843 = dma.vmem_to_hbm [thread:$0]  %s7838, 8192, %s7836, %s7821, 256, 256, 16
        $region80: #{tpu_custom_call.1} parent=51 // pred_fallthru
          _
      $region52: #{tpu_custom_call.1} parent=5 // pred_fallthru
        _
      %p7844 = scmp.le.s32.totalorder 2, %s24
      // Predicated region
      $region81: #{tpu_custom_call.1} parent=5 // pred_check
        %p7845 = pneg %p7844
      $region82: #{tpu_custom_call.1} parent=5 // pred_check_branch
        %7847 = sbr.rel (%p7845) target = $region84
      $region83: #{tpu_custom_call.1} parent=5 // pred_region
        %s7848 = ssub.s32 %s24, 2
        // Predicated region
        $region85: #{tpu_custom_call.1} parent=83 // pred_check
          %p7849 = pneg %p247
        $region86: #{tpu_custom_call.1} parent=83 // pred_check_branch
          %7851 = sbr.rel (%p7849) target = $region88
        $region87: #{tpu_custom_call.1} parent=83 // pred_region
          %s7852 = sand.u32 %s232, 1
          %s7853 = scalar_lea.sflag [#allocation5], %s7852
          %s7854 = sand.u32 %s232, 1
          %s7855 = smul.addr %s7854, 512
          %s7856 = scalar_lea.vmem [#allocation12], %s7855
          %7857 = dma.done %s7853, 8192
        $region88: #{tpu_custom_call.1} parent=83 // pred_fallthru
          _
      $region84: #{tpu_custom_call.1} parent=5 // pred_fallthru
        _
    $region6: #{tpu_custom_call.1} parent=1 // loop_footer
      %s28 = sadd.s32 1, %s24
    $region7: #{tpu_custom_call.1} parent=1 // loop_footer_branch
      %23 = sbr.rel target = $region3
    $region8: #{tpu_custom_call.1} parent=1 // loop_exit
      _
    %7858 = vsyncpa [#allocation4], 1
    %s7859 = scalar_lea.sflag [#allocation4], 1
    %7860 = vsyncpa %s7859, 1
    %7861 = vsyncpa [#allocation7], 1
    %s7862 = scalar_lea.sflag [#allocation7], 1
    %7863 = vsyncpa %s7862, 1
    %7864 = vsyncpa [#allocation10], 1
    %7865 = vsyncpa [#allocation5], 1
    %s7866 = scalar_lea.sflag [#allocation5], 1
    %7867 = vsyncpa %s7866, 1

</llo_original>
